<compile_context>
chip_gen: v7x
topology: tpu7x:2x2x1
jax: 0.10.0
libtpu: 0.0.40
codegen_flags: <defaults>
</compile_context>

<pallas_src>
import numpy as np
import jax
import jax.numpy as jnp
from jax.experimental import pallas as pl
from jax.experimental.pallas import tpu as pltpu

# ---------------------------------------------------------------------------
# Sizes (first level of DiffusionAttnUnet1D: io_channels=2, channels[0]=128,
# cond_embed_dim=16, kernel_size=5).  T kept small for the demo.
# ---------------------------------------------------------------------------
B, IO, T = 2, 2, 128
NFREQ = 8                    # FourierFeatures(1, 16) -> 8 frequencies
NEMB = 2 * NFREQ             # 16 timestep-embedding channels
CIN = IO + NEMB              # 18 channels into the first conv
C = 128                      # channels[0]
K, PAD = 5, 2                # Conv1d(kernel_size=5, padding=2)
EPS = 1e-5                   # GroupNorm eps (PyTorch default)

# ---------------------------------------------------------------------------
# Parameter-slab layout: ONE (SLAB_ROWS, 128) f32 operand, packed once.
# All row offsets are multiples of 8 and all lane ranges start at 0, so every
# in-kernel view is an aligned, zero-cost static slice.
#   W2  : K blocks of (C, C)    conv2 weight, tap k
#   EW  : 6 blocks of (C, 16)   emb-channel cols of conv1 taps 0..4, then skip
#   XW  : 6 blocks of (C, 2)    io-channel  cols of conv1 taps 0..4, then skip
#   VEC : 6 blocks of (C, 1)    conv1_b, conv2_b, gn1_g, gn1_b, gn2_g, gn2_b
#   FRQ : (8, 1)                Fourier frequencies
# ---------------------------------------------------------------------------
ROW_W2 = 0
ROW_EW = ROW_W2 + K * C          # 640
ROW_XW = ROW_EW + 6 * C          # 1408
ROW_VEC = ROW_XW + 6 * C         # 2176
ROW_FRQ = ROW_VEC + 6 * C        # 2944
SLAB_ROWS = ROW_FRQ + 8          # 2952


def _gelu(x):
    # TODO(synk): PyTorch nn.GELU() defaults to the exact erf form; the tanh
    # approximation is used here (and in the reference) for guaranteed lowering.
    return 0.5 * x * (1.0 + jnp.tanh(0.7978845608028654 * (x + 0.044715 * x * x * x)))


def _groupnorm(h, gamma_col, beta_col):
    m = jnp.mean(h, keepdims=True)                       # (1, 1)
    v = jnp.mean((h - m) ** 2, keepdims=True)            # (1, 1), biased var
    return (h - m) * jax.lax.rsqrt(v + EPS) * gamma_col + beta_col


# ---------------------------------------------------------------------------
# Kernel: whole conditioning front-end + first ResConvBlock, grid=().
# ---------------------------------------------------------------------------
def cond_resblock_kernel(t_ref, p_ref, x_ref, o_ref):
    f32 = jnp.float32

    # ---- static, aligned views into the packed parameter slab ----
    ew = p_ref[ROW_EW:ROW_EW + 6 * C, 0:NEMB]            # (6C, 16)
    xw = p_ref[ROW_XW:ROW_XW + 6 * C, 0:IO]              # (6C, 2)

    def vec_col(i):
        return p_ref[ROW_VEC + i * C:ROW_VEC + (i + 1) * C, 0:1]   # (C, 1)

    b1, b2 = vec_col(0), vec_col(1)
    g1, be1 = vec_col(2), vec_col(3)
    g2, be2 = vec_col(4), vec_col(5)
    freqs = p_ref[ROW_FRQ:ROW_FRQ + NFREQ, 0:1]          # (8, 1)

    # ---- shifted-identity matrices: time shift as an (idle-)MXU matmul ----
    rows = jax.lax.broadcasted_iota(jnp.int32, (T, T), 0)
    cols = jax.lax.broadcasted_iota(jnp.int32, (T, T), 1)
    shift = [(rows - cols == (k - PAD)).astype(f32) for k in range(K)]   # (T, T)

    for b in range(B):                                   # static unroll, B = 2
        # ---- Fourier timestep embedding (cos/sin on the EUP) ----
        ang = (2.0 * jnp.pi) * t_ref[b] * freqs                          # (8, 1)
        emb = jnp.concatenate([jnp.cos(ang), jnp.sin(ang)], axis=0)      # (16, 1)
        planes = jnp.broadcast_to(emb, (NEMB, T))                        # (16, T)

        # ---- channel-group matmuls for conv1 taps 0..4 and the 1x1 skip ----
        # pre[k*C:(k+1)*C] = conv1_w[:, :, k] @ cat([x_b, planes])  (un-shifted)
        # pre[5C:6C]       = skip_w @ cat([x_b, planes])
        pre = (jnp.dot(ew, planes, preferred_element_type=f32) +
               jnp.dot(xw, x_ref[b], preferred_element_type=f32))        # (6C, T)

        # ---- conv1 (k=5, pad=2) + GroupNorm(1, C) + GELU ----
        acc1 = jnp.broadcast_to(b1, (C, T))
        for k in range(K):
            acc1 = acc1 + jnp.dot(pre[k * C:(k + 1) * C, :], shift[k],
                                  preferred_element_type=f32)
        h = _gelu(_groupnorm(acc1, g1, be1))

        # ---- conv2 (k=5, pad=2) + GroupNorm(1, C) + GELU ----
        acc2 = jnp.broadcast_to(b2, (C, T))
        for k in range(K):
            w2k = p_ref[ROW_W2 + k * C:ROW_W2 + (k + 1) * C, :]          # (C, C)
            acc2 = acc2 + jnp.dot(jnp.dot(w2k, h, preferred_element_type=f32),
                                  shift[k], preferred_element_type=f32)
        h2 = _gelu(_groupnorm(acc2, g2, be2))

        # ---- residual: 1x1 skip conv (no bias) ----
        o_ref[b] = (h2 + pre[5 * C:6 * C, :]).astype(o_ref.dtype)


# ---------------------------------------------------------------------------
# Wrapper: the jitted forward is exactly one pallas_call.
# ---------------------------------------------------------------------------
def diffusion_forward(x, t, slab):
    flops_per_b = (2 * 6 * C * (NEMB + IO) * T            # channel-group matmuls
                   + K * 2 * C * T * T                    # conv1 tap shifts
                   + K * (2 * C * C * T + 2 * C * T * T)) # conv2 taps + shifts
    cost = pl.CostEstimate(
        flops=B * flops_per_b,
        transcendentals=2 * B * C * T + 2 * B * NFREQ,
        bytes_accessed=4 * (B + SLAB_ROWS * 128 + B * IO * T + B * C * T))

    return pl.pallas_call(
        cond_resblock_kernel,
        out_shape=jax.ShapeDtypeStruct((B, C, T), jnp.float32),
        in_specs=[
            pl.BlockSpec(memory_space=pltpu.MemorySpace.SMEM),   # t  (B,)
            pl.BlockSpec(memory_space=pltpu.MemorySpace.VMEM),   # param slab
            pl.BlockSpec(memory_space=pltpu.MemorySpace.VMEM),   # x  (B, IO, T)
        ],
        out_specs=pl.BlockSpec(memory_space=pltpu.MemorySpace.VMEM),
        cost_estimate=cost,
    )(t, slab, x)


# ---------------------------------------------------------------------------
# One-time parameter packing (outside the jitted path).
# ---------------------------------------------------------------------------
def pack_params(p):
    slab = np.zeros((SLAB_ROWS, 128), np.float32)
    w1 = np.asarray(p["conv1_w"])     # (C, CIN, K), input channels = [x(2), emb(16)]
    w2 = np.asarray(p["conv2_w"])     # (C, C, K)
    ws = np.asarray(p["skip_w"])      # (C, CIN)
    for k in range(K):
        slab[ROW_W2 + k * C:ROW_W2 + (k + 1) * C, :C] = w2[:, :, k]
        slab[ROW_EW + k * C:ROW_EW + (k + 1) * C, :NEMB] = w1[:, IO:, k]
        slab[ROW_XW + k * C:ROW_XW + (k + 1) * C, :IO] = w1[:, :IO, k]
    slab[ROW_EW + K * C:ROW_EW + 6 * C, :NEMB] = ws[:, IO:]
    slab[ROW_XW + K * C:ROW_XW + 6 * C, :IO] = ws[:, :IO]
    for i, name in enumerate(["conv1_b", "conv2_b", "gn1_g", "gn1_b", "gn2_g", "gn2_b"]):
        slab[ROW_VEC + i * C:ROW_VEC + (i + 1) * C, 0] = np.asarray(p[name])
    slab[ROW_FRQ:ROW_FRQ + NFREQ, 0] = np.asarray(p["freqs"])
    return jnp.asarray(slab)


# ---------------------------------------------------------------------------
# Pure-JAX reference for the same fused region.
# ---------------------------------------------------------------------------
def reference(x, t, p):
    f = 2.0 * jnp.pi * t[:, None] * p["freqs"][None, :]                 # (B, 8)
    emb = jnp.concatenate([jnp.cos(f), jnp.sin(f)], axis=-1)            # (B, 16)
    planes = jnp.broadcast_to(emb[:, :, None], (B, NEMB, T))
    xin = jnp.concatenate([x, planes], axis=1)                          # (B, 18, T)

    def conv1d(h, w, b):
        y = jax.lax.conv_general_dilated(
            h, w, window_strides=(1,), padding=[(PAD, PAD)],
            dimension_numbers=("NCH", "OIH", "NCH"),
            precision=jax.lax.Precision.HIGHEST)
        return y + b[None, :, None]

    def gn(h, g, b):
        m = jnp.mean(h, axis=(1, 2), keepdims=True)
        v = jnp.mean((h - m) ** 2, axis=(1, 2), keepdims=True)
        return (h - m) * jax.lax.rsqrt(v + EPS) * g[None, :, None] + b[None, :, None]

    h = _gelu(gn(conv1d(xin, p["conv1_w"], p["conv1_b"]), p["gn1_g"], p["gn1_b"]))
    h = _gelu(gn(conv1d(h, p["conv2_w"], p["conv2_b"]), p["gn2_g"], p["gn2_b"]))
    skip = jnp.einsum("oc,bct->bot", p["skip_w"], xin,
                      precision=jax.lax.Precision.HIGHEST)
    return h + skip


def init_params(key):
    ks = jax.random.split(key, 10)
    half = 0.5   # DiffusionAttnUnet1D scales every self.net parameter by 0.5 at init
    return {
        "freqs": jax.random.normal(ks[0], (NFREQ,), jnp.float32),   # FourierFeatures, std=1
        "conv1_w": half * 0.1 * jax.random.normal(ks[1], (C, CIN, K), jnp.float32),
        "conv1_b": half * 0.02 * jax.random.normal(ks[2], (C,), jnp.float32),
        "conv2_w": half * 0.05 * jax.random.normal(ks[3], (C, C, K), jnp.float32),
        "conv2_b": half * 0.02 * jax.random.normal(ks[4], (C,), jnp.float32),
        "skip_w": half * 0.1 * jax.random.normal(ks[5], (C, CIN), jnp.float32),
        "gn1_g": 1.0 + 0.1 * jax.random.normal(ks[6], (C,), jnp.float32),
        "gn1_b": 0.1 * jax.random.normal(ks[7], (C,), jnp.float32),
        "gn2_g": 1.0 + 0.1 * jax.random.normal(ks[8], (C,), jnp.float32),
        "gn2_b": 0.1 * jax.random.normal(ks[9], (C,), jnp.float32),
    }


if __name__ == "__main__":
    key = jax.random.PRNGKey(0)
    kx, kt, kp = jax.random.split(key, 3)

    params = init_params(kp)
    slab = pack_params(params)                           # packed ONCE, outside jit
    x = jax.random.normal(kx, (B, IO, T), jnp.float32)   # audio latent (B, io_channels, T)
    t = jax.random.uniform(kt, (B,), jnp.float32)        # diffusion timesteps in [0, 1)

    fwd = jax.jit(diffusion_forward)
    out = jax.block_until_ready(fwd(x, t, slab))

    ref = reference(x, t, params)
    assert out.shape == (B, C, T)
    assert jnp.allclose(out, ref, atol=2e-2, rtol=2e-2), "mismatch vs reference"
    print("KERNEL_OK")
</pallas_src>

<mosaic_0001>
module attributes {stable_mosaic.version = 11 : i64} {
  func.func @cond_resblock_kernel(%arg0: memref<2xf32, #tpu.memory_space<smem>>, %arg1: memref<2952x128xf32, #tpu.memory_space<vmem>>, %arg2: memref<2x2x128xf32, #tpu.memory_space<vmem>>, %arg3: memref<2x128x128xf32, #tpu.memory_space<vmem>>) attributes {dimension_semantics = [], scalar_prefetch = 0 : i64, scratch_operands = 0 : i64, tpu.core_type = #tpu.core_type<tc>} {
    %c640 = arith.constant 640 : index
    %c0 = arith.constant 0 : index
    %0 = vector.load %arg1[%c640, %c0] : memref<2952x128xf32, #tpu.memory_space<vmem>>, vector<768x16xf32>
    %c1408 = arith.constant 1408 : index
    %c0_0 = arith.constant 0 : index
    %1 = vector.load %arg1[%c1408, %c0_0] : memref<2952x128xf32, #tpu.memory_space<vmem>>, vector<768x2xf32>
    %c2176 = arith.constant 2176 : index
    %c0_1 = arith.constant 0 : index
    %2 = vector.load %arg1[%c2176, %c0_1] : memref<2952x128xf32, #tpu.memory_space<vmem>>, vector<128x1xf32>
    %c2304 = arith.constant 2304 : index
    %c0_2 = arith.constant 0 : index
    %3 = vector.load %arg1[%c2304, %c0_2] : memref<2952x128xf32, #tpu.memory_space<vmem>>, vector<128x1xf32>
    %c2432 = arith.constant 2432 : index
    %c0_3 = arith.constant 0 : index
    %4 = vector.load %arg1[%c2432, %c0_3] : memref<2952x128xf32, #tpu.memory_space<vmem>>, vector<128x1xf32>
    %c2560 = arith.constant 2560 : index
    %c0_4 = arith.constant 0 : index
    %5 = vector.load %arg1[%c2560, %c0_4] : memref<2952x128xf32, #tpu.memory_space<vmem>>, vector<128x1xf32>
    %c2688 = arith.constant 2688 : index
    %c0_5 = arith.constant 0 : index
    %6 = vector.load %arg1[%c2688, %c0_5] : memref<2952x128xf32, #tpu.memory_space<vmem>>, vector<128x1xf32>
    %c2816 = arith.constant 2816 : index
    %c0_6 = arith.constant 0 : index
    %7 = vector.load %arg1[%c2816, %c0_6] : memref<2952x128xf32, #tpu.memory_space<vmem>>, vector<128x1xf32>
    %c2944 = arith.constant 2944 : index
    %c0_7 = arith.constant 0 : index
    %8 = vector.load %arg1[%c2944, %c0_7] : memref<2952x128xf32, #tpu.memory_space<vmem>>, vector<8x1xf32>
    %9 = tpu.iota {dimensions = array<i32: 0>} : vector<128x128xi32>
    %10 = tpu.iota {dimensions = array<i32: 1>} : vector<128x128xi32>
    %11 = arith.subi %9, %10 : vector<128x128xi32>
    %c-2_i32 = arith.constant -2 : i32
    %12 = vector.broadcast %c-2_i32 : i32 to vector<128x128xi32>
    %13 = arith.cmpi eq, %11, %12 : vector<128x128xi32>
    %14 = arith.extui %13 : vector<128x128xi1> to vector<128x128xi32>
    %15 = arith.sitofp %14 : vector<128x128xi32> to vector<128x128xf32>
    %16 = arith.subi %9, %10 : vector<128x128xi32>
    %c-1_i32 = arith.constant -1 : i32
    %17 = vector.broadcast %c-1_i32 : i32 to vector<128x128xi32>
    %18 = arith.cmpi eq, %16, %17 : vector<128x128xi32>
    %19 = arith.extui %18 : vector<128x128xi1> to vector<128x128xi32>
    %20 = arith.sitofp %19 : vector<128x128xi32> to vector<128x128xf32>
    %21 = arith.subi %9, %10 : vector<128x128xi32>
    %c0_i32 = arith.constant 0 : i32
    %22 = vector.broadcast %c0_i32 : i32 to vector<128x128xi32>
    %23 = arith.cmpi eq, %21, %22 : vector<128x128xi32>
    %24 = arith.extui %23 : vector<128x128xi1> to vector<128x128xi32>
    %25 = arith.sitofp %24 : vector<128x128xi32> to vector<128x128xf32>
    %26 = arith.subi %9, %10 : vector<128x128xi32>
    %c1_i32 = arith.constant 1 : i32
    %27 = vector.broadcast %c1_i32 : i32 to vector<128x128xi32>
    %28 = arith.cmpi eq, %26, %27 : vector<128x128xi32>
    %29 = arith.extui %28 : vector<128x128xi1> to vector<128x128xi32>
    %30 = arith.sitofp %29 : vector<128x128xi32> to vector<128x128xf32>
    %31 = arith.subi %9, %10 : vector<128x128xi32>
    %c2_i32 = arith.constant 2 : i32
    %32 = vector.broadcast %c2_i32 : i32 to vector<128x128xi32>
    %33 = arith.cmpi eq, %31, %32 : vector<128x128xi32>
    %34 = arith.extui %33 : vector<128x128xi1> to vector<128x128xi32>
    %35 = arith.sitofp %34 : vector<128x128xi32> to vector<128x128xf32>
    %c0_8 = arith.constant 0 : index
    %36 = memref.load %arg0[%c0_8] : memref<2xf32, #tpu.memory_space<smem>>
    %cst = arith.constant 6.28318548 : f32
    %37 = arith.mulf %cst, %36 : f32
    %38 = vector.broadcast %37 : f32 to vector<8x1xf32>
    %39 = arith.mulf %38, %8 : vector<8x1xf32>
    %40 = math.cos %39 : vector<8x1xf32>
    %41 = math.sin %39 : vector<8x1xf32>
    %42 = tpu.concatenate %40, %41 in 0 : vector<8x1xf32>, vector<8x1xf32> -> vector<16x1xf32>
    %43 = vector.shape_cast %42 : vector<16x1xf32> to vector<16x1xf32>
    %44 = vector.broadcast %43 : vector<16x1xf32> to vector<16x128xf32>
    %cst_9 = arith.constant dense<0.000000e+00> : vector<768x128xf32>
    %45 = tpu.matmul %0, %44, %cst_9 {dimension_numbers = #tpu.dot_dimension_numbers<[1], [0], [0], [1], [0, 0, 1, 1], [], []>} : vector<768x16xf32>, vector<16x128xf32>, vector<768x128xf32> -> vector<768x128xf32>
    %c0_10 = arith.constant 0 : index
    %c0_11 = arith.constant 0 : index
    %c0_12 = arith.constant 0 : index
    %46 = vector.load %arg2[%c0_10, %c0_11, %c0_12] : memref<2x2x128xf32, #tpu.memory_space<vmem>>, vector<1x2x128xf32>
    %47 = vector.shape_cast %46 : vector<1x2x128xf32> to vector<2x128xf32>
    %cst_13 = arith.constant dense<0.000000e+00> : vector<768x128xf32>
    %48 = tpu.matmul %1, %47, %cst_13 {dimension_numbers = #tpu.dot_dimension_numbers<[1], [0], [0], [1], [0, 0, 1, 1], [], []>} : vector<768x2xf32>, vector<2x128xf32>, vector<768x128xf32> -> vector<768x128xf32>
    %49 = arith.addf %45, %48 : vector<768x128xf32>
    %50 = vector.shape_cast %2 : vector<128x1xf32> to vector<128x1xf32>
    %51 = vector.broadcast %50 : vector<128x1xf32> to vector<128x128xf32>
    %52 = vector.extract_strided_slice %49 {offsets = [0, 0], sizes = [128, 128], strides = [1, 1]} : vector<768x128xf32> to vector<128x128xf32>
    %cst_14 = arith.constant dense<0.000000e+00> : vector<128x128xf32>
    %53 = tpu.matmul %52, %15, %cst_14 {dimension_numbers = #tpu.dot_dimension_numbers<[1], [0], [0], [1], [0, 0, 1, 1], [], []>} : vector<128x128xf32>, vector<128x128xf32>, vector<128x128xf32> -> vector<128x128xf32>
    %54 = arith.addf %51, %53 : vector<128x128xf32>
    %55 = vector.extract_strided_slice %49 {offsets = [128, 0], sizes = [128, 128], strides = [1, 1]} : vector<768x128xf32> to vector<128x128xf32>
    %cst_15 = arith.constant dense<0.000000e+00> : vector<128x128xf32>
    %56 = tpu.matmul %55, %20, %cst_15 {dimension_numbers = #tpu.dot_dimension_numbers<[1], [0], [0], [1], [0, 0, 1, 1], [], []>} : vector<128x128xf32>, vector<128x128xf32>, vector<128x128xf32> -> vector<128x128xf32>
    %57 = arith.addf %54, %56 : vector<128x128xf32>
    %58 = vector.extract_strided_slice %49 {offsets = [256, 0], sizes = [128, 128], strides = [1, 1]} : vector<768x128xf32> to vector<128x128xf32>
    %cst_16 = arith.constant dense<0.000000e+00> : vector<128x128xf32>
    %59 = tpu.matmul %58, %25, %cst_16 {dimension_numbers = #tpu.dot_dimension_numbers<[1], [0], [0], [1], [0, 0, 1, 1], [], []>} : vector<128x128xf32>, vector<128x128xf32>, vector<128x128xf32> -> vector<128x128xf32>
    %60 = arith.addf %57, %59 : vector<128x128xf32>
    %61 = vector.extract_strided_slice %49 {offsets = [384, 0], sizes = [128, 128], strides = [1, 1]} : vector<768x128xf32> to vector<128x128xf32>
    %cst_17 = arith.constant dense<0.000000e+00> : vector<128x128xf32>
    %62 = tpu.matmul %61, %30, %cst_17 {dimension_numbers = #tpu.dot_dimension_numbers<[1], [0], [0], [1], [0, 0, 1, 1], [], []>} : vector<128x128xf32>, vector<128x128xf32>, vector<128x128xf32> -> vector<128x128xf32>
    %63 = arith.addf %60, %62 : vector<128x128xf32>
    %64 = vector.extract_strided_slice %49 {offsets = [512, 0], sizes = [128, 128], strides = [1, 1]} : vector<768x128xf32> to vector<128x128xf32>
    %cst_18 = arith.constant dense<0.000000e+00> : vector<128x128xf32>
    %65 = tpu.matmul %64, %35, %cst_18 {dimension_numbers = #tpu.dot_dimension_numbers<[1], [0], [0], [1], [0, 0, 1, 1], [], []>} : vector<128x128xf32>, vector<128x128xf32>, vector<128x128xf32> -> vector<128x128xf32>
    %66 = arith.addf %63, %65 : vector<128x128xf32>
    %67 = vector.shape_cast %66 : vector<128x128xf32> to vector<1x128x128xf32>
    %cst_19 = arith.constant dense<0.000000e+00> : vector<1xf32>
    %68 = vector.multi_reduction <add>, %67, %cst_19 [1, 2] : vector<1x128x128xf32> to vector<1xf32>
    %69 = vector.shape_cast %68 : vector<1xf32> to vector<1x1x1xf32>
    %70 = vector.extract %69[0, 0, 0] : f32 from vector<1x1x1xf32>
    %71 = vector.broadcast %70 : f32 to vector<1x1xf32>
    %cst_20 = arith.constant 1.638400e+04 : f32
    %72 = vector.broadcast %cst_20 : f32 to vector<1x1xf32>
    %73 = arith.divf %71, %72 : vector<1x1xf32>
    %74 = vector.broadcast %73 : vector<1x1xf32> to vector<128x128xf32>
    %75 = arith.subf %66, %74 : vector<128x128xf32>
    %76 = arith.mulf %75, %75 : vector<128x128xf32>
    %77 = vector.shape_cast %76 : vector<128x128xf32> to vector<1x128x128xf32>
    %cst_21 = arith.constant dense<0.000000e+00> : vector<1xf32>
    %78 = vector.multi_reduction <add>, %77, %cst_21 [1, 2] : vector<1x128x128xf32> to vector<1xf32>
    %79 = vector.shape_cast %78 : vector<1xf32> to vector<1x1x1xf32>
    %80 = vector.extract %79[0, 0, 0] : f32 from vector<1x1x1xf32>
    %81 = vector.broadcast %80 : f32 to vector<1x1xf32>
    %cst_22 = arith.constant 1.638400e+04 : f32
    %82 = vector.broadcast %cst_22 : f32 to vector<1x1xf32>
    %83 = arith.divf %81, %82 : vector<1x1xf32>
    %84 = vector.broadcast %73 : vector<1x1xf32> to vector<128x128xf32>
    %85 = arith.subf %66, %84 : vector<128x128xf32>
    %cst_23 = arith.constant 9.99999974E-6 : f32
    %86 = vector.broadcast %cst_23 : f32 to vector<1x1xf32>
    %87 = arith.addf %83, %86 : vector<1x1xf32>
    %88 = math.rsqrt %87 : vector<1x1xf32>
    %89 = vector.broadcast %88 : vector<1x1xf32> to vector<128x128xf32>
    %90 = arith.mulf %85, %89 : vector<128x128xf32>
    %91 = vector.broadcast %4 : vector<128x1xf32> to vector<128x128xf32>
    %92 = arith.mulf %90, %91 : vector<128x128xf32>
    %93 = vector.broadcast %5 : vector<128x1xf32> to vector<128x128xf32>
    %94 = arith.addf %92, %93 : vector<128x128xf32>
    %cst_24 = arith.constant 5.000000e-01 : f32
    %95 = vector.broadcast %cst_24 : f32 to vector<128x128xf32>
    %96 = arith.mulf %95, %94 : vector<128x128xf32>
    %cst_25 = arith.constant 4.471500e-02 : f32
    %97 = vector.broadcast %cst_25 : f32 to vector<128x128xf32>
    %98 = arith.mulf %97, %94 : vector<128x128xf32>
    %99 = arith.mulf %98, %94 : vector<128x128xf32>
    %100 = arith.mulf %99, %94 : vector<128x128xf32>
    %101 = arith.addf %94, %100 : vector<128x128xf32>
    %cst_26 = arith.constant 0.797884583 : f32
    %102 = vector.broadcast %cst_26 : f32 to vector<128x128xf32>
    %103 = arith.mulf %102, %101 : vector<128x128xf32>
    %104 = math.tanh %103 : vector<128x128xf32>
    %cst_27 = arith.constant 1.000000e+00 : f32
    %105 = vector.broadcast %cst_27 : f32 to vector<128x128xf32>
    %106 = arith.addf %105, %104 : vector<128x128xf32>
    %107 = arith.mulf %96, %106 : vector<128x128xf32>
    %108 = vector.shape_cast %3 : vector<128x1xf32> to vector<128x1xf32>
    %109 = vector.broadcast %108 : vector<128x1xf32> to vector<128x128xf32>
    %c0_28 = arith.constant 0 : index
    %c0_29 = arith.constant 0 : index
    %110 = vector.load %arg1[%c0_28, %c0_29] : memref<2952x128xf32, #tpu.memory_space<vmem>>, vector<128x128xf32>
    %cst_30 = arith.constant dense<0.000000e+00> : vector<128x128xf32>
    %111 = tpu.matmul %110, %107, %cst_30 {dimension_numbers = #tpu.dot_dimension_numbers<[1], [0], [0], [1], [0, 0, 1, 1], [], []>} : vector<128x128xf32>, vector<128x128xf32>, vector<128x128xf32> -> vector<128x128xf32>
    %cst_31 = arith.constant dense<0.000000e+00> : vector<128x128xf32>
    %112 = tpu.matmul %111, %15, %cst_31 {dimension_numbers = #tpu.dot_dimension_numbers<[1], [0], [0], [1], [0, 0, 1, 1], [], []>} : vector<128x128xf32>, vector<128x128xf32>, vector<128x128xf32> -> vector<128x128xf32>
    %113 = arith.addf %109, %112 : vector<128x128xf32>
    %c128 = arith.constant 128 : index
    %c0_32 = arith.constant 0 : index
    %114 = vector.load %arg1[%c128, %c0_32] : memref<2952x128xf32, #tpu.memory_space<vmem>>, vector<128x128xf32>
    %cst_33 = arith.constant dense<0.000000e+00> : vector<128x128xf32>
    %115 = tpu.matmul %114, %107, %cst_33 {dimension_numbers = #tpu.dot_dimension_numbers<[1], [0], [0], [1], [0, 0, 1, 1], [], []>} : vector<128x128xf32>, vector<128x128xf32>, vector<128x128xf32> -> vector<128x128xf32>
    %cst_34 = arith.constant dense<0.000000e+00> : vector<128x128xf32>
    %116 = tpu.matmul %115, %20, %cst_34 {dimension_numbers = #tpu.dot_dimension_numbers<[1], [0], [0], [1], [0, 0, 1, 1], [], []>} : vector<128x128xf32>, vector<128x128xf32>, vector<128x128xf32> -> vector<128x128xf32>
    %117 = arith.addf %113, %116 : vector<128x128xf32>
    %c256 = arith.constant 256 : index
    %c0_35 = arith.constant 0 : index
    %118 = vector.load %arg1[%c256, %c0_35] : memref<2952x128xf32, #tpu.memory_space<vmem>>, vector<128x128xf32>
    %cst_36 = arith.constant dense<0.000000e+00> : vector<128x128xf32>
    %119 = tpu.matmul %118, %107, %cst_36 {dimension_numbers = #tpu.dot_dimension_numbers<[1], [0], [0], [1], [0, 0, 1, 1], [], []>} : vector<128x128xf32>, vector<128x128xf32>, vector<128x128xf32> -> vector<128x128xf32>
    %cst_37 = arith.constant dense<0.000000e+00> : vector<128x128xf32>
    %120 = tpu.matmul %119, %25, %cst_37 {dimension_numbers = #tpu.dot_dimension_numbers<[1], [0], [0], [1], [0, 0, 1, 1], [], []>} : vector<128x128xf32>, vector<128x128xf32>, vector<128x128xf32> -> vector<128x128xf32>
    %121 = arith.addf %117, %120 : vector<128x128xf32>
    %c384 = arith.constant 384 : index
    %c0_38 = arith.constant 0 : index
    %122 = vector.load %arg1[%c384, %c0_38] : memref<2952x128xf32, #tpu.memory_space<vmem>>, vector<128x128xf32>
    %cst_39 = arith.constant dense<0.000000e+00> : vector<128x128xf32>
    %123 = tpu.matmul %122, %107, %cst_39 {dimension_numbers = #tpu.dot_dimension_numbers<[1], [0], [0], [1], [0, 0, 1, 1], [], []>} : vector<128x128xf32>, vector<128x128xf32>, vector<128x128xf32> -> vector<128x128xf32>
    %cst_40 = arith.constant dense<0.000000e+00> : vector<128x128xf32>
    %124 = tpu.matmul %123, %30, %cst_40 {dimension_numbers = #tpu.dot_dimension_numbers<[1], [0], [0], [1], [0, 0, 1, 1], [], []>} : vector<128x128xf32>, vector<128x128xf32>, vector<128x128xf32> -> vector<128x128xf32>
    %125 = arith.addf %121, %124 : vector<128x128xf32>
    %c512 = arith.constant 512 : index
    %c0_41 = arith.constant 0 : index
    %126 = vector.load %arg1[%c512, %c0_41] : memref<2952x128xf32, #tpu.memory_space<vmem>>, vector<128x128xf32>
    %cst_42 = arith.constant dense<0.000000e+00> : vector<128x128xf32>
    %127 = tpu.matmul %126, %107, %cst_42 {dimension_numbers = #tpu.dot_dimension_numbers<[1], [0], [0], [1], [0, 0, 1, 1], [], []>} : vector<128x128xf32>, vector<128x128xf32>, vector<128x128xf32> -> vector<128x128xf32>
    %cst_43 = arith.constant dense<0.000000e+00> : vector<128x128xf32>
    %128 = tpu.matmul %127, %35, %cst_43 {dimension_numbers = #tpu.dot_dimension_numbers<[1], [0], [0], [1], [0, 0, 1, 1], [], []>} : vector<128x128xf32>, vector<128x128xf32>, vector<128x128xf32> -> vector<128x128xf32>
    %129 = arith.addf %125, %128 : vector<128x128xf32>
    %130 = vector.shape_cast %129 : vector<128x128xf32> to vector<1x128x128xf32>
    %cst_44 = arith.constant dense<0.000000e+00> : vector<1xf32>
    %131 = vector.multi_reduction <add>, %130, %cst_44 [1, 2] : vector<1x128x128xf32> to vector<1xf32>
    %132 = vector.shape_cast %131 : vector<1xf32> to vector<1x1x1xf32>
    %133 = vector.extract %132[0, 0, 0] : f32 from vector<1x1x1xf32>
    %134 = vector.broadcast %133 : f32 to vector<1x1xf32>
    %cst_45 = arith.constant 1.638400e+04 : f32
    %135 = vector.broadcast %cst_45 : f32 to vector<1x1xf32>
    %136 = arith.divf %134, %135 : vector<1x1xf32>
    %137 = vector.broadcast %136 : vector<1x1xf32> to vector<128x128xf32>
    %138 = arith.subf %129, %137 : vector<128x128xf32>
    %139 = arith.mulf %138, %138 : vector<128x128xf32>
    %140 = vector.shape_cast %139 : vector<128x128xf32> to vector<1x128x128xf32>
    %cst_46 = arith.constant dense<0.000000e+00> : vector<1xf32>
    %141 = vector.multi_reduction <add>, %140, %cst_46 [1, 2] : vector<1x128x128xf32> to vector<1xf32>
    %142 = vector.shape_cast %141 : vector<1xf32> to vector<1x1x1xf32>
    %143 = vector.extract %142[0, 0, 0] : f32 from vector<1x1x1xf32>
    %144 = vector.broadcast %143 : f32 to vector<1x1xf32>
    %cst_47 = arith.constant 1.638400e+04 : f32
    %145 = vector.broadcast %cst_47 : f32 to vector<1x1xf32>
    %146 = arith.divf %144, %145 : vector<1x1xf32>
    %147 = vector.broadcast %136 : vector<1x1xf32> to vector<128x128xf32>
    %148 = arith.subf %129, %147 : vector<128x128xf32>
    %cst_48 = arith.constant 9.99999974E-6 : f32
    %149 = vector.broadcast %cst_48 : f32 to vector<1x1xf32>
    %150 = arith.addf %146, %149 : vector<1x1xf32>
    %151 = math.rsqrt %150 : vector<1x1xf32>
    %152 = vector.broadcast %151 : vector<1x1xf32> to vector<128x128xf32>
    %153 = arith.mulf %148, %152 : vector<128x128xf32>
    %154 = vector.broadcast %6 : vector<128x1xf32> to vector<128x128xf32>
    %155 = arith.mulf %153, %154 : vector<128x128xf32>
    %156 = vector.broadcast %7 : vector<128x1xf32> to vector<128x128xf32>
    %157 = arith.addf %155, %156 : vector<128x128xf32>
    %cst_49 = arith.constant 5.000000e-01 : f32
    %158 = vector.broadcast %cst_49 : f32 to vector<128x128xf32>
    %159 = arith.mulf %158, %157 : vector<128x128xf32>
    %cst_50 = arith.constant 4.471500e-02 : f32
    %160 = vector.broadcast %cst_50 : f32 to vector<128x128xf32>
    %161 = arith.mulf %160, %157 : vector<128x128xf32>
    %162 = arith.mulf %161, %157 : vector<128x128xf32>
    %163 = arith.mulf %162, %157 : vector<128x128xf32>
    %164 = arith.addf %157, %163 : vector<128x128xf32>
    %cst_51 = arith.constant 0.797884583 : f32
    %165 = vector.broadcast %cst_51 : f32 to vector<128x128xf32>
    %166 = arith.mulf %165, %164 : vector<128x128xf32>
    %167 = math.tanh %166 : vector<128x128xf32>
    %cst_52 = arith.constant 1.000000e+00 : f32
    %168 = vector.broadcast %cst_52 : f32 to vector<128x128xf32>
    %169 = arith.addf %168, %167 : vector<128x128xf32>
    %170 = arith.mulf %159, %169 : vector<128x128xf32>
    %171 = vector.extract_strided_slice %49 {offsets = [640, 0], sizes = [128, 128], strides = [1, 1]} : vector<768x128xf32> to vector<128x128xf32>
    %172 = arith.addf %170, %171 : vector<128x128xf32>
    %c0_53 = arith.constant 0 : index
    %c0_54 = arith.constant 0 : index
    %c0_55 = arith.constant 0 : index
    %173 = vector.load %arg3[%c0_53, %c0_54, %c0_55] : memref<2x128x128xf32, #tpu.memory_space<vmem>>, vector<1x128x128xf32>
    %174 = vector.shape_cast %173 : vector<1x128x128xf32> to vector<128x128xf32>
    %175 = vector.shape_cast %172 : vector<128x128xf32> to vector<1x128x128xf32>
    tpu.vector_store %arg3[%c0_53, %c0_54, %c0_55], %175 {strides = array<i32>} : memref<2x128x128xf32, #tpu.memory_space<vmem>>, vector<1x128x128xf32>,
    %c1 = arith.constant 1 : index
    %176 = memref.load %arg0[%c1] : memref<2xf32, #tpu.memory_space<smem>>
    %cst_56 = arith.constant 6.28318548 : f32
    %177 = arith.mulf %cst_56, %176 : f32
    %178 = vector.broadcast %177 : f32 to vector<8x1xf32>
    %179 = arith.mulf %178, %8 : vector<8x1xf32>
    %180 = math.cos %179 : vector<8x1xf32>
    %181 = math.sin %179 : vector<8x1xf32>
    %182 = tpu.concatenate %180, %181 in 0 : vector<8x1xf32>, vector<8x1xf32> -> vector<16x1xf32>
    %183 = vector.shape_cast %182 : vector<16x1xf32> to vector<16x1xf32>
    %184 = vector.broadcast %183 : vector<16x1xf32> to vector<16x128xf32>
    %cst_57 = arith.constant dense<0.000000e+00> : vector<768x128xf32>
    %185 = tpu.matmul %0, %184, %cst_57 {dimension_numbers = #tpu.dot_dimension_numbers<[1], [0], [0], [1], [0, 0, 1, 1], [], []>} : vector<768x16xf32>, vector<16x128xf32>, vector<768x128xf32> -> vector<768x128xf32>
    %c1_58 = arith.constant 1 : index
    %c0_59 = arith.constant 0 : index
    %c0_60 = arith.constant 0 : index
    %186 = vector.load %arg2[%c1_58, %c0_59, %c0_60] : memref<2x2x128xf32, #tpu.memory_space<vmem>>, vector<1x2x128xf32>
    %187 = vector.shape_cast %186 : vector<1x2x128xf32> to vector<2x128xf32>
    %cst_61 = arith.constant dense<0.000000e+00> : vector<768x128xf32>
    %188 = tpu.matmul %1, %187, %cst_61 {dimension_numbers = #tpu.dot_dimension_numbers<[1], [0], [0], [1], [0, 0, 1, 1], [], []>} : vector<768x2xf32>, vector<2x128xf32>, vector<768x128xf32> -> vector<768x128xf32>
    %189 = arith.addf %185, %188 : vector<768x128xf32>
    %190 = vector.shape_cast %2 : vector<128x1xf32> to vector<128x1xf32>
    %191 = vector.broadcast %190 : vector<128x1xf32> to vector<128x128xf32>
    %192 = vector.extract_strided_slice %189 {offsets = [0, 0], sizes = [128, 128], strides = [1, 1]} : vector<768x128xf32> to vector<128x128xf32>
    %cst_62 = arith.constant dense<0.000000e+00> : vector<128x128xf32>
    %193 = tpu.matmul %192, %15, %cst_62 {dimension_numbers = #tpu.dot_dimension_numbers<[1], [0], [0], [1], [0, 0, 1, 1], [], []>} : vector<128x128xf32>, vector<128x128xf32>, vector<128x128xf32> -> vector<128x128xf32>
    %194 = arith.addf %191, %193 : vector<128x128xf32>
    %195 = vector.extract_strided_slice %189 {offsets = [128, 0], sizes = [128, 128], strides = [1, 1]} : vector<768x128xf32> to vector<128x128xf32>
    %cst_63 = arith.constant dense<0.000000e+00> : vector<128x128xf32>
    %196 = tpu.matmul %195, %20, %cst_63 {dimension_numbers = #tpu.dot_dimension_numbers<[1], [0], [0], [1], [0, 0, 1, 1], [], []>} : vector<128x128xf32>, vector<128x128xf32>, vector<128x128xf32> -> vector<128x128xf32>
    %197 = arith.addf %194, %196 : vector<128x128xf32>
    %198 = vector.extract_strided_slice %189 {offsets = [256, 0], sizes = [128, 128], strides = [1, 1]} : vector<768x128xf32> to vector<128x128xf32>
    %cst_64 = arith.constant dense<0.000000e+00> : vector<128x128xf32>
    %199 = tpu.matmul %198, %25, %cst_64 {dimension_numbers = #tpu.dot_dimension_numbers<[1], [0], [0], [1], [0, 0, 1, 1], [], []>} : vector<128x128xf32>, vector<128x128xf32>, vector<128x128xf32> -> vector<128x128xf32>
    %200 = arith.addf %197, %199 : vector<128x128xf32>
    %201 = vector.extract_strided_slice %189 {offsets = [384, 0], sizes = [128, 128], strides = [1, 1]} : vector<768x128xf32> to vector<128x128xf32>
    %cst_65 = arith.constant dense<0.000000e+00> : vector<128x128xf32>
    %202 = tpu.matmul %201, %30, %cst_65 {dimension_numbers = #tpu.dot_dimension_numbers<[1], [0], [0], [1], [0, 0, 1, 1], [], []>} : vector<128x128xf32>, vector<128x128xf32>, vector<128x128xf32> -> vector<128x128xf32>
    %203 = arith.addf %200, %202 : vector<128x128xf32>
    %204 = vector.extract_strided_slice %189 {offsets = [512, 0], sizes = [128, 128], strides = [1, 1]} : vector<768x128xf32> to vector<128x128xf32>
    %cst_66 = arith.constant dense<0.000000e+00> : vector<128x128xf32>
    %205 = tpu.matmul %204, %35, %cst_66 {dimension_numbers = #tpu.dot_dimension_numbers<[1], [0], [0], [1], [0, 0, 1, 1], [], []>} : vector<128x128xf32>, vector<128x128xf32>, vector<128x128xf32> -> vector<128x128xf32>
    %206 = arith.addf %203, %205 : vector<128x128xf32>
    %207 = vector.shape_cast %206 : vector<128x128xf32> to vector<1x128x128xf32>
    %cst_67 = arith.constant dense<0.000000e+00> : vector<1xf32>
    %208 = vector.multi_reduction <add>, %207, %cst_67 [1, 2] : vector<1x128x128xf32> to vector<1xf32>
    %209 = vector.shape_cast %208 : vector<1xf32> to vector<1x1x1xf32>
    %210 = vector.extract %209[0, 0, 0] : f32 from vector<1x1x1xf32>
    %211 = vector.broadcast %210 : f32 to vector<1x1xf32>
    %cst_68 = arith.constant 1.638400e+04 : f32
    %212 = vector.broadcast %cst_68 : f32 to vector<1x1xf32>
    %213 = arith.divf %211, %212 : vector<1x1xf32>
    %214 = vector.broadcast %213 : vector<1x1xf32> to vector<128x128xf32>
    %215 = arith.subf %206, %214 : vector<128x128xf32>
    %216 = arith.mulf %215, %215 : vector<128x128xf32>
    %217 = vector.shape_cast %216 : vector<128x128xf32> to vector<1x128x128xf32>
    %cst_69 = arith.constant dense<0.000000e+00> : vector<1xf32>
    %218 = vector.multi_reduction <add>, %217, %cst_69 [1, 2] : vector<1x128x128xf32> to vector<1xf32>
    %219 = vector.shape_cast %218 : vector<1xf32> to vector<1x1x1xf32>
    %220 = vector.extract %219[0, 0, 0] : f32 from vector<1x1x1xf32>
    %221 = vector.broadcast %220 : f32 to vector<1x1xf32>
    %cst_70 = arith.constant 1.638400e+04 : f32
    %222 = vector.broadcast %cst_70 : f32 to vector<1x1xf32>
    %223 = arith.divf %221, %222 : vector<1x1xf32>
    %224 = vector.broadcast %213 : vector<1x1xf32> to vector<128x128xf32>
    %225 = arith.subf %206, %224 : vector<128x128xf32>
    %cst_71 = arith.constant 9.99999974E-6 : f32
    %226 = vector.broadcast %cst_71 : f32 to vector<1x1xf32>
    %227 = arith.addf %223, %226 : vector<1x1xf32>
    %228 = math.rsqrt %227 : vector<1x1xf32>
    %229 = vector.broadcast %228 : vector<1x1xf32> to vector<128x128xf32>
    %230 = arith.mulf %225, %229 : vector<128x128xf32>
    %231 = vector.broadcast %4 : vector<128x1xf32> to vector<128x128xf32>
    %232 = arith.mulf %230, %231 : vector<128x128xf32>
    %233 = vector.broadcast %5 : vector<128x1xf32> to vector<128x128xf32>
    %234 = arith.addf %232, %233 : vector<128x128xf32>
    %cst_72 = arith.constant 5.000000e-01 : f32
    %235 = vector.broadcast %cst_72 : f32 to vector<128x128xf32>
    %236 = arith.mulf %235, %234 : vector<128x128xf32>
    %cst_73 = arith.constant 4.471500e-02 : f32
    %237 = vector.broadcast %cst_73 : f32 to vector<128x128xf32>
    %238 = arith.mulf %237, %234 : vector<128x128xf32>
    %239 = arith.mulf %238, %234 : vector<128x128xf32>
    %240 = arith.mulf %239, %234 : vector<128x128xf32>
    %241 = arith.addf %234, %240 : vector<128x128xf32>
    %cst_74 = arith.constant 0.797884583 : f32
    %242 = vector.broadcast %cst_74 : f32 to vector<128x128xf32>
    %243 = arith.mulf %242, %241 : vector<128x128xf32>
    %244 = math.tanh %243 : vector<128x128xf32>
    %cst_75 = arith.constant 1.000000e+00 : f32
    %245 = vector.broadcast %cst_75 : f32 to vector<128x128xf32>
    %246 = arith.addf %245, %244 : vector<128x128xf32>
    %247 = arith.mulf %236, %246 : vector<128x128xf32>
    %248 = vector.shape_cast %3 : vector<128x1xf32> to vector<128x1xf32>
    %249 = vector.broadcast %248 : vector<128x1xf32> to vector<128x128xf32>
    %c0_76 = arith.constant 0 : index
    %c0_77 = arith.constant 0 : index
    %250 = vector.load %arg1[%c0_76, %c0_77] : memref<2952x128xf32, #tpu.memory_space<vmem>>, vector<128x128xf32>
    %cst_78 = arith.constant dense<0.000000e+00> : vector<128x128xf32>
    %251 = tpu.matmul %250, %247, %cst_78 {dimension_numbers = #tpu.dot_dimension_numbers<[1], [0], [0], [1], [0, 0, 1, 1], [], []>} : vector<128x128xf32>, vector<128x128xf32>, vector<128x128xf32> -> vector<128x128xf32>
    %cst_79 = arith.constant dense<0.000000e+00> : vector<128x128xf32>
    %252 = tpu.matmul %251, %15, %cst_79 {dimension_numbers = #tpu.dot_dimension_numbers<[1], [0], [0], [1], [0, 0, 1, 1], [], []>} : vector<128x128xf32>, vector<128x128xf32>, vector<128x128xf32> -> vector<128x128xf32>
    %253 = arith.addf %249, %252 : vector<128x128xf32>
    %c128_80 = arith.constant 128 : index
    %c0_81 = arith.constant 0 : index
    %254 = vector.load %arg1[%c128_80, %c0_81] : memref<2952x128xf32, #tpu.memory_space<vmem>>, vector<128x128xf32>
    %cst_82 = arith.constant dense<0.000000e+00> : vector<128x128xf32>
    %255 = tpu.matmul %254, %247, %cst_82 {dimension_numbers = #tpu.dot_dimension_numbers<[1], [0], [0], [1], [0, 0, 1, 1], [], []>} : vector<128x128xf32>, vector<128x128xf32>, vector<128x128xf32> -> vector<128x128xf32>
    %cst_83 = arith.constant dense<0.000000e+00> : vector<128x128xf32>
    %256 = tpu.matmul %255, %20, %cst_83 {dimension_numbers = #tpu.dot_dimension_numbers<[1], [0], [0], [1], [0, 0, 1, 1], [], []>} : vector<128x128xf32>, vector<128x128xf32>, vector<128x128xf32> -> vector<128x128xf32>
    %257 = arith.addf %253, %256 : vector<128x128xf32>
    %c256_84 = arith.constant 256 : index
    %c0_85 = arith.constant 0 : index
    %258 = vector.load %arg1[%c256_84, %c0_85] : memref<2952x128xf32, #tpu.memory_space<vmem>>, vector<128x128xf32>
    %cst_86 = arith.constant dense<0.000000e+00> : vector<128x128xf32>
    %259 = tpu.matmul %258, %247, %cst_86 {dimension_numbers = #tpu.dot_dimension_numbers<[1], [0], [0], [1], [0, 0, 1, 1], [], []>} : vector<128x128xf32>, vector<128x128xf32>, vector<128x128xf32> -> vector<128x128xf32>
    %cst_87 = arith.constant dense<0.000000e+00> : vector<128x128xf32>
    %260 = tpu.matmul %259, %25, %cst_87 {dimension_numbers = #tpu.dot_dimension_numbers<[1], [0], [0], [1], [0, 0, 1, 1], [], []>} : vector<128x128xf32>, vector<128x128xf32>, vector<128x128xf32> -> vector<128x128xf32>
    %261 = arith.addf %257, %260 : vector<128x128xf32>
    %c384_88 = arith.constant 384 : index
    %c0_89 = arith.constant 0 : index
    %262 = vector.load %arg1[%c384_88, %c0_89] : memref<2952x128xf32, #tpu.memory_space<vmem>>, vector<128x128xf32>
    %cst_90 = arith.constant dense<0.000000e+00> : vector<128x128xf32>
    %263 = tpu.matmul %262, %247, %cst_90 {dimension_numbers = #tpu.dot_dimension_numbers<[1], [0], [0], [1], [0, 0, 1, 1], [], []>} : vector<128x128xf32>, vector<128x128xf32>, vector<128x128xf32> -> vector<128x128xf32>
    %cst_91 = arith.constant dense<0.000000e+00> : vector<128x128xf32>
    %264 = tpu.matmul %263, %30, %cst_91 {dimension_numbers = #tpu.dot_dimension_numbers<[1], [0], [0], [1], [0, 0, 1, 1], [], []>} : vector<128x128xf32>, vector<128x128xf32>, vector<128x128xf32> -> vector<128x128xf32>
    %265 = arith.addf %261, %264 : vector<128x128xf32>
    %c512_92 = arith.constant 512 : index
    %c0_93 = arith.constant 0 : index
    %266 = vector.load %arg1[%c512_92, %c0_93] : memref<2952x128xf32, #tpu.memory_space<vmem>>, vector<128x128xf32>
    %cst_94 = arith.constant dense<0.000000e+00> : vector<128x128xf32>
    %267 = tpu.matmul %266, %247, %cst_94 {dimension_numbers = #tpu.dot_dimension_numbers<[1], [0], [0], [1], [0, 0, 1, 1], [], []>} : vector<128x128xf32>, vector<128x128xf32>, vector<128x128xf32> -> vector<128x128xf32>
    %cst_95 = arith.constant dense<0.000000e+00> : vector<128x128xf32>
    %268 = tpu.matmul %267, %35, %cst_95 {dimension_numbers = #tpu.dot_dimension_numbers<[1], [0], [0], [1], [0, 0, 1, 1], [], []>} : vector<128x128xf32>, vector<128x128xf32>, vector<128x128xf32> -> vector<128x128xf32>
    %269 = arith.addf %265, %268 : vector<128x128xf32>
    %270 = vector.shape_cast %269 : vector<128x128xf32> to vector<1x128x128xf32>
    %cst_96 = arith.constant dense<0.000000e+00> : vector<1xf32>
    %271 = vector.multi_reduction <add>, %270, %cst_96 [1, 2] : vector<1x128x128xf32> to vector<1xf32>
    %272 = vector.shape_cast %271 : vector<1xf32> to vector<1x1x1xf32>
    %273 = vector.extract %272[0, 0, 0] : f32 from vector<1x1x1xf32>
    %274 = vector.broadcast %273 : f32 to vector<1x1xf32>
    %cst_97 = arith.constant 1.638400e+04 : f32
    %275 = vector.broadcast %cst_97 : f32 to vector<1x1xf32>
    %276 = arith.divf %274, %275 : vector<1x1xf32>
    %277 = vector.broadcast %276 : vector<1x1xf32> to vector<128x128xf32>
    %278 = arith.subf %269, %277 : vector<128x128xf32>
    %279 = arith.mulf %278, %278 : vector<128x128xf32>
    %280 = vector.shape_cast %279 : vector<128x128xf32> to vector<1x128x128xf32>
    %cst_98 = arith.constant dense<0.000000e+00> : vector<1xf32>
    %281 = vector.multi_reduction <add>, %280, %cst_98 [1, 2] : vector<1x128x128xf32> to vector<1xf32>
    %282 = vector.shape_cast %281 : vector<1xf32> to vector<1x1x1xf32>
    %283 = vector.extract %282[0, 0, 0] : f32 from vector<1x1x1xf32>
    %284 = vector.broadcast %283 : f32 to vector<1x1xf32>
    %cst_99 = arith.constant 1.638400e+04 : f32
    %285 = vector.broadcast %cst_99 : f32 to vector<1x1xf32>
    %286 = arith.divf %284, %285 : vector<1x1xf32>
    %287 = vector.broadcast %276 : vector<1x1xf32> to vector<128x128xf32>
    %288 = arith.subf %269, %287 : vector<128x128xf32>
    %cst_100 = arith.constant 9.99999974E-6 : f32
    %289 = vector.broadcast %cst_100 : f32 to vector<1x1xf32>
    %290 = arith.addf %286, %289 : vector<1x1xf32>
    %291 = math.rsqrt %290 : vector<1x1xf32>
    %292 = vector.broadcast %291 : vector<1x1xf32> to vector<128x128xf32>
    %293 = arith.mulf %288, %292 : vector<128x128xf32>
    %294 = vector.broadcast %6 : vector<128x1xf32> to vector<128x128xf32>
    %295 = arith.mulf %293, %294 : vector<128x128xf32>
    %296 = vector.broadcast %7 : vector<128x1xf32> to vector<128x128xf32>
    %297 = arith.addf %295, %296 : vector<128x128xf32>
    %cst_101 = arith.constant 5.000000e-01 : f32
    %298 = vector.broadcast %cst_101 : f32 to vector<128x128xf32>
    %299 = arith.mulf %298, %297 : vector<128x128xf32>
    %cst_102 = arith.constant 4.471500e-02 : f32
    %300 = vector.broadcast %cst_102 : f32 to vector<128x128xf32>
    %301 = arith.mulf %300, %297 : vector<128x128xf32>
    %302 = arith.mulf %301, %297 : vector<128x128xf32>
    %303 = arith.mulf %302, %297 : vector<128x128xf32>
    %304 = arith.addf %297, %303 : vector<128x128xf32>
    %cst_103 = arith.constant 0.797884583 : f32
    %305 = vector.broadcast %cst_103 : f32 to vector<128x128xf32>
    %306 = arith.mulf %305, %304 : vector<128x128xf32>
    %307 = math.tanh %306 : vector<128x128xf32>
    %cst_104 = arith.constant 1.000000e+00 : f32
    %308 = vector.broadcast %cst_104 : f32 to vector<128x128xf32>
    %309 = arith.addf %308, %307 : vector<128x128xf32>
    %310 = arith.mulf %299, %309 : vector<128x128xf32>
    %311 = vector.extract_strided_slice %189 {offsets = [640, 0], sizes = [128, 128], strides = [1, 1]} : vector<768x128xf32> to vector<128x128xf32>
    %312 = arith.addf %310, %311 : vector<128x128xf32>
    %c1_105 = arith.constant 1 : index
    %c0_106 = arith.constant 0 : index
    %c0_107 = arith.constant 0 : index
    %313 = vector.load %arg3[%c1_105, %c0_106, %c0_107] : memref<2x128x128xf32, #tpu.memory_space<vmem>>, vector<1x128x128xf32>
    %314 = vector.shape_cast %313 : vector<1x128x128xf32> to vector<128x128xf32>
    %315 = vector.shape_cast %312 : vector<128x128xf32> to vector<1x128x128xf32>
    tpu.vector_store %arg3[%c1_105, %c0_106, %c0_107], %315 {strides = array<i32>} : memref<2x128x128xf32, #tpu.memory_space<vmem>>, vector<1x128x128xf32>,
    return
  }
}

</mosaic_0001>

<llo_original>
// kernel: diffusion_forward.1
$region0: #{diffusion_forward.1}
  #allocation0 [shape = 'u32[]', space=smem, size = 0x4, offset = 0x4, fixed_abs, tag = 'smem constant byte address 0x4 - core index']
  #allocation1 [shape = 'u32[144,128]{1,0:T(1,128)}', space=vmem, size = 0x12000, scoped, tag = 'internal scratch']
  %s0 = inlined_call_operand.hbm [shape: f32[2], index: 0, kind: input, shape index: {}]
  %s1 = inlined_call_operand.hbm [shape: f32[2952,128], index: 1, kind: input, shape index: {}]
  %s2 = inlined_call_operand.hbm [shape: f32[2,2,128], index: 2, kind: input, shape index: {}]
  %s3 = inlined_call_operand.hbm [shape: f32[2,128,128], index: 3, kind: output, shape index: {}]
  %s4 = sld [smem:[#allocation0]]
  $region34: #{diffusion_forward.1} parent=0
    _
  %s6 = ssub.s32 1, %s4
  %s7 = scalar_select 0, %s6, %s4
  $region1: #{diffusion_forward.1} parent=0
    #allocation2 [shape = 'u8[512]{0}', space=smem, size = 0x200, scoped, tag = 'input window, operand 0, single buffered']
    #allocation3 [shape = 's32[1]{0}', space=sflag, size = 0x4, scoped, tag = 'scoped memory for diffusion_forward.1']
    #allocation4 [shape = 's32[1]{0}', space=sflag, size = 0x4, scoped, tag = 'scoped memory for diffusion_forward.1']
    #allocation5 [shape = 's32[1]{0}', space=sflag, size = 0x4, scoped, tag = 'scoped memory for diffusion_forward.1']
    #allocation6 [shape = 'u8[1511424]{0}', space=vmem, size = 0x171000, scoped, tag = 'input window, operand 1, single buffered']
    #allocation7 [shape = 'u8[2048]{0}', space=vmem, size = 0x800, scoped, tag = 'input window, operand 2, single buffered']
    #allocation8 [shape = 's32[1]{0}', space=sflag, size = 0x4, scoped, tag = 'scoped memory for diffusion_forward.1']
    #allocation9 [shape = 'u8[131072]{0}', space=vmem, size = 0x20000, scoped, tag = 'output window, operand 0, single buffered']
    %8 = vsyncpa [#allocation5], 0
    %9 = vsyncpa [#allocation3], 0
    %10 = vsyncpa [#allocation8], 0
    %11 = vsyncpa [#allocation4], 0
    // Predicated region
    $region2: #{diffusion_forward.1} parent=1 // pred_check
      _
    $region3: #{diffusion_forward.1} parent=1 // pred_check_branch
      %13 = sbr.rel (0) target = $region5
    $region4: #{diffusion_forward.1} parent=1 // pred_region
      %s15 = ssub.s32 16, 16
      %16 = vsyncadd [#allocation5], %s15
      %19 = dma.hbm_to_smem %s0, 16, [#allocation2], [#allocation5]
    $region5: #{diffusion_forward.1} parent=1 // pred_fallthru
      _
    // Predicated region
    $region6: #{diffusion_forward.1} parent=1 // pred_check
      _
    $region7: #{diffusion_forward.1} parent=1 // pred_check_branch
      %21 = sbr.rel (0) target = $region9
    $region8: #{diffusion_forward.1} parent=1 // pred_region
      %s23 = ssub.s32 47232, 47232
      %24 = vsyncadd [#allocation3], %s23
      %s25 = sshll.u32 [#allocation6], 4
      %s26 = int_to_ptr.vmem [resolvable:$true] %s25
      %31 = dma.hbm_to_vmem [thread:$0]  %s1, 47232, %s26, [#allocation3], 128, 128, 8
    $region9: #{diffusion_forward.1} parent=1 // pred_fallthru
      _
    // Predicated region
    $region10: #{diffusion_forward.1} parent=1 // pred_check
      _
    $region11: #{diffusion_forward.1} parent=1 // pred_check_branch
      %33 = sbr.rel (0) target = $region13
    $region12: #{diffusion_forward.1} parent=1 // pred_region
      %s35 = ssub.s32 64, 64
      %36 = vsyncadd [#allocation8], %s35
      %s37 = sshll.u32 [#allocation7], 4
      %s38 = int_to_ptr.vmem [resolvable:$true] %s37
      %43 = dma.hbm_to_vmem [thread:$0]  %s2, 64, %s38, [#allocation8], 32, 32, 2
    $region13: #{diffusion_forward.1} parent=1 // pred_fallthru
      _
    // Predicated region
    $region14: #{diffusion_forward.1} parent=1 // pred_check
      _
    $region15: #{diffusion_forward.1} parent=1 // pred_check_branch
      %45 = sbr.rel (0) target = $region17
    $region16: #{diffusion_forward.1} parent=1 // pred_region
      %46 = dma.done [#allocation5], 16
    $region17: #{diffusion_forward.1} parent=1 // pred_fallthru
      _
    // Predicated region
    $region18: #{diffusion_forward.1} parent=1 // pred_check
      _
    $region19: #{diffusion_forward.1} parent=1 // pred_check_branch
      %48 = sbr.rel (0) target = $region21
    $region20: #{diffusion_forward.1} parent=1 // pred_region
      %49 = dma.done [#allocation3], 47232
    $region21: #{diffusion_forward.1} parent=1 // pred_fallthru
      _
    // Predicated region
    $region22: #{diffusion_forward.1} parent=1 // pred_check
      _
    $region23: #{diffusion_forward.1} parent=1 // pred_check_branch
      %51 = sbr.rel (0) target = $region25
    $region24: #{diffusion_forward.1} parent=1 // pred_region
      %52 = dma.done [#allocation8], 64
    $region25: #{diffusion_forward.1} parent=1 // pred_fallthru
      _
    %53 = sfence
    %v54 = vld [vmem:[#allocation6 + $0x280] sm:$0xff]
    %v55 = vld [vmem:[#allocation6 + $0x288] sm:$0xff]
    %v56 = vld [vmem:[#allocation6 + $0x290] sm:$0xff]
    %v57 = vld [vmem:[#allocation6 + $0x298] sm:$0xff]
    %v58 = vld [vmem:[#allocation6 + $0x2a0] sm:$0xff]
    %v59 = vld [vmem:[#allocation6 + $0x2a8] sm:$0xff]
    %v60 = vld [vmem:[#allocation6 + $0x2b0] sm:$0xff]
    %v61 = vld [vmem:[#allocation6 + $0x2b8] sm:$0xff]
    %v62 = vld [vmem:[#allocation6 + $0x2c0] sm:$0xff]
    %v63 = vld [vmem:[#allocation6 + $0x2c8] sm:$0xff]
    %v64 = vld [vmem:[#allocation6 + $0x2d0] sm:$0xff]
    %v65 = vld [vmem:[#allocation6 + $0x2d8] sm:$0xff]
    %v66 = vld [vmem:[#allocation6 + $0x2e0] sm:$0xff]
    %v67 = vld [vmem:[#allocation6 + $0x2e8] sm:$0xff]
    %v68 = vld [vmem:[#allocation6 + $0x2f0] sm:$0xff]
    %v69 = vld [vmem:[#allocation6 + $0x2f8] sm:$0xff]
    %v70 = vld [vmem:[#allocation6 + $0x300] sm:$0xff]
    %v71 = vld [vmem:[#allocation6 + $0x308] sm:$0xff]
    %v72 = vld [vmem:[#allocation6 + $0x310] sm:$0xff]
    %v73 = vld [vmem:[#allocation6 + $0x318] sm:$0xff]
    %v74 = vld [vmem:[#allocation6 + $0x320] sm:$0xff]
    %v75 = vld [vmem:[#allocation6 + $0x328] sm:$0xff]
    %v76 = vld [vmem:[#allocation6 + $0x330] sm:$0xff]
    %v77 = vld [vmem:[#allocation6 + $0x338] sm:$0xff]
    %v78 = vld [vmem:[#allocation6 + $0x340] sm:$0xff]
    %v79 = vld [vmem:[#allocation6 + $0x348] sm:$0xff]
    %v80 = vld [vmem:[#allocation6 + $0x350] sm:$0xff]
    %v81 = vld [vmem:[#allocation6 + $0x358] sm:$0xff]
    %v82 = vld [vmem:[#allocation6 + $0x360] sm:$0xff]
    %v83 = vld [vmem:[#allocation6 + $0x368] sm:$0xff]
    %v84 = vld [vmem:[#allocation6 + $0x370] sm:$0xff]
    %v85 = vld [vmem:[#allocation6 + $0x378] sm:$0xff]
    %v86 = vld [vmem:[#allocation6 + $0x380] sm:$0xff]
    %v87 = vld [vmem:[#allocation6 + $0x388] sm:$0xff]
    %v88 = vld [vmem:[#allocation6 + $0x390] sm:$0xff]
    %v89 = vld [vmem:[#allocation6 + $0x398] sm:$0xff]
    %v90 = vld [vmem:[#allocation6 + $0x3a0] sm:$0xff]
    %v91 = vld [vmem:[#allocation6 + $0x3a8] sm:$0xff]
    %v92 = vld [vmem:[#allocation6 + $0x3b0] sm:$0xff]
    %v93 = vld [vmem:[#allocation6 + $0x3b8] sm:$0xff]
    %v94 = vld [vmem:[#allocation6 + $0x3c0] sm:$0xff]
    %v95 = vld [vmem:[#allocation6 + $0x3c8] sm:$0xff]
    %v96 = vld [vmem:[#allocation6 + $0x3d0] sm:$0xff]
    %v97 = vld [vmem:[#allocation6 + $0x3d8] sm:$0xff]
    %v98 = vld [vmem:[#allocation6 + $0x3e0] sm:$0xff]
    %v99 = vld [vmem:[#allocation6 + $0x3e8] sm:$0xff]
    %v100 = vld [vmem:[#allocation6 + $0x3f0] sm:$0xff]
    %v101 = vld [vmem:[#allocation6 + $0x3f8] sm:$0xff]
    %v102 = vld [vmem:[#allocation6 + $0x400] sm:$0xff]
    %v103 = vld [vmem:[#allocation6 + $0x408] sm:$0xff]
    %v104 = vld [vmem:[#allocation6 + $0x410] sm:$0xff]
    %v105 = vld [vmem:[#allocation6 + $0x418] sm:$0xff]
    %v106 = vld [vmem:[#allocation6 + $0x420] sm:$0xff]
    %v107 = vld [vmem:[#allocation6 + $0x428] sm:$0xff]
    %v108 = vld [vmem:[#allocation6 + $0x430] sm:$0xff]
    %v109 = vld [vmem:[#allocation6 + $0x438] sm:$0xff]
    %v110 = vld [vmem:[#allocation6 + $0x440] sm:$0xff]
    %v111 = vld [vmem:[#allocation6 + $0x448] sm:$0xff]
    %v112 = vld [vmem:[#allocation6 + $0x450] sm:$0xff]
    %v113 = vld [vmem:[#allocation6 + $0x458] sm:$0xff]
    %v114 = vld [vmem:[#allocation6 + $0x460] sm:$0xff]
    %v115 = vld [vmem:[#allocation6 + $0x468] sm:$0xff]
    %v116 = vld [vmem:[#allocation6 + $0x470] sm:$0xff]
    %v117 = vld [vmem:[#allocation6 + $0x478] sm:$0xff]
    %v118 = vld [vmem:[#allocation6 + $0x480] sm:$0xff]
    %v119 = vld [vmem:[#allocation6 + $0x488] sm:$0xff]
    %v120 = vld [vmem:[#allocation6 + $0x490] sm:$0xff]
    %v121 = vld [vmem:[#allocation6 + $0x498] sm:$0xff]
    %v122 = vld [vmem:[#allocation6 + $0x4a0] sm:$0xff]
    %v123 = vld [vmem:[#allocation6 + $0x4a8] sm:$0xff]
    %v124 = vld [vmem:[#allocation6 + $0x4b0] sm:$0xff]
    %v125 = vld [vmem:[#allocation6 + $0x4b8] sm:$0xff]
    %v126 = vld [vmem:[#allocation6 + $0x4c0] sm:$0xff]
    %v127 = vld [vmem:[#allocation6 + $0x4c8] sm:$0xff]
    %v128 = vld [vmem:[#allocation6 + $0x4d0] sm:$0xff]
    %v129 = vld [vmem:[#allocation6 + $0x4d8] sm:$0xff]
    %v130 = vld [vmem:[#allocation6 + $0x4e0] sm:$0xff]
    %v131 = vld [vmem:[#allocation6 + $0x4e8] sm:$0xff]
    %v132 = vld [vmem:[#allocation6 + $0x4f0] sm:$0xff]
    %v133 = vld [vmem:[#allocation6 + $0x4f8] sm:$0xff]
    %v134 = vld [vmem:[#allocation6 + $0x500] sm:$0xff]
    %v135 = vld [vmem:[#allocation6 + $0x508] sm:$0xff]
    %v136 = vld [vmem:[#allocation6 + $0x510] sm:$0xff]
    %v137 = vld [vmem:[#allocation6 + $0x518] sm:$0xff]
    %v138 = vld [vmem:[#allocation6 + $0x520] sm:$0xff]
    %v139 = vld [vmem:[#allocation6 + $0x528] sm:$0xff]
    %v140 = vld [vmem:[#allocation6 + $0x530] sm:$0xff]
    %v141 = vld [vmem:[#allocation6 + $0x538] sm:$0xff]
    %v142 = vld [vmem:[#allocation6 + $0x540] sm:$0xff]
    %v143 = vld [vmem:[#allocation6 + $0x548] sm:$0xff]
    %v144 = vld [vmem:[#allocation6 + $0x550] sm:$0xff]
    %v145 = vld [vmem:[#allocation6 + $0x558] sm:$0xff]
    %v146 = vld [vmem:[#allocation6 + $0x560] sm:$0xff]
    %v147 = vld [vmem:[#allocation6 + $0x568] sm:$0xff]
    %v148 = vld [vmem:[#allocation6 + $0x570] sm:$0xff]
    %v149 = vld [vmem:[#allocation6 + $0x578] sm:$0xff]
    %v150 = vld [vmem:[#allocation6 + $0x580] sm:$0xff]
    %v151 = vld [vmem:[#allocation6 + $0x588] sm:$0xff]
    %v152 = vld [vmem:[#allocation6 + $0x590] sm:$0xff]
    %v153 = vld [vmem:[#allocation6 + $0x598] sm:$0xff]
    %v154 = vld [vmem:[#allocation6 + $0x5a0] sm:$0xff]
    %v155 = vld [vmem:[#allocation6 + $0x5a8] sm:$0xff]
    %v156 = vld [vmem:[#allocation6 + $0x5b0] sm:$0xff]
    %v157 = vld [vmem:[#allocation6 + $0x5b8] sm:$0xff]
    %v158 = vld [vmem:[#allocation6 + $0x5c0] sm:$0xff]
    %v159 = vld [vmem:[#allocation6 + $0x5c8] sm:$0xff]
    %v160 = vld [vmem:[#allocation6 + $0x5d0] sm:$0xff]
    %v161 = vld [vmem:[#allocation6 + $0x5d8] sm:$0xff]
    %v162 = vld [vmem:[#allocation6 + $0x5e0] sm:$0xff]
    %v163 = vld [vmem:[#allocation6 + $0x5e8] sm:$0xff]
    %v164 = vld [vmem:[#allocation6 + $0x5f0] sm:$0xff]
    %v165 = vld [vmem:[#allocation6 + $0x5f8] sm:$0xff]
    %v166 = vld [vmem:[#allocation6 + $0x600] sm:$0xff]
    %v167 = vld [vmem:[#allocation6 + $0x608] sm:$0xff]
    %v168 = vld [vmem:[#allocation6 + $0x610] sm:$0xff]
    %v169 = vld [vmem:[#allocation6 + $0x618] sm:$0xff]
    %v170 = vld [vmem:[#allocation6 + $0x620] sm:$0xff]
    %v171 = vld [vmem:[#allocation6 + $0x628] sm:$0xff]
    %v172 = vld [vmem:[#allocation6 + $0x630] sm:$0xff]
    %v173 = vld [vmem:[#allocation6 + $0x638] sm:$0xff]
    %v174 = vld [vmem:[#allocation6 + $0x640] sm:$0xff]
    %v175 = vld [vmem:[#allocation6 + $0x648] sm:$0xff]
    %v176 = vld [vmem:[#allocation6 + $0x650] sm:$0xff]
    %v177 = vld [vmem:[#allocation6 + $0x658] sm:$0xff]
    %v178 = vld [vmem:[#allocation6 + $0x660] sm:$0xff]
    %v179 = vld [vmem:[#allocation6 + $0x668] sm:$0xff]
    %v180 = vld [vmem:[#allocation6 + $0x670] sm:$0xff]
    %v181 = vld [vmem:[#allocation6 + $0x678] sm:$0xff]
    %v182 = vld [vmem:[#allocation6 + $0x680] sm:$0xff]
    %v183 = vld [vmem:[#allocation6 + $0x688] sm:$0xff]
    %v184 = vld [vmem:[#allocation6 + $0x690] sm:$0xff]
    %v185 = vld [vmem:[#allocation6 + $0x698] sm:$0xff]
    %v186 = vld [vmem:[#allocation6 + $0x6a0] sm:$0xff]
    %v187 = vld [vmem:[#allocation6 + $0x6a8] sm:$0xff]
    %v188 = vld [vmem:[#allocation6 + $0x6b0] sm:$0xff]
    %v189 = vld [vmem:[#allocation6 + $0x6b8] sm:$0xff]
    %v190 = vld [vmem:[#allocation6 + $0x6c0] sm:$0xff]
    %v191 = vld [vmem:[#allocation6 + $0x6c8] sm:$0xff]
    %v192 = vld [vmem:[#allocation6 + $0x6d0] sm:$0xff]
    %v193 = vld [vmem:[#allocation6 + $0x6d8] sm:$0xff]
    %v194 = vld [vmem:[#allocation6 + $0x6e0] sm:$0xff]
    %v195 = vld [vmem:[#allocation6 + $0x6e8] sm:$0xff]
    %v196 = vld [vmem:[#allocation6 + $0x6f0] sm:$0xff]
    %v197 = vld [vmem:[#allocation6 + $0x6f8] sm:$0xff]
    %v198 = vld [vmem:[#allocation6 + $0x700] sm:$0xff]
    %v199 = vld [vmem:[#allocation6 + $0x708] sm:$0xff]
    %v200 = vld [vmem:[#allocation6 + $0x710] sm:$0xff]
    %v201 = vld [vmem:[#allocation6 + $0x718] sm:$0xff]
    %v202 = vld [vmem:[#allocation6 + $0x720] sm:$0xff]
    %v203 = vld [vmem:[#allocation6 + $0x728] sm:$0xff]
    %v204 = vld [vmem:[#allocation6 + $0x730] sm:$0xff]
    %v205 = vld [vmem:[#allocation6 + $0x738] sm:$0xff]
    %v206 = vld [vmem:[#allocation6 + $0x740] sm:$0xff]
    %v207 = vld [vmem:[#allocation6 + $0x748] sm:$0xff]
    %v208 = vld [vmem:[#allocation6 + $0x750] sm:$0xff]
    %v209 = vld [vmem:[#allocation6 + $0x758] sm:$0xff]
    %v210 = vld [vmem:[#allocation6 + $0x760] sm:$0xff]
    %v211 = vld [vmem:[#allocation6 + $0x768] sm:$0xff]
    %v212 = vld [vmem:[#allocation6 + $0x770] sm:$0xff]
    %v213 = vld [vmem:[#allocation6 + $0x778] sm:$0xff]
    %v214 = vld [vmem:[#allocation6 + $0x780] sm:$0xff]
    %v215 = vld [vmem:[#allocation6 + $0x788] sm:$0xff]
    %v216 = vld [vmem:[#allocation6 + $0x790] sm:$0xff]
    %v217 = vld [vmem:[#allocation6 + $0x798] sm:$0xff]
    %v218 = vld [vmem:[#allocation6 + $0x7a0] sm:$0xff]
    %v219 = vld [vmem:[#allocation6 + $0x7a8] sm:$0xff]
    %v220 = vld [vmem:[#allocation6 + $0x7b0] sm:$0xff]
    %v221 = vld [vmem:[#allocation6 + $0x7b8] sm:$0xff]
    %v222 = vld [vmem:[#allocation6 + $0x7c0] sm:$0xff]
    %v223 = vld [vmem:[#allocation6 + $0x7c8] sm:$0xff]
    %v224 = vld [vmem:[#allocation6 + $0x7d0] sm:$0xff]
    %v225 = vld [vmem:[#allocation6 + $0x7d8] sm:$0xff]
    %v226 = vld [vmem:[#allocation6 + $0x7e0] sm:$0xff]
    %v227 = vld [vmem:[#allocation6 + $0x7e8] sm:$0xff]
    %v228 = vld [vmem:[#allocation6 + $0x7f0] sm:$0xff]
    %v229 = vld [vmem:[#allocation6 + $0x7f8] sm:$0xff]
    %v230 = vld [vmem:[#allocation6 + $0x800] sm:$0xff]
    %v231 = vld [vmem:[#allocation6 + $0x808] sm:$0xff]
    %v232 = vld [vmem:[#allocation6 + $0x810] sm:$0xff]
    %v233 = vld [vmem:[#allocation6 + $0x818] sm:$0xff]
    %v234 = vld [vmem:[#allocation6 + $0x820] sm:$0xff]
    %v235 = vld [vmem:[#allocation6 + $0x828] sm:$0xff]
    %v236 = vld [vmem:[#allocation6 + $0x830] sm:$0xff]
    %v237 = vld [vmem:[#allocation6 + $0x838] sm:$0xff]
    %v238 = vld [vmem:[#allocation6 + $0x840] sm:$0xff]
    %v239 = vld [vmem:[#allocation6 + $0x848] sm:$0xff]
    %v240 = vld [vmem:[#allocation6 + $0x850] sm:$0xff]
    %v241 = vld [vmem:[#allocation6 + $0x858] sm:$0xff]
    %v242 = vld [vmem:[#allocation6 + $0x860] sm:$0xff]
    %v243 = vld [vmem:[#allocation6 + $0x868] sm:$0xff]
    %v244 = vld [vmem:[#allocation6 + $0x870] sm:$0xff]
    %v245 = vld [vmem:[#allocation6 + $0x878] sm:$0xff]
    %v246 = vld [vmem:[#allocation6 + $0x880] sm:$0xff]
    %v247 = vld [vmem:[#allocation6 + $0x888] sm:$0xff]
    %v248 = vld [vmem:[#allocation6 + $0x890] sm:$0xff]
    %v249 = vld [vmem:[#allocation6 + $0x898] sm:$0xff]
    %v250 = vld [vmem:[#allocation6 + $0x8a0] sm:$0xff]
    %v251 = vld [vmem:[#allocation6 + $0x8a8] sm:$0xff]
    %v252 = vld [vmem:[#allocation6 + $0x8b0] sm:$0xff]
    %v253 = vld [vmem:[#allocation6 + $0x8b8] sm:$0xff]
    %v254 = vld [vmem:[#allocation6 + $0x8c0] sm:$0xff]
    %v255 = vld [vmem:[#allocation6 + $0x8c8] sm:$0xff]
    %v256 = vld [vmem:[#allocation6 + $0x8d0] sm:$0xff]
    %v257 = vld [vmem:[#allocation6 + $0x8d8] sm:$0xff]
    %v258 = vld [vmem:[#allocation6 + $0x8e0] sm:$0xff]
    %v259 = vld [vmem:[#allocation6 + $0x8e8] sm:$0xff]
    %v260 = vld [vmem:[#allocation6 + $0x8f0] sm:$0xff]
    %v261 = vld [vmem:[#allocation6 + $0x8f8] sm:$0xff]
    %v262 = vld [vmem:[#allocation6 + $0x900] sm:$0xff]
    %v263 = vld [vmem:[#allocation6 + $0x908] sm:$0xff]
    %v264 = vld [vmem:[#allocation6 + $0x910] sm:$0xff]
    %v265 = vld [vmem:[#allocation6 + $0x918] sm:$0xff]
    %v266 = vld [vmem:[#allocation6 + $0x920] sm:$0xff]
    %v267 = vld [vmem:[#allocation6 + $0x928] sm:$0xff]
    %v268 = vld [vmem:[#allocation6 + $0x930] sm:$0xff]
    %v269 = vld [vmem:[#allocation6 + $0x938] sm:$0xff]
    %v270 = vld [vmem:[#allocation6 + $0x940] sm:$0xff]
    %v271 = vld [vmem:[#allocation6 + $0x948] sm:$0xff]
    %v272 = vld [vmem:[#allocation6 + $0x950] sm:$0xff]
    %v273 = vld [vmem:[#allocation6 + $0x958] sm:$0xff]
    %v274 = vld [vmem:[#allocation6 + $0x960] sm:$0xff]
    %v275 = vld [vmem:[#allocation6 + $0x968] sm:$0xff]
    %v276 = vld [vmem:[#allocation6 + $0x970] sm:$0xff]
    %v277 = vld [vmem:[#allocation6 + $0x978] sm:$0xff]
    %v278 = vld [vmem:[#allocation6 + $0x980] sm:$0xff]
    %v279 = vld [vmem:[#allocation6 + $0x988] sm:$0xff]
    %v280 = vld [vmem:[#allocation6 + $0x990] sm:$0xff]
    %v281 = vld [vmem:[#allocation6 + $0x998] sm:$0xff]
    %v282 = vld [vmem:[#allocation6 + $0x9a0] sm:$0xff]
    %v283 = vld [vmem:[#allocation6 + $0x9a8] sm:$0xff]
    %v284 = vld [vmem:[#allocation6 + $0x9b0] sm:$0xff]
    %v285 = vld [vmem:[#allocation6 + $0x9b8] sm:$0xff]
    %v286 = vld [vmem:[#allocation6 + $0x9c0] sm:$0xff]
    %v287 = vld [vmem:[#allocation6 + $0x9c8] sm:$0xff]
    %v288 = vld [vmem:[#allocation6 + $0x9d0] sm:$0xff]
    %v289 = vld [vmem:[#allocation6 + $0x9d8] sm:$0xff]
    %v290 = vld [vmem:[#allocation6 + $0x9e0] sm:$0xff]
    %v291 = vld [vmem:[#allocation6 + $0x9e8] sm:$0xff]
    %v292 = vld [vmem:[#allocation6 + $0x9f0] sm:$0xff]
    %v293 = vld [vmem:[#allocation6 + $0x9f8] sm:$0xff]
    %v294 = vld [vmem:[#allocation6 + $0xa00] sm:$0xff]
    %v295 = vld [vmem:[#allocation6 + $0xa08] sm:$0xff]
    %v296 = vld [vmem:[#allocation6 + $0xa10] sm:$0xff]
    %v297 = vld [vmem:[#allocation6 + $0xa18] sm:$0xff]
    %v298 = vld [vmem:[#allocation6 + $0xa20] sm:$0xff]
    %v299 = vld [vmem:[#allocation6 + $0xa28] sm:$0xff]
    %v300 = vld [vmem:[#allocation6 + $0xa30] sm:$0xff]
    %v301 = vld [vmem:[#allocation6 + $0xa38] sm:$0xff]
    %v302 = vld [vmem:[#allocation6 + $0xa40] sm:$0xff]
    %v303 = vld [vmem:[#allocation6 + $0xa48] sm:$0xff]
    %v304 = vld [vmem:[#allocation6 + $0xa50] sm:$0xff]
    %v305 = vld [vmem:[#allocation6 + $0xa58] sm:$0xff]
    %v306 = vld [vmem:[#allocation6 + $0xa60] sm:$0xff]
    %v307 = vld [vmem:[#allocation6 + $0xa68] sm:$0xff]
    %v308 = vld [vmem:[#allocation6 + $0xa70] sm:$0xff]
    %v309 = vld [vmem:[#allocation6 + $0xa78] sm:$0xff]
    %v310 = vld [vmem:[#allocation6 + $0xa80] sm:$0xff]
    %v311 = vld [vmem:[#allocation6 + $0xa88] sm:$0xff]
    %v312 = vld [vmem:[#allocation6 + $0xa90] sm:$0xff]
    %v313 = vld [vmem:[#allocation6 + $0xa98] sm:$0xff]
    %v314 = vld [vmem:[#allocation6 + $0xaa0] sm:$0xff]
    %v315 = vld [vmem:[#allocation6 + $0xaa8] sm:$0xff]
    %v316 = vld [vmem:[#allocation6 + $0xab0] sm:$0xff]
    %v317 = vld [vmem:[#allocation6 + $0xab8] sm:$0xff]
    %v318 = vld [vmem:[#allocation6 + $0xac0] sm:$0xff]
    %v319 = vld [vmem:[#allocation6 + $0xac8] sm:$0xff]
    %v320 = vld [vmem:[#allocation6 + $0xad0] sm:$0xff]
    %v321 = vld [vmem:[#allocation6 + $0xad8] sm:$0xff]
    %v322 = vld [vmem:[#allocation6 + $0xae0] sm:$0xff]
    %v323 = vld [vmem:[#allocation6 + $0xae8] sm:$0xff]
    %v324 = vld [vmem:[#allocation6 + $0xaf0] sm:$0xff]
    %v325 = vld [vmem:[#allocation6 + $0xaf8] sm:$0xff]
    %v326 = vld [vmem:[#allocation6 + $0xb00] sm:$0xff]
    %v327 = vld [vmem:[#allocation6 + $0xb08] sm:$0xff]
    %v328 = vld [vmem:[#allocation6 + $0xb10] sm:$0xff]
    %v329 = vld [vmem:[#allocation6 + $0xb18] sm:$0xff]
    %v330 = vld [vmem:[#allocation6 + $0xb20] sm:$0xff]
    %v331 = vld [vmem:[#allocation6 + $0xb28] sm:$0xff]
    %v332 = vld [vmem:[#allocation6 + $0xb30] sm:$0xff]
    %v333 = vld [vmem:[#allocation6 + $0xb38] sm:$0xff]
    %v334 = vld [vmem:[#allocation6 + $0xb40] sm:$0xff]
    %v335 = vld [vmem:[#allocation6 + $0xb48] sm:$0xff]
    %v336 = vld [vmem:[#allocation6 + $0xb50] sm:$0xff]
    %v337 = vld [vmem:[#allocation6 + $0xb58] sm:$0xff]
    %v338 = vld [vmem:[#allocation6 + $0xb60] sm:$0xff]
    %v339 = vld [vmem:[#allocation6 + $0xb68] sm:$0xff]
    %v340 = vld [vmem:[#allocation6 + $0xb70] sm:$0xff]
    %v341 = vld [vmem:[#allocation6 + $0xb78] sm:$0xff]
    %v342 = vld [vmem:[#allocation6 + $0xb80] sm:$0xff]
    %v343 = vlaneseq
    %v344 = vshrl.u32 %v343, 7
    %v345 = vadd.s32 %v344, 8
    %v346 = vadd.s32 %v344, 16
    %v347 = vadd.s32 %v344, 24
    %v348 = vadd.s32 %v344, 32
    %v349 = vadd.s32 %v344, 40
    %v350 = vadd.s32 %v344, 48
    %v351 = vadd.s32 %v344, 56
    %v352 = vadd.s32 %v344, 64
    %v353 = vadd.s32 %v344, 72
    %v354 = vadd.s32 %v344, 80
    %v355 = vadd.s32 %v344, 88
    %v356 = vadd.s32 %v344, 96
    %v357 = vadd.s32 %v344, 104
    %v358 = vadd.s32 %v344, 112
    %v359 = vadd.s32 %v344, 120
    %v360 = vlaneseq
    %v361 = vand.u32 %v360, 127
    %v362 = vsub.s32 %v344, %v361
    %v363 = vsub.s32 %v345, %v361
    %v364 = vsub.s32 %v346, %v361
    %v365 = vsub.s32 %v347, %v361
    %v366 = vsub.s32 %v348, %v361
    %v367 = vsub.s32 %v349, %v361
    %v368 = vsub.s32 %v350, %v361
    %v369 = vsub.s32 %v351, %v361
    %v370 = vsub.s32 %v352, %v361
    %v371 = vsub.s32 %v353, %v361
    %v372 = vsub.s32 %v354, %v361
    %v373 = vsub.s32 %v355, %v361
    %v374 = vsub.s32 %v356, %v361
    %v375 = vsub.s32 %v357, %v361
    %v376 = vsub.s32 %v358, %v361
    %v377 = vsub.s32 %v359, %v361
    %vm378 = vcmp.eq.s32.totalorder %v362, 4294967294
    %vm379 = vcmp.eq.s32.totalorder %v363, 4294967294
    %vm380 = vcmp.eq.s32.totalorder %v364, 4294967294
    %vm381 = vcmp.eq.s32.totalorder %v365, 4294967294
    %vm382 = vcmp.eq.s32.totalorder %v366, 4294967294
    %vm383 = vcmp.eq.s32.totalorder %v367, 4294967294
    %vm384 = vcmp.eq.s32.totalorder %v368, 4294967294
    %vm385 = vcmp.eq.s32.totalorder %v369, 4294967294
    %vm386 = vcmp.eq.s32.totalorder %v370, 4294967294
    %vm387 = vcmp.eq.s32.totalorder %v371, 4294967294
    %vm388 = vcmp.eq.s32.totalorder %v372, 4294967294
    %vm389 = vcmp.eq.s32.totalorder %v373, 4294967294
    %vm390 = vcmp.eq.s32.totalorder %v374, 4294967294
    %vm391 = vcmp.eq.s32.totalorder %v375, 4294967294
    %vm392 = vcmp.eq.s32.totalorder %v376, 4294967294
    %vm393 = vcmp.eq.s32.totalorder %v377, 4294967294
    %v394 = vsel %vm378, 1, 0
    %v395 = vsel %vm379, 1, 0
    %v396 = vsel %vm380, 1, 0
    %v397 = vsel %vm381, 1, 0
    %v398 = vsel %vm382, 1, 0
    %v399 = vsel %vm383, 1, 0
    %v400 = vsel %vm384, 1, 0
    %v401 = vsel %vm385, 1, 0
    %v402 = vsel %vm386, 1, 0
    %v403 = vsel %vm387, 1, 0
    %v404 = vsel %vm388, 1, 0
    %v405 = vsel %vm389, 1, 0
    %v406 = vsel %vm390, 1, 0
    %v407 = vsel %vm391, 1, 0
    %v408 = vsel %vm392, 1, 0
    %v409 = vsel %vm393, 1, 0
    %v410 = vcvt.s32.f32 %v394
    %v411 = vcvt.s32.f32 %v395
    %v412 = vcvt.s32.f32 %v396
    %v413 = vcvt.s32.f32 %v397
    %v414 = vcvt.s32.f32 %v398
    %v415 = vcvt.s32.f32 %v399
    %v416 = vcvt.s32.f32 %v400
    %v417 = vcvt.s32.f32 %v401
    %v418 = vcvt.s32.f32 %v402
    %v419 = vcvt.s32.f32 %v403
    %v420 = vcvt.s32.f32 %v404
    %v421 = vcvt.s32.f32 %v405
    %v422 = vcvt.s32.f32 %v406
    %v423 = vcvt.s32.f32 %v407
    %v424 = vcvt.s32.f32 %v408
    %v425 = vcvt.s32.f32 %v409
    %vm426 = vcmp.eq.s32.totalorder %v362, 4294967295
    %vm427 = vcmp.eq.s32.totalorder %v363, 4294967295
    %vm428 = vcmp.eq.s32.totalorder %v364, 4294967295
    %vm429 = vcmp.eq.s32.totalorder %v365, 4294967295
    %vm430 = vcmp.eq.s32.totalorder %v366, 4294967295
    %vm431 = vcmp.eq.s32.totalorder %v367, 4294967295
    %vm432 = vcmp.eq.s32.totalorder %v368, 4294967295
    %vm433 = vcmp.eq.s32.totalorder %v369, 4294967295
    %vm434 = vcmp.eq.s32.totalorder %v370, 4294967295
    %vm435 = vcmp.eq.s32.totalorder %v371, 4294967295
    %vm436 = vcmp.eq.s32.totalorder %v372, 4294967295
    %vm437 = vcmp.eq.s32.totalorder %v373, 4294967295
    %vm438 = vcmp.eq.s32.totalorder %v374, 4294967295
    %vm439 = vcmp.eq.s32.totalorder %v375, 4294967295
    %vm440 = vcmp.eq.s32.totalorder %v376, 4294967295
    %vm441 = vcmp.eq.s32.totalorder %v377, 4294967295
    %v442 = vsel %vm426, 1, 0
    %v443 = vsel %vm427, 1, 0
    %v444 = vsel %vm428, 1, 0
    %v445 = vsel %vm429, 1, 0
    %v446 = vsel %vm430, 1, 0
    %v447 = vsel %vm431, 1, 0
    %v448 = vsel %vm432, 1, 0
    %v449 = vsel %vm433, 1, 0
    %v450 = vsel %vm434, 1, 0
    %v451 = vsel %vm435, 1, 0
    %v452 = vsel %vm436, 1, 0
    %v453 = vsel %vm437, 1, 0
    %v454 = vsel %vm438, 1, 0
    %v455 = vsel %vm439, 1, 0
    %v456 = vsel %vm440, 1, 0
    %v457 = vsel %vm441, 1, 0
    %v458 = vcvt.s32.f32 %v442
    %v459 = vcvt.s32.f32 %v443
    %v460 = vcvt.s32.f32 %v444
    %v461 = vcvt.s32.f32 %v445
    %v462 = vcvt.s32.f32 %v446
    %v463 = vcvt.s32.f32 %v447
    %v464 = vcvt.s32.f32 %v448
    %v465 = vcvt.s32.f32 %v449
    %v466 = vcvt.s32.f32 %v450
    %v467 = vcvt.s32.f32 %v451
    %v468 = vcvt.s32.f32 %v452
    %v469 = vcvt.s32.f32 %v453
    %v470 = vcvt.s32.f32 %v454
    %v471 = vcvt.s32.f32 %v455
    %v472 = vcvt.s32.f32 %v456
    %v473 = vcvt.s32.f32 %v457
    %vm474 = vcmp.eq.s32.totalorder %v362, 0
    %vm475 = vcmp.eq.s32.totalorder %v363, 0
    %vm476 = vcmp.eq.s32.totalorder %v364, 0
    %vm477 = vcmp.eq.s32.totalorder %v365, 0
    %vm478 = vcmp.eq.s32.totalorder %v366, 0
    %vm479 = vcmp.eq.s32.totalorder %v367, 0
    %vm480 = vcmp.eq.s32.totalorder %v368, 0
    %vm481 = vcmp.eq.s32.totalorder %v369, 0
    %vm482 = vcmp.eq.s32.totalorder %v370, 0
    %vm483 = vcmp.eq.s32.totalorder %v371, 0
    %vm484 = vcmp.eq.s32.totalorder %v372, 0
    %vm485 = vcmp.eq.s32.totalorder %v373, 0
    %vm486 = vcmp.eq.s32.totalorder %v374, 0
    %vm487 = vcmp.eq.s32.totalorder %v375, 0
    %vm488 = vcmp.eq.s32.totalorder %v376, 0
    %vm489 = vcmp.eq.s32.totalorder %v377, 0
    %v490 = vsel %vm474, 1, 0
    %v491 = vsel %vm475, 1, 0
    %v492 = vsel %vm476, 1, 0
    %v493 = vsel %vm477, 1, 0
    %v494 = vsel %vm478, 1, 0
    %v495 = vsel %vm479, 1, 0
    %v496 = vsel %vm480, 1, 0
    %v497 = vsel %vm481, 1, 0
    %v498 = vsel %vm482, 1, 0
    %v499 = vsel %vm483, 1, 0
    %v500 = vsel %vm484, 1, 0
    %v501 = vsel %vm485, 1, 0
    %v502 = vsel %vm486, 1, 0
    %v503 = vsel %vm487, 1, 0
    %v504 = vsel %vm488, 1, 0
    %v505 = vsel %vm489, 1, 0
    %v506 = vcvt.s32.f32 %v490
    %v507 = vcvt.s32.f32 %v491
    %v508 = vcvt.s32.f32 %v492
    %v509 = vcvt.s32.f32 %v493
    %v510 = vcvt.s32.f32 %v494
    %v511 = vcvt.s32.f32 %v495
    %v512 = vcvt.s32.f32 %v496
    %v513 = vcvt.s32.f32 %v497
    %v514 = vcvt.s32.f32 %v498
    %v515 = vcvt.s32.f32 %v499
    %v516 = vcvt.s32.f32 %v500
    %v517 = vcvt.s32.f32 %v501
    %v518 = vcvt.s32.f32 %v502
    %v519 = vcvt.s32.f32 %v503
    %v520 = vcvt.s32.f32 %v504
    %v521 = vcvt.s32.f32 %v505
    %vm522 = vcmp.eq.s32.totalorder %v362, 1
    %vm523 = vcmp.eq.s32.totalorder %v363, 1
    %vm524 = vcmp.eq.s32.totalorder %v364, 1
    %vm525 = vcmp.eq.s32.totalorder %v365, 1
    %vm526 = vcmp.eq.s32.totalorder %v366, 1
    %vm527 = vcmp.eq.s32.totalorder %v367, 1
    %vm528 = vcmp.eq.s32.totalorder %v368, 1
    %vm529 = vcmp.eq.s32.totalorder %v369, 1
    %vm530 = vcmp.eq.s32.totalorder %v370, 1
    %vm531 = vcmp.eq.s32.totalorder %v371, 1
    %vm532 = vcmp.eq.s32.totalorder %v372, 1
    %vm533 = vcmp.eq.s32.totalorder %v373, 1
    %vm534 = vcmp.eq.s32.totalorder %v374, 1
    %vm535 = vcmp.eq.s32.totalorder %v375, 1
    %vm536 = vcmp.eq.s32.totalorder %v376, 1
    %vm537 = vcmp.eq.s32.totalorder %v377, 1
    %v538 = vsel %vm522, 1, 0
    %v539 = vsel %vm523, 1, 0
    %v540 = vsel %vm524, 1, 0
    %v541 = vsel %vm525, 1, 0
    %v542 = vsel %vm526, 1, 0
    %v543 = vsel %vm527, 1, 0
    %v544 = vsel %vm528, 1, 0
    %v545 = vsel %vm529, 1, 0
    %v546 = vsel %vm530, 1, 0
    %v547 = vsel %vm531, 1, 0
    %v548 = vsel %vm532, 1, 0
    %v549 = vsel %vm533, 1, 0
    %v550 = vsel %vm534, 1, 0
    %v551 = vsel %vm535, 1, 0
    %v552 = vsel %vm536, 1, 0
    %v553 = vsel %vm537, 1, 0
    %v554 = vcvt.s32.f32 %v538
    %v555 = vcvt.s32.f32 %v539
    %v556 = vcvt.s32.f32 %v540
    %v557 = vcvt.s32.f32 %v541
    %v558 = vcvt.s32.f32 %v542
    %v559 = vcvt.s32.f32 %v543
    %v560 = vcvt.s32.f32 %v544
    %v561 = vcvt.s32.f32 %v545
    %v562 = vcvt.s32.f32 %v546
    %v563 = vcvt.s32.f32 %v547
    %v564 = vcvt.s32.f32 %v548
    %v565 = vcvt.s32.f32 %v549
    %v566 = vcvt.s32.f32 %v550
    %v567 = vcvt.s32.f32 %v551
    %v568 = vcvt.s32.f32 %v552
    %v569 = vcvt.s32.f32 %v553
    %vm570 = vcmp.eq.s32.totalorder %v362, 2
    %vm571 = vcmp.eq.s32.totalorder %v363, 2
    %vm572 = vcmp.eq.s32.totalorder %v364, 2
    %vm573 = vcmp.eq.s32.totalorder %v365, 2
    %vm574 = vcmp.eq.s32.totalorder %v366, 2
    %vm575 = vcmp.eq.s32.totalorder %v367, 2
    %vm576 = vcmp.eq.s32.totalorder %v368, 2
    %vm577 = vcmp.eq.s32.totalorder %v369, 2
    %vm578 = vcmp.eq.s32.totalorder %v370, 2
    %vm579 = vcmp.eq.s32.totalorder %v371, 2
    %vm580 = vcmp.eq.s32.totalorder %v372, 2
    %vm581 = vcmp.eq.s32.totalorder %v373, 2
    %vm582 = vcmp.eq.s32.totalorder %v374, 2
    %vm583 = vcmp.eq.s32.totalorder %v375, 2
    %vm584 = vcmp.eq.s32.totalorder %v376, 2
    %vm585 = vcmp.eq.s32.totalorder %v377, 2
    %v586 = vsel %vm570, 1, 0
    %v587 = vsel %vm571, 1, 0
    %v588 = vsel %vm572, 1, 0
    %v589 = vsel %vm573, 1, 0
    %v590 = vsel %vm574, 1, 0
    %v591 = vsel %vm575, 1, 0
    %v592 = vsel %vm576, 1, 0
    %v593 = vsel %vm577, 1, 0
    %v594 = vsel %vm578, 1, 0
    %v595 = vsel %vm579, 1, 0
    %v596 = vsel %vm580, 1, 0
    %v597 = vsel %vm581, 1, 0
    %v598 = vsel %vm582, 1, 0
    %v599 = vsel %vm583, 1, 0
    %v600 = vsel %vm584, 1, 0
    %v601 = vsel %vm585, 1, 0
    %v602 = vcvt.s32.f32 %v586
    %v603 = vcvt.s32.f32 %v587
    %v604 = vcvt.s32.f32 %v588
    %v605 = vcvt.s32.f32 %v589
    %v606 = vcvt.s32.f32 %v590
    %v607 = vcvt.s32.f32 %v591
    %v608 = vcvt.s32.f32 %v592
    %v609 = vcvt.s32.f32 %v593
    %v610 = vcvt.s32.f32 %v594
    %v611 = vcvt.s32.f32 %v595
    %v612 = vcvt.s32.f32 %v596
    %v613 = vcvt.s32.f32 %v597
    %v614 = vcvt.s32.f32 %v598
    %v615 = vcvt.s32.f32 %v599
    %v616 = vcvt.s32.f32 %v600
    %v617 = vcvt.s32.f32 %v601
    %s618 = sld [smem:[#allocation2]]
    %s619 = smul.f32 %s618, 6.2831855
    %v620 = vstv %s619
    %v621 = vmul.f32 %v620, %v342
    %v622 = vand.u32 2147483647, %v621
    %vm623 = vcmp.le.f32.partialorder %v622, 0.7853982
    %vm624 = vcmp.lt.s32.totalorder %v621, 0
    %v625 = vand.u32 %v621, 2139095040
    %v626 = vshrl.u32 %v625, 23
    %v627 = vsub.s32 %v626, 127
    %v628 = vand.u32 2147483647, %v621
    %v629 = vand.u32 %v628, 8388607
    %v630 = vor.u32 %v629, 8388608
    %v631 = vsub.s32 0, %v630
    %v632 = vadd.s32 %v627, 1
    %vm633 = vcmp.gt.s32.totalorder %v632, 0
    %v634 = vsel %vm633, %v632, 0
    %v635 = vshrl.u32 %v634, 5
    %v636 = vand.u32 %v634, 31
    %v637 = vsub.s32 32, %v636
    %v638 = vshrl.u32 683565275, %v637
    %v639 = vshll.u32 683565275, %v636
    %v640 = vshrl.u32 2475754826, %v637
    %v641 = vor.u32 %v639, %v640
    %v642 = vshll.u32 2475754826, %v636
    %v643 = vshrl.u32 2131351028, %v637
    %v644 = vor.u32 %v642, %v643
    %v645 = vshll.u32 2131351028, %v636
    %v646 = vshrl.u32 2102212464, %v637
    %v647 = vor.u32 %v645, %v646
    %v648 = vshll.u32 2102212464, %v636
    %v649 = vshrl.u32 920167782, %v637
    %v650 = vor.u32 %v648, %v649
    %v651 = vshll.u32 920167782, %v636
    %v652 = vshrl.u32 1326507024, %v637
    %v653 = vor.u32 %v651, %v652
    %vm654 = vcmp.lt.s32.totalorder %v635, 1
    %vm655 = vcmp.lt.s32.totalorder %v635, 2
    %vm656 = vcmp.lt.s32.totalorder %v635, 3
    %vm657 = vcmp.lt.s32.totalorder %v635, 4
    %v658 = vsel %vm654, %v638, %v641
    %v659 = vsel %vm657, %v647, 2102212464
    %v660 = vsel %vm656, %v644, %v659
    %v661 = vsel %vm655, %v658, %v660
    %v662 = vsel %vm654, %v641, %v644
    %v663 = vsel %vm657, %v650, 920167782
    %v664 = vsel %vm656, %v647, %v663
    %v665 = vsel %vm655, %v662, %v664
    %v666 = vsel %vm654, %v644, %v647
    %v667 = vsel %vm657, %v653, 1326507024
    %v668 = vsel %vm656, %v650, %v667
    %v669 = vsel %vm655, %v666, %v668
    %v670 = vshll.u32 %v630, 8
    %v671 = vmul.u32.u64.compose %v670, %v669
    %v672 = vextract.low.u32 %v671
    %v673 = vextract.high.u32 %v671
    %v674 = vmul.u32.u64.compose %v670, %v665
    %v675 = vextract.low.u32 %v674
    %v676 = vextract.high.u32 %v674
    %v677 = vmul.u32 %v670, %v661
    %v678 = vadd.s32 %v673, %v675
    %vm679 = vc.u32 %v673, %v675
    %v680 = vadd.s32 %v676, 1
    %v681 = vsel %vm679, %v680, %v676
    %v682 = vadd.s32 %v677, %v681
    %v683 = vadd.s32 %v682, 536870912
    %v684 = vshrl.u32 %v683, 30
    %v685 = vshll.u32 %v684, 30
    %v686 = vsub.s32 %v682, %v685
    %vm687 = vcmp.lt.s32.totalorder %v686, 0
    %v688 = vsub.s32 0, %v686
    %v689 = vsel %vm687, %v688, %v686
    %v690 = vclz %v689
    %v691 = vsub.s32 %v690, 2
    %vm692 = vcmp.gt.s32.totalorder 0, %v691
    %v693 = vsel %vm692, 0, %v691
    %v694 = vsub.s32 32, %v693
    %v695 = vshll.u32 %v686, %v693
    %v696 = vshrl.u32 %v678, %v694
    %v697 = vor.u32 %v695, %v696
    %v698 = vsub.s32 4294967266, %v693
    %v699 = vadd.s32 %v698, 127
    %v700 = vshll.u32 %v699, 23
    %v701 = vor.u32 4788187, %v700
    %v702 = vand.u32 2147483647, %v701
    %v704 = vcvt.s32.f32 %v697
    %v705 = vmul.f32 %v704, %v702
    %v706 = vxor.u32 %v705, 2147483648
    %v707 = vsel %vm624, %v706, %v705
    %v708 = vsub.s32 4, %v684
    %v709 = vsel %vm624, %v708, %v684
    %v710 = vsel %vm623, %v621, %v707
    %v711 = vsel %vm623, 0, %v709
    %v712 = vcosq.f32.pop %v710
    %v713 = vsinq.f32.pop %v710
    %vm714 = vweird.f32 %v621
    %v715 = vand.u32 %v711, 3
    %vm716 = vcmp.lt.s32.totalorder %v715, 2
    %vm717 = vcmp.eq.s32.totalorder %v715, 0
    %v718 = vxor.u32 %v713, 2147483648
    %v719 = vsel %vm717, %v712, %v718
    %vm720 = vcmp.eq.s32.totalorder %v715, 2
    %v721 = vxor.u32 %v712, 2147483648
    %v722 = vsel %vm720, %v721, %v713
    %v723 = vsel %vm716, %v719, %v722
    %v724 = vsel %vm714, nan, %v723
    %v725 = vand.u32 2147483647, %v621
    %vm726 = vcmp.le.f32.partialorder %v725, 0.7853982
    %vm727 = vcmp.lt.s32.totalorder %v621, 0
    %v728 = vand.u32 %v621, 2139095040
    %v729 = vshrl.u32 %v728, 23
    %v730 = vsub.s32 %v729, 127
    %v731 = vand.u32 2147483647, %v621
    %v732 = vand.u32 %v731, 8388607
    %v733 = vor.u32 %v732, 8388608
    %v734 = vsub.s32 0, %v733
    %v735 = vadd.s32 %v730, 1
    %vm736 = vcmp.gt.s32.totalorder %v735, 0
    %v737 = vsel %vm736, %v735, 0
    %v738 = vshrl.u32 %v737, 5
    %v739 = vand.u32 %v737, 31
    %v740 = vsub.s32 32, %v739
    %v741 = vshrl.u32 683565275, %v740
    %v742 = vshll.u32 683565275, %v739
    %v743 = vshrl.u32 2475754826, %v740
    %v744 = vor.u32 %v742, %v743
    %v745 = vshll.u32 2475754826, %v739
    %v746 = vshrl.u32 2131351028, %v740
    %v747 = vor.u32 %v745, %v746
    %v748 = vshll.u32 2131351028, %v739
    %v749 = vshrl.u32 2102212464, %v740
    %v750 = vor.u32 %v748, %v749
    %v751 = vshll.u32 2102212464, %v739
    %v752 = vshrl.u32 920167782, %v740
    %v753 = vor.u32 %v751, %v752
    %v754 = vshll.u32 920167782, %v739
    %v755 = vshrl.u32 1326507024, %v740
    %v756 = vor.u32 %v754, %v755
    %vm757 = vcmp.lt.s32.totalorder %v738, 1
    %vm758 = vcmp.lt.s32.totalorder %v738, 2
    %vm759 = vcmp.lt.s32.totalorder %v738, 3
    %vm760 = vcmp.lt.s32.totalorder %v738, 4
    %v761 = vsel %vm757, %v741, %v744
    %v762 = vsel %vm760, %v750, 2102212464
    %v763 = vsel %vm759, %v747, %v762
    %v764 = vsel %vm758, %v761, %v763
    %v765 = vsel %vm757, %v744, %v747
    %v766 = vsel %vm760, %v753, 920167782
    %v767 = vsel %vm759, %v750, %v766
    %v768 = vsel %vm758, %v765, %v767
    %v769 = vsel %vm757, %v747, %v750
    %v770 = vsel %vm760, %v756, 1326507024
    %v771 = vsel %vm759, %v753, %v770
    %v772 = vsel %vm758, %v769, %v771
    %v773 = vshll.u32 %v733, 8
    %v774 = vmul.u32.u64.compose %v773, %v772
    %v775 = vextract.low.u32 %v774
    %v776 = vextract.high.u32 %v774
    %v777 = vmul.u32.u64.compose %v773, %v768
    %v778 = vextract.low.u32 %v777
    %v779 = vextract.high.u32 %v777
    %v780 = vmul.u32 %v773, %v764
    %v781 = vadd.s32 %v776, %v778
    %vm782 = vc.u32 %v776, %v778
    %v783 = vadd.s32 %v779, 1
    %v784 = vsel %vm782, %v783, %v779
    %v785 = vadd.s32 %v780, %v784
    %v786 = vadd.s32 %v785, 536870912
    %v787 = vshrl.u32 %v786, 30
    %v788 = vshll.u32 %v787, 30
    %v789 = vsub.s32 %v785, %v788
    %vm790 = vcmp.lt.s32.totalorder %v789, 0
    %v791 = vsub.s32 0, %v789
    %v792 = vsel %vm790, %v791, %v789
    %v793 = vclz %v792
    %v794 = vsub.s32 %v793, 2
    %vm795 = vcmp.gt.s32.totalorder 0, %v794
    %v796 = vsel %vm795, 0, %v794
    %v797 = vsub.s32 32, %v796
    %v798 = vshll.u32 %v789, %v796
    %v799 = vshrl.u32 %v781, %v797
    %v800 = vor.u32 %v798, %v799
    %v801 = vsub.s32 4294967266, %v796
    %v802 = vadd.s32 %v801, 127
    %v803 = vshll.u32 %v802, 23
    %v804 = vor.u32 4788187, %v803
    %v805 = vand.u32 2147483647, %v804
    %v807 = vcvt.s32.f32 %v800
    %v808 = vmul.f32 %v807, %v805
    %v809 = vxor.u32 %v808, 2147483648
    %v810 = vsel %vm727, %v809, %v808
    %v811 = vsub.s32 4, %v787
    %v812 = vsel %vm727, %v811, %v787
    %v813 = vsel %vm726, %v621, %v810
    %v814 = vsel %vm726, 0, %v812
    %v815 = vcosq.f32.pop %v813
    %v816 = vsinq.f32.pop %v813
    %vm817 = vweird.f32 %v621
    %v818 = vadd.s32 %v814, 3
    %v819 = vand.u32 %v818, 3
    %vm820 = vcmp.lt.s32.totalorder %v819, 2
    %vm821 = vcmp.eq.s32.totalorder %v819, 0
    %v822 = vxor.u32 %v816, 2147483648
    %v823 = vsel %vm821, %v815, %v822
    %vm824 = vcmp.eq.s32.totalorder %v819, 2
    %v825 = vxor.u32 %v815, 2147483648
    %v826 = vsel %vm824, %v825, %v816
    %v827 = vsel %vm820, %v823, %v826
    %v828 = vsel %vm817, nan, %v827
    %830 = vset.pattern.permute.xlu0 0
    %831 = vperm.xlu0 %830, %v724
    %v832 = vpop.permute.xlu0 %831
    %835 = vset.pattern.permute.xlu0 0
    %836 = vperm.xlu0 %835, %v828
    %v837 = vpop.permute.xlu0 %836
    %v839 = vld [vmem:[#allocation7] sm:$0x3]
    %vm840 = vcmask 15360
    %v842 = vsel %vm840, %v150, 0
    %v845 = vsel %vm840, %v151, 0
    %v848 = vsel %vm840, %v152, 0
    %v851 = vsel %vm840, %v153, 0
    %v854 = vsel %vm840, %v154, 0
    %v857 = vsel %vm840, %v155, 0
    %v860 = vsel %vm840, %v156, 0
    %v863 = vsel %vm840, %v157, 0
    %v866 = vsel %vm840, %v158, 0
    %v869 = vsel %vm840, %v159, 0
    %v872 = vsel %vm840, %v160, 0
    %v875 = vsel %vm840, %v161, 0
    %v878 = vsel %vm840, %v162, 0
    %v881 = vsel %vm840, %v163, 0
    %v884 = vsel %vm840, %v164, 0
    %v887 = vsel %vm840, %v165, 0
    %v890 = vsel %vm840, %v166, 0
    %v893 = vsel %vm840, %v167, 0
    %v896 = vsel %vm840, %v168, 0
    %v899 = vsel %vm840, %v169, 0
    %v902 = vsel %vm840, %v170, 0
    %v905 = vsel %vm840, %v171, 0
    %v908 = vsel %vm840, %v172, 0
    %v911 = vsel %vm840, %v173, 0
    %v914 = vsel %vm840, %v174, 0
    %v917 = vsel %vm840, %v175, 0
    %v920 = vsel %vm840, %v176, 0
    %v923 = vsel %vm840, %v177, 0
    %v926 = vsel %vm840, %v178, 0
    %v929 = vsel %vm840, %v179, 0
    %v932 = vsel %vm840, %v180, 0
    %v935 = vsel %vm840, %v181, 0
    %v938 = vsel %vm840, %v182, 0
    %v941 = vsel %vm840, %v183, 0
    %v944 = vsel %vm840, %v184, 0
    %v947 = vsel %vm840, %v185, 0
    %v950 = vsel %vm840, %v186, 0
    %v953 = vsel %vm840, %v187, 0
    %v956 = vsel %vm840, %v188, 0
    %v959 = vsel %vm840, %v189, 0
    %v962 = vsel %vm840, %v190, 0
    %v965 = vsel %vm840, %v191, 0
    %v968 = vsel %vm840, %v192, 0
    %v971 = vsel %vm840, %v193, 0
    %v974 = vsel %vm840, %v194, 0
    %v977 = vsel %vm840, %v195, 0
    %v980 = vsel %vm840, %v196, 0
    %v983 = vsel %vm840, %v197, 0
    %v986 = vsel %vm840, %v198, 0
    %v989 = vsel %vm840, %v199, 0
    %v992 = vsel %vm840, %v200, 0
    %v995 = vsel %vm840, %v201, 0
    %v998 = vsel %vm840, %v202, 0
    %v1001 = vsel %vm840, %v203, 0
    %v1004 = vsel %vm840, %v204, 0
    %v1007 = vsel %vm840, %v205, 0
    %v1010 = vsel %vm840, %v206, 0
    %v1013 = vsel %vm840, %v207, 0
    %v1016 = vsel %vm840, %v208, 0
    %v1019 = vsel %vm840, %v209, 0
    %v1022 = vsel %vm840, %v210, 0
    %v1025 = vsel %vm840, %v211, 0
    %v1028 = vsel %vm840, %v212, 0
    %v1031 = vsel %vm840, %v213, 0
    %v1034 = vsel %vm840, %v214, 0
    %v1037 = vsel %vm840, %v215, 0
    %v1040 = vsel %vm840, %v216, 0
    %v1043 = vsel %vm840, %v217, 0
    %v1046 = vsel %vm840, %v218, 0
    %v1049 = vsel %vm840, %v219, 0
    %v1052 = vsel %vm840, %v220, 0
    %v1055 = vsel %vm840, %v221, 0
    %v1058 = vsel %vm840, %v222, 0
    %v1061 = vsel %vm840, %v223, 0
    %v1064 = vsel %vm840, %v224, 0
    %v1067 = vsel %vm840, %v225, 0
    %v1070 = vsel %vm840, %v226, 0
    %v1073 = vsel %vm840, %v227, 0
    %v1076 = vsel %vm840, %v228, 0
    %v1079 = vsel %vm840, %v229, 0
    %v1082 = vsel %vm840, %v230, 0
    %v1085 = vsel %vm840, %v231, 0
    %v1088 = vsel %vm840, %v232, 0
    %v1091 = vsel %vm840, %v233, 0
    %v1094 = vsel %vm840, %v234, 0
    %v1097 = vsel %vm840, %v235, 0
    %v1100 = vsel %vm840, %v236, 0
    %v1103 = vsel %vm840, %v237, 0
    %v1106 = vsel %vm840, %v238, 0
    %v1109 = vsel %vm840, %v239, 0
    %v1112 = vsel %vm840, %v240, 0
    %v1115 = vsel %vm840, %v241, 0
    %v1118 = vsel %vm840, %v242, 0
    %v1121 = vsel %vm840, %v243, 0
    %v1124 = vsel %vm840, %v244, 0
    %v1127 = vsel %vm840, %v245, 0
    %vm1129 = vcmask 1041408
    %v1131 = vsel %vm1129, %v839, 0
    %1133 = vmatprep.subr.mxu0 0.0
    %1134 = vmatpush1.msra.mxu0 %v1131
    %1135 = vmatprep.subr.mxu0 0.0
    %1136 = vmatpush1.msra.mxu0 0.0
    %1137 = vmatprep.subr.mxu0 0.0
    %1138 = vmatpush1.msra.mxu0 0.0
    %1139 = vmatprep.subr.mxu0 0.0
    %1140 = vmatpush1.msra.mxu0 0.0
    %1141 = vmatprep.subr.mxu0 0.0
    %1142 = vmatpush1.msra.mxu0 0.0
    %1143 = vmatprep.subr.mxu0 0.0
    %1144 = vmatpush1.msra.mxu0 0.0
    %1145 = vmatprep.subr.mxu0 0.0
    %1146 = vmatpush1.msra.mxu0 0.0
    %1147 = vmatprep.subr.mxu0 0.0
    %1148 = vmatpush1.msra.mxu0 0.0
    %1149 = vmatprep.subr.mxu0 0.0
    %1150 = vmatpush1.msra.mxu0 0.0
    %1151 = vmatprep.subr.mxu0 0.0
    %1152 = vmatpush1.msra.mxu0 0.0
    %1153 = vmatprep.subr.mxu0 0.0
    %1154 = vmatpush1.msra.mxu0 0.0
    %1155 = vmatprep.subr.mxu0 0.0
    %1156 = vmatpush1.msra.mxu0 0.0
    %1157 = vmatprep.subr.mxu0 0.0
    %1158 = vmatpush1.msra.mxu0 0.0
    %1159 = vmatprep.subr.mxu0 0.0
    %1160 = vmatpush1.msra.mxu0 0.0
    %1161 = vmatprep.subr.mxu0 0.0
    %1162 = vmatpush1.msra.mxu0 0.0
    %1163 = vmatprep.subr.mxu0 0.0
    %1164 = vmatpush1.msra.mxu0 0.0
    %1165 = vmatprep.subr.mxu0 0.0
    %1166 = vmatpush1.msra.mxu0 0.0
    %1167 = vmatprep.subr.mxu0 0.0
    %1168 = vmatpush1.msra.mxu0 0.0
    %1169 = vmatprep.subr.mxu0 0.0
    %1170 = vmatpush1.msra.mxu0 0.0
    %1171 = vmatprep.subr.mxu0 0.0
    %1172 = vmatpush1.msra.mxu0 0.0
    %1173 = vmatprep.subr.mxu0 0.0
    %1174 = vmatpush1.msra.mxu0 0.0
    %1175 = vmatprep.subr.mxu0 0.0
    %1176 = vmatpush1.msra.mxu0 0.0
    %1177 = vmatprep.subr.mxu0 0.0
    %1178 = vmatpush1.msra.mxu0 0.0
    %1179 = vmatprep.subr.mxu0 0.0
    %1180 = vmatpush1.msra.mxu0 0.0
    %1181 = vmatprep.subr.mxu0 0.0
    %1182 = vmatpush1.msra.mxu0 0.0
    %1183 = vmatprep.subr.mxu0 0.0
    %1184 = vmatpush1.msra.mxu0 0.0
    %1185 = vmatprep.subr.mxu0 0.0
    %1186 = vmatpush1.msra.mxu0 0.0
    %1187 = vmatprep.subr.mxu0 0.0
    %1188 = vmatpush1.msra.mxu0 0.0
    %1189 = vmatprep.subr.mxu0 0.0
    %1190 = vmatpush1.msra.mxu0 0.0
    %1191 = vmatprep.subr.mxu0 0.0
    %1192 = vmatpush1.msra.mxu0 0.0
    %1193 = vmatprep.subr.mxu0 0.0
    %1194 = vmatpush1.msra.mxu0 0.0
    %1195 = vmatprep.subr.mxu0 0.0
    %1196 = vmatpush1.msra.mxu0 0.0
    %1197 = vmatprep.mubr.f32.mxu0 0.0
    %1198 = vmatmul.mubr.f32.gmra.mrb[0].mxu0 %v842
    %v1199 = vpop.f32.mrb[0].mxu0
    %v1200 = vadd.f32 0.0, %v1199
    %v1201 = vpop.f32.mrb[0].mxu0
    %1202 = vmatprep.mubr.f32.mxu0 0.0
    %1203 = vmatmul.mubr.f32.gmra.mrb[0].mxu0 %v845
    %v1204 = vpop.f32.mrb[0].mxu0
    %v1205 = vadd.f32 0.0, %v1204
    %v1206 = vpop.f32.mrb[0].mxu0
    %1207 = vmatprep.mubr.f32.mxu0 0.0
    %1208 = vmatmul.mubr.f32.gmra.mrb[0].mxu0 %v848
    %v1209 = vpop.f32.mrb[0].mxu0
    %v1210 = vadd.f32 0.0, %v1209
    %v1211 = vpop.f32.mrb[0].mxu0
    %1212 = vmatprep.mubr.f32.mxu0 0.0
    %1213 = vmatmul.mubr.f32.gmra.mrb[0].mxu0 %v851
    %v1214 = vpop.f32.mrb[0].mxu0
    %v1215 = vadd.f32 0.0, %v1214
    %v1216 = vpop.f32.mrb[0].mxu0
    %1217 = vmatprep.mubr.f32.mxu0 0.0
    %1218 = vmatmul.mubr.f32.gmra.mrb[0].mxu0 %v854
    %v1219 = vpop.f32.mrb[0].mxu0
    %v1220 = vadd.f32 0.0, %v1219
    %v1221 = vpop.f32.mrb[0].mxu0
    %1222 = vmatprep.mubr.f32.mxu0 0.0
    %1223 = vmatmul.mubr.f32.gmra.mrb[0].mxu0 %v857
    %v1224 = vpop.f32.mrb[0].mxu0
    %v1225 = vadd.f32 0.0, %v1224
    %v1226 = vpop.f32.mrb[0].mxu0
    %1227 = vmatprep.mubr.f32.mxu0 0.0
    %1228 = vmatmul.mubr.f32.gmra.mrb[0].mxu0 %v860
    %v1229 = vpop.f32.mrb[0].mxu0
    %v1230 = vadd.f32 0.0, %v1229
    %v1231 = vpop.f32.mrb[0].mxu0
    %1232 = vmatprep.mubr.f32.mxu0 0.0
    %1233 = vmatmul.mubr.f32.gmra.mrb[0].mxu0 %v863
    %v1234 = vpop.f32.mrb[0].mxu0
    %v1235 = vadd.f32 0.0, %v1234
    %v1236 = vpop.f32.mrb[0].mxu0
    %1237 = vmatprep.mubr.f32.mxu0 0.0
    %1238 = vmatmul.mubr.f32.gmra.mrb[0].mxu0 %v866
    %v1239 = vpop.f32.mrb[0].mxu0
    %v1240 = vadd.f32 0.0, %v1239
    %v1241 = vpop.f32.mrb[0].mxu0
    %1242 = vmatprep.mubr.f32.mxu0 0.0
    %1243 = vmatmul.mubr.f32.gmra.mrb[0].mxu0 %v869
    %v1244 = vpop.f32.mrb[0].mxu0
    %v1245 = vadd.f32 0.0, %v1244
    %v1246 = vpop.f32.mrb[0].mxu0
    %1247 = vmatprep.mubr.f32.mxu0 0.0
    %1248 = vmatmul.mubr.f32.gmra.mrb[0].mxu0 %v872
    %v1249 = vpop.f32.mrb[0].mxu0
    %v1250 = vadd.f32 0.0, %v1249
    %v1251 = vpop.f32.mrb[0].mxu0
    %1252 = vmatprep.mubr.f32.mxu0 0.0
    %1253 = vmatmul.mubr.f32.gmra.mrb[0].mxu0 %v875
    %v1254 = vpop.f32.mrb[0].mxu0
    %v1255 = vadd.f32 0.0, %v1254
    %v1256 = vpop.f32.mrb[0].mxu0
    %1257 = vmatprep.mubr.f32.mxu0 0.0
    %1258 = vmatmul.mubr.f32.gmra.mrb[0].mxu0 %v878
    %v1259 = vpop.f32.mrb[0].mxu0
    %v1260 = vadd.f32 0.0, %v1259
    %v1261 = vpop.f32.mrb[0].mxu0
    %1262 = vmatprep.mubr.f32.mxu0 0.0
    %1263 = vmatmul.mubr.f32.gmra.mrb[0].mxu0 %v881
    %v1264 = vpop.f32.mrb[0].mxu0
    %v1265 = vadd.f32 0.0, %v1264
    %v1266 = vpop.f32.mrb[0].mxu0
    %1267 = vmatprep.mubr.f32.mxu0 0.0
    %1268 = vmatmul.mubr.f32.gmra.mrb[0].mxu0 %v884
    %v1269 = vpop.f32.mrb[0].mxu0
    %v1270 = vadd.f32 0.0, %v1269
    %v1271 = vpop.f32.mrb[0].mxu0
    %1272 = vmatprep.mubr.f32.mxu0 0.0
    %1273 = vmatmul.mubr.f32.gmra.mrb[0].mxu0 %v887
    %v1274 = vpop.f32.mrb[0].mxu0
    %v1275 = vadd.f32 0.0, %v1274
    %v1276 = vpop.f32.mrb[0].mxu0
    %1277 = vmatprep.mubr.f32.mxu0 0.0
    %1278 = vmatmul.mubr.f32.gmra.mrb[0].mxu0 %v890
    %v1279 = vpop.f32.mrb[0].mxu0
    %v1280 = vadd.f32 0.0, %v1279
    %v1281 = vpop.f32.mrb[0].mxu0
    %1282 = vmatprep.mubr.f32.mxu0 0.0
    %1283 = vmatmul.mubr.f32.gmra.mrb[0].mxu0 %v893
    %v1284 = vpop.f32.mrb[0].mxu0
    %v1285 = vadd.f32 0.0, %v1284
    %v1286 = vpop.f32.mrb[0].mxu0
    %1287 = vmatprep.mubr.f32.mxu0 0.0
    %1288 = vmatmul.mubr.f32.gmra.mrb[0].mxu0 %v896
    %v1289 = vpop.f32.mrb[0].mxu0
    %v1290 = vadd.f32 0.0, %v1289
    %v1291 = vpop.f32.mrb[0].mxu0
    %1292 = vmatprep.mubr.f32.mxu0 0.0
    %1293 = vmatmul.mubr.f32.gmra.mrb[0].mxu0 %v899
    %v1294 = vpop.f32.mrb[0].mxu0
    %v1295 = vadd.f32 0.0, %v1294
    %v1296 = vpop.f32.mrb[0].mxu0
    %1297 = vmatprep.mubr.f32.mxu0 0.0
    %1298 = vmatmul.mubr.f32.gmra.mrb[0].mxu0 %v902
    %v1299 = vpop.f32.mrb[0].mxu0
    %v1300 = vadd.f32 0.0, %v1299
    %v1301 = vpop.f32.mrb[0].mxu0
    %1302 = vmatprep.mubr.f32.mxu0 0.0
    %1303 = vmatmul.mubr.f32.gmra.mrb[0].mxu0 %v905
    %v1304 = vpop.f32.mrb[0].mxu0
    %v1305 = vadd.f32 0.0, %v1304
    %v1306 = vpop.f32.mrb[0].mxu0
    %1307 = vmatprep.mubr.f32.mxu0 0.0
    %1308 = vmatmul.mubr.f32.gmra.mrb[0].mxu0 %v908
    %v1309 = vpop.f32.mrb[0].mxu0
    %v1310 = vadd.f32 0.0, %v1309
    %v1311 = vpop.f32.mrb[0].mxu0
    %1312 = vmatprep.mubr.f32.mxu0 0.0
    %1313 = vmatmul.mubr.f32.gmra.mrb[0].mxu0 %v911
    %v1314 = vpop.f32.mrb[0].mxu0
    %v1315 = vadd.f32 0.0, %v1314
    %v1316 = vpop.f32.mrb[0].mxu0
    %1317 = vmatprep.mubr.f32.mxu0 0.0
    %1318 = vmatmul.mubr.f32.gmra.mrb[0].mxu0 %v914
    %v1319 = vpop.f32.mrb[0].mxu0
    %v1320 = vadd.f32 0.0, %v1319
    %v1321 = vpop.f32.mrb[0].mxu0
    %1322 = vmatprep.mubr.f32.mxu0 0.0
    %1323 = vmatmul.mubr.f32.gmra.mrb[0].mxu0 %v917
    %v1324 = vpop.f32.mrb[0].mxu0
    %v1325 = vadd.f32 0.0, %v1324
    %v1326 = vpop.f32.mrb[0].mxu0
    %1327 = vmatprep.mubr.f32.mxu0 0.0
    %1328 = vmatmul.mubr.f32.gmra.mrb[0].mxu0 %v920
    %v1329 = vpop.f32.mrb[0].mxu0
    %v1330 = vadd.f32 0.0, %v1329
    %v1331 = vpop.f32.mrb[0].mxu0
    %1332 = vmatprep.mubr.f32.mxu0 0.0
    %1333 = vmatmul.mubr.f32.gmra.mrb[0].mxu0 %v923
    %v1334 = vpop.f32.mrb[0].mxu0
    %v1335 = vadd.f32 0.0, %v1334
    %v1336 = vpop.f32.mrb[0].mxu0
    %1337 = vmatprep.mubr.f32.mxu0 0.0
    %1338 = vmatmul.mubr.f32.gmra.mrb[0].mxu0 %v926
    %v1339 = vpop.f32.mrb[0].mxu0
    %v1340 = vadd.f32 0.0, %v1339
    %v1341 = vpop.f32.mrb[0].mxu0
    %1342 = vmatprep.mubr.f32.mxu0 0.0
    %1343 = vmatmul.mubr.f32.gmra.mrb[0].mxu0 %v929
    %v1344 = vpop.f32.mrb[0].mxu0
    %v1345 = vadd.f32 0.0, %v1344
    %v1346 = vpop.f32.mrb[0].mxu0
    %1347 = vmatprep.mubr.f32.mxu0 0.0
    %1348 = vmatmul.mubr.f32.gmra.mrb[0].mxu0 %v932
    %v1349 = vpop.f32.mrb[0].mxu0
    %v1350 = vadd.f32 0.0, %v1349
    %v1351 = vpop.f32.mrb[0].mxu0
    %1352 = vmatprep.mubr.f32.mxu0 0.0
    %1353 = vmatmul.mubr.f32.gmra.mrb[0].mxu0 %v935
    %v1354 = vpop.f32.mrb[0].mxu0
    %v1355 = vadd.f32 0.0, %v1354
    %v1356 = vpop.f32.mrb[0].mxu0
    %1357 = vmatprep.mubr.f32.mxu0 0.0
    %1358 = vmatmul.mubr.f32.gmra.mrb[0].mxu0 %v938
    %v1359 = vpop.f32.mrb[0].mxu0
    %v1360 = vadd.f32 0.0, %v1359
    %v1361 = vpop.f32.mrb[0].mxu0
    %1362 = vmatprep.mubr.f32.mxu0 0.0
    %1363 = vmatmul.mubr.f32.gmra.mrb[0].mxu0 %v941
    %v1364 = vpop.f32.mrb[0].mxu0
    %v1365 = vadd.f32 0.0, %v1364
    %v1366 = vpop.f32.mrb[0].mxu0
    %1367 = vmatprep.mubr.f32.mxu0 0.0
    %1368 = vmatmul.mubr.f32.gmra.mrb[0].mxu0 %v944
    %v1369 = vpop.f32.mrb[0].mxu0
    %v1370 = vadd.f32 0.0, %v1369
    %v1371 = vpop.f32.mrb[0].mxu0
    %1372 = vmatprep.mubr.f32.mxu0 0.0
    %1373 = vmatmul.mubr.f32.gmra.mrb[0].mxu0 %v947
    %v1374 = vpop.f32.mrb[0].mxu0
    %v1375 = vadd.f32 0.0, %v1374
    %v1376 = vpop.f32.mrb[0].mxu0
    %1377 = vmatprep.mubr.f32.mxu0 0.0
    %1378 = vmatmul.mubr.f32.gmra.mrb[0].mxu0 %v950
    %v1379 = vpop.f32.mrb[0].mxu0
    %v1380 = vadd.f32 0.0, %v1379
    %v1381 = vpop.f32.mrb[0].mxu0
    %1382 = vmatprep.mubr.f32.mxu0 0.0
    %1383 = vmatmul.mubr.f32.gmra.mrb[0].mxu0 %v953
    %v1384 = vpop.f32.mrb[0].mxu0
    %v1385 = vadd.f32 0.0, %v1384
    %v1386 = vpop.f32.mrb[0].mxu0
    %1387 = vmatprep.mubr.f32.mxu0 0.0
    %1388 = vmatmul.mubr.f32.gmra.mrb[0].mxu0 %v956
    %v1389 = vpop.f32.mrb[0].mxu0
    %v1390 = vadd.f32 0.0, %v1389
    %v1391 = vpop.f32.mrb[0].mxu0
    %1392 = vmatprep.mubr.f32.mxu0 0.0
    %1393 = vmatmul.mubr.f32.gmra.mrb[0].mxu0 %v959
    %v1394 = vpop.f32.mrb[0].mxu0
    %v1395 = vadd.f32 0.0, %v1394
    %v1396 = vpop.f32.mrb[0].mxu0
    %1397 = vmatprep.mubr.f32.mxu0 0.0
    %1398 = vmatmul.mubr.f32.gmra.mrb[0].mxu0 %v962
    %v1399 = vpop.f32.mrb[0].mxu0
    %v1400 = vadd.f32 0.0, %v1399
    %v1401 = vpop.f32.mrb[0].mxu0
    %1402 = vmatprep.mubr.f32.mxu0 0.0
    %1403 = vmatmul.mubr.f32.gmra.mrb[0].mxu0 %v965
    %v1404 = vpop.f32.mrb[0].mxu0
    %v1405 = vadd.f32 0.0, %v1404
    %v1406 = vpop.f32.mrb[0].mxu0
    %1407 = vmatprep.mubr.f32.mxu0 0.0
    %1408 = vmatmul.mubr.f32.gmra.mrb[0].mxu0 %v968
    %v1409 = vpop.f32.mrb[0].mxu0
    %v1410 = vadd.f32 0.0, %v1409
    %v1411 = vpop.f32.mrb[0].mxu0
    %1412 = vmatprep.mubr.f32.mxu0 0.0
    %1413 = vmatmul.mubr.f32.gmra.mrb[0].mxu0 %v971
    %v1414 = vpop.f32.mrb[0].mxu0
    %v1415 = vadd.f32 0.0, %v1414
    %v1416 = vpop.f32.mrb[0].mxu0
    %1417 = vmatprep.mubr.f32.mxu0 0.0
    %1418 = vmatmul.mubr.f32.gmra.mrb[0].mxu0 %v974
    %v1419 = vpop.f32.mrb[0].mxu0
    %v1420 = vadd.f32 0.0, %v1419
    %v1421 = vpop.f32.mrb[0].mxu0
    %1422 = vmatprep.mubr.f32.mxu0 0.0
    %1423 = vmatmul.mubr.f32.gmra.mrb[0].mxu0 %v977
    %v1424 = vpop.f32.mrb[0].mxu0
    %v1425 = vadd.f32 0.0, %v1424
    %v1426 = vpop.f32.mrb[0].mxu0
    %1427 = vmatprep.mubr.f32.mxu0 0.0
    %1428 = vmatmul.mubr.f32.gmra.mrb[0].mxu0 %v980
    %v1429 = vpop.f32.mrb[0].mxu0
    %v1430 = vadd.f32 0.0, %v1429
    %v1431 = vpop.f32.mrb[0].mxu0
    %1432 = vmatprep.mubr.f32.mxu0 0.0
    %1433 = vmatmul.mubr.f32.gmra.mrb[0].mxu0 %v983
    %v1434 = vpop.f32.mrb[0].mxu0
    %v1435 = vadd.f32 0.0, %v1434
    %v1436 = vpop.f32.mrb[0].mxu0
    %1437 = vmatprep.mubr.f32.mxu0 0.0
    %1438 = vmatmul.mubr.f32.gmra.mrb[0].mxu0 %v986
    %v1439 = vpop.f32.mrb[0].mxu0
    %v1440 = vadd.f32 0.0, %v1439
    %v1441 = vpop.f32.mrb[0].mxu0
    %1442 = vmatprep.mubr.f32.mxu0 0.0
    %1443 = vmatmul.mubr.f32.gmra.mrb[0].mxu0 %v989
    %v1444 = vpop.f32.mrb[0].mxu0
    %v1445 = vadd.f32 0.0, %v1444
    %v1446 = vpop.f32.mrb[0].mxu0
    %1447 = vmatprep.mubr.f32.mxu0 0.0
    %1448 = vmatmul.mubr.f32.gmra.mrb[0].mxu0 %v992
    %v1449 = vpop.f32.mrb[0].mxu0
    %v1450 = vadd.f32 0.0, %v1449
    %v1451 = vpop.f32.mrb[0].mxu0
    %1452 = vmatprep.mubr.f32.mxu0 0.0
    %1453 = vmatmul.mubr.f32.gmra.mrb[0].mxu0 %v995
    %v1454 = vpop.f32.mrb[0].mxu0
    %v1455 = vadd.f32 0.0, %v1454
    %v1456 = vpop.f32.mrb[0].mxu0
    %1457 = vmatprep.mubr.f32.mxu0 0.0
    %1458 = vmatmul.mubr.f32.gmra.mrb[0].mxu0 %v998
    %v1459 = vpop.f32.mrb[0].mxu0
    %v1460 = vadd.f32 0.0, %v1459
    %v1461 = vpop.f32.mrb[0].mxu0
    %1462 = vmatprep.mubr.f32.mxu0 0.0
    %1463 = vmatmul.mubr.f32.gmra.mrb[0].mxu0 %v1001
    %v1464 = vpop.f32.mrb[0].mxu0
    %v1465 = vadd.f32 0.0, %v1464
    %v1466 = vpop.f32.mrb[0].mxu0
    %1467 = vmatprep.mubr.f32.mxu0 0.0
    %1468 = vmatmul.mubr.f32.gmra.mrb[0].mxu0 %v1004
    %v1469 = vpop.f32.mrb[0].mxu0
    %v1470 = vadd.f32 0.0, %v1469
    %v1471 = vpop.f32.mrb[0].mxu0
    %1472 = vmatprep.mubr.f32.mxu0 0.0
    %1473 = vmatmul.mubr.f32.gmra.mrb[0].mxu0 %v1007
    %v1474 = vpop.f32.mrb[0].mxu0
    %v1475 = vadd.f32 0.0, %v1474
    %v1476 = vpop.f32.mrb[0].mxu0
    %1477 = vmatprep.mubr.f32.mxu0 0.0
    %1478 = vmatmul.mubr.f32.gmra.mrb[0].mxu0 %v1010
    %v1479 = vpop.f32.mrb[0].mxu0
    %v1480 = vadd.f32 0.0, %v1479
    %v1481 = vpop.f32.mrb[0].mxu0
    %1482 = vmatprep.mubr.f32.mxu0 0.0
    %1483 = vmatmul.mubr.f32.gmra.mrb[0].mxu0 %v1013
    %v1484 = vpop.f32.mrb[0].mxu0
    %v1485 = vadd.f32 0.0, %v1484
    %v1486 = vpop.f32.mrb[0].mxu0
    %1487 = vmatprep.mubr.f32.mxu0 0.0
    %1488 = vmatmul.mubr.f32.gmra.mrb[0].mxu0 %v1016
    %v1489 = vpop.f32.mrb[0].mxu0
    %v1490 = vadd.f32 0.0, %v1489
    %v1491 = vpop.f32.mrb[0].mxu0
    %1492 = vmatprep.mubr.f32.mxu0 0.0
    %1493 = vmatmul.mubr.f32.gmra.mrb[0].mxu0 %v1019
    %v1494 = vpop.f32.mrb[0].mxu0
    %v1495 = vadd.f32 0.0, %v1494
    %v1496 = vpop.f32.mrb[0].mxu0
    %1497 = vmatprep.mubr.f32.mxu0 0.0
    %1498 = vmatmul.mubr.f32.gmra.mrb[0].mxu0 %v1022
    %v1499 = vpop.f32.mrb[0].mxu0
    %v1500 = vadd.f32 0.0, %v1499
    %v1501 = vpop.f32.mrb[0].mxu0
    %1502 = vmatprep.mubr.f32.mxu0 0.0
    %1503 = vmatmul.mubr.f32.gmra.mrb[0].mxu0 %v1025
    %v1504 = vpop.f32.mrb[0].mxu0
    %v1505 = vadd.f32 0.0, %v1504
    %v1506 = vpop.f32.mrb[0].mxu0
    %1507 = vmatprep.mubr.f32.mxu0 0.0
    %1508 = vmatmul.mubr.f32.gmra.mrb[0].mxu0 %v1028
    %v1509 = vpop.f32.mrb[0].mxu0
    %v1510 = vadd.f32 0.0, %v1509
    %v1511 = vpop.f32.mrb[0].mxu0
    %1512 = vmatprep.mubr.f32.mxu0 0.0
    %1513 = vmatmul.mubr.f32.gmra.mrb[0].mxu0 %v1031
    %v1514 = vpop.f32.mrb[0].mxu0
    %v1515 = vadd.f32 0.0, %v1514
    %v1516 = vpop.f32.mrb[0].mxu0
    %1517 = vmatprep.mubr.f32.mxu0 0.0
    %1518 = vmatmul.mubr.f32.gmra.mrb[0].mxu0 %v1034
    %v1519 = vpop.f32.mrb[0].mxu0
    %v1520 = vadd.f32 0.0, %v1519
    %v1521 = vpop.f32.mrb[0].mxu0
    %1522 = vmatprep.mubr.f32.mxu0 0.0
    %1523 = vmatmul.mubr.f32.gmra.mrb[0].mxu0 %v1037
    %v1524 = vpop.f32.mrb[0].mxu0
    %v1525 = vadd.f32 0.0, %v1524
    %v1526 = vpop.f32.mrb[0].mxu0
    %1527 = vmatprep.mubr.f32.mxu0 0.0
    %1528 = vmatmul.mubr.f32.gmra.mrb[0].mxu0 %v1040
    %v1529 = vpop.f32.mrb[0].mxu0
    %v1530 = vadd.f32 0.0, %v1529
    %v1531 = vpop.f32.mrb[0].mxu0
    %1532 = vmatprep.mubr.f32.mxu0 0.0
    %1533 = vmatmul.mubr.f32.gmra.mrb[0].mxu0 %v1043
    %v1534 = vpop.f32.mrb[0].mxu0
    %v1535 = vadd.f32 0.0, %v1534
    %v1536 = vpop.f32.mrb[0].mxu0
    %1537 = vmatprep.mubr.f32.mxu0 0.0
    %1538 = vmatmul.mubr.f32.gmra.mrb[0].mxu0 %v1046
    %v1539 = vpop.f32.mrb[0].mxu0
    %v1540 = vadd.f32 0.0, %v1539
    %v1541 = vpop.f32.mrb[0].mxu0
    %1542 = vmatprep.mubr.f32.mxu0 0.0
    %1543 = vmatmul.mubr.f32.gmra.mrb[0].mxu0 %v1049
    %v1544 = vpop.f32.mrb[0].mxu0
    %v1545 = vadd.f32 0.0, %v1544
    %v1546 = vpop.f32.mrb[0].mxu0
    %1547 = vmatprep.mubr.f32.mxu0 0.0
    %1548 = vmatmul.mubr.f32.gmra.mrb[0].mxu0 %v1052
    %v1549 = vpop.f32.mrb[0].mxu0
    %v1550 = vadd.f32 0.0, %v1549
    %v1551 = vpop.f32.mrb[0].mxu0
    %1552 = vmatprep.mubr.f32.mxu0 0.0
    %1553 = vmatmul.mubr.f32.gmra.mrb[0].mxu0 %v1055
    %v1554 = vpop.f32.mrb[0].mxu0
    %v1555 = vadd.f32 0.0, %v1554
    %v1556 = vpop.f32.mrb[0].mxu0
    %1557 = vmatprep.mubr.f32.mxu0 0.0
    %1558 = vmatmul.mubr.f32.gmra.mrb[0].mxu0 %v1058
    %v1559 = vpop.f32.mrb[0].mxu0
    %v1560 = vadd.f32 0.0, %v1559
    %v1561 = vpop.f32.mrb[0].mxu0
    %1562 = vmatprep.mubr.f32.mxu0 0.0
    %1563 = vmatmul.mubr.f32.gmra.mrb[0].mxu0 %v1061
    %v1564 = vpop.f32.mrb[0].mxu0
    %v1565 = vadd.f32 0.0, %v1564
    %v1566 = vpop.f32.mrb[0].mxu0
    %1567 = vmatprep.mubr.f32.mxu0 0.0
    %1568 = vmatmul.mubr.f32.gmra.mrb[0].mxu0 %v1064
    %v1569 = vpop.f32.mrb[0].mxu0
    %v1570 = vadd.f32 0.0, %v1569
    %v1571 = vpop.f32.mrb[0].mxu0
    %1572 = vmatprep.mubr.f32.mxu0 0.0
    %1573 = vmatmul.mubr.f32.gmra.mrb[0].mxu0 %v1067
    %v1574 = vpop.f32.mrb[0].mxu0
    %v1575 = vadd.f32 0.0, %v1574
    %v1576 = vpop.f32.mrb[0].mxu0
    %1577 = vmatprep.mubr.f32.mxu0 0.0
    %1578 = vmatmul.mubr.f32.gmra.mrb[0].mxu0 %v1070
    %v1579 = vpop.f32.mrb[0].mxu0
    %v1580 = vadd.f32 0.0, %v1579
    %v1581 = vpop.f32.mrb[0].mxu0
    %1582 = vmatprep.mubr.f32.mxu0 0.0
    %1583 = vmatmul.mubr.f32.gmra.mrb[0].mxu0 %v1073
    %v1584 = vpop.f32.mrb[0].mxu0
    %v1585 = vadd.f32 0.0, %v1584
    %v1586 = vpop.f32.mrb[0].mxu0
    %1587 = vmatprep.mubr.f32.mxu0 0.0
    %1588 = vmatmul.mubr.f32.gmra.mrb[0].mxu0 %v1076
    %v1589 = vpop.f32.mrb[0].mxu0
    %v1590 = vadd.f32 0.0, %v1589
    %v1591 = vpop.f32.mrb[0].mxu0
    %1592 = vmatprep.mubr.f32.mxu0 0.0
    %1593 = vmatmul.mubr.f32.gmra.mrb[0].mxu0 %v1079
    %v1594 = vpop.f32.mrb[0].mxu0
    %v1595 = vadd.f32 0.0, %v1594
    %v1596 = vpop.f32.mrb[0].mxu0
    %1597 = vmatprep.mubr.f32.mxu0 0.0
    %1598 = vmatmul.mubr.f32.gmra.mrb[0].mxu0 %v1082
    %v1599 = vpop.f32.mrb[0].mxu0
    %v1600 = vadd.f32 0.0, %v1599
    %v1601 = vpop.f32.mrb[0].mxu0
    %1602 = vmatprep.mubr.f32.mxu0 0.0
    %1603 = vmatmul.mubr.f32.gmra.mrb[0].mxu0 %v1085
    %v1604 = vpop.f32.mrb[0].mxu0
    %v1605 = vadd.f32 0.0, %v1604
    %v1606 = vpop.f32.mrb[0].mxu0
    %1607 = vmatprep.mubr.f32.mxu0 0.0
    %1608 = vmatmul.mubr.f32.gmra.mrb[0].mxu0 %v1088
    %v1609 = vpop.f32.mrb[0].mxu0
    %v1610 = vadd.f32 0.0, %v1609
    %v1611 = vpop.f32.mrb[0].mxu0
    %1612 = vmatprep.mubr.f32.mxu0 0.0
    %1613 = vmatmul.mubr.f32.gmra.mrb[0].mxu0 %v1091
    %v1614 = vpop.f32.mrb[0].mxu0
    %v1615 = vadd.f32 0.0, %v1614
    %v1616 = vpop.f32.mrb[0].mxu0
    %1617 = vmatprep.mubr.f32.mxu0 0.0
    %1618 = vmatmul.mubr.f32.gmra.mrb[0].mxu0 %v1094
    %v1619 = vpop.f32.mrb[0].mxu0
    %v1620 = vadd.f32 0.0, %v1619
    %v1621 = vpop.f32.mrb[0].mxu0
    %1622 = vmatprep.mubr.f32.mxu0 0.0
    %1623 = vmatmul.mubr.f32.gmra.mrb[0].mxu0 %v1097
    %v1624 = vpop.f32.mrb[0].mxu0
    %v1625 = vadd.f32 0.0, %v1624
    %v1626 = vpop.f32.mrb[0].mxu0
    %1627 = vmatprep.mubr.f32.mxu0 0.0
    %1628 = vmatmul.mubr.f32.gmra.mrb[0].mxu0 %v1100
    %v1629 = vpop.f32.mrb[0].mxu0
    %v1630 = vadd.f32 0.0, %v1629
    %v1631 = vpop.f32.mrb[0].mxu0
    %1632 = vmatprep.mubr.f32.mxu0 0.0
    %1633 = vmatmul.mubr.f32.gmra.mrb[0].mxu0 %v1103
    %v1634 = vpop.f32.mrb[0].mxu0
    %v1635 = vadd.f32 0.0, %v1634
    %v1636 = vpop.f32.mrb[0].mxu0
    %1637 = vmatprep.mubr.f32.mxu0 0.0
    %1638 = vmatmul.mubr.f32.gmra.mrb[0].mxu0 %v1106
    %v1639 = vpop.f32.mrb[0].mxu0
    %v1640 = vadd.f32 0.0, %v1639
    %v1641 = vpop.f32.mrb[0].mxu0
    %1642 = vmatprep.mubr.f32.mxu0 0.0
    %1643 = vmatmul.mubr.f32.gmra.mrb[0].mxu0 %v1109
    %v1644 = vpop.f32.mrb[0].mxu0
    %v1645 = vadd.f32 0.0, %v1644
    %v1646 = vpop.f32.mrb[0].mxu0
    %1647 = vmatprep.mubr.f32.mxu0 0.0
    %1648 = vmatmul.mubr.f32.gmra.mrb[0].mxu0 %v1112
    %v1649 = vpop.f32.mrb[0].mxu0
    %v1650 = vadd.f32 0.0, %v1649
    %v1651 = vpop.f32.mrb[0].mxu0
    %1652 = vmatprep.mubr.f32.mxu0 0.0
    %1653 = vmatmul.mubr.f32.gmra.mrb[0].mxu0 %v1115
    %v1654 = vpop.f32.mrb[0].mxu0
    %v1655 = vadd.f32 0.0, %v1654
    %v1656 = vpop.f32.mrb[0].mxu0
    %1657 = vmatprep.mubr.f32.mxu0 0.0
    %1658 = vmatmul.mubr.f32.gmra.mrb[0].mxu0 %v1118
    %v1659 = vpop.f32.mrb[0].mxu0
    %v1660 = vadd.f32 0.0, %v1659
    %v1661 = vpop.f32.mrb[0].mxu0
    %1662 = vmatprep.mubr.f32.mxu0 0.0
    %1663 = vmatmul.mubr.f32.gmra.mrb[0].mxu0 %v1121
    %v1664 = vpop.f32.mrb[0].mxu0
    %v1665 = vadd.f32 0.0, %v1664
    %v1666 = vpop.f32.mrb[0].mxu0
    %1667 = vmatprep.mubr.f32.mxu0 0.0
    %1668 = vmatmul.mubr.f32.gmra.mrb[0].mxu0 %v1124
    %v1669 = vpop.f32.mrb[0].mxu0
    %v1670 = vadd.f32 0.0, %v1669
    %v1671 = vpop.f32.mrb[0].mxu0
    %1672 = vmatprep.mubr.f32.mxu0 0.0
    %1673 = vmatmul.mubr.f32.gmra.mrb[0].mxu0 %v1127
    %v1674 = vpop.f32.mrb[0].mxu0
    %v1675 = vadd.f32 0.0, %v1674
    %v1676 = vpop.f32.mrb[0].mxu0
    %1677 = vdwg.mxu0
    %vm1678 = vcmask 130048
    %v1680 = vsel %vm1678, %v54, 0
    %v1683 = vsel %vm1678, %v55, 0
    %v1686 = vsel %vm1678, %v56, 0
    %v1689 = vsel %vm1678, %v57, 0
    %v1692 = vsel %vm1678, %v58, 0
    %v1695 = vsel %vm1678, %v59, 0
    %v1698 = vsel %vm1678, %v60, 0
    %v1701 = vsel %vm1678, %v61, 0
    %v1704 = vsel %vm1678, %v62, 0
    %v1707 = vsel %vm1678, %v63, 0
    %v1710 = vsel %vm1678, %v64, 0
    %v1713 = vsel %vm1678, %v65, 0
    %v1716 = vsel %vm1678, %v66, 0
    %v1719 = vsel %vm1678, %v67, 0
    %v1722 = vsel %vm1678, %v68, 0
    %v1725 = vsel %vm1678, %v69, 0
    %v1728 = vsel %vm1678, %v70, 0
    %v1731 = vsel %vm1678, %v71, 0
    %v1734 = vsel %vm1678, %v72, 0
    %v1737 = vsel %vm1678, %v73, 0
    %v1740 = vsel %vm1678, %v74, 0
    %v1743 = vsel %vm1678, %v75, 0
    %v1746 = vsel %vm1678, %v76, 0
    %v1749 = vsel %vm1678, %v77, 0
    %v1752 = vsel %vm1678, %v78, 0
    %v1755 = vsel %vm1678, %v79, 0
    %v1758 = vsel %vm1678, %v80, 0
    %v1761 = vsel %vm1678, %v81, 0
    %v1764 = vsel %vm1678, %v82, 0
    %v1767 = vsel %vm1678, %v83, 0
    %v1770 = vsel %vm1678, %v84, 0
    %v1773 = vsel %vm1678, %v85, 0
    %v1776 = vsel %vm1678, %v86, 0
    %v1779 = vsel %vm1678, %v87, 0
    %v1782 = vsel %vm1678, %v88, 0
    %v1785 = vsel %vm1678, %v89, 0
    %v1788 = vsel %vm1678, %v90, 0
    %v1791 = vsel %vm1678, %v91, 0
    %v1794 = vsel %vm1678, %v92, 0
    %v1797 = vsel %vm1678, %v93, 0
    %v1800 = vsel %vm1678, %v94, 0
    %v1803 = vsel %vm1678, %v95, 0
    %v1806 = vsel %vm1678, %v96, 0
    %v1809 = vsel %vm1678, %v97, 0
    %v1812 = vsel %vm1678, %v98, 0
    %v1815 = vsel %vm1678, %v99, 0
    %v1818 = vsel %vm1678, %v100, 0
    %v1821 = vsel %vm1678, %v101, 0
    %v1824 = vsel %vm1678, %v102, 0
    %v1827 = vsel %vm1678, %v103, 0
    %v1830 = vsel %vm1678, %v104, 0
    %v1833 = vsel %vm1678, %v105, 0
    %v1836 = vsel %vm1678, %v106, 0
    %v1839 = vsel %vm1678, %v107, 0
    %v1842 = vsel %vm1678, %v108, 0
    %v1845 = vsel %vm1678, %v109, 0
    %v1848 = vsel %vm1678, %v110, 0
    %v1851 = vsel %vm1678, %v111, 0
    %v1854 = vsel %vm1678, %v112, 0
    %v1857 = vsel %vm1678, %v113, 0
    %v1860 = vsel %vm1678, %v114, 0
    %v1863 = vsel %vm1678, %v115, 0
    %v1866 = vsel %vm1678, %v116, 0
    %v1869 = vsel %vm1678, %v117, 0
    %v1872 = vsel %vm1678, %v118, 0
    %v1875 = vsel %vm1678, %v119, 0
    %v1878 = vsel %vm1678, %v120, 0
    %v1881 = vsel %vm1678, %v121, 0
    %v1884 = vsel %vm1678, %v122, 0
    %v1887 = vsel %vm1678, %v123, 0
    %v1890 = vsel %vm1678, %v124, 0
    %v1893 = vsel %vm1678, %v125, 0
    %v1896 = vsel %vm1678, %v126, 0
    %v1899 = vsel %vm1678, %v127, 0
    %v1902 = vsel %vm1678, %v128, 0
    %v1905 = vsel %vm1678, %v129, 0
    %v1908 = vsel %vm1678, %v130, 0
    %v1911 = vsel %vm1678, %v131, 0
    %v1914 = vsel %vm1678, %v132, 0
    %v1917 = vsel %vm1678, %v133, 0
    %v1920 = vsel %vm1678, %v134, 0
    %v1923 = vsel %vm1678, %v135, 0
    %v1926 = vsel %vm1678, %v136, 0
    %v1929 = vsel %vm1678, %v137, 0
    %v1932 = vsel %vm1678, %v138, 0
    %v1935 = vsel %vm1678, %v139, 0
    %v1938 = vsel %vm1678, %v140, 0
    %v1941 = vsel %vm1678, %v141, 0
    %v1944 = vsel %vm1678, %v142, 0
    %v1947 = vsel %vm1678, %v143, 0
    %v1950 = vsel %vm1678, %v144, 0
    %v1953 = vsel %vm1678, %v145, 0
    %v1956 = vsel %vm1678, %v146, 0
    %v1959 = vsel %vm1678, %v147, 0
    %v1962 = vsel %vm1678, %v148, 0
    %v1965 = vsel %vm1678, %v149, 0
    %1967 = vmatprep.subr.mxu0 0.0
    %1968 = vmatpush1.msra.mxu0 %v832
    %1969 = vmatprep.subr.mxu0 0.0
    %1970 = vmatpush1.msra.mxu0 %v837
    %1971 = vmatprep.subr.mxu0 0.0
    %1972 = vmatpush1.msra.mxu0 0.0
    %1973 = vmatprep.subr.mxu0 0.0
    %1974 = vmatpush1.msra.mxu0 0.0
    %1975 = vmatprep.subr.mxu0 0.0
    %1976 = vmatpush1.msra.mxu0 0.0
    %1977 = vmatprep.subr.mxu0 0.0
    %1978 = vmatpush1.msra.mxu0 0.0
    %1979 = vmatprep.subr.mxu0 0.0
    %1980 = vmatpush1.msra.mxu0 0.0
    %1981 = vmatprep.subr.mxu0 0.0
    %1982 = vmatpush1.msra.mxu0 0.0
    %1983 = vmatprep.subr.mxu0 0.0
    %1984 = vmatpush1.msra.mxu0 0.0
    %1985 = vmatprep.subr.mxu0 0.0
    %1986 = vmatpush1.msra.mxu0 0.0
    %1987 = vmatprep.subr.mxu0 0.0
    %1988 = vmatpush1.msra.mxu0 0.0
    %1989 = vmatprep.subr.mxu0 0.0
    %1990 = vmatpush1.msra.mxu0 0.0
    %1991 = vmatprep.subr.mxu0 0.0
    %1992 = vmatpush1.msra.mxu0 0.0
    %1993 = vmatprep.subr.mxu0 0.0
    %1994 = vmatpush1.msra.mxu0 0.0
    %1995 = vmatprep.subr.mxu0 0.0
    %1996 = vmatpush1.msra.mxu0 0.0
    %1997 = vmatprep.subr.mxu0 0.0
    %1998 = vmatpush1.msra.mxu0 0.0
    %1999 = vmatprep.subr.mxu0 0.0
    %2000 = vmatpush1.msra.mxu0 0.0
    %2001 = vmatprep.subr.mxu0 0.0
    %2002 = vmatpush1.msra.mxu0 0.0
    %2003 = vmatprep.subr.mxu0 0.0
    %2004 = vmatpush1.msra.mxu0 0.0
    %2005 = vmatprep.subr.mxu0 0.0
    %2006 = vmatpush1.msra.mxu0 0.0
    %2007 = vmatprep.subr.mxu0 0.0
    %2008 = vmatpush1.msra.mxu0 0.0
    %2009 = vmatprep.subr.mxu0 0.0
    %2010 = vmatpush1.msra.mxu0 0.0
    %2011 = vmatprep.subr.mxu0 0.0
    %2012 = vmatpush1.msra.mxu0 0.0
    %2013 = vmatprep.subr.mxu0 0.0
    %2014 = vmatpush1.msra.mxu0 0.0
    %2015 = vmatprep.subr.mxu0 0.0
    %2016 = vmatpush1.msra.mxu0 0.0
    %2017 = vmatprep.subr.mxu0 0.0
    %2018 = vmatpush1.msra.mxu0 0.0
    %2019 = vmatprep.subr.mxu0 0.0
    %2020 = vmatpush1.msra.mxu0 0.0
    %2021 = vmatprep.subr.mxu0 0.0
    %2022 = vmatpush1.msra.mxu0 0.0
    %2023 = vmatprep.subr.mxu0 0.0
    %2024 = vmatpush1.msra.mxu0 0.0
    %2025 = vmatprep.subr.mxu0 0.0
    %2026 = vmatpush1.msra.mxu0 0.0
    %2027 = vmatprep.subr.mxu0 0.0
    %2028 = vmatpush1.msra.mxu0 0.0
    %2029 = vmatprep.subr.mxu0 0.0
    %2030 = vmatpush1.msra.mxu0 0.0
    %2031 = vmatprep.mubr.f32.mxu0 0.0
    %2032 = vmatmul.mubr.f32.gmra.mrb[0].mxu0 %v1680
    %v2033 = vpop.f32.mrb[0].mxu0
    %v2034 = vadd.f32 %v1200, %v2033
    %v2035 = vpop.f32.mrb[0].mxu0
    %2036 = vmatprep.mubr.f32.mxu0 0.0
    %2037 = vmatmul.mubr.f32.gmra.mrb[0].mxu0 %v1683
    %v2038 = vpop.f32.mrb[0].mxu0
    %v2039 = vadd.f32 %v1205, %v2038
    %v2040 = vpop.f32.mrb[0].mxu0
    %2041 = vmatprep.mubr.f32.mxu0 0.0
    %2042 = vmatmul.mubr.f32.gmra.mrb[0].mxu0 %v1686
    %v2043 = vpop.f32.mrb[0].mxu0
    %v2044 = vadd.f32 %v1210, %v2043
    %v2045 = vpop.f32.mrb[0].mxu0
    %2046 = vmatprep.mubr.f32.mxu0 0.0
    %2047 = vmatmul.mubr.f32.gmra.mrb[0].mxu0 %v1689
    %v2048 = vpop.f32.mrb[0].mxu0
    %v2049 = vadd.f32 %v1215, %v2048
    %v2050 = vpop.f32.mrb[0].mxu0
    %2051 = vmatprep.mubr.f32.mxu0 0.0
    %2052 = vmatmul.mubr.f32.gmra.mrb[0].mxu0 %v1692
    %v2053 = vpop.f32.mrb[0].mxu0
    %v2054 = vadd.f32 %v1220, %v2053
    %v2055 = vpop.f32.mrb[0].mxu0
    %2056 = vmatprep.mubr.f32.mxu0 0.0
    %2057 = vmatmul.mubr.f32.gmra.mrb[0].mxu0 %v1695
    %v2058 = vpop.f32.mrb[0].mxu0
    %v2059 = vadd.f32 %v1225, %v2058
    %v2060 = vpop.f32.mrb[0].mxu0
    %2061 = vmatprep.mubr.f32.mxu0 0.0
    %2062 = vmatmul.mubr.f32.gmra.mrb[0].mxu0 %v1698
    %v2063 = vpop.f32.mrb[0].mxu0
    %v2064 = vadd.f32 %v1230, %v2063
    %v2065 = vpop.f32.mrb[0].mxu0
    %2066 = vmatprep.mubr.f32.mxu0 0.0
    %2067 = vmatmul.mubr.f32.gmra.mrb[0].mxu0 %v1701
    %v2068 = vpop.f32.mrb[0].mxu0
    %v2069 = vadd.f32 %v1235, %v2068
    %v2070 = vpop.f32.mrb[0].mxu0
    %2071 = vmatprep.mubr.f32.mxu0 0.0
    %2072 = vmatmul.mubr.f32.gmra.mrb[0].mxu0 %v1704
    %v2073 = vpop.f32.mrb[0].mxu0
    %v2074 = vadd.f32 %v1240, %v2073
    %v2075 = vpop.f32.mrb[0].mxu0
    %2076 = vmatprep.mubr.f32.mxu0 0.0
    %2077 = vmatmul.mubr.f32.gmra.mrb[0].mxu0 %v1707
    %v2078 = vpop.f32.mrb[0].mxu0
    %v2079 = vadd.f32 %v1245, %v2078
    %v2080 = vpop.f32.mrb[0].mxu0
    %2081 = vmatprep.mubr.f32.mxu0 0.0
    %2082 = vmatmul.mubr.f32.gmra.mrb[0].mxu0 %v1710
    %v2083 = vpop.f32.mrb[0].mxu0
    %v2084 = vadd.f32 %v1250, %v2083
    %v2085 = vpop.f32.mrb[0].mxu0
    %2086 = vmatprep.mubr.f32.mxu0 0.0
    %2087 = vmatmul.mubr.f32.gmra.mrb[0].mxu0 %v1713
    %v2088 = vpop.f32.mrb[0].mxu0
    %v2089 = vadd.f32 %v1255, %v2088
    %v2090 = vpop.f32.mrb[0].mxu0
    %2091 = vmatprep.mubr.f32.mxu0 0.0
    %2092 = vmatmul.mubr.f32.gmra.mrb[0].mxu0 %v1716
    %v2093 = vpop.f32.mrb[0].mxu0
    %v2094 = vadd.f32 %v1260, %v2093
    %v2095 = vpop.f32.mrb[0].mxu0
    %2096 = vmatprep.mubr.f32.mxu0 0.0
    %2097 = vmatmul.mubr.f32.gmra.mrb[0].mxu0 %v1719
    %v2098 = vpop.f32.mrb[0].mxu0
    %v2099 = vadd.f32 %v1265, %v2098
    %v2100 = vpop.f32.mrb[0].mxu0
    %2101 = vmatprep.mubr.f32.mxu0 0.0
    %2102 = vmatmul.mubr.f32.gmra.mrb[0].mxu0 %v1722
    %v2103 = vpop.f32.mrb[0].mxu0
    %v2104 = vadd.f32 %v1270, %v2103
    %v2105 = vpop.f32.mrb[0].mxu0
    %2106 = vmatprep.mubr.f32.mxu0 0.0
    %2107 = vmatmul.mubr.f32.gmra.mrb[0].mxu0 %v1725
    %v2108 = vpop.f32.mrb[0].mxu0
    %v2109 = vadd.f32 %v1275, %v2108
    %v2110 = vpop.f32.mrb[0].mxu0
    %2111 = vmatprep.mubr.f32.mxu0 0.0
    %2112 = vmatmul.mubr.f32.gmra.mrb[0].mxu0 %v1728
    %v2113 = vpop.f32.mrb[0].mxu0
    %v2114 = vadd.f32 %v1280, %v2113
    %v2115 = vpop.f32.mrb[0].mxu0
    %2116 = vmatprep.mubr.f32.mxu0 0.0
    %2117 = vmatmul.mubr.f32.gmra.mrb[0].mxu0 %v1731
    %v2118 = vpop.f32.mrb[0].mxu0
    %v2119 = vadd.f32 %v1285, %v2118
    %v2120 = vpop.f32.mrb[0].mxu0
    %2121 = vmatprep.mubr.f32.mxu0 0.0
    %2122 = vmatmul.mubr.f32.gmra.mrb[0].mxu0 %v1734
    %v2123 = vpop.f32.mrb[0].mxu0
    %v2124 = vadd.f32 %v1290, %v2123
    %v2125 = vpop.f32.mrb[0].mxu0
    %2126 = vmatprep.mubr.f32.mxu0 0.0
    %2127 = vmatmul.mubr.f32.gmra.mrb[0].mxu0 %v1737
    %v2128 = vpop.f32.mrb[0].mxu0
    %v2129 = vadd.f32 %v1295, %v2128
    %v2130 = vpop.f32.mrb[0].mxu0
    %2131 = vmatprep.mubr.f32.mxu0 0.0
    %2132 = vmatmul.mubr.f32.gmra.mrb[0].mxu0 %v1740
    %v2133 = vpop.f32.mrb[0].mxu0
    %v2134 = vadd.f32 %v1300, %v2133
    %v2135 = vpop.f32.mrb[0].mxu0
    %2136 = vmatprep.mubr.f32.mxu0 0.0
    %2137 = vmatmul.mubr.f32.gmra.mrb[0].mxu0 %v1743
    %v2138 = vpop.f32.mrb[0].mxu0
    %v2139 = vadd.f32 %v1305, %v2138
    %v2140 = vpop.f32.mrb[0].mxu0
    %2141 = vmatprep.mubr.f32.mxu0 0.0
    %2142 = vmatmul.mubr.f32.gmra.mrb[0].mxu0 %v1746
    %v2143 = vpop.f32.mrb[0].mxu0
    %v2144 = vadd.f32 %v1310, %v2143
    %v2145 = vpop.f32.mrb[0].mxu0
    %2146 = vmatprep.mubr.f32.mxu0 0.0
    %2147 = vmatmul.mubr.f32.gmra.mrb[0].mxu0 %v1749
    %v2148 = vpop.f32.mrb[0].mxu0
    %v2149 = vadd.f32 %v1315, %v2148
    %v2150 = vpop.f32.mrb[0].mxu0
    %2151 = vmatprep.mubr.f32.mxu0 0.0
    %2152 = vmatmul.mubr.f32.gmra.mrb[0].mxu0 %v1752
    %v2153 = vpop.f32.mrb[0].mxu0
    %v2154 = vadd.f32 %v1320, %v2153
    %v2155 = vpop.f32.mrb[0].mxu0
    %2156 = vmatprep.mubr.f32.mxu0 0.0
    %2157 = vmatmul.mubr.f32.gmra.mrb[0].mxu0 %v1755
    %v2158 = vpop.f32.mrb[0].mxu0
    %v2159 = vadd.f32 %v1325, %v2158
    %v2160 = vpop.f32.mrb[0].mxu0
    %2161 = vmatprep.mubr.f32.mxu0 0.0
    %2162 = vmatmul.mubr.f32.gmra.mrb[0].mxu0 %v1758
    %v2163 = vpop.f32.mrb[0].mxu0
    %v2164 = vadd.f32 %v1330, %v2163
    %v2165 = vpop.f32.mrb[0].mxu0
    %2166 = vmatprep.mubr.f32.mxu0 0.0
    %2167 = vmatmul.mubr.f32.gmra.mrb[0].mxu0 %v1761
    %v2168 = vpop.f32.mrb[0].mxu0
    %v2169 = vadd.f32 %v1335, %v2168
    %v2170 = vpop.f32.mrb[0].mxu0
    %2171 = vmatprep.mubr.f32.mxu0 0.0
    %2172 = vmatmul.mubr.f32.gmra.mrb[0].mxu0 %v1764
    %v2173 = vpop.f32.mrb[0].mxu0
    %v2174 = vadd.f32 %v1340, %v2173
    %v2175 = vpop.f32.mrb[0].mxu0
    %2176 = vmatprep.mubr.f32.mxu0 0.0
    %2177 = vmatmul.mubr.f32.gmra.mrb[0].mxu0 %v1767
    %v2178 = vpop.f32.mrb[0].mxu0
    %v2179 = vadd.f32 %v1345, %v2178
    %v2180 = vpop.f32.mrb[0].mxu0
    %2181 = vmatprep.mubr.f32.mxu0 0.0
    %2182 = vmatmul.mubr.f32.gmra.mrb[0].mxu0 %v1770
    %v2183 = vpop.f32.mrb[0].mxu0
    %v2184 = vadd.f32 %v1350, %v2183
    %v2185 = vpop.f32.mrb[0].mxu0
    %2186 = vmatprep.mubr.f32.mxu0 0.0
    %2187 = vmatmul.mubr.f32.gmra.mrb[0].mxu0 %v1773
    %v2188 = vpop.f32.mrb[0].mxu0
    %v2189 = vadd.f32 %v1355, %v2188
    %v2190 = vpop.f32.mrb[0].mxu0
    %2191 = vmatprep.mubr.f32.mxu0 0.0
    %2192 = vmatmul.mubr.f32.gmra.mrb[0].mxu0 %v1776
    %v2193 = vpop.f32.mrb[0].mxu0
    %v2194 = vadd.f32 %v1360, %v2193
    %v2195 = vpop.f32.mrb[0].mxu0
    %2196 = vmatprep.mubr.f32.mxu0 0.0
    %2197 = vmatmul.mubr.f32.gmra.mrb[0].mxu0 %v1779
    %v2198 = vpop.f32.mrb[0].mxu0
    %v2199 = vadd.f32 %v1365, %v2198
    %v2200 = vpop.f32.mrb[0].mxu0
    %2201 = vmatprep.mubr.f32.mxu0 0.0
    %2202 = vmatmul.mubr.f32.gmra.mrb[0].mxu0 %v1782
    %v2203 = vpop.f32.mrb[0].mxu0
    %v2204 = vadd.f32 %v1370, %v2203
    %v2205 = vpop.f32.mrb[0].mxu0
    %2206 = vmatprep.mubr.f32.mxu0 0.0
    %2207 = vmatmul.mubr.f32.gmra.mrb[0].mxu0 %v1785
    %v2208 = vpop.f32.mrb[0].mxu0
    %v2209 = vadd.f32 %v1375, %v2208
    %v2210 = vpop.f32.mrb[0].mxu0
    %2211 = vmatprep.mubr.f32.mxu0 0.0
    %2212 = vmatmul.mubr.f32.gmra.mrb[0].mxu0 %v1788
    %v2213 = vpop.f32.mrb[0].mxu0
    %v2214 = vadd.f32 %v1380, %v2213
    %v2215 = vpop.f32.mrb[0].mxu0
    %2216 = vmatprep.mubr.f32.mxu0 0.0
    %2217 = vmatmul.mubr.f32.gmra.mrb[0].mxu0 %v1791
    %v2218 = vpop.f32.mrb[0].mxu0
    %v2219 = vadd.f32 %v1385, %v2218
    %v2220 = vpop.f32.mrb[0].mxu0
    %2221 = vmatprep.mubr.f32.mxu0 0.0
    %2222 = vmatmul.mubr.f32.gmra.mrb[0].mxu0 %v1794
    %v2223 = vpop.f32.mrb[0].mxu0
    %v2224 = vadd.f32 %v1390, %v2223
    %v2225 = vpop.f32.mrb[0].mxu0
    %2226 = vmatprep.mubr.f32.mxu0 0.0
    %2227 = vmatmul.mubr.f32.gmra.mrb[0].mxu0 %v1797
    %v2228 = vpop.f32.mrb[0].mxu0
    %v2229 = vadd.f32 %v1395, %v2228
    %v2230 = vpop.f32.mrb[0].mxu0
    %2231 = vmatprep.mubr.f32.mxu0 0.0
    %2232 = vmatmul.mubr.f32.gmra.mrb[0].mxu0 %v1800
    %v2233 = vpop.f32.mrb[0].mxu0
    %v2234 = vadd.f32 %v1400, %v2233
    %v2235 = vpop.f32.mrb[0].mxu0
    %2236 = vmatprep.mubr.f32.mxu0 0.0
    %2237 = vmatmul.mubr.f32.gmra.mrb[0].mxu0 %v1803
    %v2238 = vpop.f32.mrb[0].mxu0
    %v2239 = vadd.f32 %v1405, %v2238
    %v2240 = vpop.f32.mrb[0].mxu0
    %2241 = vmatprep.mubr.f32.mxu0 0.0
    %2242 = vmatmul.mubr.f32.gmra.mrb[0].mxu0 %v1806
    %v2243 = vpop.f32.mrb[0].mxu0
    %v2244 = vadd.f32 %v1410, %v2243
    %v2245 = vpop.f32.mrb[0].mxu0
    %2246 = vmatprep.mubr.f32.mxu0 0.0
    %2247 = vmatmul.mubr.f32.gmra.mrb[0].mxu0 %v1809
    %v2248 = vpop.f32.mrb[0].mxu0
    %v2249 = vadd.f32 %v1415, %v2248
    %v2250 = vpop.f32.mrb[0].mxu0
    %2251 = vmatprep.mubr.f32.mxu0 0.0
    %2252 = vmatmul.mubr.f32.gmra.mrb[0].mxu0 %v1812
    %v2253 = vpop.f32.mrb[0].mxu0
    %v2254 = vadd.f32 %v1420, %v2253
    %v2255 = vpop.f32.mrb[0].mxu0
    %2256 = vmatprep.mubr.f32.mxu0 0.0
    %2257 = vmatmul.mubr.f32.gmra.mrb[0].mxu0 %v1815
    %v2258 = vpop.f32.mrb[0].mxu0
    %v2259 = vadd.f32 %v1425, %v2258
    %v2260 = vpop.f32.mrb[0].mxu0
    %2261 = vmatprep.mubr.f32.mxu0 0.0
    %2262 = vmatmul.mubr.f32.gmra.mrb[0].mxu0 %v1818
    %v2263 = vpop.f32.mrb[0].mxu0
    %v2264 = vadd.f32 %v1430, %v2263
    %v2265 = vpop.f32.mrb[0].mxu0
    %2266 = vmatprep.mubr.f32.mxu0 0.0
    %2267 = vmatmul.mubr.f32.gmra.mrb[0].mxu0 %v1821
    %v2268 = vpop.f32.mrb[0].mxu0
    %v2269 = vadd.f32 %v1435, %v2268
    %v2270 = vpop.f32.mrb[0].mxu0
    %2271 = vmatprep.mubr.f32.mxu0 0.0
    %2272 = vmatmul.mubr.f32.gmra.mrb[0].mxu0 %v1824
    %v2273 = vpop.f32.mrb[0].mxu0
    %v2274 = vadd.f32 %v1440, %v2273
    %v2275 = vpop.f32.mrb[0].mxu0
    %2276 = vmatprep.mubr.f32.mxu0 0.0
    %2277 = vmatmul.mubr.f32.gmra.mrb[0].mxu0 %v1827
    %v2278 = vpop.f32.mrb[0].mxu0
    %v2279 = vadd.f32 %v1445, %v2278
    %v2280 = vpop.f32.mrb[0].mxu0
    %2281 = vmatprep.mubr.f32.mxu0 0.0
    %2282 = vmatmul.mubr.f32.gmra.mrb[0].mxu0 %v1830
    %v2283 = vpop.f32.mrb[0].mxu0
    %v2284 = vadd.f32 %v1450, %v2283
    %v2285 = vpop.f32.mrb[0].mxu0
    %2286 = vmatprep.mubr.f32.mxu0 0.0
    %2287 = vmatmul.mubr.f32.gmra.mrb[0].mxu0 %v1833
    %v2288 = vpop.f32.mrb[0].mxu0
    %v2289 = vadd.f32 %v1455, %v2288
    %v2290 = vpop.f32.mrb[0].mxu0
    %2291 = vmatprep.mubr.f32.mxu0 0.0
    %2292 = vmatmul.mubr.f32.gmra.mrb[0].mxu0 %v1836
    %v2293 = vpop.f32.mrb[0].mxu0
    %v2294 = vadd.f32 %v1460, %v2293
    %v2295 = vpop.f32.mrb[0].mxu0
    %2296 = vmatprep.mubr.f32.mxu0 0.0
    %2297 = vmatmul.mubr.f32.gmra.mrb[0].mxu0 %v1839
    %v2298 = vpop.f32.mrb[0].mxu0
    %v2299 = vadd.f32 %v1465, %v2298
    %v2300 = vpop.f32.mrb[0].mxu0
    %2301 = vmatprep.mubr.f32.mxu0 0.0
    %2302 = vmatmul.mubr.f32.gmra.mrb[0].mxu0 %v1842
    %v2303 = vpop.f32.mrb[0].mxu0
    %v2304 = vadd.f32 %v1470, %v2303
    %v2305 = vpop.f32.mrb[0].mxu0
    %2306 = vmatprep.mubr.f32.mxu0 0.0
    %2307 = vmatmul.mubr.f32.gmra.mrb[0].mxu0 %v1845
    %v2308 = vpop.f32.mrb[0].mxu0
    %v2309 = vadd.f32 %v1475, %v2308
    %v2310 = vpop.f32.mrb[0].mxu0
    %2311 = vmatprep.mubr.f32.mxu0 0.0
    %2312 = vmatmul.mubr.f32.gmra.mrb[0].mxu0 %v1848
    %v2313 = vpop.f32.mrb[0].mxu0
    %v2314 = vadd.f32 %v1480, %v2313
    %v2315 = vpop.f32.mrb[0].mxu0
    %2316 = vmatprep.mubr.f32.mxu0 0.0
    %2317 = vmatmul.mubr.f32.gmra.mrb[0].mxu0 %v1851
    %v2318 = vpop.f32.mrb[0].mxu0
    %v2319 = vadd.f32 %v1485, %v2318
    %v2320 = vpop.f32.mrb[0].mxu0
    %2321 = vmatprep.mubr.f32.mxu0 0.0
    %2322 = vmatmul.mubr.f32.gmra.mrb[0].mxu0 %v1854
    %v2323 = vpop.f32.mrb[0].mxu0
    %v2324 = vadd.f32 %v1490, %v2323
    %v2325 = vpop.f32.mrb[0].mxu0
    %2326 = vmatprep.mubr.f32.mxu0 0.0
    %2327 = vmatmul.mubr.f32.gmra.mrb[0].mxu0 %v1857
    %v2328 = vpop.f32.mrb[0].mxu0
    %v2329 = vadd.f32 %v1495, %v2328
    %v2330 = vpop.f32.mrb[0].mxu0
    %2331 = vmatprep.mubr.f32.mxu0 0.0
    %2332 = vmatmul.mubr.f32.gmra.mrb[0].mxu0 %v1860
    %v2333 = vpop.f32.mrb[0].mxu0
    %v2334 = vadd.f32 %v1500, %v2333
    %v2335 = vpop.f32.mrb[0].mxu0
    %2336 = vmatprep.mubr.f32.mxu0 0.0
    %2337 = vmatmul.mubr.f32.gmra.mrb[0].mxu0 %v1863
    %v2338 = vpop.f32.mrb[0].mxu0
    %v2339 = vadd.f32 %v1505, %v2338
    %v2340 = vpop.f32.mrb[0].mxu0
    %2341 = vmatprep.mubr.f32.mxu0 0.0
    %2342 = vmatmul.mubr.f32.gmra.mrb[0].mxu0 %v1866
    %v2343 = vpop.f32.mrb[0].mxu0
    %v2344 = vadd.f32 %v1510, %v2343
    %v2345 = vpop.f32.mrb[0].mxu0
    %2346 = vmatprep.mubr.f32.mxu0 0.0
    %2347 = vmatmul.mubr.f32.gmra.mrb[0].mxu0 %v1869
    %v2348 = vpop.f32.mrb[0].mxu0
    %v2349 = vadd.f32 %v1515, %v2348
    %v2350 = vpop.f32.mrb[0].mxu0
    %2351 = vmatprep.mubr.f32.mxu0 0.0
    %2352 = vmatmul.mubr.f32.gmra.mrb[0].mxu0 %v1872
    %v2353 = vpop.f32.mrb[0].mxu0
    %v2354 = vadd.f32 %v1520, %v2353
    %v2355 = vpop.f32.mrb[0].mxu0
    %2356 = vmatprep.mubr.f32.mxu0 0.0
    %2357 = vmatmul.mubr.f32.gmra.mrb[0].mxu0 %v1875
    %v2358 = vpop.f32.mrb[0].mxu0
    %v2359 = vadd.f32 %v1525, %v2358
    %v2360 = vpop.f32.mrb[0].mxu0
    %2361 = vmatprep.mubr.f32.mxu0 0.0
    %2362 = vmatmul.mubr.f32.gmra.mrb[0].mxu0 %v1878
    %v2363 = vpop.f32.mrb[0].mxu0
    %v2364 = vadd.f32 %v1530, %v2363
    %v2365 = vpop.f32.mrb[0].mxu0
    %2366 = vmatprep.mubr.f32.mxu0 0.0
    %2367 = vmatmul.mubr.f32.gmra.mrb[0].mxu0 %v1881
    %v2368 = vpop.f32.mrb[0].mxu0
    %v2369 = vadd.f32 %v1535, %v2368
    %v2370 = vpop.f32.mrb[0].mxu0
    %2371 = vmatprep.mubr.f32.mxu0 0.0
    %2372 = vmatmul.mubr.f32.gmra.mrb[0].mxu0 %v1884
    %v2373 = vpop.f32.mrb[0].mxu0
    %v2374 = vadd.f32 %v1540, %v2373
    %v2375 = vpop.f32.mrb[0].mxu0
    %2376 = vmatprep.mubr.f32.mxu0 0.0
    %2377 = vmatmul.mubr.f32.gmra.mrb[0].mxu0 %v1887
    %v2378 = vpop.f32.mrb[0].mxu0
    %v2379 = vadd.f32 %v1545, %v2378
    %v2380 = vpop.f32.mrb[0].mxu0
    %2381 = vmatprep.mubr.f32.mxu0 0.0
    %2382 = vmatmul.mubr.f32.gmra.mrb[0].mxu0 %v1890
    %v2383 = vpop.f32.mrb[0].mxu0
    %v2384 = vadd.f32 %v1550, %v2383
    %v2385 = vpop.f32.mrb[0].mxu0
    %2386 = vmatprep.mubr.f32.mxu0 0.0
    %2387 = vmatmul.mubr.f32.gmra.mrb[0].mxu0 %v1893
    %v2388 = vpop.f32.mrb[0].mxu0
    %v2389 = vadd.f32 %v1555, %v2388
    %v2390 = vpop.f32.mrb[0].mxu0
    %2391 = vmatprep.mubr.f32.mxu0 0.0
    %2392 = vmatmul.mubr.f32.gmra.mrb[0].mxu0 %v1896
    %v2393 = vpop.f32.mrb[0].mxu0
    %v2394 = vadd.f32 %v1560, %v2393
    %v2395 = vpop.f32.mrb[0].mxu0
    %2396 = vmatprep.mubr.f32.mxu0 0.0
    %2397 = vmatmul.mubr.f32.gmra.mrb[0].mxu0 %v1899
    %v2398 = vpop.f32.mrb[0].mxu0
    %v2399 = vadd.f32 %v1565, %v2398
    %v2400 = vpop.f32.mrb[0].mxu0
    %2401 = vmatprep.mubr.f32.mxu0 0.0
    %2402 = vmatmul.mubr.f32.gmra.mrb[0].mxu0 %v1902
    %v2403 = vpop.f32.mrb[0].mxu0
    %v2404 = vadd.f32 %v1570, %v2403
    %v2405 = vpop.f32.mrb[0].mxu0
    %2406 = vmatprep.mubr.f32.mxu0 0.0
    %2407 = vmatmul.mubr.f32.gmra.mrb[0].mxu0 %v1905
    %v2408 = vpop.f32.mrb[0].mxu0
    %v2409 = vadd.f32 %v1575, %v2408
    %v2410 = vpop.f32.mrb[0].mxu0
    %2411 = vmatprep.mubr.f32.mxu0 0.0
    %2412 = vmatmul.mubr.f32.gmra.mrb[0].mxu0 %v1908
    %v2413 = vpop.f32.mrb[0].mxu0
    %v2414 = vadd.f32 %v1580, %v2413
    %v2415 = vpop.f32.mrb[0].mxu0
    %2416 = vmatprep.mubr.f32.mxu0 0.0
    %2417 = vmatmul.mubr.f32.gmra.mrb[0].mxu0 %v1911
    %v2418 = vpop.f32.mrb[0].mxu0
    %v2419 = vadd.f32 %v1585, %v2418
    %v2420 = vpop.f32.mrb[0].mxu0
    %2421 = vmatprep.mubr.f32.mxu0 0.0
    %2422 = vmatmul.mubr.f32.gmra.mrb[0].mxu0 %v1914
    %v2423 = vpop.f32.mrb[0].mxu0
    %v2424 = vadd.f32 %v1590, %v2423
    %v2425 = vpop.f32.mrb[0].mxu0
    %2426 = vmatprep.mubr.f32.mxu0 0.0
    %2427 = vmatmul.mubr.f32.gmra.mrb[0].mxu0 %v1917
    %v2428 = vpop.f32.mrb[0].mxu0
    %v2429 = vadd.f32 %v1595, %v2428
    %v2430 = vpop.f32.mrb[0].mxu0
    %2431 = vmatprep.mubr.f32.mxu0 0.0
    %2432 = vmatmul.mubr.f32.gmra.mrb[0].mxu0 %v1920
    %v2433 = vpop.f32.mrb[0].mxu0
    %v2434 = vadd.f32 %v1600, %v2433
    %v2435 = vpop.f32.mrb[0].mxu0
    %2436 = vmatprep.mubr.f32.mxu0 0.0
    %2437 = vmatmul.mubr.f32.gmra.mrb[0].mxu0 %v1923
    %v2438 = vpop.f32.mrb[0].mxu0
    %v2439 = vadd.f32 %v1605, %v2438
    %v2440 = vpop.f32.mrb[0].mxu0
    %2441 = vmatprep.mubr.f32.mxu0 0.0
    %2442 = vmatmul.mubr.f32.gmra.mrb[0].mxu0 %v1926
    %v2443 = vpop.f32.mrb[0].mxu0
    %v2444 = vadd.f32 %v1610, %v2443
    %v2445 = vpop.f32.mrb[0].mxu0
    %2446 = vmatprep.mubr.f32.mxu0 0.0
    %2447 = vmatmul.mubr.f32.gmra.mrb[0].mxu0 %v1929
    %v2448 = vpop.f32.mrb[0].mxu0
    %v2449 = vadd.f32 %v1615, %v2448
    %v2450 = vpop.f32.mrb[0].mxu0
    %2451 = vmatprep.mubr.f32.mxu0 0.0
    %2452 = vmatmul.mubr.f32.gmra.mrb[0].mxu0 %v1932
    %v2453 = vpop.f32.mrb[0].mxu0
    %v2454 = vadd.f32 %v1620, %v2453
    %v2455 = vpop.f32.mrb[0].mxu0
    %2456 = vmatprep.mubr.f32.mxu0 0.0
    %2457 = vmatmul.mubr.f32.gmra.mrb[0].mxu0 %v1935
    %v2458 = vpop.f32.mrb[0].mxu0
    %v2459 = vadd.f32 %v1625, %v2458
    %v2460 = vpop.f32.mrb[0].mxu0
    %2461 = vmatprep.mubr.f32.mxu0 0.0
    %2462 = vmatmul.mubr.f32.gmra.mrb[0].mxu0 %v1938
    %v2463 = vpop.f32.mrb[0].mxu0
    %v2464 = vadd.f32 %v1630, %v2463
    %v2465 = vpop.f32.mrb[0].mxu0
    %2466 = vmatprep.mubr.f32.mxu0 0.0
    %2467 = vmatmul.mubr.f32.gmra.mrb[0].mxu0 %v1941
    %v2468 = vpop.f32.mrb[0].mxu0
    %v2469 = vadd.f32 %v1635, %v2468
    %v2470 = vpop.f32.mrb[0].mxu0
    %2471 = vmatprep.mubr.f32.mxu0 0.0
    %2472 = vmatmul.mubr.f32.gmra.mrb[0].mxu0 %v1944
    %v2473 = vpop.f32.mrb[0].mxu0
    %v2474 = vadd.f32 %v1640, %v2473
    %v2475 = vpop.f32.mrb[0].mxu0
    %2476 = vmatprep.mubr.f32.mxu0 0.0
    %2477 = vmatmul.mubr.f32.gmra.mrb[0].mxu0 %v1947
    %v2478 = vpop.f32.mrb[0].mxu0
    %v2479 = vadd.f32 %v1645, %v2478
    %v2480 = vpop.f32.mrb[0].mxu0
    %2481 = vmatprep.mubr.f32.mxu0 0.0
    %2482 = vmatmul.mubr.f32.gmra.mrb[0].mxu0 %v1950
    %v2483 = vpop.f32.mrb[0].mxu0
    %v2484 = vadd.f32 %v1650, %v2483
    %v2485 = vpop.f32.mrb[0].mxu0
    %2486 = vmatprep.mubr.f32.mxu0 0.0
    %2487 = vmatmul.mubr.f32.gmra.mrb[0].mxu0 %v1953
    %v2488 = vpop.f32.mrb[0].mxu0
    %v2489 = vadd.f32 %v1655, %v2488
    %v2490 = vpop.f32.mrb[0].mxu0
    %2491 = vmatprep.mubr.f32.mxu0 0.0
    %2492 = vmatmul.mubr.f32.gmra.mrb[0].mxu0 %v1956
    %v2493 = vpop.f32.mrb[0].mxu0
    %v2494 = vadd.f32 %v1660, %v2493
    %v2495 = vpop.f32.mrb[0].mxu0
    %2496 = vmatprep.mubr.f32.mxu0 0.0
    %2497 = vmatmul.mubr.f32.gmra.mrb[0].mxu0 %v1959
    %v2498 = vpop.f32.mrb[0].mxu0
    %v2499 = vadd.f32 %v1665, %v2498
    %v2500 = vpop.f32.mrb[0].mxu0
    %2501 = vmatprep.mubr.f32.mxu0 0.0
    %2502 = vmatmul.mubr.f32.gmra.mrb[0].mxu0 %v1962
    %v2503 = vpop.f32.mrb[0].mxu0
    %v2504 = vadd.f32 %v1670, %v2503
    %v2505 = vpop.f32.mrb[0].mxu0
    %2506 = vmatprep.mubr.f32.mxu0 0.0
    %2507 = vmatmul.mubr.f32.gmra.mrb[0].mxu0 %v1965
    %v2508 = vpop.f32.mrb[0].mxu0
    %v2509 = vadd.f32 %v1675, %v2508
    %v2510 = vpop.f32.mrb[0].mxu0
    %2511 = vdwg.mxu0
    %2513 = vset.pattern.permute.xlu0 0
    %2514 = vperm.xlu0 %2513, %v246
    %v2515 = vpop.permute.xlu0 %2514
    %2518 = vset.pattern.permute.xlu0 0
    %2519 = vperm.xlu0 %2518, %v247
    %v2520 = vpop.permute.xlu0 %2519
    %2523 = vset.pattern.permute.xlu0 0
    %2524 = vperm.xlu0 %2523, %v248
    %v2525 = vpop.permute.xlu0 %2524
    %2528 = vset.pattern.permute.xlu0 0
    %2529 = vperm.xlu0 %2528, %v249
    %v2530 = vpop.permute.xlu0 %2529
    %2533 = vset.pattern.permute.xlu0 0
    %2534 = vperm.xlu0 %2533, %v250
    %v2535 = vpop.permute.xlu0 %2534
    %2538 = vset.pattern.permute.xlu0 0
    %2539 = vperm.xlu0 %2538, %v251
    %v2540 = vpop.permute.xlu0 %2539
    %2543 = vset.pattern.permute.xlu0 0
    %2544 = vperm.xlu0 %2543, %v252
    %v2545 = vpop.permute.xlu0 %2544
    %2548 = vset.pattern.permute.xlu0 0
    %2549 = vperm.xlu0 %2548, %v253
    %v2550 = vpop.permute.xlu0 %2549
    %2553 = vset.pattern.permute.xlu0 0
    %2554 = vperm.xlu0 %2553, %v254
    %v2555 = vpop.permute.xlu0 %2554
    %2558 = vset.pattern.permute.xlu0 0
    %2559 = vperm.xlu0 %2558, %v255
    %v2560 = vpop.permute.xlu0 %2559
    %2563 = vset.pattern.permute.xlu0 0
    %2564 = vperm.xlu0 %2563, %v256
    %v2565 = vpop.permute.xlu0 %2564
    %2568 = vset.pattern.permute.xlu0 0
    %2569 = vperm.xlu0 %2568, %v257
    %v2570 = vpop.permute.xlu0 %2569
    %2573 = vset.pattern.permute.xlu0 0
    %2574 = vperm.xlu0 %2573, %v258
    %v2575 = vpop.permute.xlu0 %2574
    %2578 = vset.pattern.permute.xlu0 0
    %2579 = vperm.xlu0 %2578, %v259
    %v2580 = vpop.permute.xlu0 %2579
    %2583 = vset.pattern.permute.xlu0 0
    %2584 = vperm.xlu0 %2583, %v260
    %v2585 = vpop.permute.xlu0 %2584
    %2588 = vset.pattern.permute.xlu0 0
    %2589 = vperm.xlu0 %2588, %v261
    %v2590 = vpop.permute.xlu0 %2589
    %2592 = vmatprep.subr.mxu0 0.0
    %2593 = vmatpush1.msra.mxu0 %v410
    %2594 = vmatprep.subr.mxu0 0.0
    %2595 = vmatpush1.msra.mxu0 %v411
    %2596 = vmatprep.subr.mxu0 0.0
    %2597 = vmatpush1.msra.mxu0 %v412
    %2598 = vmatprep.subr.mxu0 0.0
    %2599 = vmatpush1.msra.mxu0 %v413
    %2600 = vmatprep.subr.mxu0 0.0
    %2601 = vmatpush1.msra.mxu0 %v414
    %2602 = vmatprep.subr.mxu0 0.0
    %2603 = vmatpush1.msra.mxu0 %v415
    %2604 = vmatprep.subr.mxu0 0.0
    %2605 = vmatpush1.msra.mxu0 %v416
    %2606 = vmatprep.subr.mxu0 0.0
    %2607 = vmatpush1.msra.mxu0 %v417
    %2608 = vmatprep.subr.mxu0 0.0
    %2609 = vmatpush1.msra.mxu0 %v418
    %2610 = vmatprep.subr.mxu0 0.0
    %2611 = vmatpush1.msra.mxu0 %v419
    %2612 = vmatprep.subr.mxu0 0.0
    %2613 = vmatpush1.msra.mxu0 %v420
    %2614 = vmatprep.subr.mxu0 0.0
    %2615 = vmatpush1.msra.mxu0 %v421
    %2616 = vmatprep.subr.mxu0 0.0
    %2617 = vmatpush1.msra.mxu0 %v422
    %2618 = vmatprep.subr.mxu0 0.0
    %2619 = vmatpush1.msra.mxu0 %v423
    %2620 = vmatprep.subr.mxu0 0.0
    %2621 = vmatpush1.msra.mxu0 %v424
    %2622 = vmatprep.subr.mxu0 0.0
    %2623 = vmatpush1.msra.mxu0 %v425
    %2624 = vmatprep.subr.mxu0 0.0
    %2625 = vmatpush1.msra.mxu0 0.0
    %2626 = vmatprep.subr.mxu0 0.0
    %2627 = vmatpush1.msra.mxu0 0.0
    %2628 = vmatprep.subr.mxu0 0.0
    %2629 = vmatpush1.msra.mxu0 0.0
    %2630 = vmatprep.subr.mxu0 0.0
    %2631 = vmatpush1.msra.mxu0 0.0
    %2632 = vmatprep.subr.mxu0 0.0
    %2633 = vmatpush1.msra.mxu0 0.0
    %2634 = vmatprep.subr.mxu0 0.0
    %2635 = vmatpush1.msra.mxu0 0.0
    %2636 = vmatprep.subr.mxu0 0.0
    %2637 = vmatpush1.msra.mxu0 0.0
    %2638 = vmatprep.subr.mxu0 0.0
    %2639 = vmatpush1.msra.mxu0 0.0
    %2640 = vmatprep.subr.mxu0 0.0
    %2641 = vmatpush1.msra.mxu0 0.0
    %2642 = vmatprep.subr.mxu0 0.0
    %2643 = vmatpush1.msra.mxu0 0.0
    %2644 = vmatprep.subr.mxu0 0.0
    %2645 = vmatpush1.msra.mxu0 0.0
    %2646 = vmatprep.subr.mxu0 0.0
    %2647 = vmatpush1.msra.mxu0 0.0
    %2648 = vmatprep.subr.mxu0 0.0
    %2649 = vmatpush1.msra.mxu0 0.0
    %2650 = vmatprep.subr.mxu0 0.0
    %2651 = vmatpush1.msra.mxu0 0.0
    %2652 = vmatprep.subr.mxu0 0.0
    %2653 = vmatpush1.msra.mxu0 0.0
    %2654 = vmatprep.subr.mxu0 0.0
    %2655 = vmatpush1.msra.mxu0 0.0
    %2656 = vmatprep.mubr.f32.mxu0 0.0
    %2657 = vmatmul.mubr.f32.gmra.mrb[0].mxu0 %v2034
    %v2658 = vpop.f32.mrb[0].mxu0
    %v2659 = vadd.f32 0.0, %v2658
    %v2660 = vpop.f32.mrb[0].mxu0
    %2661 = vmatprep.mubr.f32.mxu0 0.0
    %2662 = vmatmul.mubr.f32.gmra.mrb[0].mxu0 %v2039
    %v2663 = vpop.f32.mrb[0].mxu0
    %v2664 = vadd.f32 0.0, %v2663
    %v2665 = vpop.f32.mrb[0].mxu0
    %2666 = vmatprep.mubr.f32.mxu0 0.0
    %2667 = vmatmul.mubr.f32.gmra.mrb[0].mxu0 %v2044
    %v2668 = vpop.f32.mrb[0].mxu0
    %v2669 = vadd.f32 0.0, %v2668
    %v2670 = vpop.f32.mrb[0].mxu0
    %2671 = vmatprep.mubr.f32.mxu0 0.0
    %2672 = vmatmul.mubr.f32.gmra.mrb[0].mxu0 %v2049
    %v2673 = vpop.f32.mrb[0].mxu0
    %v2674 = vadd.f32 0.0, %v2673
    %v2675 = vpop.f32.mrb[0].mxu0
    %2676 = vmatprep.mubr.f32.mxu0 0.0
    %2677 = vmatmul.mubr.f32.gmra.mrb[0].mxu0 %v2054
    %v2678 = vpop.f32.mrb[0].mxu0
    %v2679 = vadd.f32 0.0, %v2678
    %v2680 = vpop.f32.mrb[0].mxu0
    %2681 = vmatprep.mubr.f32.mxu0 0.0
    %2682 = vmatmul.mubr.f32.gmra.mrb[0].mxu0 %v2059
    %v2683 = vpop.f32.mrb[0].mxu0
    %v2684 = vadd.f32 0.0, %v2683
    %v2685 = vpop.f32.mrb[0].mxu0
    %2686 = vmatprep.mubr.f32.mxu0 0.0
    %2687 = vmatmul.mubr.f32.gmra.mrb[0].mxu0 %v2064
    %v2688 = vpop.f32.mrb[0].mxu0
    %v2689 = vadd.f32 0.0, %v2688
    %v2690 = vpop.f32.mrb[0].mxu0
    %2691 = vmatprep.mubr.f32.mxu0 0.0
    %2692 = vmatmul.mubr.f32.gmra.mrb[0].mxu0 %v2069
    %v2693 = vpop.f32.mrb[0].mxu0
    %v2694 = vadd.f32 0.0, %v2693
    %v2695 = vpop.f32.mrb[0].mxu0
    %2696 = vmatprep.mubr.f32.mxu0 0.0
    %2697 = vmatmul.mubr.f32.gmra.mrb[0].mxu0 %v2074
    %v2698 = vpop.f32.mrb[0].mxu0
    %v2699 = vadd.f32 0.0, %v2698
    %v2700 = vpop.f32.mrb[0].mxu0
    %2701 = vmatprep.mubr.f32.mxu0 0.0
    %2702 = vmatmul.mubr.f32.gmra.mrb[0].mxu0 %v2079
    %v2703 = vpop.f32.mrb[0].mxu0
    %v2704 = vadd.f32 0.0, %v2703
    %v2705 = vpop.f32.mrb[0].mxu0
    %2706 = vmatprep.mubr.f32.mxu0 0.0
    %2707 = vmatmul.mubr.f32.gmra.mrb[0].mxu0 %v2084
    %v2708 = vpop.f32.mrb[0].mxu0
    %v2709 = vadd.f32 0.0, %v2708
    %v2710 = vpop.f32.mrb[0].mxu0
    %2711 = vmatprep.mubr.f32.mxu0 0.0
    %2712 = vmatmul.mubr.f32.gmra.mrb[0].mxu0 %v2089
    %v2713 = vpop.f32.mrb[0].mxu0
    %v2714 = vadd.f32 0.0, %v2713
    %v2715 = vpop.f32.mrb[0].mxu0
    %2716 = vmatprep.mubr.f32.mxu0 0.0
    %2717 = vmatmul.mubr.f32.gmra.mrb[0].mxu0 %v2094
    %v2718 = vpop.f32.mrb[0].mxu0
    %v2719 = vadd.f32 0.0, %v2718
    %v2720 = vpop.f32.mrb[0].mxu0
    %2721 = vmatprep.mubr.f32.mxu0 0.0
    %2722 = vmatmul.mubr.f32.gmra.mrb[0].mxu0 %v2099
    %v2723 = vpop.f32.mrb[0].mxu0
    %v2724 = vadd.f32 0.0, %v2723
    %v2725 = vpop.f32.mrb[0].mxu0
    %2726 = vmatprep.mubr.f32.mxu0 0.0
    %2727 = vmatmul.mubr.f32.gmra.mrb[0].mxu0 %v2104
    %v2728 = vpop.f32.mrb[0].mxu0
    %v2729 = vadd.f32 0.0, %v2728
    %v2730 = vpop.f32.mrb[0].mxu0
    %2731 = vmatprep.mubr.f32.mxu0 0.0
    %2732 = vmatmul.mubr.f32.gmra.mrb[0].mxu0 %v2109
    %v2733 = vpop.f32.mrb[0].mxu0
    %v2734 = vadd.f32 0.0, %v2733
    %v2735 = vpop.f32.mrb[0].mxu0
    %2736 = vdwg.mxu0
    %v2737 = vadd.f32 %v2515, %v2659
    %v2738 = vadd.f32 %v2520, %v2664
    %v2739 = vadd.f32 %v2525, %v2669
    %v2740 = vadd.f32 %v2530, %v2674
    %v2741 = vadd.f32 %v2535, %v2679
    %v2742 = vadd.f32 %v2540, %v2684
    %v2743 = vadd.f32 %v2545, %v2689
    %v2744 = vadd.f32 %v2550, %v2694
    %v2745 = vadd.f32 %v2555, %v2699
    %v2746 = vadd.f32 %v2560, %v2704
    %v2747 = vadd.f32 %v2565, %v2709
    %v2748 = vadd.f32 %v2570, %v2714
    %v2749 = vadd.f32 %v2575, %v2719
    %v2750 = vadd.f32 %v2580, %v2724
    %v2751 = vadd.f32 %v2585, %v2729
    %v2752 = vadd.f32 %v2590, %v2734
    %2753 = vmatprep.subr.mxu0 0.0
    %2754 = vmatpush1.msra.mxu0 %v458
    %2755 = vmatprep.subr.mxu0 0.0
    %2756 = vmatpush1.msra.mxu0 %v459
    %2757 = vmatprep.subr.mxu0 0.0
    %2758 = vmatpush1.msra.mxu0 %v460
    %2759 = vmatprep.subr.mxu0 0.0
    %2760 = vmatpush1.msra.mxu0 %v461
    %2761 = vmatprep.subr.mxu0 0.0
    %2762 = vmatpush1.msra.mxu0 %v462
    %2763 = vmatprep.subr.mxu0 0.0
    %2764 = vmatpush1.msra.mxu0 %v463
    %2765 = vmatprep.subr.mxu0 0.0
    %2766 = vmatpush1.msra.mxu0 %v464
    %2767 = vmatprep.subr.mxu0 0.0
    %2768 = vmatpush1.msra.mxu0 %v465
    %2769 = vmatprep.subr.mxu0 0.0
    %2770 = vmatpush1.msra.mxu0 %v466
    %2771 = vmatprep.subr.mxu0 0.0
    %2772 = vmatpush1.msra.mxu0 %v467
    %2773 = vmatprep.subr.mxu0 0.0
    %2774 = vmatpush1.msra.mxu0 %v468
    %2775 = vmatprep.subr.mxu0 0.0
    %2776 = vmatpush1.msra.mxu0 %v469
    %2777 = vmatprep.subr.mxu0 0.0
    %2778 = vmatpush1.msra.mxu0 %v470
    %2779 = vmatprep.subr.mxu0 0.0
    %2780 = vmatpush1.msra.mxu0 %v471
    %2781 = vmatprep.subr.mxu0 0.0
    %2782 = vmatpush1.msra.mxu0 %v472
    %2783 = vmatprep.subr.mxu0 0.0
    %2784 = vmatpush1.msra.mxu0 %v473
    %2785 = vmatprep.subr.mxu0 0.0
    %2786 = vmatpush1.msra.mxu0 0.0
    %2787 = vmatprep.subr.mxu0 0.0
    %2788 = vmatpush1.msra.mxu0 0.0
    %2789 = vmatprep.subr.mxu0 0.0
    %2790 = vmatpush1.msra.mxu0 0.0
    %2791 = vmatprep.subr.mxu0 0.0
    %2792 = vmatpush1.msra.mxu0 0.0
    %2793 = vmatprep.subr.mxu0 0.0
    %2794 = vmatpush1.msra.mxu0 0.0
    %2795 = vmatprep.subr.mxu0 0.0
    %2796 = vmatpush1.msra.mxu0 0.0
    %2797 = vmatprep.subr.mxu0 0.0
    %2798 = vmatpush1.msra.mxu0 0.0
    %2799 = vmatprep.subr.mxu0 0.0
    %2800 = vmatpush1.msra.mxu0 0.0
    %2801 = vmatprep.subr.mxu0 0.0
    %2802 = vmatpush1.msra.mxu0 0.0
    %2803 = vmatprep.subr.mxu0 0.0
    %2804 = vmatpush1.msra.mxu0 0.0
    %2805 = vmatprep.subr.mxu0 0.0
    %2806 = vmatpush1.msra.mxu0 0.0
    %2807 = vmatprep.subr.mxu0 0.0
    %2808 = vmatpush1.msra.mxu0 0.0
    %2809 = vmatprep.subr.mxu0 0.0
    %2810 = vmatpush1.msra.mxu0 0.0
    %2811 = vmatprep.subr.mxu0 0.0
    %2812 = vmatpush1.msra.mxu0 0.0
    %2813 = vmatprep.subr.mxu0 0.0
    %2814 = vmatpush1.msra.mxu0 0.0
    %2815 = vmatprep.subr.mxu0 0.0
    %2816 = vmatpush1.msra.mxu0 0.0
    %2817 = vmatprep.mubr.f32.mxu0 0.0
    %2818 = vmatmul.mubr.f32.gmra.mrb[0].mxu0 %v2114
    %v2819 = vpop.f32.mrb[0].mxu0
    %v2820 = vadd.f32 0.0, %v2819
    %v2821 = vpop.f32.mrb[0].mxu0
    %2822 = vmatprep.mubr.f32.mxu0 0.0
    %2823 = vmatmul.mubr.f32.gmra.mrb[0].mxu0 %v2119
    %v2824 = vpop.f32.mrb[0].mxu0
    %v2825 = vadd.f32 0.0, %v2824
    %v2826 = vpop.f32.mrb[0].mxu0
    %2827 = vmatprep.mubr.f32.mxu0 0.0
    %2828 = vmatmul.mubr.f32.gmra.mrb[0].mxu0 %v2124
    %v2829 = vpop.f32.mrb[0].mxu0
    %v2830 = vadd.f32 0.0, %v2829
    %v2831 = vpop.f32.mrb[0].mxu0
    %2832 = vmatprep.mubr.f32.mxu0 0.0
    %2833 = vmatmul.mubr.f32.gmra.mrb[0].mxu0 %v2129
    %v2834 = vpop.f32.mrb[0].mxu0
    %v2835 = vadd.f32 0.0, %v2834
    %v2836 = vpop.f32.mrb[0].mxu0
    %2837 = vmatprep.mubr.f32.mxu0 0.0
    %2838 = vmatmul.mubr.f32.gmra.mrb[0].mxu0 %v2134
    %v2839 = vpop.f32.mrb[0].mxu0
    %v2840 = vadd.f32 0.0, %v2839
    %v2841 = vpop.f32.mrb[0].mxu0
    %2842 = vmatprep.mubr.f32.mxu0 0.0
    %2843 = vmatmul.mubr.f32.gmra.mrb[0].mxu0 %v2139
    %v2844 = vpop.f32.mrb[0].mxu0
    %v2845 = vadd.f32 0.0, %v2844
    %v2846 = vpop.f32.mrb[0].mxu0
    %2847 = vmatprep.mubr.f32.mxu0 0.0
    %2848 = vmatmul.mubr.f32.gmra.mrb[0].mxu0 %v2144
    %v2849 = vpop.f32.mrb[0].mxu0
    %v2850 = vadd.f32 0.0, %v2849
    %v2851 = vpop.f32.mrb[0].mxu0
    %2852 = vmatprep.mubr.f32.mxu0 0.0
    %2853 = vmatmul.mubr.f32.gmra.mrb[0].mxu0 %v2149
    %v2854 = vpop.f32.mrb[0].mxu0
    %v2855 = vadd.f32 0.0, %v2854
    %v2856 = vpop.f32.mrb[0].mxu0
    %2857 = vmatprep.mubr.f32.mxu0 0.0
    %2858 = vmatmul.mubr.f32.gmra.mrb[0].mxu0 %v2154
    %v2859 = vpop.f32.mrb[0].mxu0
    %v2860 = vadd.f32 0.0, %v2859
    %v2861 = vpop.f32.mrb[0].mxu0
    %2862 = vmatprep.mubr.f32.mxu0 0.0
    %2863 = vmatmul.mubr.f32.gmra.mrb[0].mxu0 %v2159
    %v2864 = vpop.f32.mrb[0].mxu0
    %v2865 = vadd.f32 0.0, %v2864
    %v2866 = vpop.f32.mrb[0].mxu0
    %2867 = vmatprep.mubr.f32.mxu0 0.0
    %2868 = vmatmul.mubr.f32.gmra.mrb[0].mxu0 %v2164
    %v2869 = vpop.f32.mrb[0].mxu0
    %v2870 = vadd.f32 0.0, %v2869
    %v2871 = vpop.f32.mrb[0].mxu0
    %2872 = vmatprep.mubr.f32.mxu0 0.0
    %2873 = vmatmul.mubr.f32.gmra.mrb[0].mxu0 %v2169
    %v2874 = vpop.f32.mrb[0].mxu0
    %v2875 = vadd.f32 0.0, %v2874
    %v2876 = vpop.f32.mrb[0].mxu0
    %2877 = vmatprep.mubr.f32.mxu0 0.0
    %2878 = vmatmul.mubr.f32.gmra.mrb[0].mxu0 %v2174
    %v2879 = vpop.f32.mrb[0].mxu0
    %v2880 = vadd.f32 0.0, %v2879
    %v2881 = vpop.f32.mrb[0].mxu0
    %2882 = vmatprep.mubr.f32.mxu0 0.0
    %2883 = vmatmul.mubr.f32.gmra.mrb[0].mxu0 %v2179
    %v2884 = vpop.f32.mrb[0].mxu0
    %v2885 = vadd.f32 0.0, %v2884
    %v2886 = vpop.f32.mrb[0].mxu0
    %2887 = vmatprep.mubr.f32.mxu0 0.0
    %2888 = vmatmul.mubr.f32.gmra.mrb[0].mxu0 %v2184
    %v2889 = vpop.f32.mrb[0].mxu0
    %v2890 = vadd.f32 0.0, %v2889
    %v2891 = vpop.f32.mrb[0].mxu0
    %2892 = vmatprep.mubr.f32.mxu0 0.0
    %2893 = vmatmul.mubr.f32.gmra.mrb[0].mxu0 %v2189
    %v2894 = vpop.f32.mrb[0].mxu0
    %v2895 = vadd.f32 0.0, %v2894
    %v2896 = vpop.f32.mrb[0].mxu0
    %2897 = vdwg.mxu0
    %v2898 = vadd.f32 %v2737, %v2820
    %v2899 = vadd.f32 %v2738, %v2825
    %v2900 = vadd.f32 %v2739, %v2830
    %v2901 = vadd.f32 %v2740, %v2835
    %v2902 = vadd.f32 %v2741, %v2840
    %v2903 = vadd.f32 %v2742, %v2845
    %v2904 = vadd.f32 %v2743, %v2850
    %v2905 = vadd.f32 %v2744, %v2855
    %v2906 = vadd.f32 %v2745, %v2860
    %v2907 = vadd.f32 %v2746, %v2865
    %v2908 = vadd.f32 %v2747, %v2870
    %v2909 = vadd.f32 %v2748, %v2875
    %v2910 = vadd.f32 %v2749, %v2880
    %v2911 = vadd.f32 %v2750, %v2885
    %v2912 = vadd.f32 %v2751, %v2890
    %v2913 = vadd.f32 %v2752, %v2895
    %2914 = vmatprep.subr.mxu0 0.0
    %2915 = vmatpush1.msra.mxu0 %v506
    %2916 = vmatprep.subr.mxu0 0.0
    %2917 = vmatpush1.msra.mxu0 %v507
    %2918 = vmatprep.subr.mxu0 0.0
    %2919 = vmatpush1.msra.mxu0 %v508
    %2920 = vmatprep.subr.mxu0 0.0
    %2921 = vmatpush1.msra.mxu0 %v509
    %2922 = vmatprep.subr.mxu0 0.0
    %2923 = vmatpush1.msra.mxu0 %v510
    %2924 = vmatprep.subr.mxu0 0.0
    %2925 = vmatpush1.msra.mxu0 %v511
    %2926 = vmatprep.subr.mxu0 0.0
    %2927 = vmatpush1.msra.mxu0 %v512
    %2928 = vmatprep.subr.mxu0 0.0
    %2929 = vmatpush1.msra.mxu0 %v513
    %2930 = vmatprep.subr.mxu0 0.0
    %2931 = vmatpush1.msra.mxu0 %v514
    %2932 = vmatprep.subr.mxu0 0.0
    %2933 = vmatpush1.msra.mxu0 %v515
    %2934 = vmatprep.subr.mxu0 0.0
    %2935 = vmatpush1.msra.mxu0 %v516
    %2936 = vmatprep.subr.mxu0 0.0
    %2937 = vmatpush1.msra.mxu0 %v517
    %2938 = vmatprep.subr.mxu0 0.0
    %2939 = vmatpush1.msra.mxu0 %v518
    %2940 = vmatprep.subr.mxu0 0.0
    %2941 = vmatpush1.msra.mxu0 %v519
    %2942 = vmatprep.subr.mxu0 0.0
    %2943 = vmatpush1.msra.mxu0 %v520
    %2944 = vmatprep.subr.mxu0 0.0
    %2945 = vmatpush1.msra.mxu0 %v521
    %2946 = vmatprep.subr.mxu0 0.0
    %2947 = vmatpush1.msra.mxu0 0.0
    %2948 = vmatprep.subr.mxu0 0.0
    %2949 = vmatpush1.msra.mxu0 0.0
    %2950 = vmatprep.subr.mxu0 0.0
    %2951 = vmatpush1.msra.mxu0 0.0
    %2952 = vmatprep.subr.mxu0 0.0
    %2953 = vmatpush1.msra.mxu0 0.0
    %2954 = vmatprep.subr.mxu0 0.0
    %2955 = vmatpush1.msra.mxu0 0.0
    %2956 = vmatprep.subr.mxu0 0.0
    %2957 = vmatpush1.msra.mxu0 0.0
    %2958 = vmatprep.subr.mxu0 0.0
    %2959 = vmatpush1.msra.mxu0 0.0
    %2960 = vmatprep.subr.mxu0 0.0
    %2961 = vmatpush1.msra.mxu0 0.0
    %2962 = vmatprep.subr.mxu0 0.0
    %2963 = vmatpush1.msra.mxu0 0.0
    %2964 = vmatprep.subr.mxu0 0.0
    %2965 = vmatpush1.msra.mxu0 0.0
    %2966 = vmatprep.subr.mxu0 0.0
    %2967 = vmatpush1.msra.mxu0 0.0
    %2968 = vmatprep.subr.mxu0 0.0
    %2969 = vmatpush1.msra.mxu0 0.0
    %2970 = vmatprep.subr.mxu0 0.0
    %2971 = vmatpush1.msra.mxu0 0.0
    %2972 = vmatprep.subr.mxu0 0.0
    %2973 = vmatpush1.msra.mxu0 0.0
    %2974 = vmatprep.subr.mxu0 0.0
    %2975 = vmatpush1.msra.mxu0 0.0
    %2976 = vmatprep.subr.mxu0 0.0
    %2977 = vmatpush1.msra.mxu0 0.0
    %2978 = vmatprep.mubr.f32.mxu0 0.0
    %2979 = vmatmul.mubr.f32.gmra.mrb[0].mxu0 %v2194
    %v2980 = vpop.f32.mrb[0].mxu0
    %v2981 = vadd.f32 0.0, %v2980
    %v2982 = vpop.f32.mrb[0].mxu0
    %2983 = vmatprep.mubr.f32.mxu0 0.0
    %2984 = vmatmul.mubr.f32.gmra.mrb[0].mxu0 %v2199
    %v2985 = vpop.f32.mrb[0].mxu0
    %v2986 = vadd.f32 0.0, %v2985
    %v2987 = vpop.f32.mrb[0].mxu0
    %2988 = vmatprep.mubr.f32.mxu0 0.0
    %2989 = vmatmul.mubr.f32.gmra.mrb[0].mxu0 %v2204
    %v2990 = vpop.f32.mrb[0].mxu0
    %v2991 = vadd.f32 0.0, %v2990
    %v2992 = vpop.f32.mrb[0].mxu0
    %2993 = vmatprep.mubr.f32.mxu0 0.0
    %2994 = vmatmul.mubr.f32.gmra.mrb[0].mxu0 %v2209
    %v2995 = vpop.f32.mrb[0].mxu0
    %v2996 = vadd.f32 0.0, %v2995
    %v2997 = vpop.f32.mrb[0].mxu0
    %2998 = vmatprep.mubr.f32.mxu0 0.0
    %2999 = vmatmul.mubr.f32.gmra.mrb[0].mxu0 %v2214
    %v3000 = vpop.f32.mrb[0].mxu0
    %v3001 = vadd.f32 0.0, %v3000
    %v3002 = vpop.f32.mrb[0].mxu0
    %3003 = vmatprep.mubr.f32.mxu0 0.0
    %3004 = vmatmul.mubr.f32.gmra.mrb[0].mxu0 %v2219
    %v3005 = vpop.f32.mrb[0].mxu0
    %v3006 = vadd.f32 0.0, %v3005
    %v3007 = vpop.f32.mrb[0].mxu0
    %3008 = vmatprep.mubr.f32.mxu0 0.0
    %3009 = vmatmul.mubr.f32.gmra.mrb[0].mxu0 %v2224
    %v3010 = vpop.f32.mrb[0].mxu0
    %v3011 = vadd.f32 0.0, %v3010
    %v3012 = vpop.f32.mrb[0].mxu0
    %3013 = vmatprep.mubr.f32.mxu0 0.0
    %3014 = vmatmul.mubr.f32.gmra.mrb[0].mxu0 %v2229
    %v3015 = vpop.f32.mrb[0].mxu0
    %v3016 = vadd.f32 0.0, %v3015
    %v3017 = vpop.f32.mrb[0].mxu0
    %3018 = vmatprep.mubr.f32.mxu0 0.0
    %3019 = vmatmul.mubr.f32.gmra.mrb[0].mxu0 %v2234
    %v3020 = vpop.f32.mrb[0].mxu0
    %v3021 = vadd.f32 0.0, %v3020
    %v3022 = vpop.f32.mrb[0].mxu0
    %3023 = vmatprep.mubr.f32.mxu0 0.0
    %3024 = vmatmul.mubr.f32.gmra.mrb[0].mxu0 %v2239
    %v3025 = vpop.f32.mrb[0].mxu0
    %v3026 = vadd.f32 0.0, %v3025
    %v3027 = vpop.f32.mrb[0].mxu0
    %3028 = vmatprep.mubr.f32.mxu0 0.0
    %3029 = vmatmul.mubr.f32.gmra.mrb[0].mxu0 %v2244
    %v3030 = vpop.f32.mrb[0].mxu0
    %v3031 = vadd.f32 0.0, %v3030
    %v3032 = vpop.f32.mrb[0].mxu0
    %3033 = vmatprep.mubr.f32.mxu0 0.0
    %3034 = vmatmul.mubr.f32.gmra.mrb[0].mxu0 %v2249
    %v3035 = vpop.f32.mrb[0].mxu0
    %v3036 = vadd.f32 0.0, %v3035
    %v3037 = vpop.f32.mrb[0].mxu0
    %3038 = vmatprep.mubr.f32.mxu0 0.0
    %3039 = vmatmul.mubr.f32.gmra.mrb[0].mxu0 %v2254
    %v3040 = vpop.f32.mrb[0].mxu0
    %v3041 = vadd.f32 0.0, %v3040
    %v3042 = vpop.f32.mrb[0].mxu0
    %3043 = vmatprep.mubr.f32.mxu0 0.0
    %3044 = vmatmul.mubr.f32.gmra.mrb[0].mxu0 %v2259
    %v3045 = vpop.f32.mrb[0].mxu0
    %v3046 = vadd.f32 0.0, %v3045
    %v3047 = vpop.f32.mrb[0].mxu0
    %3048 = vmatprep.mubr.f32.mxu0 0.0
    %3049 = vmatmul.mubr.f32.gmra.mrb[0].mxu0 %v2264
    %v3050 = vpop.f32.mrb[0].mxu0
    %v3051 = vadd.f32 0.0, %v3050
    %v3052 = vpop.f32.mrb[0].mxu0
    %3053 = vmatprep.mubr.f32.mxu0 0.0
    %3054 = vmatmul.mubr.f32.gmra.mrb[0].mxu0 %v2269
    %v3055 = vpop.f32.mrb[0].mxu0
    %v3056 = vadd.f32 0.0, %v3055
    %v3057 = vpop.f32.mrb[0].mxu0
    %3058 = vdwg.mxu0
    %v3059 = vadd.f32 %v2898, %v2981
    %v3060 = vadd.f32 %v2899, %v2986
    %v3061 = vadd.f32 %v2900, %v2991
    %v3062 = vadd.f32 %v2901, %v2996
    %v3063 = vadd.f32 %v2902, %v3001
    %v3064 = vadd.f32 %v2903, %v3006
    %v3065 = vadd.f32 %v2904, %v3011
    %v3066 = vadd.f32 %v2905, %v3016
    %v3067 = vadd.f32 %v2906, %v3021
    %v3068 = vadd.f32 %v2907, %v3026
    %v3069 = vadd.f32 %v2908, %v3031
    %v3070 = vadd.f32 %v2909, %v3036
    %v3071 = vadd.f32 %v2910, %v3041
    %v3072 = vadd.f32 %v2911, %v3046
    %v3073 = vadd.f32 %v2912, %v3051
    %v3074 = vadd.f32 %v2913, %v3056
    %3075 = vmatprep.subr.mxu0 0.0
    %3076 = vmatpush1.msra.mxu0 %v554
    %3077 = vmatprep.subr.mxu0 0.0
    %3078 = vmatpush1.msra.mxu0 %v555
    %3079 = vmatprep.subr.mxu0 0.0
    %3080 = vmatpush1.msra.mxu0 %v556
    %3081 = vmatprep.subr.mxu0 0.0
    %3082 = vmatpush1.msra.mxu0 %v557
    %3083 = vmatprep.subr.mxu0 0.0
    %3084 = vmatpush1.msra.mxu0 %v558
    %3085 = vmatprep.subr.mxu0 0.0
    %3086 = vmatpush1.msra.mxu0 %v559
    %3087 = vmatprep.subr.mxu0 0.0
    %3088 = vmatpush1.msra.mxu0 %v560
    %3089 = vmatprep.subr.mxu0 0.0
    %3090 = vmatpush1.msra.mxu0 %v561
    %3091 = vmatprep.subr.mxu0 0.0
    %3092 = vmatpush1.msra.mxu0 %v562
    %3093 = vmatprep.subr.mxu0 0.0
    %3094 = vmatpush1.msra.mxu0 %v563
    %3095 = vmatprep.subr.mxu0 0.0
    %3096 = vmatpush1.msra.mxu0 %v564
    %3097 = vmatprep.subr.mxu0 0.0
    %3098 = vmatpush1.msra.mxu0 %v565
    %3099 = vmatprep.subr.mxu0 0.0
    %3100 = vmatpush1.msra.mxu0 %v566
    %3101 = vmatprep.subr.mxu0 0.0
    %3102 = vmatpush1.msra.mxu0 %v567
    %3103 = vmatprep.subr.mxu0 0.0
    %3104 = vmatpush1.msra.mxu0 %v568
    %3105 = vmatprep.subr.mxu0 0.0
    %3106 = vmatpush1.msra.mxu0 %v569
    %3107 = vmatprep.subr.mxu0 0.0
    %3108 = vmatpush1.msra.mxu0 0.0
    %3109 = vmatprep.subr.mxu0 0.0
    %3110 = vmatpush1.msra.mxu0 0.0
    %3111 = vmatprep.subr.mxu0 0.0
    %3112 = vmatpush1.msra.mxu0 0.0
    %3113 = vmatprep.subr.mxu0 0.0
    %3114 = vmatpush1.msra.mxu0 0.0
    %3115 = vmatprep.subr.mxu0 0.0
    %3116 = vmatpush1.msra.mxu0 0.0
    %3117 = vmatprep.subr.mxu0 0.0
    %3118 = vmatpush1.msra.mxu0 0.0
    %3119 = vmatprep.subr.mxu0 0.0
    %3120 = vmatpush1.msra.mxu0 0.0
    %3121 = vmatprep.subr.mxu0 0.0
    %3122 = vmatpush1.msra.mxu0 0.0
    %3123 = vmatprep.subr.mxu0 0.0
    %3124 = vmatpush1.msra.mxu0 0.0
    %3125 = vmatprep.subr.mxu0 0.0
    %3126 = vmatpush1.msra.mxu0 0.0
    %3127 = vmatprep.subr.mxu0 0.0
    %3128 = vmatpush1.msra.mxu0 0.0
    %3129 = vmatprep.subr.mxu0 0.0
    %3130 = vmatpush1.msra.mxu0 0.0
    %3131 = vmatprep.subr.mxu0 0.0
    %3132 = vmatpush1.msra.mxu0 0.0
    %3133 = vmatprep.subr.mxu0 0.0
    %3134 = vmatpush1.msra.mxu0 0.0
    %3135 = vmatprep.subr.mxu0 0.0
    %3136 = vmatpush1.msra.mxu0 0.0
    %3137 = vmatprep.subr.mxu0 0.0
    %3138 = vmatpush1.msra.mxu0 0.0
    %3139 = vmatprep.mubr.f32.mxu0 0.0
    %3140 = vmatmul.mubr.f32.gmra.mrb[0].mxu0 %v2274
    %v3141 = vpop.f32.mrb[0].mxu0
    %v3142 = vadd.f32 0.0, %v3141
    %v3143 = vpop.f32.mrb[0].mxu0
    %3144 = vmatprep.mubr.f32.mxu0 0.0
    %3145 = vmatmul.mubr.f32.gmra.mrb[0].mxu0 %v2279
    %v3146 = vpop.f32.mrb[0].mxu0
    %v3147 = vadd.f32 0.0, %v3146
    %v3148 = vpop.f32.mrb[0].mxu0
    %3149 = vmatprep.mubr.f32.mxu0 0.0
    %3150 = vmatmul.mubr.f32.gmra.mrb[0].mxu0 %v2284
    %v3151 = vpop.f32.mrb[0].mxu0
    %v3152 = vadd.f32 0.0, %v3151
    %v3153 = vpop.f32.mrb[0].mxu0
    %3154 = vmatprep.mubr.f32.mxu0 0.0
    %3155 = vmatmul.mubr.f32.gmra.mrb[0].mxu0 %v2289
    %v3156 = vpop.f32.mrb[0].mxu0
    %v3157 = vadd.f32 0.0, %v3156
    %v3158 = vpop.f32.mrb[0].mxu0
    %3159 = vmatprep.mubr.f32.mxu0 0.0
    %3160 = vmatmul.mubr.f32.gmra.mrb[0].mxu0 %v2294
    %v3161 = vpop.f32.mrb[0].mxu0
    %v3162 = vadd.f32 0.0, %v3161
    %v3163 = vpop.f32.mrb[0].mxu0
    %3164 = vmatprep.mubr.f32.mxu0 0.0
    %3165 = vmatmul.mubr.f32.gmra.mrb[0].mxu0 %v2299
    %v3166 = vpop.f32.mrb[0].mxu0
    %v3167 = vadd.f32 0.0, %v3166
    %v3168 = vpop.f32.mrb[0].mxu0
    %3169 = vmatprep.mubr.f32.mxu0 0.0
    %3170 = vmatmul.mubr.f32.gmra.mrb[0].mxu0 %v2304
    %v3171 = vpop.f32.mrb[0].mxu0
    %v3172 = vadd.f32 0.0, %v3171
    %v3173 = vpop.f32.mrb[0].mxu0
    %3174 = vmatprep.mubr.f32.mxu0 0.0
    %3175 = vmatmul.mubr.f32.gmra.mrb[0].mxu0 %v2309
    %v3176 = vpop.f32.mrb[0].mxu0
    %v3177 = vadd.f32 0.0, %v3176
    %v3178 = vpop.f32.mrb[0].mxu0
    %3179 = vmatprep.mubr.f32.mxu0 0.0
    %3180 = vmatmul.mubr.f32.gmra.mrb[0].mxu0 %v2314
    %v3181 = vpop.f32.mrb[0].mxu0
    %v3182 = vadd.f32 0.0, %v3181
    %v3183 = vpop.f32.mrb[0].mxu0
    %3184 = vmatprep.mubr.f32.mxu0 0.0
    %3185 = vmatmul.mubr.f32.gmra.mrb[0].mxu0 %v2319
    %v3186 = vpop.f32.mrb[0].mxu0
    %v3187 = vadd.f32 0.0, %v3186
    %v3188 = vpop.f32.mrb[0].mxu0
    %3189 = vmatprep.mubr.f32.mxu0 0.0
    %3190 = vmatmul.mubr.f32.gmra.mrb[0].mxu0 %v2324
    %v3191 = vpop.f32.mrb[0].mxu0
    %v3192 = vadd.f32 0.0, %v3191
    %v3193 = vpop.f32.mrb[0].mxu0
    %3194 = vmatprep.mubr.f32.mxu0 0.0
    %3195 = vmatmul.mubr.f32.gmra.mrb[0].mxu0 %v2329
    %v3196 = vpop.f32.mrb[0].mxu0
    %v3197 = vadd.f32 0.0, %v3196
    %v3198 = vpop.f32.mrb[0].mxu0
    %3199 = vmatprep.mubr.f32.mxu0 0.0
    %3200 = vmatmul.mubr.f32.gmra.mrb[0].mxu0 %v2334
    %v3201 = vpop.f32.mrb[0].mxu0
    %v3202 = vadd.f32 0.0, %v3201
    %v3203 = vpop.f32.mrb[0].mxu0
    %3204 = vmatprep.mubr.f32.mxu0 0.0
    %3205 = vmatmul.mubr.f32.gmra.mrb[0].mxu0 %v2339
    %v3206 = vpop.f32.mrb[0].mxu0
    %v3207 = vadd.f32 0.0, %v3206
    %v3208 = vpop.f32.mrb[0].mxu0
    %3209 = vmatprep.mubr.f32.mxu0 0.0
    %3210 = vmatmul.mubr.f32.gmra.mrb[0].mxu0 %v2344
    %v3211 = vpop.f32.mrb[0].mxu0
    %v3212 = vadd.f32 0.0, %v3211
    %v3213 = vpop.f32.mrb[0].mxu0
    %3214 = vmatprep.mubr.f32.mxu0 0.0
    %3215 = vmatmul.mubr.f32.gmra.mrb[0].mxu0 %v2349
    %v3216 = vpop.f32.mrb[0].mxu0
    %v3217 = vadd.f32 0.0, %v3216
    %v3218 = vpop.f32.mrb[0].mxu0
    %3219 = vdwg.mxu0
    %v3220 = vadd.f32 %v3059, %v3142
    %v3221 = vadd.f32 %v3060, %v3147
    %v3222 = vadd.f32 %v3061, %v3152
    %v3223 = vadd.f32 %v3062, %v3157
    %v3224 = vadd.f32 %v3063, %v3162
    %v3225 = vadd.f32 %v3064, %v3167
    %v3226 = vadd.f32 %v3065, %v3172
    %v3227 = vadd.f32 %v3066, %v3177
    %v3228 = vadd.f32 %v3067, %v3182
    %v3229 = vadd.f32 %v3068, %v3187
    %v3230 = vadd.f32 %v3069, %v3192
    %v3231 = vadd.f32 %v3070, %v3197
    %v3232 = vadd.f32 %v3071, %v3202
    %v3233 = vadd.f32 %v3072, %v3207
    %v3234 = vadd.f32 %v3073, %v3212
    %v3235 = vadd.f32 %v3074, %v3217
    %3236 = vmatprep.subr.mxu0 0.0
    %3237 = vmatpush1.msra.mxu0 %v602
    %3238 = vmatprep.subr.mxu0 0.0
    %3239 = vmatpush1.msra.mxu0 %v603
    %3240 = vmatprep.subr.mxu0 0.0
    %3241 = vmatpush1.msra.mxu0 %v604
    %3242 = vmatprep.subr.mxu0 0.0
    %3243 = vmatpush1.msra.mxu0 %v605
    %3244 = vmatprep.subr.mxu0 0.0
    %3245 = vmatpush1.msra.mxu0 %v606
    %3246 = vmatprep.subr.mxu0 0.0
    %3247 = vmatpush1.msra.mxu0 %v607
    %3248 = vmatprep.subr.mxu0 0.0
    %3249 = vmatpush1.msra.mxu0 %v608
    %3250 = vmatprep.subr.mxu0 0.0
    %3251 = vmatpush1.msra.mxu0 %v609
    %3252 = vmatprep.subr.mxu0 0.0
    %3253 = vmatpush1.msra.mxu0 %v610
    %3254 = vmatprep.subr.mxu0 0.0
    %3255 = vmatpush1.msra.mxu0 %v611
    %3256 = vmatprep.subr.mxu0 0.0
    %3257 = vmatpush1.msra.mxu0 %v612
    %3258 = vmatprep.subr.mxu0 0.0
    %3259 = vmatpush1.msra.mxu0 %v613
    %3260 = vmatprep.subr.mxu0 0.0
    %3261 = vmatpush1.msra.mxu0 %v614
    %3262 = vmatprep.subr.mxu0 0.0
    %3263 = vmatpush1.msra.mxu0 %v615
    %3264 = vmatprep.subr.mxu0 0.0
    %3265 = vmatpush1.msra.mxu0 %v616
    %3266 = vmatprep.subr.mxu0 0.0
    %3267 = vmatpush1.msra.mxu0 %v617
    %3268 = vmatprep.subr.mxu0 0.0
    %3269 = vmatpush1.msra.mxu0 0.0
    %3270 = vmatprep.subr.mxu0 0.0
    %3271 = vmatpush1.msra.mxu0 0.0
    %3272 = vmatprep.subr.mxu0 0.0
    %3273 = vmatpush1.msra.mxu0 0.0
    %3274 = vmatprep.subr.mxu0 0.0
    %3275 = vmatpush1.msra.mxu0 0.0
    %3276 = vmatprep.subr.mxu0 0.0
    %3277 = vmatpush1.msra.mxu0 0.0
    %3278 = vmatprep.subr.mxu0 0.0
    %3279 = vmatpush1.msra.mxu0 0.0
    %3280 = vmatprep.subr.mxu0 0.0
    %3281 = vmatpush1.msra.mxu0 0.0
    %3282 = vmatprep.subr.mxu0 0.0
    %3283 = vmatpush1.msra.mxu0 0.0
    %3284 = vmatprep.subr.mxu0 0.0
    %3285 = vmatpush1.msra.mxu0 0.0
    %3286 = vmatprep.subr.mxu0 0.0
    %3287 = vmatpush1.msra.mxu0 0.0
    %3288 = vmatprep.subr.mxu0 0.0
    %3289 = vmatpush1.msra.mxu0 0.0
    %3290 = vmatprep.subr.mxu0 0.0
    %3291 = vmatpush1.msra.mxu0 0.0
    %3292 = vmatprep.subr.mxu0 0.0
    %3293 = vmatpush1.msra.mxu0 0.0
    %3294 = vmatprep.subr.mxu0 0.0
    %3295 = vmatpush1.msra.mxu0 0.0
    %3296 = vmatprep.subr.mxu0 0.0
    %3297 = vmatpush1.msra.mxu0 0.0
    %3298 = vmatprep.subr.mxu0 0.0
    %3299 = vmatpush1.msra.mxu0 0.0
    %3300 = vmatprep.mubr.f32.mxu0 0.0
    %3301 = vmatmul.mubr.f32.gmra.mrb[0].mxu0 %v2354
    %v3302 = vpop.f32.mrb[0].mxu0
    %v3303 = vadd.f32 0.0, %v3302
    %v3304 = vpop.f32.mrb[0].mxu0
    %3305 = vmatprep.mubr.f32.mxu0 0.0
    %3306 = vmatmul.mubr.f32.gmra.mrb[0].mxu0 %v2359
    %v3307 = vpop.f32.mrb[0].mxu0
    %v3308 = vadd.f32 0.0, %v3307
    %v3309 = vpop.f32.mrb[0].mxu0
    %3310 = vmatprep.mubr.f32.mxu0 0.0
    %3311 = vmatmul.mubr.f32.gmra.mrb[0].mxu0 %v2364
    %v3312 = vpop.f32.mrb[0].mxu0
    %v3313 = vadd.f32 0.0, %v3312
    %v3314 = vpop.f32.mrb[0].mxu0
    %3315 = vmatprep.mubr.f32.mxu0 0.0
    %3316 = vmatmul.mubr.f32.gmra.mrb[0].mxu0 %v2369
    %v3317 = vpop.f32.mrb[0].mxu0
    %v3318 = vadd.f32 0.0, %v3317
    %v3319 = vpop.f32.mrb[0].mxu0
    %3320 = vmatprep.mubr.f32.mxu0 0.0
    %3321 = vmatmul.mubr.f32.gmra.mrb[0].mxu0 %v2374
    %v3322 = vpop.f32.mrb[0].mxu0
    %v3323 = vadd.f32 0.0, %v3322
    %v3324 = vpop.f32.mrb[0].mxu0
    %3325 = vmatprep.mubr.f32.mxu0 0.0
    %3326 = vmatmul.mubr.f32.gmra.mrb[0].mxu0 %v2379
    %v3327 = vpop.f32.mrb[0].mxu0
    %v3328 = vadd.f32 0.0, %v3327
    %v3329 = vpop.f32.mrb[0].mxu0
    %3330 = vmatprep.mubr.f32.mxu0 0.0
    %3331 = vmatmul.mubr.f32.gmra.mrb[0].mxu0 %v2384
    %v3332 = vpop.f32.mrb[0].mxu0
    %v3333 = vadd.f32 0.0, %v3332
    %v3334 = vpop.f32.mrb[0].mxu0
    %3335 = vmatprep.mubr.f32.mxu0 0.0
    %3336 = vmatmul.mubr.f32.gmra.mrb[0].mxu0 %v2389
    %v3337 = vpop.f32.mrb[0].mxu0
    %v3338 = vadd.f32 0.0, %v3337
    %v3339 = vpop.f32.mrb[0].mxu0
    %3340 = vmatprep.mubr.f32.mxu0 0.0
    %3341 = vmatmul.mubr.f32.gmra.mrb[0].mxu0 %v2394
    %v3342 = vpop.f32.mrb[0].mxu0
    %v3343 = vadd.f32 0.0, %v3342
    %v3344 = vpop.f32.mrb[0].mxu0
    %3345 = vmatprep.mubr.f32.mxu0 0.0
    %3346 = vmatmul.mubr.f32.gmra.mrb[0].mxu0 %v2399
    %v3347 = vpop.f32.mrb[0].mxu0
    %v3348 = vadd.f32 0.0, %v3347
    %v3349 = vpop.f32.mrb[0].mxu0
    %3350 = vmatprep.mubr.f32.mxu0 0.0
    %3351 = vmatmul.mubr.f32.gmra.mrb[0].mxu0 %v2404
    %v3352 = vpop.f32.mrb[0].mxu0
    %v3353 = vadd.f32 0.0, %v3352
    %v3354 = vpop.f32.mrb[0].mxu0
    %3355 = vmatprep.mubr.f32.mxu0 0.0
    %3356 = vmatmul.mubr.f32.gmra.mrb[0].mxu0 %v2409
    %v3357 = vpop.f32.mrb[0].mxu0
    %v3358 = vadd.f32 0.0, %v3357
    %v3359 = vpop.f32.mrb[0].mxu0
    %3360 = vmatprep.mubr.f32.mxu0 0.0
    %3361 = vmatmul.mubr.f32.gmra.mrb[0].mxu0 %v2414
    %v3362 = vpop.f32.mrb[0].mxu0
    %v3363 = vadd.f32 0.0, %v3362
    %v3364 = vpop.f32.mrb[0].mxu0
    %3365 = vmatprep.mubr.f32.mxu0 0.0
    %3366 = vmatmul.mubr.f32.gmra.mrb[0].mxu0 %v2419
    %v3367 = vpop.f32.mrb[0].mxu0
    %v3368 = vadd.f32 0.0, %v3367
    %v3369 = vpop.f32.mrb[0].mxu0
    %3370 = vmatprep.mubr.f32.mxu0 0.0
    %3371 = vmatmul.mubr.f32.gmra.mrb[0].mxu0 %v2424
    %v3372 = vpop.f32.mrb[0].mxu0
    %v3373 = vadd.f32 0.0, %v3372
    %v3374 = vpop.f32.mrb[0].mxu0
    %3375 = vmatprep.mubr.f32.mxu0 0.0
    %3376 = vmatmul.mubr.f32.gmra.mrb[0].mxu0 %v2429
    %v3377 = vpop.f32.mrb[0].mxu0
    %v3378 = vadd.f32 0.0, %v3377
    %v3379 = vpop.f32.mrb[0].mxu0
    %3380 = vdwg.mxu0
    %v3381 = vadd.f32 %v3220, %v3303
    %v3382 = vadd.f32 %v3221, %v3308
    %v3383 = vadd.f32 %v3222, %v3313
    %v3384 = vadd.f32 %v3223, %v3318
    %v3385 = vadd.f32 %v3224, %v3323
    %v3386 = vadd.f32 %v3225, %v3328
    %v3387 = vadd.f32 %v3226, %v3333
    %v3388 = vadd.f32 %v3227, %v3338
    %v3389 = vadd.f32 %v3228, %v3343
    %v3390 = vadd.f32 %v3229, %v3348
    %v3391 = vadd.f32 %v3230, %v3353
    %v3392 = vadd.f32 %v3231, %v3358
    %v3393 = vadd.f32 %v3232, %v3363
    %v3394 = vadd.f32 %v3233, %v3368
    %v3395 = vadd.f32 %v3234, %v3373
    %v3396 = vadd.f32 %v3235, %v3378
    %v3397 = vadd.f32 %v3381, %v3382
    %v3398 = vadd.f32 %v3397, %v3383
    %v3399 = vadd.f32 %v3398, %v3384
    %v3400 = vadd.f32 %v3399, %v3385
    %v3401 = vadd.f32 %v3400, %v3386
    %v3402 = vadd.f32 %v3401, %v3387
    %v3403 = vadd.f32 %v3402, %v3388
    %v3404 = vadd.f32 %v3403, %v3389
    %v3405 = vadd.f32 %v3404, %v3390
    %v3406 = vadd.f32 %v3405, %v3391
    %v3407 = vadd.f32 %v3406, %v3392
    %v3408 = vadd.f32 %v3407, %v3393
    %v3409 = vadd.f32 %v3408, %v3394
    %v3410 = vadd.f32 %v3409, %v3395
    %v3411 = vadd.f32 %v3410, %v3396
    %3412 = vadd.xlane.f32.xlu0 %v3411
    %v3413 = vpop.xlane.xlu0 %3412
    %v3414 = vrot.slane %v3413, 4
    %v3415 = vadd.f32 %v3413, %v3414
    %v3416 = vrot.slane %v3415, 2
    %v3417 = vadd.f32 %v3415, %v3416
    %v3418 = vrot.slane %v3417, 1
    %v3419 = vadd.f32 %v3417, %v3418
    %s3420 = vtos %v3419
    %v3421 = vstv %s3420
    %v3422 = vrcp.pop 16384.0
    %v3423 = vmul.f32 %v3421, %v3422
    %v3424 = vsub.f32 %v3381, %v3423
    %v3425 = vsub.f32 %v3382, %v3423
    %v3426 = vsub.f32 %v3383, %v3423
    %v3427 = vsub.f32 %v3384, %v3423
    %v3428 = vsub.f32 %v3385, %v3423
    %v3429 = vsub.f32 %v3386, %v3423
    %v3430 = vsub.f32 %v3387, %v3423
    %v3431 = vsub.f32 %v3388, %v3423
    %v3432 = vsub.f32 %v3389, %v3423
    %v3433 = vsub.f32 %v3390, %v3423
    %v3434 = vsub.f32 %v3391, %v3423
    %v3435 = vsub.f32 %v3392, %v3423
    %v3436 = vsub.f32 %v3393, %v3423
    %v3437 = vsub.f32 %v3394, %v3423
    %v3438 = vsub.f32 %v3395, %v3423
    %v3439 = vsub.f32 %v3396, %v3423
    %v3440 = vmul.f32 %v3424, %v3424
    %v3441 = vmul.f32 %v3425, %v3425
    %v3442 = vmul.f32 %v3426, %v3426
    %v3443 = vmul.f32 %v3427, %v3427
    %v3444 = vmul.f32 %v3428, %v3428
    %v3445 = vmul.f32 %v3429, %v3429
    %v3446 = vmul.f32 %v3430, %v3430
    %v3447 = vmul.f32 %v3431, %v3431
    %v3448 = vmul.f32 %v3432, %v3432
    %v3449 = vmul.f32 %v3433, %v3433
    %v3450 = vmul.f32 %v3434, %v3434
    %v3451 = vmul.f32 %v3435, %v3435
    %v3452 = vmul.f32 %v3436, %v3436
    %v3453 = vmul.f32 %v3437, %v3437
    %v3454 = vmul.f32 %v3438, %v3438
    %v3455 = vmul.f32 %v3439, %v3439
    %v3456 = vadd.f32 %v3440, %v3441
    %v3457 = vadd.f32 %v3456, %v3442
    %v3458 = vadd.f32 %v3457, %v3443
    %v3459 = vadd.f32 %v3458, %v3444
    %v3460 = vadd.f32 %v3459, %v3445
    %v3461 = vadd.f32 %v3460, %v3446
    %v3462 = vadd.f32 %v3461, %v3447
    %v3463 = vadd.f32 %v3462, %v3448
    %v3464 = vadd.f32 %v3463, %v3449
    %v3465 = vadd.f32 %v3464, %v3450
    %v3466 = vadd.f32 %v3465, %v3451
    %v3467 = vadd.f32 %v3466, %v3452
    %v3468 = vadd.f32 %v3467, %v3453
    %v3469 = vadd.f32 %v3468, %v3454
    %v3470 = vadd.f32 %v3469, %v3455
    %3471 = vadd.xlane.f32.xlu0 %v3470
    %v3472 = vpop.xlane.xlu0 %3471
    %v3473 = vrot.slane %v3472, 4
    %v3474 = vadd.f32 %v3472, %v3473
    %v3475 = vrot.slane %v3474, 2
    %v3476 = vadd.f32 %v3474, %v3475
    %v3477 = vrot.slane %v3476, 1
    %v3478 = vadd.f32 %v3476, %v3477
    %s3479 = vtos %v3478
    %v3480 = vstv %s3479
    %v3481 = vmul.f32 %v3480, %v3422
    %v3482 = vadd.f32 %v3481, 1e-05
    %v3483 = vrsqrt.pop %v3482
    %v3484 = vmul.f32 %v3424, %v3483
    %v3485 = vmul.f32 %v3425, %v3483
    %v3486 = vmul.f32 %v3426, %v3483
    %v3487 = vmul.f32 %v3427, %v3483
    %v3488 = vmul.f32 %v3428, %v3483
    %v3489 = vmul.f32 %v3429, %v3483
    %v3490 = vmul.f32 %v3430, %v3483
    %v3491 = vmul.f32 %v3431, %v3483
    %v3492 = vmul.f32 %v3432, %v3483
    %v3493 = vmul.f32 %v3433, %v3483
    %v3494 = vmul.f32 %v3434, %v3483
    %v3495 = vmul.f32 %v3435, %v3483
    %v3496 = vmul.f32 %v3436, %v3483
    %v3497 = vmul.f32 %v3437, %v3483
    %v3498 = vmul.f32 %v3438, %v3483
    %v3499 = vmul.f32 %v3439, %v3483
    %3501 = vset.pattern.permute.xlu0 0
    %3502 = vperm.xlu0 %3501, %v278
    %v3503 = vpop.permute.xlu0 %3502
    %3506 = vset.pattern.permute.xlu0 0
    %3507 = vperm.xlu0 %3506, %v279
    %v3508 = vpop.permute.xlu0 %3507
    %3511 = vset.pattern.permute.xlu0 0
    %3512 = vperm.xlu0 %3511, %v280
    %v3513 = vpop.permute.xlu0 %3512
    %3516 = vset.pattern.permute.xlu0 0
    %3517 = vperm.xlu0 %3516, %v281
    %v3518 = vpop.permute.xlu0 %3517
    %3521 = vset.pattern.permute.xlu0 0
    %3522 = vperm.xlu0 %3521, %v282
    %v3523 = vpop.permute.xlu0 %3522
    %3526 = vset.pattern.permute.xlu0 0
    %3527 = vperm.xlu0 %3526, %v283
    %v3528 = vpop.permute.xlu0 %3527
    %3531 = vset.pattern.permute.xlu0 0
    %3532 = vperm.xlu0 %3531, %v284
    %v3533 = vpop.permute.xlu0 %3532
    %3536 = vset.pattern.permute.xlu0 0
    %3537 = vperm.xlu0 %3536, %v285
    %v3538 = vpop.permute.xlu0 %3537
    %3541 = vset.pattern.permute.xlu0 0
    %3542 = vperm.xlu0 %3541, %v286
    %v3543 = vpop.permute.xlu0 %3542
    %3546 = vset.pattern.permute.xlu0 0
    %3547 = vperm.xlu0 %3546, %v287
    %v3548 = vpop.permute.xlu0 %3547
    %3551 = vset.pattern.permute.xlu0 0
    %3552 = vperm.xlu0 %3551, %v288
    %v3553 = vpop.permute.xlu0 %3552
    %3556 = vset.pattern.permute.xlu0 0
    %3557 = vperm.xlu0 %3556, %v289
    %v3558 = vpop.permute.xlu0 %3557
    %3561 = vset.pattern.permute.xlu0 0
    %3562 = vperm.xlu0 %3561, %v290
    %v3563 = vpop.permute.xlu0 %3562
    %3566 = vset.pattern.permute.xlu0 0
    %3567 = vperm.xlu0 %3566, %v291
    %v3568 = vpop.permute.xlu0 %3567
    %3571 = vset.pattern.permute.xlu0 0
    %3572 = vperm.xlu0 %3571, %v292
    %v3573 = vpop.permute.xlu0 %3572
    %3576 = vset.pattern.permute.xlu0 0
    %3577 = vperm.xlu0 %3576, %v293
    %v3578 = vpop.permute.xlu0 %3577
    %v3580 = vmul.f32 %v3484, %v3503
    %v3581 = vmul.f32 %v3485, %v3508
    %v3582 = vmul.f32 %v3486, %v3513
    %v3583 = vmul.f32 %v3487, %v3518
    %v3584 = vmul.f32 %v3488, %v3523
    %v3585 = vmul.f32 %v3489, %v3528
    %v3586 = vmul.f32 %v3490, %v3533
    %v3587 = vmul.f32 %v3491, %v3538
    %v3588 = vmul.f32 %v3492, %v3543
    %v3589 = vmul.f32 %v3493, %v3548
    %v3590 = vmul.f32 %v3494, %v3553
    %v3591 = vmul.f32 %v3495, %v3558
    %v3592 = vmul.f32 %v3496, %v3563
    %v3593 = vmul.f32 %v3497, %v3568
    %v3594 = vmul.f32 %v3498, %v3573
    %v3595 = vmul.f32 %v3499, %v3578
    %3597 = vset.pattern.permute.xlu0 0
    %3598 = vperm.xlu0 %3597, %v294
    %v3599 = vpop.permute.xlu0 %3598
    %3602 = vset.pattern.permute.xlu0 0
    %3603 = vperm.xlu0 %3602, %v295
    %v3604 = vpop.permute.xlu0 %3603
    %3607 = vset.pattern.permute.xlu0 0
    %3608 = vperm.xlu0 %3607, %v296
    %v3609 = vpop.permute.xlu0 %3608
    %3612 = vset.pattern.permute.xlu0 0
    %3613 = vperm.xlu0 %3612, %v297
    %v3614 = vpop.permute.xlu0 %3613
    %3617 = vset.pattern.permute.xlu0 0
    %3618 = vperm.xlu0 %3617, %v298
    %v3619 = vpop.permute.xlu0 %3618
    %3622 = vset.pattern.permute.xlu0 0
    %3623 = vperm.xlu0 %3622, %v299
    %v3624 = vpop.permute.xlu0 %3623
    %3627 = vset.pattern.permute.xlu0 0
    %3628 = vperm.xlu0 %3627, %v300
    %v3629 = vpop.permute.xlu0 %3628
    %3632 = vset.pattern.permute.xlu0 0
    %3633 = vperm.xlu0 %3632, %v301
    %v3634 = vpop.permute.xlu0 %3633
    %3637 = vset.pattern.permute.xlu0 0
    %3638 = vperm.xlu0 %3637, %v302
    %v3639 = vpop.permute.xlu0 %3638
    %3642 = vset.pattern.permute.xlu0 0
    %3643 = vperm.xlu0 %3642, %v303
    %v3644 = vpop.permute.xlu0 %3643
    %3647 = vset.pattern.permute.xlu0 0
    %3648 = vperm.xlu0 %3647, %v304
    %v3649 = vpop.permute.xlu0 %3648
    %3652 = vset.pattern.permute.xlu0 0
    %3653 = vperm.xlu0 %3652, %v305
    %v3654 = vpop.permute.xlu0 %3653
    %3657 = vset.pattern.permute.xlu0 0
    %3658 = vperm.xlu0 %3657, %v306
    %v3659 = vpop.permute.xlu0 %3658
    %3662 = vset.pattern.permute.xlu0 0
    %3663 = vperm.xlu0 %3662, %v307
    %v3664 = vpop.permute.xlu0 %3663
    %3667 = vset.pattern.permute.xlu0 0
    %3668 = vperm.xlu0 %3667, %v308
    %v3669 = vpop.permute.xlu0 %3668
    %3672 = vset.pattern.permute.xlu0 0
    %3673 = vperm.xlu0 %3672, %v309
    %v3674 = vpop.permute.xlu0 %3673
    %v3676 = vadd.f32 %v3580, %v3599
    %v3677 = vadd.f32 %v3581, %v3604
    %v3678 = vadd.f32 %v3582, %v3609
    %v3679 = vadd.f32 %v3583, %v3614
    %v3680 = vadd.f32 %v3584, %v3619
    %v3681 = vadd.f32 %v3585, %v3624
    %v3682 = vadd.f32 %v3586, %v3629
    %v3683 = vadd.f32 %v3587, %v3634
    %v3684 = vadd.f32 %v3588, %v3639
    %v3685 = vadd.f32 %v3589, %v3644
    %v3686 = vadd.f32 %v3590, %v3649
    %v3687 = vadd.f32 %v3591, %v3654
    %v3688 = vadd.f32 %v3592, %v3659
    %v3689 = vadd.f32 %v3593, %v3664
    %v3690 = vadd.f32 %v3594, %v3669
    %v3691 = vadd.f32 %v3595, %v3674
    %v3692 = vmul.f32 %v3676, 0.5
    %v3693 = vmul.f32 %v3677, 0.5
    %v3694 = vmul.f32 %v3678, 0.5
    %v3695 = vmul.f32 %v3679, 0.5
    %v3696 = vmul.f32 %v3680, 0.5
    %v3697 = vmul.f32 %v3681, 0.5
    %v3698 = vmul.f32 %v3682, 0.5
    %v3699 = vmul.f32 %v3683, 0.5
    %v3700 = vmul.f32 %v3684, 0.5
    %v3701 = vmul.f32 %v3685, 0.5
    %v3702 = vmul.f32 %v3686, 0.5
    %v3703 = vmul.f32 %v3687, 0.5
    %v3704 = vmul.f32 %v3688, 0.5
    %v3705 = vmul.f32 %v3689, 0.5
    %v3706 = vmul.f32 %v3690, 0.5
    %v3707 = vmul.f32 %v3691, 0.5
    %v3708 = vmul.f32 %v3676, 0.044715
    %v3709 = vmul.f32 %v3677, 0.044715
    %v3710 = vmul.f32 %v3678, 0.044715
    %v3711 = vmul.f32 %v3679, 0.044715
    %v3712 = vmul.f32 %v3680, 0.044715
    %v3713 = vmul.f32 %v3681, 0.044715
    %v3714 = vmul.f32 %v3682, 0.044715
    %v3715 = vmul.f32 %v3683, 0.044715
    %v3716 = vmul.f32 %v3684, 0.044715
    %v3717 = vmul.f32 %v3685, 0.044715
    %v3718 = vmul.f32 %v3686, 0.044715
    %v3719 = vmul.f32 %v3687, 0.044715
    %v3720 = vmul.f32 %v3688, 0.044715
    %v3721 = vmul.f32 %v3689, 0.044715
    %v3722 = vmul.f32 %v3690, 0.044715
    %v3723 = vmul.f32 %v3691, 0.044715
    %v3724 = vmul.f32 %v3708, %v3676
    %v3725 = vmul.f32 %v3709, %v3677
    %v3726 = vmul.f32 %v3710, %v3678
    %v3727 = vmul.f32 %v3711, %v3679
    %v3728 = vmul.f32 %v3712, %v3680
    %v3729 = vmul.f32 %v3713, %v3681
    %v3730 = vmul.f32 %v3714, %v3682
    %v3731 = vmul.f32 %v3715, %v3683
    %v3732 = vmul.f32 %v3716, %v3684
    %v3733 = vmul.f32 %v3717, %v3685
    %v3734 = vmul.f32 %v3718, %v3686
    %v3735 = vmul.f32 %v3719, %v3687
    %v3736 = vmul.f32 %v3720, %v3688
    %v3737 = vmul.f32 %v3721, %v3689
    %v3738 = vmul.f32 %v3722, %v3690
    %v3739 = vmul.f32 %v3723, %v3691
    %v3740 = vmul.f32 %v3724, %v3676
    %v3741 = vmul.f32 %v3725, %v3677
    %v3742 = vmul.f32 %v3726, %v3678
    %v3743 = vmul.f32 %v3727, %v3679
    %v3744 = vmul.f32 %v3728, %v3680
    %v3745 = vmul.f32 %v3729, %v3681
    %v3746 = vmul.f32 %v3730, %v3682
    %v3747 = vmul.f32 %v3731, %v3683
    %v3748 = vmul.f32 %v3732, %v3684
    %v3749 = vmul.f32 %v3733, %v3685
    %v3750 = vmul.f32 %v3734, %v3686
    %v3751 = vmul.f32 %v3735, %v3687
    %v3752 = vmul.f32 %v3736, %v3688
    %v3753 = vmul.f32 %v3737, %v3689
    %v3754 = vmul.f32 %v3738, %v3690
    %v3755 = vmul.f32 %v3739, %v3691
    %v3756 = vadd.f32 %v3676, %v3740
    %v3757 = vadd.f32 %v3677, %v3741
    %v3758 = vadd.f32 %v3678, %v3742
    %v3759 = vadd.f32 %v3679, %v3743
    %v3760 = vadd.f32 %v3680, %v3744
    %v3761 = vadd.f32 %v3681, %v3745
    %v3762 = vadd.f32 %v3682, %v3746
    %v3763 = vadd.f32 %v3683, %v3747
    %v3764 = vadd.f32 %v3684, %v3748
    %v3765 = vadd.f32 %v3685, %v3749
    %v3766 = vadd.f32 %v3686, %v3750
    %v3767 = vadd.f32 %v3687, %v3751
    %v3768 = vadd.f32 %v3688, %v3752
    %v3769 = vadd.f32 %v3689, %v3753
    %v3770 = vadd.f32 %v3690, %v3754
    %v3771 = vadd.f32 %v3691, %v3755
    %v3772 = vmul.f32 %v3756, 0.7978846
    %v3773 = vmul.f32 %v3757, 0.7978846
    %v3774 = vmul.f32 %v3758, 0.7978846
    %v3775 = vmul.f32 %v3759, 0.7978846
    %v3776 = vmul.f32 %v3760, 0.7978846
    %v3777 = vmul.f32 %v3761, 0.7978846
    %v3778 = vmul.f32 %v3762, 0.7978846
    %v3779 = vmul.f32 %v3763, 0.7978846
    %v3780 = vmul.f32 %v3764, 0.7978846
    %v3781 = vmul.f32 %v3765, 0.7978846
    %v3782 = vmul.f32 %v3766, 0.7978846
    %v3783 = vmul.f32 %v3767, 0.7978846
    %v3784 = vmul.f32 %v3768, 0.7978846
    %v3785 = vmul.f32 %v3769, 0.7978846
    %v3786 = vmul.f32 %v3770, 0.7978846
    %v3787 = vmul.f32 %v3771, 0.7978846
    %v3788 = vtanh.pop %v3772
    %v3789 = vtanh.pop %v3773
    %v3790 = vtanh.pop %v3774
    %v3791 = vtanh.pop %v3775
    %v3792 = vtanh.pop %v3776
    %v3793 = vtanh.pop %v3777
    %v3794 = vtanh.pop %v3778
    %v3795 = vtanh.pop %v3779
    %v3796 = vtanh.pop %v3780
    %v3797 = vtanh.pop %v3781
    %v3798 = vtanh.pop %v3782
    %v3799 = vtanh.pop %v3783
    %v3800 = vtanh.pop %v3784
    %v3801 = vtanh.pop %v3785
    %v3802 = vtanh.pop %v3786
    %v3803 = vtanh.pop %v3787
    %v3804 = vadd.f32 %v3788, 1.0
    %v3805 = vadd.f32 %v3789, 1.0
    %v3806 = vadd.f32 %v3790, 1.0
    %v3807 = vadd.f32 %v3791, 1.0
    %v3808 = vadd.f32 %v3792, 1.0
    %v3809 = vadd.f32 %v3793, 1.0
    %v3810 = vadd.f32 %v3794, 1.0
    %v3811 = vadd.f32 %v3795, 1.0
    %v3812 = vadd.f32 %v3796, 1.0
    %v3813 = vadd.f32 %v3797, 1.0
    %v3814 = vadd.f32 %v3798, 1.0
    %v3815 = vadd.f32 %v3799, 1.0
    %v3816 = vadd.f32 %v3800, 1.0
    %v3817 = vadd.f32 %v3801, 1.0
    %v3818 = vadd.f32 %v3802, 1.0
    %v3819 = vadd.f32 %v3803, 1.0
    %v3820 = vmul.f32 %v3692, %v3804
    %v3821 = vmul.f32 %v3693, %v3805
    %v3822 = vmul.f32 %v3694, %v3806
    %v3823 = vmul.f32 %v3695, %v3807
    %v3824 = vmul.f32 %v3696, %v3808
    %v3825 = vmul.f32 %v3697, %v3809
    %v3826 = vmul.f32 %v3698, %v3810
    %v3827 = vmul.f32 %v3699, %v3811
    %v3828 = vmul.f32 %v3700, %v3812
    %v3829 = vmul.f32 %v3701, %v3813
    %v3830 = vmul.f32 %v3702, %v3814
    %v3831 = vmul.f32 %v3703, %v3815
    %v3832 = vmul.f32 %v3704, %v3816
    %v3833 = vmul.f32 %v3705, %v3817
    %v3834 = vmul.f32 %v3706, %v3818
    %v3835 = vmul.f32 %v3707, %v3819
    %3837 = vset.pattern.permute.xlu0 0
    %3838 = vperm.xlu0 %3837, %v262
    %v3839 = vpop.permute.xlu0 %3838
    %3842 = vset.pattern.permute.xlu0 0
    %3843 = vperm.xlu0 %3842, %v263
    %v3844 = vpop.permute.xlu0 %3843
    %3847 = vset.pattern.permute.xlu0 0
    %3848 = vperm.xlu0 %3847, %v264
    %v3849 = vpop.permute.xlu0 %3848
    %3852 = vset.pattern.permute.xlu0 0
    %3853 = vperm.xlu0 %3852, %v265
    %v3854 = vpop.permute.xlu0 %3853
    %3857 = vset.pattern.permute.xlu0 0
    %3858 = vperm.xlu0 %3857, %v266
    %v3859 = vpop.permute.xlu0 %3858
    %3862 = vset.pattern.permute.xlu0 0
    %3863 = vperm.xlu0 %3862, %v267
    %v3864 = vpop.permute.xlu0 %3863
    %3867 = vset.pattern.permute.xlu0 0
    %3868 = vperm.xlu0 %3867, %v268
    %v3869 = vpop.permute.xlu0 %3868
    %3872 = vset.pattern.permute.xlu0 0
    %3873 = vperm.xlu0 %3872, %v269
    %v3874 = vpop.permute.xlu0 %3873
    %3877 = vset.pattern.permute.xlu0 0
    %3878 = vperm.xlu0 %3877, %v270
    %v3879 = vpop.permute.xlu0 %3878
    %3882 = vset.pattern.permute.xlu0 0
    %3883 = vperm.xlu0 %3882, %v271
    %v3884 = vpop.permute.xlu0 %3883
    %3887 = vset.pattern.permute.xlu0 0
    %3888 = vperm.xlu0 %3887, %v272
    %v3889 = vpop.permute.xlu0 %3888
    %3892 = vset.pattern.permute.xlu0 0
    %3893 = vperm.xlu0 %3892, %v273
    %v3894 = vpop.permute.xlu0 %3893
    %3897 = vset.pattern.permute.xlu0 0
    %3898 = vperm.xlu0 %3897, %v274
    %v3899 = vpop.permute.xlu0 %3898
    %3902 = vset.pattern.permute.xlu0 0
    %3903 = vperm.xlu0 %3902, %v275
    %v3904 = vpop.permute.xlu0 %3903
    %3907 = vset.pattern.permute.xlu0 0
    %3908 = vperm.xlu0 %3907, %v276
    %v3909 = vpop.permute.xlu0 %3908
    %3912 = vset.pattern.permute.xlu0 0
    %3913 = vperm.xlu0 %3912, %v277
    %v3914 = vpop.permute.xlu0 %3913
    %v3916 = vld [vmem:[#allocation6] sm:$0xff]
    %v3917 = vld [vmem:[#allocation6 + $0x8] sm:$0xff]
    %v3918 = vld [vmem:[#allocation6 + $0x10] sm:$0xff]
    %v3919 = vld [vmem:[#allocation6 + $0x18] sm:$0xff]
    %v3920 = vld [vmem:[#allocation6 + $0x20] sm:$0xff]
    %v3921 = vld [vmem:[#allocation6 + $0x28] sm:$0xff]
    %v3922 = vld [vmem:[#allocation6 + $0x30] sm:$0xff]
    %v3923 = vld [vmem:[#allocation6 + $0x38] sm:$0xff]
    %v3924 = vld [vmem:[#allocation6 + $0x40] sm:$0xff]
    %v3925 = vld [vmem:[#allocation6 + $0x48] sm:$0xff]
    %v3926 = vld [vmem:[#allocation6 + $0x50] sm:$0xff]
    %v3927 = vld [vmem:[#allocation6 + $0x58] sm:$0xff]
    %v3928 = vld [vmem:[#allocation6 + $0x60] sm:$0xff]
    %v3929 = vld [vmem:[#allocation6 + $0x68] sm:$0xff]
    %v3930 = vld [vmem:[#allocation6 + $0x70] sm:$0xff]
    %v3931 = vld [vmem:[#allocation6 + $0x78] sm:$0xff]
    %3932 = vmatprep.subr.mxu0 0.0
    %3933 = vmatpush1.msra.mxu0 %v3820
    %3934 = vmatprep.subr.mxu0 0.0
    %3935 = vmatpush1.msra.mxu0 %v3821
    %3936 = vmatprep.subr.mxu0 0.0
    %3937 = vmatpush1.msra.mxu0 %v3822
    %3938 = vmatprep.subr.mxu0 0.0
    %3939 = vmatpush1.msra.mxu0 %v3823
    %3940 = vmatprep.subr.mxu0 0.0
    %3941 = vmatpush1.msra.mxu0 %v3824
    %3942 = vmatprep.subr.mxu0 0.0
    %3943 = vmatpush1.msra.mxu0 %v3825
    %3944 = vmatprep.subr.mxu0 0.0
    %3945 = vmatpush1.msra.mxu0 %v3826
    %3946 = vmatprep.subr.mxu0 0.0
    %3947 = vmatpush1.msra.mxu0 %v3827
    %3948 = vmatprep.subr.mxu0 0.0
    %3949 = vmatpush1.msra.mxu0 %v3828
    %3950 = vmatprep.subr.mxu0 0.0
    %3951 = vmatpush1.msra.mxu0 %v3829
    %3952 = vmatprep.subr.mxu0 0.0
    %3953 = vmatpush1.msra.mxu0 %v3830
    %3954 = vmatprep.subr.mxu0 0.0
    %3955 = vmatpush1.msra.mxu0 %v3831
    %3956 = vmatprep.subr.mxu0 0.0
    %3957 = vmatpush1.msra.mxu0 %v3832
    %3958 = vmatprep.subr.mxu0 0.0
    %3959 = vmatpush1.msra.mxu0 %v3833
    %3960 = vmatprep.subr.mxu0 0.0
    %3961 = vmatpush1.msra.mxu0 %v3834
    %3962 = vmatprep.subr.mxu0 0.0
    %3963 = vmatpush1.msra.mxu0 %v3835
    %3964 = vmatprep.subr.mxu0 0.0
    %3965 = vmatpush1.msra.mxu0 0.0
    %3966 = vmatprep.subr.mxu0 0.0
    %3967 = vmatpush1.msra.mxu0 0.0
    %3968 = vmatprep.subr.mxu0 0.0
    %3969 = vmatpush1.msra.mxu0 0.0
    %3970 = vmatprep.subr.mxu0 0.0
    %3971 = vmatpush1.msra.mxu0 0.0
    %3972 = vmatprep.subr.mxu0 0.0
    %3973 = vmatpush1.msra.mxu0 0.0
    %3974 = vmatprep.subr.mxu0 0.0
    %3975 = vmatpush1.msra.mxu0 0.0
    %3976 = vmatprep.subr.mxu0 0.0
    %3977 = vmatpush1.msra.mxu0 0.0
    %3978 = vmatprep.subr.mxu0 0.0
    %3979 = vmatpush1.msra.mxu0 0.0
    %3980 = vmatprep.subr.mxu0 0.0
    %3981 = vmatpush1.msra.mxu0 0.0
    %3982 = vmatprep.subr.mxu0 0.0
    %3983 = vmatpush1.msra.mxu0 0.0
    %3984 = vmatprep.subr.mxu0 0.0
    %3985 = vmatpush1.msra.mxu0 0.0
    %3986 = vmatprep.subr.mxu0 0.0
    %3987 = vmatpush1.msra.mxu0 0.0
    %3988 = vmatprep.subr.mxu0 0.0
    %3989 = vmatpush1.msra.mxu0 0.0
    %3990 = vmatprep.subr.mxu0 0.0
    %3991 = vmatpush1.msra.mxu0 0.0
    %3992 = vmatprep.subr.mxu0 0.0
    %3993 = vmatpush1.msra.mxu0 0.0
    %3994 = vmatprep.subr.mxu0 0.0
    %3995 = vmatpush1.msra.mxu0 0.0
    %3996 = vmatprep.mubr.f32.mxu0 0.0
    %3997 = vmatmul.mubr.f32.gmra.mrb[0].mxu0 %v3916
    %v3998 = vpop.f32.mrb[0].mxu0
    %v3999 = vadd.f32 0.0, %v3998
    %v4000 = vpop.f32.mrb[0].mxu0
    %4001 = vmatprep.mubr.f32.mxu0 0.0
    %4002 = vmatmul.mubr.f32.gmra.mrb[0].mxu0 %v3917
    %v4003 = vpop.f32.mrb[0].mxu0
    %v4004 = vadd.f32 0.0, %v4003
    %v4005 = vpop.f32.mrb[0].mxu0
    %4006 = vmatprep.mubr.f32.mxu0 0.0
    %4007 = vmatmul.mubr.f32.gmra.mrb[0].mxu0 %v3918
    %v4008 = vpop.f32.mrb[0].mxu0
    %v4009 = vadd.f32 0.0, %v4008
    %v4010 = vpop.f32.mrb[0].mxu0
    %4011 = vmatprep.mubr.f32.mxu0 0.0
    %4012 = vmatmul.mubr.f32.gmra.mrb[0].mxu0 %v3919
    %v4013 = vpop.f32.mrb[0].mxu0
    %v4014 = vadd.f32 0.0, %v4013
    %v4015 = vpop.f32.mrb[0].mxu0
    %4016 = vmatprep.mubr.f32.mxu0 0.0
    %4017 = vmatmul.mubr.f32.gmra.mrb[0].mxu0 %v3920
    %v4018 = vpop.f32.mrb[0].mxu0
    %v4019 = vadd.f32 0.0, %v4018
    %v4020 = vpop.f32.mrb[0].mxu0
    %4021 = vmatprep.mubr.f32.mxu0 0.0
    %4022 = vmatmul.mubr.f32.gmra.mrb[0].mxu0 %v3921
    %v4023 = vpop.f32.mrb[0].mxu0
    %v4024 = vadd.f32 0.0, %v4023
    %v4025 = vpop.f32.mrb[0].mxu0
    %4026 = vmatprep.mubr.f32.mxu0 0.0
    %4027 = vmatmul.mubr.f32.gmra.mrb[0].mxu0 %v3922
    %v4028 = vpop.f32.mrb[0].mxu0
    %v4029 = vadd.f32 0.0, %v4028
    %v4030 = vpop.f32.mrb[0].mxu0
    %4031 = vmatprep.mubr.f32.mxu0 0.0
    %4032 = vmatmul.mubr.f32.gmra.mrb[0].mxu0 %v3923
    %v4033 = vpop.f32.mrb[0].mxu0
    %v4034 = vadd.f32 0.0, %v4033
    %v4035 = vpop.f32.mrb[0].mxu0
    %4036 = vmatprep.mubr.f32.mxu0 0.0
    %4037 = vmatmul.mubr.f32.gmra.mrb[0].mxu0 %v3924
    %v4038 = vpop.f32.mrb[0].mxu0
    %v4039 = vadd.f32 0.0, %v4038
    %v4040 = vpop.f32.mrb[0].mxu0
    %4041 = vmatprep.mubr.f32.mxu0 0.0
    %4042 = vmatmul.mubr.f32.gmra.mrb[0].mxu0 %v3925
    %v4043 = vpop.f32.mrb[0].mxu0
    %v4044 = vadd.f32 0.0, %v4043
    %v4045 = vpop.f32.mrb[0].mxu0
    %4046 = vmatprep.mubr.f32.mxu0 0.0
    %4047 = vmatmul.mubr.f32.gmra.mrb[0].mxu0 %v3926
    %v4048 = vpop.f32.mrb[0].mxu0
    %v4049 = vadd.f32 0.0, %v4048
    %v4050 = vpop.f32.mrb[0].mxu0
    %4051 = vmatprep.mubr.f32.mxu0 0.0
    %4052 = vmatmul.mubr.f32.gmra.mrb[0].mxu0 %v3927
    %v4053 = vpop.f32.mrb[0].mxu0
    %v4054 = vadd.f32 0.0, %v4053
    %v4055 = vpop.f32.mrb[0].mxu0
    %4056 = vmatprep.mubr.f32.mxu0 0.0
    %4057 = vmatmul.mubr.f32.gmra.mrb[0].mxu0 %v3928
    %v4058 = vpop.f32.mrb[0].mxu0
    %v4059 = vadd.f32 0.0, %v4058
    %v4060 = vpop.f32.mrb[0].mxu0
    %4061 = vmatprep.mubr.f32.mxu0 0.0
    %4062 = vmatmul.mubr.f32.gmra.mrb[0].mxu0 %v3929
    %v4063 = vpop.f32.mrb[0].mxu0
    %v4064 = vadd.f32 0.0, %v4063
    %v4065 = vpop.f32.mrb[0].mxu0
    %4066 = vmatprep.mubr.f32.mxu0 0.0
    %4067 = vmatmul.mubr.f32.gmra.mrb[0].mxu0 %v3930
    %v4068 = vpop.f32.mrb[0].mxu0
    %v4069 = vadd.f32 0.0, %v4068
    %v4070 = vpop.f32.mrb[0].mxu0
    %4071 = vmatprep.mubr.f32.mxu0 0.0
    %4072 = vmatmul.mubr.f32.gmra.mrb[0].mxu0 %v3931
    %v4073 = vpop.f32.mrb[0].mxu0
    %v4074 = vadd.f32 0.0, %v4073
    %v4075 = vpop.f32.mrb[0].mxu0
    %4076 = vdwg.mxu0
    %4077 = vmatprep.subr.mxu0 0.0
    %4078 = vmatpush1.msra.mxu0 %v410
    %4079 = vmatprep.subr.mxu0 0.0
    %4080 = vmatpush1.msra.mxu0 %v411
    %4081 = vmatprep.subr.mxu0 0.0
    %4082 = vmatpush1.msra.mxu0 %v412
    %4083 = vmatprep.subr.mxu0 0.0
    %4084 = vmatpush1.msra.mxu0 %v413
    %4085 = vmatprep.subr.mxu0 0.0
    %4086 = vmatpush1.msra.mxu0 %v414
    %4087 = vmatprep.subr.mxu0 0.0
    %4088 = vmatpush1.msra.mxu0 %v415
    %4089 = vmatprep.subr.mxu0 0.0
    %4090 = vmatpush1.msra.mxu0 %v416
    %4091 = vmatprep.subr.mxu0 0.0
    %4092 = vmatpush1.msra.mxu0 %v417
    %4093 = vmatprep.subr.mxu0 0.0
    %4094 = vmatpush1.msra.mxu0 %v418
    %4095 = vmatprep.subr.mxu0 0.0
    %4096 = vmatpush1.msra.mxu0 %v419
    %4097 = vmatprep.subr.mxu0 0.0
    %4098 = vmatpush1.msra.mxu0 %v420
    %4099 = vmatprep.subr.mxu0 0.0
    %4100 = vmatpush1.msra.mxu0 %v421
    %4101 = vmatprep.subr.mxu0 0.0
    %4102 = vmatpush1.msra.mxu0 %v422
    %4103 = vmatprep.subr.mxu0 0.0
    %4104 = vmatpush1.msra.mxu0 %v423
    %4105 = vmatprep.subr.mxu0 0.0
    %4106 = vmatpush1.msra.mxu0 %v424
    %4107 = vmatprep.subr.mxu0 0.0
    %4108 = vmatpush1.msra.mxu0 %v425
    %4109 = vmatprep.subr.mxu0 0.0
    %4110 = vmatpush1.msra.mxu0 0.0
    %4111 = vmatprep.subr.mxu0 0.0
    %4112 = vmatpush1.msra.mxu0 0.0
    %4113 = vmatprep.subr.mxu0 0.0
    %4114 = vmatpush1.msra.mxu0 0.0
    %4115 = vmatprep.subr.mxu0 0.0
    %4116 = vmatpush1.msra.mxu0 0.0
    %4117 = vmatprep.subr.mxu0 0.0
    %4118 = vmatpush1.msra.mxu0 0.0
    %4119 = vmatprep.subr.mxu0 0.0
    %4120 = vmatpush1.msra.mxu0 0.0
    %4121 = vmatprep.subr.mxu0 0.0
    %4122 = vmatpush1.msra.mxu0 0.0
    %4123 = vmatprep.subr.mxu0 0.0
    %4124 = vmatpush1.msra.mxu0 0.0
    %4125 = vmatprep.subr.mxu0 0.0
    %4126 = vmatpush1.msra.mxu0 0.0
    %4127 = vmatprep.subr.mxu0 0.0
    %4128 = vmatpush1.msra.mxu0 0.0
    %4129 = vmatprep.subr.mxu0 0.0
    %4130 = vmatpush1.msra.mxu0 0.0
    %4131 = vmatprep.subr.mxu0 0.0
    %4132 = vmatpush1.msra.mxu0 0.0
    %4133 = vmatprep.subr.mxu0 0.0
    %4134 = vmatpush1.msra.mxu0 0.0
    %4135 = vmatprep.subr.mxu0 0.0
    %4136 = vmatpush1.msra.mxu0 0.0
    %4137 = vmatprep.subr.mxu0 0.0
    %4138 = vmatpush1.msra.mxu0 0.0
    %4139 = vmatprep.subr.mxu0 0.0
    %4140 = vmatpush1.msra.mxu0 0.0
    %4141 = vmatprep.mubr.f32.mxu0 0.0
    %4142 = vmatmul.mubr.f32.gmra.mrb[0].mxu0 %v3999
    %v4143 = vpop.f32.mrb[0].mxu0
    %v4144 = vadd.f32 0.0, %v4143
    %v4145 = vpop.f32.mrb[0].mxu0
    %4146 = vmatprep.mubr.f32.mxu0 0.0
    %4147 = vmatmul.mubr.f32.gmra.mrb[0].mxu0 %v4004
    %v4148 = vpop.f32.mrb[0].mxu0
    %v4149 = vadd.f32 0.0, %v4148
    %v4150 = vpop.f32.mrb[0].mxu0
    %4151 = vmatprep.mubr.f32.mxu0 0.0
    %4152 = vmatmul.mubr.f32.gmra.mrb[0].mxu0 %v4009
    %v4153 = vpop.f32.mrb[0].mxu0
    %v4154 = vadd.f32 0.0, %v4153
    %v4155 = vpop.f32.mrb[0].mxu0
    %4156 = vmatprep.mubr.f32.mxu0 0.0
    %4157 = vmatmul.mubr.f32.gmra.mrb[0].mxu0 %v4014
    %v4158 = vpop.f32.mrb[0].mxu0
    %v4159 = vadd.f32 0.0, %v4158
    %v4160 = vpop.f32.mrb[0].mxu0
    %4161 = vmatprep.mubr.f32.mxu0 0.0
    %4162 = vmatmul.mubr.f32.gmra.mrb[0].mxu0 %v4019
    %v4163 = vpop.f32.mrb[0].mxu0
    %v4164 = vadd.f32 0.0, %v4163
    %v4165 = vpop.f32.mrb[0].mxu0
    %4166 = vmatprep.mubr.f32.mxu0 0.0
    %4167 = vmatmul.mubr.f32.gmra.mrb[0].mxu0 %v4024
    %v4168 = vpop.f32.mrb[0].mxu0
    %v4169 = vadd.f32 0.0, %v4168
    %v4170 = vpop.f32.mrb[0].mxu0
    %4171 = vmatprep.mubr.f32.mxu0 0.0
    %4172 = vmatmul.mubr.f32.gmra.mrb[0].mxu0 %v4029
    %v4173 = vpop.f32.mrb[0].mxu0
    %v4174 = vadd.f32 0.0, %v4173
    %v4175 = vpop.f32.mrb[0].mxu0
    %4176 = vmatprep.mubr.f32.mxu0 0.0
    %4177 = vmatmul.mubr.f32.gmra.mrb[0].mxu0 %v4034
    %v4178 = vpop.f32.mrb[0].mxu0
    %v4179 = vadd.f32 0.0, %v4178
    %v4180 = vpop.f32.mrb[0].mxu0
    %4181 = vmatprep.mubr.f32.mxu0 0.0
    %4182 = vmatmul.mubr.f32.gmra.mrb[0].mxu0 %v4039
    %v4183 = vpop.f32.mrb[0].mxu0
    %v4184 = vadd.f32 0.0, %v4183
    %v4185 = vpop.f32.mrb[0].mxu0
    %4186 = vmatprep.mubr.f32.mxu0 0.0
    %4187 = vmatmul.mubr.f32.gmra.mrb[0].mxu0 %v4044
    %v4188 = vpop.f32.mrb[0].mxu0
    %v4189 = vadd.f32 0.0, %v4188
    %v4190 = vpop.f32.mrb[0].mxu0
    %4191 = vmatprep.mubr.f32.mxu0 0.0
    %4192 = vmatmul.mubr.f32.gmra.mrb[0].mxu0 %v4049
    %v4193 = vpop.f32.mrb[0].mxu0
    %v4194 = vadd.f32 0.0, %v4193
    %v4195 = vpop.f32.mrb[0].mxu0
    %4196 = vmatprep.mubr.f32.mxu0 0.0
    %4197 = vmatmul.mubr.f32.gmra.mrb[0].mxu0 %v4054
    %v4198 = vpop.f32.mrb[0].mxu0
    %v4199 = vadd.f32 0.0, %v4198
    %v4200 = vpop.f32.mrb[0].mxu0
    %4201 = vmatprep.mubr.f32.mxu0 0.0
    %4202 = vmatmul.mubr.f32.gmra.mrb[0].mxu0 %v4059
    %v4203 = vpop.f32.mrb[0].mxu0
    %v4204 = vadd.f32 0.0, %v4203
    %v4205 = vpop.f32.mrb[0].mxu0
    %4206 = vmatprep.mubr.f32.mxu0 0.0
    %4207 = vmatmul.mubr.f32.gmra.mrb[0].mxu0 %v4064
    %v4208 = vpop.f32.mrb[0].mxu0
    %v4209 = vadd.f32 0.0, %v4208
    %v4210 = vpop.f32.mrb[0].mxu0
    %4211 = vmatprep.mubr.f32.mxu0 0.0
    %4212 = vmatmul.mubr.f32.gmra.mrb[0].mxu0 %v4069
    %v4213 = vpop.f32.mrb[0].mxu0
    %v4214 = vadd.f32 0.0, %v4213
    %v4215 = vpop.f32.mrb[0].mxu0
    %4216 = vmatprep.mubr.f32.mxu0 0.0
    %4217 = vmatmul.mubr.f32.gmra.mrb[0].mxu0 %v4074
    %v4218 = vpop.f32.mrb[0].mxu0
    %v4219 = vadd.f32 0.0, %v4218
    %v4220 = vpop.f32.mrb[0].mxu0
    %4221 = vdwg.mxu0
    %v4222 = vadd.f32 %v3839, %v4144
    %v4223 = vadd.f32 %v3844, %v4149
    %v4224 = vadd.f32 %v3849, %v4154
    %v4225 = vadd.f32 %v3854, %v4159
    %v4226 = vadd.f32 %v3859, %v4164
    %v4227 = vadd.f32 %v3864, %v4169
    %v4228 = vadd.f32 %v3869, %v4174
    %v4229 = vadd.f32 %v3874, %v4179
    %v4230 = vadd.f32 %v3879, %v4184
    %v4231 = vadd.f32 %v3884, %v4189
    %v4232 = vadd.f32 %v3889, %v4194
    %v4233 = vadd.f32 %v3894, %v4199
    %v4234 = vadd.f32 %v3899, %v4204
    %v4235 = vadd.f32 %v3904, %v4209
    %v4236 = vadd.f32 %v3909, %v4214
    %v4237 = vadd.f32 %v3914, %v4219
    %v4238 = vld [vmem:[#allocation6 + $0x80] sm:$0xff]
    %v4239 = vld [vmem:[#allocation6 + $0x88] sm:$0xff]
    %v4240 = vld [vmem:[#allocation6 + $0x90] sm:$0xff]
    %v4241 = vld [vmem:[#allocation6 + $0x98] sm:$0xff]
    %v4242 = vld [vmem:[#allocation6 + $0xa0] sm:$0xff]
    %v4243 = vld [vmem:[#allocation6 + $0xa8] sm:$0xff]
    %v4244 = vld [vmem:[#allocation6 + $0xb0] sm:$0xff]
    %v4245 = vld [vmem:[#allocation6 + $0xb8] sm:$0xff]
    %v4246 = vld [vmem:[#allocation6 + $0xc0] sm:$0xff]
    %v4247 = vld [vmem:[#allocation6 + $0xc8] sm:$0xff]
    %v4248 = vld [vmem:[#allocation6 + $0xd0] sm:$0xff]
    %v4249 = vld [vmem:[#allocation6 + $0xd8] sm:$0xff]
    %v4250 = vld [vmem:[#allocation6 + $0xe0] sm:$0xff]
    %v4251 = vld [vmem:[#allocation6 + $0xe8] sm:$0xff]
    %v4252 = vld [vmem:[#allocation6 + $0xf0] sm:$0xff]
    %v4253 = vld [vmem:[#allocation6 + $0xf8] sm:$0xff]
    %4254 = vmatprep.subr.mxu0 0.0
    %4255 = vmatpush1.msra.mxu0 %v3820
    %4256 = vmatprep.subr.mxu0 0.0
    %4257 = vmatpush1.msra.mxu0 %v3821
    %4258 = vmatprep.subr.mxu0 0.0
    %4259 = vmatpush1.msra.mxu0 %v3822
    %4260 = vmatprep.subr.mxu0 0.0
    %4261 = vmatpush1.msra.mxu0 %v3823
    %4262 = vmatprep.subr.mxu0 0.0
    %4263 = vmatpush1.msra.mxu0 %v3824
    %4264 = vmatprep.subr.mxu0 0.0
    %4265 = vmatpush1.msra.mxu0 %v3825
    %4266 = vmatprep.subr.mxu0 0.0
    %4267 = vmatpush1.msra.mxu0 %v3826
    %4268 = vmatprep.subr.mxu0 0.0
    %4269 = vmatpush1.msra.mxu0 %v3827
    %4270 = vmatprep.subr.mxu0 0.0
    %4271 = vmatpush1.msra.mxu0 %v3828
    %4272 = vmatprep.subr.mxu0 0.0
    %4273 = vmatpush1.msra.mxu0 %v3829
    %4274 = vmatprep.subr.mxu0 0.0
    %4275 = vmatpush1.msra.mxu0 %v3830
    %4276 = vmatprep.subr.mxu0 0.0
    %4277 = vmatpush1.msra.mxu0 %v3831
    %4278 = vmatprep.subr.mxu0 0.0
    %4279 = vmatpush1.msra.mxu0 %v3832
    %4280 = vmatprep.subr.mxu0 0.0
    %4281 = vmatpush1.msra.mxu0 %v3833
    %4282 = vmatprep.subr.mxu0 0.0
    %4283 = vmatpush1.msra.mxu0 %v3834
    %4284 = vmatprep.subr.mxu0 0.0
    %4285 = vmatpush1.msra.mxu0 %v3835
    %4286 = vmatprep.subr.mxu0 0.0
    %4287 = vmatpush1.msra.mxu0 0.0
    %4288 = vmatprep.subr.mxu0 0.0
    %4289 = vmatpush1.msra.mxu0 0.0
    %4290 = vmatprep.subr.mxu0 0.0
    %4291 = vmatpush1.msra.mxu0 0.0
    %4292 = vmatprep.subr.mxu0 0.0
    %4293 = vmatpush1.msra.mxu0 0.0
    %4294 = vmatprep.subr.mxu0 0.0
    %4295 = vmatpush1.msra.mxu0 0.0
    %4296 = vmatprep.subr.mxu0 0.0
    %4297 = vmatpush1.msra.mxu0 0.0
    %4298 = vmatprep.subr.mxu0 0.0
    %4299 = vmatpush1.msra.mxu0 0.0
    %4300 = vmatprep.subr.mxu0 0.0
    %4301 = vmatpush1.msra.mxu0 0.0
    %4302 = vmatprep.subr.mxu0 0.0
    %4303 = vmatpush1.msra.mxu0 0.0
    %4304 = vmatprep.subr.mxu0 0.0
    %4305 = vmatpush1.msra.mxu0 0.0
    %4306 = vmatprep.subr.mxu0 0.0
    %4307 = vmatpush1.msra.mxu0 0.0
    %4308 = vmatprep.subr.mxu0 0.0
    %4309 = vmatpush1.msra.mxu0 0.0
    %4310 = vmatprep.subr.mxu0 0.0
    %4311 = vmatpush1.msra.mxu0 0.0
    %4312 = vmatprep.subr.mxu0 0.0
    %4313 = vmatpush1.msra.mxu0 0.0
    %4314 = vmatprep.subr.mxu0 0.0
    %4315 = vmatpush1.msra.mxu0 0.0
    %4316 = vmatprep.subr.mxu0 0.0
    %4317 = vmatpush1.msra.mxu0 0.0
    %4318 = vmatprep.mubr.f32.mxu0 0.0
    %4319 = vmatmul.mubr.f32.gmra.mrb[0].mxu0 %v4238
    %v4320 = vpop.f32.mrb[0].mxu0
    %v4321 = vadd.f32 0.0, %v4320
    %v4322 = vpop.f32.mrb[0].mxu0
    %4323 = vmatprep.mubr.f32.mxu0 0.0
    %4324 = vmatmul.mubr.f32.gmra.mrb[0].mxu0 %v4239
    %v4325 = vpop.f32.mrb[0].mxu0
    %v4326 = vadd.f32 0.0, %v4325
    %v4327 = vpop.f32.mrb[0].mxu0
    %4328 = vmatprep.mubr.f32.mxu0 0.0
    %4329 = vmatmul.mubr.f32.gmra.mrb[0].mxu0 %v4240
    %v4330 = vpop.f32.mrb[0].mxu0
    %v4331 = vadd.f32 0.0, %v4330
    %v4332 = vpop.f32.mrb[0].mxu0
    %4333 = vmatprep.mubr.f32.mxu0 0.0
    %4334 = vmatmul.mubr.f32.gmra.mrb[0].mxu0 %v4241
    %v4335 = vpop.f32.mrb[0].mxu0
    %v4336 = vadd.f32 0.0, %v4335
    %v4337 = vpop.f32.mrb[0].mxu0
    %4338 = vmatprep.mubr.f32.mxu0 0.0
    %4339 = vmatmul.mubr.f32.gmra.mrb[0].mxu0 %v4242
    %v4340 = vpop.f32.mrb[0].mxu0
    %v4341 = vadd.f32 0.0, %v4340
    %v4342 = vpop.f32.mrb[0].mxu0
    %4343 = vmatprep.mubr.f32.mxu0 0.0
    %4344 = vmatmul.mubr.f32.gmra.mrb[0].mxu0 %v4243
    %v4345 = vpop.f32.mrb[0].mxu0
    %v4346 = vadd.f32 0.0, %v4345
    %v4347 = vpop.f32.mrb[0].mxu0
    %4348 = vmatprep.mubr.f32.mxu0 0.0
    %4349 = vmatmul.mubr.f32.gmra.mrb[0].mxu0 %v4244
    %v4350 = vpop.f32.mrb[0].mxu0
    %v4351 = vadd.f32 0.0, %v4350
    %v4352 = vpop.f32.mrb[0].mxu0
    %4353 = vmatprep.mubr.f32.mxu0 0.0
    %4354 = vmatmul.mubr.f32.gmra.mrb[0].mxu0 %v4245
    %v4355 = vpop.f32.mrb[0].mxu0
    %v4356 = vadd.f32 0.0, %v4355
    %v4357 = vpop.f32.mrb[0].mxu0
    %4358 = vmatprep.mubr.f32.mxu0 0.0
    %4359 = vmatmul.mubr.f32.gmra.mrb[0].mxu0 %v4246
    %v4360 = vpop.f32.mrb[0].mxu0
    %v4361 = vadd.f32 0.0, %v4360
    %v4362 = vpop.f32.mrb[0].mxu0
    %4363 = vmatprep.mubr.f32.mxu0 0.0
    %4364 = vmatmul.mubr.f32.gmra.mrb[0].mxu0 %v4247
    %v4365 = vpop.f32.mrb[0].mxu0
    %v4366 = vadd.f32 0.0, %v4365
    %v4367 = vpop.f32.mrb[0].mxu0
    %4368 = vmatprep.mubr.f32.mxu0 0.0
    %4369 = vmatmul.mubr.f32.gmra.mrb[0].mxu0 %v4248
    %v4370 = vpop.f32.mrb[0].mxu0
    %v4371 = vadd.f32 0.0, %v4370
    %v4372 = vpop.f32.mrb[0].mxu0
    %4373 = vmatprep.mubr.f32.mxu0 0.0
    %4374 = vmatmul.mubr.f32.gmra.mrb[0].mxu0 %v4249
    %v4375 = vpop.f32.mrb[0].mxu0
    %v4376 = vadd.f32 0.0, %v4375
    %v4377 = vpop.f32.mrb[0].mxu0
    %4378 = vmatprep.mubr.f32.mxu0 0.0
    %4379 = vmatmul.mubr.f32.gmra.mrb[0].mxu0 %v4250
    %v4380 = vpop.f32.mrb[0].mxu0
    %v4381 = vadd.f32 0.0, %v4380
    %v4382 = vpop.f32.mrb[0].mxu0
    %4383 = vmatprep.mubr.f32.mxu0 0.0
    %4384 = vmatmul.mubr.f32.gmra.mrb[0].mxu0 %v4251
    %v4385 = vpop.f32.mrb[0].mxu0
    %v4386 = vadd.f32 0.0, %v4385
    %v4387 = vpop.f32.mrb[0].mxu0
    %4388 = vmatprep.mubr.f32.mxu0 0.0
    %4389 = vmatmul.mubr.f32.gmra.mrb[0].mxu0 %v4252
    %v4390 = vpop.f32.mrb[0].mxu0
    %v4391 = vadd.f32 0.0, %v4390
    %v4392 = vpop.f32.mrb[0].mxu0
    %4393 = vmatprep.mubr.f32.mxu0 0.0
    %4394 = vmatmul.mubr.f32.gmra.mrb[0].mxu0 %v4253
    %v4395 = vpop.f32.mrb[0].mxu0
    %v4396 = vadd.f32 0.0, %v4395
    %v4397 = vpop.f32.mrb[0].mxu0
    %4398 = vdwg.mxu0
    %4399 = vmatprep.subr.mxu0 0.0
    %4400 = vmatpush1.msra.mxu0 %v458
    %4401 = vmatprep.subr.mxu0 0.0
    %4402 = vmatpush1.msra.mxu0 %v459
    %4403 = vmatprep.subr.mxu0 0.0
    %4404 = vmatpush1.msra.mxu0 %v460
    %4405 = vmatprep.subr.mxu0 0.0
    %4406 = vmatpush1.msra.mxu0 %v461
    %4407 = vmatprep.subr.mxu0 0.0
    %4408 = vmatpush1.msra.mxu0 %v462
    %4409 = vmatprep.subr.mxu0 0.0
    %4410 = vmatpush1.msra.mxu0 %v463
    %4411 = vmatprep.subr.mxu0 0.0
    %4412 = vmatpush1.msra.mxu0 %v464
    %4413 = vmatprep.subr.mxu0 0.0
    %4414 = vmatpush1.msra.mxu0 %v465
    %4415 = vmatprep.subr.mxu0 0.0
    %4416 = vmatpush1.msra.mxu0 %v466
    %4417 = vmatprep.subr.mxu0 0.0
    %4418 = vmatpush1.msra.mxu0 %v467
    %4419 = vmatprep.subr.mxu0 0.0
    %4420 = vmatpush1.msra.mxu0 %v468
    %4421 = vmatprep.subr.mxu0 0.0
    %4422 = vmatpush1.msra.mxu0 %v469
    %4423 = vmatprep.subr.mxu0 0.0
    %4424 = vmatpush1.msra.mxu0 %v470
    %4425 = vmatprep.subr.mxu0 0.0
    %4426 = vmatpush1.msra.mxu0 %v471
    %4427 = vmatprep.subr.mxu0 0.0
    %4428 = vmatpush1.msra.mxu0 %v472
    %4429 = vmatprep.subr.mxu0 0.0
    %4430 = vmatpush1.msra.mxu0 %v473
    %4431 = vmatprep.subr.mxu0 0.0
    %4432 = vmatpush1.msra.mxu0 0.0
    %4433 = vmatprep.subr.mxu0 0.0
    %4434 = vmatpush1.msra.mxu0 0.0
    %4435 = vmatprep.subr.mxu0 0.0
    %4436 = vmatpush1.msra.mxu0 0.0
    %4437 = vmatprep.subr.mxu0 0.0
    %4438 = vmatpush1.msra.mxu0 0.0
    %4439 = vmatprep.subr.mxu0 0.0
    %4440 = vmatpush1.msra.mxu0 0.0
    %4441 = vmatprep.subr.mxu0 0.0
    %4442 = vmatpush1.msra.mxu0 0.0
    %4443 = vmatprep.subr.mxu0 0.0
    %4444 = vmatpush1.msra.mxu0 0.0
    %4445 = vmatprep.subr.mxu0 0.0
    %4446 = vmatpush1.msra.mxu0 0.0
    %4447 = vmatprep.subr.mxu0 0.0
    %4448 = vmatpush1.msra.mxu0 0.0
    %4449 = vmatprep.subr.mxu0 0.0
    %4450 = vmatpush1.msra.mxu0 0.0
    %4451 = vmatprep.subr.mxu0 0.0
    %4452 = vmatpush1.msra.mxu0 0.0
    %4453 = vmatprep.subr.mxu0 0.0
    %4454 = vmatpush1.msra.mxu0 0.0
    %4455 = vmatprep.subr.mxu0 0.0
    %4456 = vmatpush1.msra.mxu0 0.0
    %4457 = vmatprep.subr.mxu0 0.0
    %4458 = vmatpush1.msra.mxu0 0.0
    %4459 = vmatprep.subr.mxu0 0.0
    %4460 = vmatpush1.msra.mxu0 0.0
    %4461 = vmatprep.subr.mxu0 0.0
    %4462 = vmatpush1.msra.mxu0 0.0
    %4463 = vmatprep.mubr.f32.mxu0 0.0
    %4464 = vmatmul.mubr.f32.gmra.mrb[0].mxu0 %v4321
    %v4465 = vpop.f32.mrb[0].mxu0
    %v4466 = vadd.f32 0.0, %v4465
    %v4467 = vpop.f32.mrb[0].mxu0
    %4468 = vmatprep.mubr.f32.mxu0 0.0
    %4469 = vmatmul.mubr.f32.gmra.mrb[0].mxu0 %v4326
    %v4470 = vpop.f32.mrb[0].mxu0
    %v4471 = vadd.f32 0.0, %v4470
    %v4472 = vpop.f32.mrb[0].mxu0
    %4473 = vmatprep.mubr.f32.mxu0 0.0
    %4474 = vmatmul.mubr.f32.gmra.mrb[0].mxu0 %v4331
    %v4475 = vpop.f32.mrb[0].mxu0
    %v4476 = vadd.f32 0.0, %v4475
    %v4477 = vpop.f32.mrb[0].mxu0
    %4478 = vmatprep.mubr.f32.mxu0 0.0
    %4479 = vmatmul.mubr.f32.gmra.mrb[0].mxu0 %v4336
    %v4480 = vpop.f32.mrb[0].mxu0
    %v4481 = vadd.f32 0.0, %v4480
    %v4482 = vpop.f32.mrb[0].mxu0
    %4483 = vmatprep.mubr.f32.mxu0 0.0
    %4484 = vmatmul.mubr.f32.gmra.mrb[0].mxu0 %v4341
    %v4485 = vpop.f32.mrb[0].mxu0
    %v4486 = vadd.f32 0.0, %v4485
    %v4487 = vpop.f32.mrb[0].mxu0
    %4488 = vmatprep.mubr.f32.mxu0 0.0
    %4489 = vmatmul.mubr.f32.gmra.mrb[0].mxu0 %v4346
    %v4490 = vpop.f32.mrb[0].mxu0
    %v4491 = vadd.f32 0.0, %v4490
    %v4492 = vpop.f32.mrb[0].mxu0
    %4493 = vmatprep.mubr.f32.mxu0 0.0
    %4494 = vmatmul.mubr.f32.gmra.mrb[0].mxu0 %v4351
    %v4495 = vpop.f32.mrb[0].mxu0
    %v4496 = vadd.f32 0.0, %v4495
    %v4497 = vpop.f32.mrb[0].mxu0
    %4498 = vmatprep.mubr.f32.mxu0 0.0
    %4499 = vmatmul.mubr.f32.gmra.mrb[0].mxu0 %v4356
    %v4500 = vpop.f32.mrb[0].mxu0
    %v4501 = vadd.f32 0.0, %v4500
    %v4502 = vpop.f32.mrb[0].mxu0
    %4503 = vmatprep.mubr.f32.mxu0 0.0
    %4504 = vmatmul.mubr.f32.gmra.mrb[0].mxu0 %v4361
    %v4505 = vpop.f32.mrb[0].mxu0
    %v4506 = vadd.f32 0.0, %v4505
    %v4507 = vpop.f32.mrb[0].mxu0
    %4508 = vmatprep.mubr.f32.mxu0 0.0
    %4509 = vmatmul.mubr.f32.gmra.mrb[0].mxu0 %v4366
    %v4510 = vpop.f32.mrb[0].mxu0
    %v4511 = vadd.f32 0.0, %v4510
    %v4512 = vpop.f32.mrb[0].mxu0
    %4513 = vmatprep.mubr.f32.mxu0 0.0
    %4514 = vmatmul.mubr.f32.gmra.mrb[0].mxu0 %v4371
    %v4515 = vpop.f32.mrb[0].mxu0
    %v4516 = vadd.f32 0.0, %v4515
    %v4517 = vpop.f32.mrb[0].mxu0
    %4518 = vmatprep.mubr.f32.mxu0 0.0
    %4519 = vmatmul.mubr.f32.gmra.mrb[0].mxu0 %v4376
    %v4520 = vpop.f32.mrb[0].mxu0
    %v4521 = vadd.f32 0.0, %v4520
    %v4522 = vpop.f32.mrb[0].mxu0
    %4523 = vmatprep.mubr.f32.mxu0 0.0
    %4524 = vmatmul.mubr.f32.gmra.mrb[0].mxu0 %v4381
    %v4525 = vpop.f32.mrb[0].mxu0
    %v4526 = vadd.f32 0.0, %v4525
    %v4527 = vpop.f32.mrb[0].mxu0
    %4528 = vmatprep.mubr.f32.mxu0 0.0
    %4529 = vmatmul.mubr.f32.gmra.mrb[0].mxu0 %v4386
    %v4530 = vpop.f32.mrb[0].mxu0
    %v4531 = vadd.f32 0.0, %v4530
    %v4532 = vpop.f32.mrb[0].mxu0
    %4533 = vmatprep.mubr.f32.mxu0 0.0
    %4534 = vmatmul.mubr.f32.gmra.mrb[0].mxu0 %v4391
    %v4535 = vpop.f32.mrb[0].mxu0
    %v4536 = vadd.f32 0.0, %v4535
    %v4537 = vpop.f32.mrb[0].mxu0
    %4538 = vmatprep.mubr.f32.mxu0 0.0
    %4539 = vmatmul.mubr.f32.gmra.mrb[0].mxu0 %v4396
    %v4540 = vpop.f32.mrb[0].mxu0
    %v4541 = vadd.f32 0.0, %v4540
    %v4542 = vpop.f32.mrb[0].mxu0
    %4543 = vdwg.mxu0
    %v4544 = vadd.f32 %v4222, %v4466
    %v4545 = vadd.f32 %v4223, %v4471
    %v4546 = vadd.f32 %v4224, %v4476
    %v4547 = vadd.f32 %v4225, %v4481
    %v4548 = vadd.f32 %v4226, %v4486
    %v4549 = vadd.f32 %v4227, %v4491
    %v4550 = vadd.f32 %v4228, %v4496
    %v4551 = vadd.f32 %v4229, %v4501
    %v4552 = vadd.f32 %v4230, %v4506
    %v4553 = vadd.f32 %v4231, %v4511
    %v4554 = vadd.f32 %v4232, %v4516
    %v4555 = vadd.f32 %v4233, %v4521
    %v4556 = vadd.f32 %v4234, %v4526
    %v4557 = vadd.f32 %v4235, %v4531
    %v4558 = vadd.f32 %v4236, %v4536
    %v4559 = vadd.f32 %v4237, %v4541
    %v4560 = vld [vmem:[#allocation6 + $0x100] sm:$0xff]
    %v4561 = vld [vmem:[#allocation6 + $0x108] sm:$0xff]
    %v4562 = vld [vmem:[#allocation6 + $0x110] sm:$0xff]
    %v4563 = vld [vmem:[#allocation6 + $0x118] sm:$0xff]
    %v4564 = vld [vmem:[#allocation6 + $0x120] sm:$0xff]
    %v4565 = vld [vmem:[#allocation6 + $0x128] sm:$0xff]
    %v4566 = vld [vmem:[#allocation6 + $0x130] sm:$0xff]
    %v4567 = vld [vmem:[#allocation6 + $0x138] sm:$0xff]
    %v4568 = vld [vmem:[#allocation6 + $0x140] sm:$0xff]
    %v4569 = vld [vmem:[#allocation6 + $0x148] sm:$0xff]
    %v4570 = vld [vmem:[#allocation6 + $0x150] sm:$0xff]
    %v4571 = vld [vmem:[#allocation6 + $0x158] sm:$0xff]
    %v4572 = vld [vmem:[#allocation6 + $0x160] sm:$0xff]
    %v4573 = vld [vmem:[#allocation6 + $0x168] sm:$0xff]
    %v4574 = vld [vmem:[#allocation6 + $0x170] sm:$0xff]
    %v4575 = vld [vmem:[#allocation6 + $0x178] sm:$0xff]
    %4576 = vmatprep.subr.mxu0 0.0
    %4577 = vmatpush1.msra.mxu0 %v3820
    %4578 = vmatprep.subr.mxu0 0.0
    %4579 = vmatpush1.msra.mxu0 %v3821
    %4580 = vmatprep.subr.mxu0 0.0
    %4581 = vmatpush1.msra.mxu0 %v3822
    %4582 = vmatprep.subr.mxu0 0.0
    %4583 = vmatpush1.msra.mxu0 %v3823
    %4584 = vmatprep.subr.mxu0 0.0
    %4585 = vmatpush1.msra.mxu0 %v3824
    %4586 = vmatprep.subr.mxu0 0.0
    %4587 = vmatpush1.msra.mxu0 %v3825
    %4588 = vmatprep.subr.mxu0 0.0
    %4589 = vmatpush1.msra.mxu0 %v3826
    %4590 = vmatprep.subr.mxu0 0.0
    %4591 = vmatpush1.msra.mxu0 %v3827
    %4592 = vmatprep.subr.mxu0 0.0
    %4593 = vmatpush1.msra.mxu0 %v3828
    %4594 = vmatprep.subr.mxu0 0.0
    %4595 = vmatpush1.msra.mxu0 %v3829
    %4596 = vmatprep.subr.mxu0 0.0
    %4597 = vmatpush1.msra.mxu0 %v3830
    %4598 = vmatprep.subr.mxu0 0.0
    %4599 = vmatpush1.msra.mxu0 %v3831
    %4600 = vmatprep.subr.mxu0 0.0
    %4601 = vmatpush1.msra.mxu0 %v3832
    %4602 = vmatprep.subr.mxu0 0.0
    %4603 = vmatpush1.msra.mxu0 %v3833
    %4604 = vmatprep.subr.mxu0 0.0
    %4605 = vmatpush1.msra.mxu0 %v3834
    %4606 = vmatprep.subr.mxu0 0.0
    %4607 = vmatpush1.msra.mxu0 %v3835
    %4608 = vmatprep.subr.mxu0 0.0
    %4609 = vmatpush1.msra.mxu0 0.0
    %4610 = vmatprep.subr.mxu0 0.0
    %4611 = vmatpush1.msra.mxu0 0.0
    %4612 = vmatprep.subr.mxu0 0.0
    %4613 = vmatpush1.msra.mxu0 0.0
    %4614 = vmatprep.subr.mxu0 0.0
    %4615 = vmatpush1.msra.mxu0 0.0
    %4616 = vmatprep.subr.mxu0 0.0
    %4617 = vmatpush1.msra.mxu0 0.0
    %4618 = vmatprep.subr.mxu0 0.0
    %4619 = vmatpush1.msra.mxu0 0.0
    %4620 = vmatprep.subr.mxu0 0.0
    %4621 = vmatpush1.msra.mxu0 0.0
    %4622 = vmatprep.subr.mxu0 0.0
    %4623 = vmatpush1.msra.mxu0 0.0
    %4624 = vmatprep.subr.mxu0 0.0
    %4625 = vmatpush1.msra.mxu0 0.0
    %4626 = vmatprep.subr.mxu0 0.0
    %4627 = vmatpush1.msra.mxu0 0.0
    %4628 = vmatprep.subr.mxu0 0.0
    %4629 = vmatpush1.msra.mxu0 0.0
    %4630 = vmatprep.subr.mxu0 0.0
    %4631 = vmatpush1.msra.mxu0 0.0
    %4632 = vmatprep.subr.mxu0 0.0
    %4633 = vmatpush1.msra.mxu0 0.0
    %4634 = vmatprep.subr.mxu0 0.0
    %4635 = vmatpush1.msra.mxu0 0.0
    %4636 = vmatprep.subr.mxu0 0.0
    %4637 = vmatpush1.msra.mxu0 0.0
    %4638 = vmatprep.subr.mxu0 0.0
    %4639 = vmatpush1.msra.mxu0 0.0
    %4640 = vmatprep.mubr.f32.mxu0 0.0
    %4641 = vmatmul.mubr.f32.gmra.mrb[0].mxu0 %v4560
    %v4642 = vpop.f32.mrb[0].mxu0
    %v4643 = vadd.f32 0.0, %v4642
    %v4644 = vpop.f32.mrb[0].mxu0
    %4645 = vmatprep.mubr.f32.mxu0 0.0
    %4646 = vmatmul.mubr.f32.gmra.mrb[0].mxu0 %v4561
    %v4647 = vpop.f32.mrb[0].mxu0
    %v4648 = vadd.f32 0.0, %v4647
    %v4649 = vpop.f32.mrb[0].mxu0
    %4650 = vmatprep.mubr.f32.mxu0 0.0
    %4651 = vmatmul.mubr.f32.gmra.mrb[0].mxu0 %v4562
    %v4652 = vpop.f32.mrb[0].mxu0
    %v4653 = vadd.f32 0.0, %v4652
    %v4654 = vpop.f32.mrb[0].mxu0
    %4655 = vmatprep.mubr.f32.mxu0 0.0
    %4656 = vmatmul.mubr.f32.gmra.mrb[0].mxu0 %v4563
    %v4657 = vpop.f32.mrb[0].mxu0
    %v4658 = vadd.f32 0.0, %v4657
    %v4659 = vpop.f32.mrb[0].mxu0
    %4660 = vmatprep.mubr.f32.mxu0 0.0
    %4661 = vmatmul.mubr.f32.gmra.mrb[0].mxu0 %v4564
    %v4662 = vpop.f32.mrb[0].mxu0
    %v4663 = vadd.f32 0.0, %v4662
    %v4664 = vpop.f32.mrb[0].mxu0
    %4665 = vmatprep.mubr.f32.mxu0 0.0
    %4666 = vmatmul.mubr.f32.gmra.mrb[0].mxu0 %v4565
    %v4667 = vpop.f32.mrb[0].mxu0
    %v4668 = vadd.f32 0.0, %v4667
    %v4669 = vpop.f32.mrb[0].mxu0
    %4670 = vmatprep.mubr.f32.mxu0 0.0
    %4671 = vmatmul.mubr.f32.gmra.mrb[0].mxu0 %v4566
    %v4672 = vpop.f32.mrb[0].mxu0
    %v4673 = vadd.f32 0.0, %v4672
    %v4674 = vpop.f32.mrb[0].mxu0
    %4675 = vmatprep.mubr.f32.mxu0 0.0
    %4676 = vmatmul.mubr.f32.gmra.mrb[0].mxu0 %v4567
    %v4677 = vpop.f32.mrb[0].mxu0
    %v4678 = vadd.f32 0.0, %v4677
    %v4679 = vpop.f32.mrb[0].mxu0
    %4680 = vmatprep.mubr.f32.mxu0 0.0
    %4681 = vmatmul.mubr.f32.gmra.mrb[0].mxu0 %v4568
    %v4682 = vpop.f32.mrb[0].mxu0
    %v4683 = vadd.f32 0.0, %v4682
    %v4684 = vpop.f32.mrb[0].mxu0
    %4685 = vmatprep.mubr.f32.mxu0 0.0
    %4686 = vmatmul.mubr.f32.gmra.mrb[0].mxu0 %v4569
    %v4687 = vpop.f32.mrb[0].mxu0
    %v4688 = vadd.f32 0.0, %v4687
    %v4689 = vpop.f32.mrb[0].mxu0
    %4690 = vmatprep.mubr.f32.mxu0 0.0
    %4691 = vmatmul.mubr.f32.gmra.mrb[0].mxu0 %v4570
    %v4692 = vpop.f32.mrb[0].mxu0
    %v4693 = vadd.f32 0.0, %v4692
    %v4694 = vpop.f32.mrb[0].mxu0
    %4695 = vmatprep.mubr.f32.mxu0 0.0
    %4696 = vmatmul.mubr.f32.gmra.mrb[0].mxu0 %v4571
    %v4697 = vpop.f32.mrb[0].mxu0
    %v4698 = vadd.f32 0.0, %v4697
    %v4699 = vpop.f32.mrb[0].mxu0
    %4700 = vmatprep.mubr.f32.mxu0 0.0
    %4701 = vmatmul.mubr.f32.gmra.mrb[0].mxu0 %v4572
    %v4702 = vpop.f32.mrb[0].mxu0
    %v4703 = vadd.f32 0.0, %v4702
    %v4704 = vpop.f32.mrb[0].mxu0
    %4705 = vmatprep.mubr.f32.mxu0 0.0
    %4706 = vmatmul.mubr.f32.gmra.mrb[0].mxu0 %v4573
    %v4707 = vpop.f32.mrb[0].mxu0
    %v4708 = vadd.f32 0.0, %v4707
    %v4709 = vpop.f32.mrb[0].mxu0
    %4710 = vmatprep.mubr.f32.mxu0 0.0
    %4711 = vmatmul.mubr.f32.gmra.mrb[0].mxu0 %v4574
    %v4712 = vpop.f32.mrb[0].mxu0
    %v4713 = vadd.f32 0.0, %v4712
    %v4714 = vpop.f32.mrb[0].mxu0
    %4715 = vmatprep.mubr.f32.mxu0 0.0
    %4716 = vmatmul.mubr.f32.gmra.mrb[0].mxu0 %v4575
    %v4717 = vpop.f32.mrb[0].mxu0
    %v4718 = vadd.f32 0.0, %v4717
    %v4719 = vpop.f32.mrb[0].mxu0
    %4720 = vdwg.mxu0
    %4721 = vmatprep.subr.mxu0 0.0
    %4722 = vmatpush1.msra.mxu0 %v506
    %4723 = vmatprep.subr.mxu0 0.0
    %4724 = vmatpush1.msra.mxu0 %v507
    %4725 = vmatprep.subr.mxu0 0.0
    %4726 = vmatpush1.msra.mxu0 %v508
    %4727 = vmatprep.subr.mxu0 0.0
    %4728 = vmatpush1.msra.mxu0 %v509
    %4729 = vmatprep.subr.mxu0 0.0
    %4730 = vmatpush1.msra.mxu0 %v510
    %4731 = vmatprep.subr.mxu0 0.0
    %4732 = vmatpush1.msra.mxu0 %v511
    %4733 = vmatprep.subr.mxu0 0.0
    %4734 = vmatpush1.msra.mxu0 %v512
    %4735 = vmatprep.subr.mxu0 0.0
    %4736 = vmatpush1.msra.mxu0 %v513
    %4737 = vmatprep.subr.mxu0 0.0
    %4738 = vmatpush1.msra.mxu0 %v514
    %4739 = vmatprep.subr.mxu0 0.0
    %4740 = vmatpush1.msra.mxu0 %v515
    %4741 = vmatprep.subr.mxu0 0.0
    %4742 = vmatpush1.msra.mxu0 %v516
    %4743 = vmatprep.subr.mxu0 0.0
    %4744 = vmatpush1.msra.mxu0 %v517
    %4745 = vmatprep.subr.mxu0 0.0
    %4746 = vmatpush1.msra.mxu0 %v518
    %4747 = vmatprep.subr.mxu0 0.0
    %4748 = vmatpush1.msra.mxu0 %v519
    %4749 = vmatprep.subr.mxu0 0.0
    %4750 = vmatpush1.msra.mxu0 %v520
    %4751 = vmatprep.subr.mxu0 0.0
    %4752 = vmatpush1.msra.mxu0 %v521
    %4753 = vmatprep.subr.mxu0 0.0
    %4754 = vmatpush1.msra.mxu0 0.0
    %4755 = vmatprep.subr.mxu0 0.0
    %4756 = vmatpush1.msra.mxu0 0.0
    %4757 = vmatprep.subr.mxu0 0.0
    %4758 = vmatpush1.msra.mxu0 0.0
    %4759 = vmatprep.subr.mxu0 0.0
    %4760 = vmatpush1.msra.mxu0 0.0
    %4761 = vmatprep.subr.mxu0 0.0
    %4762 = vmatpush1.msra.mxu0 0.0
    %4763 = vmatprep.subr.mxu0 0.0
    %4764 = vmatpush1.msra.mxu0 0.0
    %4765 = vmatprep.subr.mxu0 0.0
    %4766 = vmatpush1.msra.mxu0 0.0
    %4767 = vmatprep.subr.mxu0 0.0
    %4768 = vmatpush1.msra.mxu0 0.0
    %4769 = vmatprep.subr.mxu0 0.0
    %4770 = vmatpush1.msra.mxu0 0.0
    %4771 = vmatprep.subr.mxu0 0.0
    %4772 = vmatpush1.msra.mxu0 0.0
    %4773 = vmatprep.subr.mxu0 0.0
    %4774 = vmatpush1.msra.mxu0 0.0
    %4775 = vmatprep.subr.mxu0 0.0
    %4776 = vmatpush1.msra.mxu0 0.0
    %4777 = vmatprep.subr.mxu0 0.0
    %4778 = vmatpush1.msra.mxu0 0.0
    %4779 = vmatprep.subr.mxu0 0.0
    %4780 = vmatpush1.msra.mxu0 0.0
    %4781 = vmatprep.subr.mxu0 0.0
    %4782 = vmatpush1.msra.mxu0 0.0
    %4783 = vmatprep.subr.mxu0 0.0
    %4784 = vmatpush1.msra.mxu0 0.0
    %4785 = vmatprep.mubr.f32.mxu0 0.0
    %4786 = vmatmul.mubr.f32.gmra.mrb[0].mxu0 %v4643
    %v4787 = vpop.f32.mrb[0].mxu0
    %v4788 = vadd.f32 0.0, %v4787
    %v4789 = vpop.f32.mrb[0].mxu0
    %4790 = vmatprep.mubr.f32.mxu0 0.0
    %4791 = vmatmul.mubr.f32.gmra.mrb[0].mxu0 %v4648
    %v4792 = vpop.f32.mrb[0].mxu0
    %v4793 = vadd.f32 0.0, %v4792
    %v4794 = vpop.f32.mrb[0].mxu0
    %4795 = vmatprep.mubr.f32.mxu0 0.0
    %4796 = vmatmul.mubr.f32.gmra.mrb[0].mxu0 %v4653
    %v4797 = vpop.f32.mrb[0].mxu0
    %v4798 = vadd.f32 0.0, %v4797
    %v4799 = vpop.f32.mrb[0].mxu0
    %4800 = vmatprep.mubr.f32.mxu0 0.0
    %4801 = vmatmul.mubr.f32.gmra.mrb[0].mxu0 %v4658
    %v4802 = vpop.f32.mrb[0].mxu0
    %v4803 = vadd.f32 0.0, %v4802
    %v4804 = vpop.f32.mrb[0].mxu0
    %4805 = vmatprep.mubr.f32.mxu0 0.0
    %4806 = vmatmul.mubr.f32.gmra.mrb[0].mxu0 %v4663
    %v4807 = vpop.f32.mrb[0].mxu0
    %v4808 = vadd.f32 0.0, %v4807
    %v4809 = vpop.f32.mrb[0].mxu0
    %4810 = vmatprep.mubr.f32.mxu0 0.0
    %4811 = vmatmul.mubr.f32.gmra.mrb[0].mxu0 %v4668
    %v4812 = vpop.f32.mrb[0].mxu0
    %v4813 = vadd.f32 0.0, %v4812
    %v4814 = vpop.f32.mrb[0].mxu0
    %4815 = vmatprep.mubr.f32.mxu0 0.0
    %4816 = vmatmul.mubr.f32.gmra.mrb[0].mxu0 %v4673
    %v4817 = vpop.f32.mrb[0].mxu0
    %v4818 = vadd.f32 0.0, %v4817
    %v4819 = vpop.f32.mrb[0].mxu0
    %4820 = vmatprep.mubr.f32.mxu0 0.0
    %4821 = vmatmul.mubr.f32.gmra.mrb[0].mxu0 %v4678
    %v4822 = vpop.f32.mrb[0].mxu0
    %v4823 = vadd.f32 0.0, %v4822
    %v4824 = vpop.f32.mrb[0].mxu0
    %4825 = vmatprep.mubr.f32.mxu0 0.0
    %4826 = vmatmul.mubr.f32.gmra.mrb[0].mxu0 %v4683
    %v4827 = vpop.f32.mrb[0].mxu0
    %v4828 = vadd.f32 0.0, %v4827
    %v4829 = vpop.f32.mrb[0].mxu0
    %4830 = vmatprep.mubr.f32.mxu0 0.0
    %4831 = vmatmul.mubr.f32.gmra.mrb[0].mxu0 %v4688
    %v4832 = vpop.f32.mrb[0].mxu0
    %v4833 = vadd.f32 0.0, %v4832
    %v4834 = vpop.f32.mrb[0].mxu0
    %4835 = vmatprep.mubr.f32.mxu0 0.0
    %4836 = vmatmul.mubr.f32.gmra.mrb[0].mxu0 %v4693
    %v4837 = vpop.f32.mrb[0].mxu0
    %v4838 = vadd.f32 0.0, %v4837
    %v4839 = vpop.f32.mrb[0].mxu0
    %4840 = vmatprep.mubr.f32.mxu0 0.0
    %4841 = vmatmul.mubr.f32.gmra.mrb[0].mxu0 %v4698
    %v4842 = vpop.f32.mrb[0].mxu0
    %v4843 = vadd.f32 0.0, %v4842
    %v4844 = vpop.f32.mrb[0].mxu0
    %4845 = vmatprep.mubr.f32.mxu0 0.0
    %4846 = vmatmul.mubr.f32.gmra.mrb[0].mxu0 %v4703
    %v4847 = vpop.f32.mrb[0].mxu0
    %v4848 = vadd.f32 0.0, %v4847
    %v4849 = vpop.f32.mrb[0].mxu0
    %4850 = vmatprep.mubr.f32.mxu0 0.0
    %4851 = vmatmul.mubr.f32.gmra.mrb[0].mxu0 %v4708
    %v4852 = vpop.f32.mrb[0].mxu0
    %v4853 = vadd.f32 0.0, %v4852
    %v4854 = vpop.f32.mrb[0].mxu0
    %4855 = vmatprep.mubr.f32.mxu0 0.0
    %4856 = vmatmul.mubr.f32.gmra.mrb[0].mxu0 %v4713
    %v4857 = vpop.f32.mrb[0].mxu0
    %v4858 = vadd.f32 0.0, %v4857
    %v4859 = vpop.f32.mrb[0].mxu0
    %4860 = vmatprep.mubr.f32.mxu0 0.0
    %4861 = vmatmul.mubr.f32.gmra.mrb[0].mxu0 %v4718
    %v4862 = vpop.f32.mrb[0].mxu0
    %v4863 = vadd.f32 0.0, %v4862
    %v4864 = vpop.f32.mrb[0].mxu0
    %4865 = vdwg.mxu0
    %v4866 = vadd.f32 %v4544, %v4788
    %v4867 = vadd.f32 %v4545, %v4793
    %v4868 = vadd.f32 %v4546, %v4798
    %v4869 = vadd.f32 %v4547, %v4803
    %v4870 = vadd.f32 %v4548, %v4808
    %v4871 = vadd.f32 %v4549, %v4813
    %v4872 = vadd.f32 %v4550, %v4818
    %v4873 = vadd.f32 %v4551, %v4823
    %v4874 = vadd.f32 %v4552, %v4828
    %v4875 = vadd.f32 %v4553, %v4833
    %v4876 = vadd.f32 %v4554, %v4838
    %v4877 = vadd.f32 %v4555, %v4843
    %v4878 = vadd.f32 %v4556, %v4848
    %v4879 = vadd.f32 %v4557, %v4853
    %v4880 = vadd.f32 %v4558, %v4858
    %v4881 = vadd.f32 %v4559, %v4863
    %v4882 = vld [vmem:[#allocation6 + $0x180] sm:$0xff]
    %v4883 = vld [vmem:[#allocation6 + $0x188] sm:$0xff]
    %v4884 = vld [vmem:[#allocation6 + $0x190] sm:$0xff]
    %v4885 = vld [vmem:[#allocation6 + $0x198] sm:$0xff]
    %v4886 = vld [vmem:[#allocation6 + $0x1a0] sm:$0xff]
    %v4887 = vld [vmem:[#allocation6 + $0x1a8] sm:$0xff]
    %v4888 = vld [vmem:[#allocation6 + $0x1b0] sm:$0xff]
    %v4889 = vld [vmem:[#allocation6 + $0x1b8] sm:$0xff]
    %v4890 = vld [vmem:[#allocation6 + $0x1c0] sm:$0xff]
    %v4891 = vld [vmem:[#allocation6 + $0x1c8] sm:$0xff]
    %v4892 = vld [vmem:[#allocation6 + $0x1d0] sm:$0xff]
    %v4893 = vld [vmem:[#allocation6 + $0x1d8] sm:$0xff]
    %v4894 = vld [vmem:[#allocation6 + $0x1e0] sm:$0xff]
    %v4895 = vld [vmem:[#allocation6 + $0x1e8] sm:$0xff]
    %v4896 = vld [vmem:[#allocation6 + $0x1f0] sm:$0xff]
    %v4897 = vld [vmem:[#allocation6 + $0x1f8] sm:$0xff]
    %4898 = vmatprep.subr.mxu0 0.0
    %4899 = vmatpush1.msra.mxu0 %v3820
    %4900 = vmatprep.subr.mxu0 0.0
    %4901 = vmatpush1.msra.mxu0 %v3821
    %4902 = vmatprep.subr.mxu0 0.0
    %4903 = vmatpush1.msra.mxu0 %v3822
    %4904 = vmatprep.subr.mxu0 0.0
    %4905 = vmatpush1.msra.mxu0 %v3823
    %4906 = vmatprep.subr.mxu0 0.0
    %4907 = vmatpush1.msra.mxu0 %v3824
    %4908 = vmatprep.subr.mxu0 0.0
    %4909 = vmatpush1.msra.mxu0 %v3825
    %4910 = vmatprep.subr.mxu0 0.0
    %4911 = vmatpush1.msra.mxu0 %v3826
    %4912 = vmatprep.subr.mxu0 0.0
    %4913 = vmatpush1.msra.mxu0 %v3827
    %4914 = vmatprep.subr.mxu0 0.0
    %4915 = vmatpush1.msra.mxu0 %v3828
    %4916 = vmatprep.subr.mxu0 0.0
    %4917 = vmatpush1.msra.mxu0 %v3829
    %4918 = vmatprep.subr.mxu0 0.0
    %4919 = vmatpush1.msra.mxu0 %v3830
    %4920 = vmatprep.subr.mxu0 0.0
    %4921 = vmatpush1.msra.mxu0 %v3831
    %4922 = vmatprep.subr.mxu0 0.0
    %4923 = vmatpush1.msra.mxu0 %v3832
    %4924 = vmatprep.subr.mxu0 0.0
    %4925 = vmatpush1.msra.mxu0 %v3833
    %4926 = vmatprep.subr.mxu0 0.0
    %4927 = vmatpush1.msra.mxu0 %v3834
    %4928 = vmatprep.subr.mxu0 0.0
    %4929 = vmatpush1.msra.mxu0 %v3835
    %4930 = vmatprep.subr.mxu0 0.0
    %4931 = vmatpush1.msra.mxu0 0.0
    %4932 = vmatprep.subr.mxu0 0.0
    %4933 = vmatpush1.msra.mxu0 0.0
    %4934 = vmatprep.subr.mxu0 0.0
    %4935 = vmatpush1.msra.mxu0 0.0
    %4936 = vmatprep.subr.mxu0 0.0
    %4937 = vmatpush1.msra.mxu0 0.0
    %4938 = vmatprep.subr.mxu0 0.0
    %4939 = vmatpush1.msra.mxu0 0.0
    %4940 = vmatprep.subr.mxu0 0.0
    %4941 = vmatpush1.msra.mxu0 0.0
    %4942 = vmatprep.subr.mxu0 0.0
    %4943 = vmatpush1.msra.mxu0 0.0
    %4944 = vmatprep.subr.mxu0 0.0
    %4945 = vmatpush1.msra.mxu0 0.0
    %4946 = vmatprep.subr.mxu0 0.0
    %4947 = vmatpush1.msra.mxu0 0.0
    %4948 = vmatprep.subr.mxu0 0.0
    %4949 = vmatpush1.msra.mxu0 0.0
    %4950 = vmatprep.subr.mxu0 0.0
    %4951 = vmatpush1.msra.mxu0 0.0
    %4952 = vmatprep.subr.mxu0 0.0
    %4953 = vmatpush1.msra.mxu0 0.0
    %4954 = vmatprep.subr.mxu0 0.0
    %4955 = vmatpush1.msra.mxu0 0.0
    %4956 = vmatprep.subr.mxu0 0.0
    %4957 = vmatpush1.msra.mxu0 0.0
    %4958 = vmatprep.subr.mxu0 0.0
    %4959 = vmatpush1.msra.mxu0 0.0
    %4960 = vmatprep.subr.mxu0 0.0
    %4961 = vmatpush1.msra.mxu0 0.0
    %4962 = vmatprep.mubr.f32.mxu0 0.0
    %4963 = vmatmul.mubr.f32.gmra.mrb[0].mxu0 %v4882
    %v4964 = vpop.f32.mrb[0].mxu0
    %v4965 = vadd.f32 0.0, %v4964
    %v4966 = vpop.f32.mrb[0].mxu0
    %4967 = vmatprep.mubr.f32.mxu0 0.0
    %4968 = vmatmul.mubr.f32.gmra.mrb[0].mxu0 %v4883
    %v4969 = vpop.f32.mrb[0].mxu0
    %v4970 = vadd.f32 0.0, %v4969
    %v4971 = vpop.f32.mrb[0].mxu0
    %4972 = vmatprep.mubr.f32.mxu0 0.0
    %4973 = vmatmul.mubr.f32.gmra.mrb[0].mxu0 %v4884
    %v4974 = vpop.f32.mrb[0].mxu0
    %v4975 = vadd.f32 0.0, %v4974
    %v4976 = vpop.f32.mrb[0].mxu0
    %4977 = vmatprep.mubr.f32.mxu0 0.0
    %4978 = vmatmul.mubr.f32.gmra.mrb[0].mxu0 %v4885
    %v4979 = vpop.f32.mrb[0].mxu0
    %v4980 = vadd.f32 0.0, %v4979
    %v4981 = vpop.f32.mrb[0].mxu0
    %4982 = vmatprep.mubr.f32.mxu0 0.0
    %4983 = vmatmul.mubr.f32.gmra.mrb[0].mxu0 %v4886
    %v4984 = vpop.f32.mrb[0].mxu0
    %v4985 = vadd.f32 0.0, %v4984
    %v4986 = vpop.f32.mrb[0].mxu0
    %4987 = vmatprep.mubr.f32.mxu0 0.0
    %4988 = vmatmul.mubr.f32.gmra.mrb[0].mxu0 %v4887
    %v4989 = vpop.f32.mrb[0].mxu0
    %v4990 = vadd.f32 0.0, %v4989
    %v4991 = vpop.f32.mrb[0].mxu0
    %4992 = vmatprep.mubr.f32.mxu0 0.0
    %4993 = vmatmul.mubr.f32.gmra.mrb[0].mxu0 %v4888
    %v4994 = vpop.f32.mrb[0].mxu0
    %v4995 = vadd.f32 0.0, %v4994
    %v4996 = vpop.f32.mrb[0].mxu0
    %4997 = vmatprep.mubr.f32.mxu0 0.0
    %4998 = vmatmul.mubr.f32.gmra.mrb[0].mxu0 %v4889
    %v4999 = vpop.f32.mrb[0].mxu0
    %v5000 = vadd.f32 0.0, %v4999
    %v5001 = vpop.f32.mrb[0].mxu0
    %5002 = vmatprep.mubr.f32.mxu0 0.0
    %5003 = vmatmul.mubr.f32.gmra.mrb[0].mxu0 %v4890
    %v5004 = vpop.f32.mrb[0].mxu0
    %v5005 = vadd.f32 0.0, %v5004
    %v5006 = vpop.f32.mrb[0].mxu0
    %5007 = vmatprep.mubr.f32.mxu0 0.0
    %5008 = vmatmul.mubr.f32.gmra.mrb[0].mxu0 %v4891
    %v5009 = vpop.f32.mrb[0].mxu0
    %v5010 = vadd.f32 0.0, %v5009
    %v5011 = vpop.f32.mrb[0].mxu0
    %5012 = vmatprep.mubr.f32.mxu0 0.0
    %5013 = vmatmul.mubr.f32.gmra.mrb[0].mxu0 %v4892
    %v5014 = vpop.f32.mrb[0].mxu0
    %v5015 = vadd.f32 0.0, %v5014
    %v5016 = vpop.f32.mrb[0].mxu0
    %5017 = vmatprep.mubr.f32.mxu0 0.0
    %5018 = vmatmul.mubr.f32.gmra.mrb[0].mxu0 %v4893
    %v5019 = vpop.f32.mrb[0].mxu0
    %v5020 = vadd.f32 0.0, %v5019
    %v5021 = vpop.f32.mrb[0].mxu0
    %5022 = vmatprep.mubr.f32.mxu0 0.0
    %5023 = vmatmul.mubr.f32.gmra.mrb[0].mxu0 %v4894
    %v5024 = vpop.f32.mrb[0].mxu0
    %v5025 = vadd.f32 0.0, %v5024
    %v5026 = vpop.f32.mrb[0].mxu0
    %5027 = vmatprep.mubr.f32.mxu0 0.0
    %5028 = vmatmul.mubr.f32.gmra.mrb[0].mxu0 %v4895
    %v5029 = vpop.f32.mrb[0].mxu0
    %v5030 = vadd.f32 0.0, %v5029
    %v5031 = vpop.f32.mrb[0].mxu0
    %5032 = vmatprep.mubr.f32.mxu0 0.0
    %5033 = vmatmul.mubr.f32.gmra.mrb[0].mxu0 %v4896
    %v5034 = vpop.f32.mrb[0].mxu0
    %v5035 = vadd.f32 0.0, %v5034
    %v5036 = vpop.f32.mrb[0].mxu0
    %5037 = vmatprep.mubr.f32.mxu0 0.0
    %5038 = vmatmul.mubr.f32.gmra.mrb[0].mxu0 %v4897
    %v5039 = vpop.f32.mrb[0].mxu0
    %v5040 = vadd.f32 0.0, %v5039
    %v5041 = vpop.f32.mrb[0].mxu0
    %5042 = vdwg.mxu0
    %5043 = vmatprep.subr.mxu0 0.0
    %5044 = vmatpush1.msra.mxu0 %v554
    %5045 = vmatprep.subr.mxu0 0.0
    %5046 = vmatpush1.msra.mxu0 %v555
    %5047 = vmatprep.subr.mxu0 0.0
    %5048 = vmatpush1.msra.mxu0 %v556
    %5049 = vmatprep.subr.mxu0 0.0
    %5050 = vmatpush1.msra.mxu0 %v557
    %5051 = vmatprep.subr.mxu0 0.0
    %5052 = vmatpush1.msra.mxu0 %v558
    %5053 = vmatprep.subr.mxu0 0.0
    %5054 = vmatpush1.msra.mxu0 %v559
    %5055 = vmatprep.subr.mxu0 0.0
    %5056 = vmatpush1.msra.mxu0 %v560
    %5057 = vmatprep.subr.mxu0 0.0
    %5058 = vmatpush1.msra.mxu0 %v561
    %5059 = vmatprep.subr.mxu0 0.0
    %5060 = vmatpush1.msra.mxu0 %v562
    %5061 = vmatprep.subr.mxu0 0.0
    %5062 = vmatpush1.msra.mxu0 %v563
    %5063 = vmatprep.subr.mxu0 0.0
    %5064 = vmatpush1.msra.mxu0 %v564
    %5065 = vmatprep.subr.mxu0 0.0
    %5066 = vmatpush1.msra.mxu0 %v565
    %5067 = vmatprep.subr.mxu0 0.0
    %5068 = vmatpush1.msra.mxu0 %v566
    %5069 = vmatprep.subr.mxu0 0.0
    %5070 = vmatpush1.msra.mxu0 %v567
    %5071 = vmatprep.subr.mxu0 0.0
    %5072 = vmatpush1.msra.mxu0 %v568
    %5073 = vmatprep.subr.mxu0 0.0
    %5074 = vmatpush1.msra.mxu0 %v569
    %5075 = vmatprep.subr.mxu0 0.0
    %5076 = vmatpush1.msra.mxu0 0.0
    %5077 = vmatprep.subr.mxu0 0.0
    %5078 = vmatpush1.msra.mxu0 0.0
    %5079 = vmatprep.subr.mxu0 0.0
    %5080 = vmatpush1.msra.mxu0 0.0
    %5081 = vmatprep.subr.mxu0 0.0
    %5082 = vmatpush1.msra.mxu0 0.0
    %5083 = vmatprep.subr.mxu0 0.0
    %5084 = vmatpush1.msra.mxu0 0.0
    %5085 = vmatprep.subr.mxu0 0.0
    %5086 = vmatpush1.msra.mxu0 0.0
    %5087 = vmatprep.subr.mxu0 0.0
    %5088 = vmatpush1.msra.mxu0 0.0
    %5089 = vmatprep.subr.mxu0 0.0
    %5090 = vmatpush1.msra.mxu0 0.0
    %5091 = vmatprep.subr.mxu0 0.0
    %5092 = vmatpush1.msra.mxu0 0.0
    %5093 = vmatprep.subr.mxu0 0.0
    %5094 = vmatpush1.msra.mxu0 0.0
    %5095 = vmatprep.subr.mxu0 0.0
    %5096 = vmatpush1.msra.mxu0 0.0
    %5097 = vmatprep.subr.mxu0 0.0
    %5098 = vmatpush1.msra.mxu0 0.0
    %5099 = vmatprep.subr.mxu0 0.0
    %5100 = vmatpush1.msra.mxu0 0.0
    %5101 = vmatprep.subr.mxu0 0.0
    %5102 = vmatpush1.msra.mxu0 0.0
    %5103 = vmatprep.subr.mxu0 0.0
    %5104 = vmatpush1.msra.mxu0 0.0
    %5105 = vmatprep.subr.mxu0 0.0
    %5106 = vmatpush1.msra.mxu0 0.0
    %5107 = vmatprep.mubr.f32.mxu0 0.0
    %5108 = vmatmul.mubr.f32.gmra.mrb[0].mxu0 %v4965
    %v5109 = vpop.f32.mrb[0].mxu0
    %v5110 = vadd.f32 0.0, %v5109
    %v5111 = vpop.f32.mrb[0].mxu0
    %5112 = vmatprep.mubr.f32.mxu0 0.0
    %5113 = vmatmul.mubr.f32.gmra.mrb[0].mxu0 %v4970
    %v5114 = vpop.f32.mrb[0].mxu0
    %v5115 = vadd.f32 0.0, %v5114
    %v5116 = vpop.f32.mrb[0].mxu0
    %5117 = vmatprep.mubr.f32.mxu0 0.0
    %5118 = vmatmul.mubr.f32.gmra.mrb[0].mxu0 %v4975
    %v5119 = vpop.f32.mrb[0].mxu0
    %v5120 = vadd.f32 0.0, %v5119
    %v5121 = vpop.f32.mrb[0].mxu0
    %5122 = vmatprep.mubr.f32.mxu0 0.0
    %5123 = vmatmul.mubr.f32.gmra.mrb[0].mxu0 %v4980
    %v5124 = vpop.f32.mrb[0].mxu0
    %v5125 = vadd.f32 0.0, %v5124
    %v5126 = vpop.f32.mrb[0].mxu0
    %5127 = vmatprep.mubr.f32.mxu0 0.0
    %5128 = vmatmul.mubr.f32.gmra.mrb[0].mxu0 %v4985
    %v5129 = vpop.f32.mrb[0].mxu0
    %v5130 = vadd.f32 0.0, %v5129
    %v5131 = vpop.f32.mrb[0].mxu0
    %5132 = vmatprep.mubr.f32.mxu0 0.0
    %5133 = vmatmul.mubr.f32.gmra.mrb[0].mxu0 %v4990
    %v5134 = vpop.f32.mrb[0].mxu0
    %v5135 = vadd.f32 0.0, %v5134
    %v5136 = vpop.f32.mrb[0].mxu0
    %5137 = vmatprep.mubr.f32.mxu0 0.0
    %5138 = vmatmul.mubr.f32.gmra.mrb[0].mxu0 %v4995
    %v5139 = vpop.f32.mrb[0].mxu0
    %v5140 = vadd.f32 0.0, %v5139
    %v5141 = vpop.f32.mrb[0].mxu0
    %5142 = vmatprep.mubr.f32.mxu0 0.0
    %5143 = vmatmul.mubr.f32.gmra.mrb[0].mxu0 %v5000
    %v5144 = vpop.f32.mrb[0].mxu0
    %v5145 = vadd.f32 0.0, %v5144
    %v5146 = vpop.f32.mrb[0].mxu0
    %5147 = vmatprep.mubr.f32.mxu0 0.0
    %5148 = vmatmul.mubr.f32.gmra.mrb[0].mxu0 %v5005
    %v5149 = vpop.f32.mrb[0].mxu0
    %v5150 = vadd.f32 0.0, %v5149
    %v5151 = vpop.f32.mrb[0].mxu0
    %5152 = vmatprep.mubr.f32.mxu0 0.0
    %5153 = vmatmul.mubr.f32.gmra.mrb[0].mxu0 %v5010
    %v5154 = vpop.f32.mrb[0].mxu0
    %v5155 = vadd.f32 0.0, %v5154
    %v5156 = vpop.f32.mrb[0].mxu0
    %5157 = vmatprep.mubr.f32.mxu0 0.0
    %5158 = vmatmul.mubr.f32.gmra.mrb[0].mxu0 %v5015
    %v5159 = vpop.f32.mrb[0].mxu0
    %v5160 = vadd.f32 0.0, %v5159
    %v5161 = vpop.f32.mrb[0].mxu0
    %5162 = vmatprep.mubr.f32.mxu0 0.0
    %5163 = vmatmul.mubr.f32.gmra.mrb[0].mxu0 %v5020
    %v5164 = vpop.f32.mrb[0].mxu0
    %v5165 = vadd.f32 0.0, %v5164
    %v5166 = vpop.f32.mrb[0].mxu0
    %5167 = vmatprep.mubr.f32.mxu0 0.0
    %5168 = vmatmul.mubr.f32.gmra.mrb[0].mxu0 %v5025
    %v5169 = vpop.f32.mrb[0].mxu0
    %v5170 = vadd.f32 0.0, %v5169
    %v5171 = vpop.f32.mrb[0].mxu0
    %5172 = vmatprep.mubr.f32.mxu0 0.0
    %5173 = vmatmul.mubr.f32.gmra.mrb[0].mxu0 %v5030
    %v5174 = vpop.f32.mrb[0].mxu0
    %v5175 = vadd.f32 0.0, %v5174
    %v5176 = vpop.f32.mrb[0].mxu0
    %5177 = vmatprep.mubr.f32.mxu0 0.0
    %5178 = vmatmul.mubr.f32.gmra.mrb[0].mxu0 %v5035
    %v5179 = vpop.f32.mrb[0].mxu0
    %v5180 = vadd.f32 0.0, %v5179
    %v5181 = vpop.f32.mrb[0].mxu0
    %5182 = vmatprep.mubr.f32.mxu0 0.0
    %5183 = vmatmul.mubr.f32.gmra.mrb[0].mxu0 %v5040
    %v5184 = vpop.f32.mrb[0].mxu0
    %v5185 = vadd.f32 0.0, %v5184
    %v5186 = vpop.f32.mrb[0].mxu0
    %5187 = vdwg.mxu0
    %v5188 = vadd.f32 %v4866, %v5110
    %v5189 = vadd.f32 %v4867, %v5115
    %v5190 = vadd.f32 %v4868, %v5120
    %v5191 = vadd.f32 %v4869, %v5125
    %v5192 = vadd.f32 %v4870, %v5130
    %v5193 = vadd.f32 %v4871, %v5135
    %v5194 = vadd.f32 %v4872, %v5140
    %v5195 = vadd.f32 %v4873, %v5145
    %v5196 = vadd.f32 %v4874, %v5150
    %v5197 = vadd.f32 %v4875, %v5155
    %v5198 = vadd.f32 %v4876, %v5160
    %v5199 = vadd.f32 %v4877, %v5165
    %v5200 = vadd.f32 %v4878, %v5170
    %v5201 = vadd.f32 %v4879, %v5175
    %v5202 = vadd.f32 %v4880, %v5180
    %v5203 = vadd.f32 %v4881, %v5185
    %v5204 = vld [vmem:[#allocation6 + $0x200] sm:$0xff]
    %v5205 = vld [vmem:[#allocation6 + $0x208] sm:$0xff]
    %v5206 = vld [vmem:[#allocation6 + $0x210] sm:$0xff]
    %v5207 = vld [vmem:[#allocation6 + $0x218] sm:$0xff]
    %v5208 = vld [vmem:[#allocation6 + $0x220] sm:$0xff]
    %v5209 = vld [vmem:[#allocation6 + $0x228] sm:$0xff]
    %v5210 = vld [vmem:[#allocation6 + $0x230] sm:$0xff]
    %v5211 = vld [vmem:[#allocation6 + $0x238] sm:$0xff]
    %v5212 = vld [vmem:[#allocation6 + $0x240] sm:$0xff]
    %v5213 = vld [vmem:[#allocation6 + $0x248] sm:$0xff]
    %v5214 = vld [vmem:[#allocation6 + $0x250] sm:$0xff]
    %v5215 = vld [vmem:[#allocation6 + $0x258] sm:$0xff]
    %v5216 = vld [vmem:[#allocation6 + $0x260] sm:$0xff]
    %v5217 = vld [vmem:[#allocation6 + $0x268] sm:$0xff]
    %v5218 = vld [vmem:[#allocation6 + $0x270] sm:$0xff]
    %v5219 = vld [vmem:[#allocation6 + $0x278] sm:$0xff]
    %5220 = vmatprep.subr.mxu0 0.0
    %5221 = vmatpush1.msra.mxu0 %v3820
    %5222 = vmatprep.subr.mxu0 0.0
    %5223 = vmatpush1.msra.mxu0 %v3821
    %5224 = vmatprep.subr.mxu0 0.0
    %5225 = vmatpush1.msra.mxu0 %v3822
    %5226 = vmatprep.subr.mxu0 0.0
    %5227 = vmatpush1.msra.mxu0 %v3823
    %5228 = vmatprep.subr.mxu0 0.0
    %5229 = vmatpush1.msra.mxu0 %v3824
    %5230 = vmatprep.subr.mxu0 0.0
    %5231 = vmatpush1.msra.mxu0 %v3825
    %5232 = vmatprep.subr.mxu0 0.0
    %5233 = vmatpush1.msra.mxu0 %v3826
    %5234 = vmatprep.subr.mxu0 0.0
    %5235 = vmatpush1.msra.mxu0 %v3827
    %5236 = vmatprep.subr.mxu0 0.0
    %5237 = vmatpush1.msra.mxu0 %v3828
    %5238 = vmatprep.subr.mxu0 0.0
    %5239 = vmatpush1.msra.mxu0 %v3829
    %5240 = vmatprep.subr.mxu0 0.0
    %5241 = vmatpush1.msra.mxu0 %v3830
    %5242 = vmatprep.subr.mxu0 0.0
    %5243 = vmatpush1.msra.mxu0 %v3831
    %5244 = vmatprep.subr.mxu0 0.0
    %5245 = vmatpush1.msra.mxu0 %v3832
    %5246 = vmatprep.subr.mxu0 0.0
    %5247 = vmatpush1.msra.mxu0 %v3833
    %5248 = vmatprep.subr.mxu0 0.0
    %5249 = vmatpush1.msra.mxu0 %v3834
    %5250 = vmatprep.subr.mxu0 0.0
    %5251 = vmatpush1.msra.mxu0 %v3835
    %5252 = vmatprep.subr.mxu0 0.0
    %5253 = vmatpush1.msra.mxu0 0.0
    %5254 = vmatprep.subr.mxu0 0.0
    %5255 = vmatpush1.msra.mxu0 0.0
    %5256 = vmatprep.subr.mxu0 0.0
    %5257 = vmatpush1.msra.mxu0 0.0
    %5258 = vmatprep.subr.mxu0 0.0
    %5259 = vmatpush1.msra.mxu0 0.0
    %5260 = vmatprep.subr.mxu0 0.0
    %5261 = vmatpush1.msra.mxu0 0.0
    %5262 = vmatprep.subr.mxu0 0.0
    %5263 = vmatpush1.msra.mxu0 0.0
    %5264 = vmatprep.subr.mxu0 0.0
    %5265 = vmatpush1.msra.mxu0 0.0
    %5266 = vmatprep.subr.mxu0 0.0
    %5267 = vmatpush1.msra.mxu0 0.0
    %5268 = vmatprep.subr.mxu0 0.0
    %5269 = vmatpush1.msra.mxu0 0.0
    %5270 = vmatprep.subr.mxu0 0.0
    %5271 = vmatpush1.msra.mxu0 0.0
    %5272 = vmatprep.subr.mxu0 0.0
    %5273 = vmatpush1.msra.mxu0 0.0
    %5274 = vmatprep.subr.mxu0 0.0
    %5275 = vmatpush1.msra.mxu0 0.0
    %5276 = vmatprep.subr.mxu0 0.0
    %5277 = vmatpush1.msra.mxu0 0.0
    %5278 = vmatprep.subr.mxu0 0.0
    %5279 = vmatpush1.msra.mxu0 0.0
    %5280 = vmatprep.subr.mxu0 0.0
    %5281 = vmatpush1.msra.mxu0 0.0
    %5282 = vmatprep.subr.mxu0 0.0
    %5283 = vmatpush1.msra.mxu0 0.0
    %5284 = vmatprep.mubr.f32.mxu0 0.0
    %5285 = vmatmul.mubr.f32.gmra.mrb[0].mxu0 %v5204
    %v5286 = vpop.f32.mrb[0].mxu0
    %v5287 = vadd.f32 0.0, %v5286
    %v5288 = vpop.f32.mrb[0].mxu0
    %5289 = vmatprep.mubr.f32.mxu0 0.0
    %5290 = vmatmul.mubr.f32.gmra.mrb[0].mxu0 %v5205
    %v5291 = vpop.f32.mrb[0].mxu0
    %v5292 = vadd.f32 0.0, %v5291
    %v5293 = vpop.f32.mrb[0].mxu0
    %5294 = vmatprep.mubr.f32.mxu0 0.0
    %5295 = vmatmul.mubr.f32.gmra.mrb[0].mxu0 %v5206
    %v5296 = vpop.f32.mrb[0].mxu0
    %v5297 = vadd.f32 0.0, %v5296
    %v5298 = vpop.f32.mrb[0].mxu0
    %5299 = vmatprep.mubr.f32.mxu0 0.0
    %5300 = vmatmul.mubr.f32.gmra.mrb[0].mxu0 %v5207
    %v5301 = vpop.f32.mrb[0].mxu0
    %v5302 = vadd.f32 0.0, %v5301
    %v5303 = vpop.f32.mrb[0].mxu0
    %5304 = vmatprep.mubr.f32.mxu0 0.0
    %5305 = vmatmul.mubr.f32.gmra.mrb[0].mxu0 %v5208
    %v5306 = vpop.f32.mrb[0].mxu0
    %v5307 = vadd.f32 0.0, %v5306
    %v5308 = vpop.f32.mrb[0].mxu0
    %5309 = vmatprep.mubr.f32.mxu0 0.0
    %5310 = vmatmul.mubr.f32.gmra.mrb[0].mxu0 %v5209
    %v5311 = vpop.f32.mrb[0].mxu0
    %v5312 = vadd.f32 0.0, %v5311
    %v5313 = vpop.f32.mrb[0].mxu0
    %5314 = vmatprep.mubr.f32.mxu0 0.0
    %5315 = vmatmul.mubr.f32.gmra.mrb[0].mxu0 %v5210
    %v5316 = vpop.f32.mrb[0].mxu0
    %v5317 = vadd.f32 0.0, %v5316
    %v5318 = vpop.f32.mrb[0].mxu0
    %5319 = vmatprep.mubr.f32.mxu0 0.0
    %5320 = vmatmul.mubr.f32.gmra.mrb[0].mxu0 %v5211
    %v5321 = vpop.f32.mrb[0].mxu0
    %v5322 = vadd.f32 0.0, %v5321
    %v5323 = vpop.f32.mrb[0].mxu0
    %5324 = vmatprep.mubr.f32.mxu0 0.0
    %5325 = vmatmul.mubr.f32.gmra.mrb[0].mxu0 %v5212
    %v5326 = vpop.f32.mrb[0].mxu0
    %v5327 = vadd.f32 0.0, %v5326
    %v5328 = vpop.f32.mrb[0].mxu0
    %5329 = vmatprep.mubr.f32.mxu0 0.0
    %5330 = vmatmul.mubr.f32.gmra.mrb[0].mxu0 %v5213
    %v5331 = vpop.f32.mrb[0].mxu0
    %v5332 = vadd.f32 0.0, %v5331
    %v5333 = vpop.f32.mrb[0].mxu0
    %5334 = vmatprep.mubr.f32.mxu0 0.0
    %5335 = vmatmul.mubr.f32.gmra.mrb[0].mxu0 %v5214
    %v5336 = vpop.f32.mrb[0].mxu0
    %v5337 = vadd.f32 0.0, %v5336
    %v5338 = vpop.f32.mrb[0].mxu0
    %5339 = vmatprep.mubr.f32.mxu0 0.0
    %5340 = vmatmul.mubr.f32.gmra.mrb[0].mxu0 %v5215
    %v5341 = vpop.f32.mrb[0].mxu0
    %v5342 = vadd.f32 0.0, %v5341
    %v5343 = vpop.f32.mrb[0].mxu0
    %5344 = vmatprep.mubr.f32.mxu0 0.0
    %5345 = vmatmul.mubr.f32.gmra.mrb[0].mxu0 %v5216
    %v5346 = vpop.f32.mrb[0].mxu0
    %v5347 = vadd.f32 0.0, %v5346
    %v5348 = vpop.f32.mrb[0].mxu0
    %5349 = vmatprep.mubr.f32.mxu0 0.0
    %5350 = vmatmul.mubr.f32.gmra.mrb[0].mxu0 %v5217
    %v5351 = vpop.f32.mrb[0].mxu0
    %v5352 = vadd.f32 0.0, %v5351
    %v5353 = vpop.f32.mrb[0].mxu0
    %5354 = vmatprep.mubr.f32.mxu0 0.0
    %5355 = vmatmul.mubr.f32.gmra.mrb[0].mxu0 %v5218
    %v5356 = vpop.f32.mrb[0].mxu0
    %v5357 = vadd.f32 0.0, %v5356
    %v5358 = vpop.f32.mrb[0].mxu0
    %5359 = vmatprep.mubr.f32.mxu0 0.0
    %5360 = vmatmul.mubr.f32.gmra.mrb[0].mxu0 %v5219
    %v5361 = vpop.f32.mrb[0].mxu0
    %v5362 = vadd.f32 0.0, %v5361
    %v5363 = vpop.f32.mrb[0].mxu0
    %5364 = vdwg.mxu0
    %5365 = vmatprep.subr.mxu0 0.0
    %5366 = vmatpush1.msra.mxu0 %v602
    %5367 = vmatprep.subr.mxu0 0.0
    %5368 = vmatpush1.msra.mxu0 %v603
    %5369 = vmatprep.subr.mxu0 0.0
    %5370 = vmatpush1.msra.mxu0 %v604
    %5371 = vmatprep.subr.mxu0 0.0
    %5372 = vmatpush1.msra.mxu0 %v605
    %5373 = vmatprep.subr.mxu0 0.0
    %5374 = vmatpush1.msra.mxu0 %v606
    %5375 = vmatprep.subr.mxu0 0.0
    %5376 = vmatpush1.msra.mxu0 %v607
    %5377 = vmatprep.subr.mxu0 0.0
    %5378 = vmatpush1.msra.mxu0 %v608
    %5379 = vmatprep.subr.mxu0 0.0
    %5380 = vmatpush1.msra.mxu0 %v609
    %5381 = vmatprep.subr.mxu0 0.0
    %5382 = vmatpush1.msra.mxu0 %v610
    %5383 = vmatprep.subr.mxu0 0.0
    %5384 = vmatpush1.msra.mxu0 %v611
    %5385 = vmatprep.subr.mxu0 0.0
    %5386 = vmatpush1.msra.mxu0 %v612
    %5387 = vmatprep.subr.mxu0 0.0
    %5388 = vmatpush1.msra.mxu0 %v613
    %5389 = vmatprep.subr.mxu0 0.0
    %5390 = vmatpush1.msra.mxu0 %v614
    %5391 = vmatprep.subr.mxu0 0.0
    %5392 = vmatpush1.msra.mxu0 %v615
    %5393 = vmatprep.subr.mxu0 0.0
    %5394 = vmatpush1.msra.mxu0 %v616
    %5395 = vmatprep.subr.mxu0 0.0
    %5396 = vmatpush1.msra.mxu0 %v617
    %5397 = vmatprep.subr.mxu0 0.0
    %5398 = vmatpush1.msra.mxu0 0.0
    %5399 = vmatprep.subr.mxu0 0.0
    %5400 = vmatpush1.msra.mxu0 0.0
    %5401 = vmatprep.subr.mxu0 0.0
    %5402 = vmatpush1.msra.mxu0 0.0
    %5403 = vmatprep.subr.mxu0 0.0
    %5404 = vmatpush1.msra.mxu0 0.0
    %5405 = vmatprep.subr.mxu0 0.0
    %5406 = vmatpush1.msra.mxu0 0.0
    %5407 = vmatprep.subr.mxu0 0.0
    %5408 = vmatpush1.msra.mxu0 0.0
    %5409 = vmatprep.subr.mxu0 0.0
    %5410 = vmatpush1.msra.mxu0 0.0
    %5411 = vmatprep.subr.mxu0 0.0
    %5412 = vmatpush1.msra.mxu0 0.0
    %5413 = vmatprep.subr.mxu0 0.0
    %5414 = vmatpush1.msra.mxu0 0.0
    %5415 = vmatprep.subr.mxu0 0.0
    %5416 = vmatpush1.msra.mxu0 0.0
    %5417 = vmatprep.subr.mxu0 0.0
    %5418 = vmatpush1.msra.mxu0 0.0
    %5419 = vmatprep.subr.mxu0 0.0
    %5420 = vmatpush1.msra.mxu0 0.0
    %5421 = vmatprep.subr.mxu0 0.0
    %5422 = vmatpush1.msra.mxu0 0.0
    %5423 = vmatprep.subr.mxu0 0.0
    %5424 = vmatpush1.msra.mxu0 0.0
    %5425 = vmatprep.subr.mxu0 0.0
    %5426 = vmatpush1.msra.mxu0 0.0
    %5427 = vmatprep.subr.mxu0 0.0
    %5428 = vmatpush1.msra.mxu0 0.0
    %5429 = vmatprep.mubr.f32.mxu0 0.0
    %5430 = vmatmul.mubr.f32.gmra.mrb[0].mxu0 %v5287
    %v5431 = vpop.f32.mrb[0].mxu0
    %v5432 = vadd.f32 0.0, %v5431
    %v5433 = vpop.f32.mrb[0].mxu0
    %5434 = vmatprep.mubr.f32.mxu0 0.0
    %5435 = vmatmul.mubr.f32.gmra.mrb[0].mxu0 %v5292
    %v5436 = vpop.f32.mrb[0].mxu0
    %v5437 = vadd.f32 0.0, %v5436
    %v5438 = vpop.f32.mrb[0].mxu0
    %5439 = vmatprep.mubr.f32.mxu0 0.0
    %5440 = vmatmul.mubr.f32.gmra.mrb[0].mxu0 %v5297
    %v5441 = vpop.f32.mrb[0].mxu0
    %v5442 = vadd.f32 0.0, %v5441
    %v5443 = vpop.f32.mrb[0].mxu0
    %5444 = vmatprep.mubr.f32.mxu0 0.0
    %5445 = vmatmul.mubr.f32.gmra.mrb[0].mxu0 %v5302
    %v5446 = vpop.f32.mrb[0].mxu0
    %v5447 = vadd.f32 0.0, %v5446
    %v5448 = vpop.f32.mrb[0].mxu0
    %5449 = vmatprep.mubr.f32.mxu0 0.0
    %5450 = vmatmul.mubr.f32.gmra.mrb[0].mxu0 %v5307
    %v5451 = vpop.f32.mrb[0].mxu0
    %v5452 = vadd.f32 0.0, %v5451
    %v5453 = vpop.f32.mrb[0].mxu0
    %5454 = vmatprep.mubr.f32.mxu0 0.0
    %5455 = vmatmul.mubr.f32.gmra.mrb[0].mxu0 %v5312
    %v5456 = vpop.f32.mrb[0].mxu0
    %v5457 = vadd.f32 0.0, %v5456
    %v5458 = vpop.f32.mrb[0].mxu0
    %5459 = vmatprep.mubr.f32.mxu0 0.0
    %5460 = vmatmul.mubr.f32.gmra.mrb[0].mxu0 %v5317
    %v5461 = vpop.f32.mrb[0].mxu0
    %v5462 = vadd.f32 0.0, %v5461
    %v5463 = vpop.f32.mrb[0].mxu0
    %5464 = vmatprep.mubr.f32.mxu0 0.0
    %5465 = vmatmul.mubr.f32.gmra.mrb[0].mxu0 %v5322
    %v5466 = vpop.f32.mrb[0].mxu0
    %v5467 = vadd.f32 0.0, %v5466
    %v5468 = vpop.f32.mrb[0].mxu0
    %5469 = vmatprep.mubr.f32.mxu0 0.0
    %5470 = vmatmul.mubr.f32.gmra.mrb[0].mxu0 %v5327
    %v5471 = vpop.f32.mrb[0].mxu0
    %v5472 = vadd.f32 0.0, %v5471
    %v5473 = vpop.f32.mrb[0].mxu0
    %5474 = vmatprep.mubr.f32.mxu0 0.0
    %5475 = vmatmul.mubr.f32.gmra.mrb[0].mxu0 %v5332
    %v5476 = vpop.f32.mrb[0].mxu0
    %v5477 = vadd.f32 0.0, %v5476
    %v5478 = vpop.f32.mrb[0].mxu0
    %5479 = vmatprep.mubr.f32.mxu0 0.0
    %5480 = vmatmul.mubr.f32.gmra.mrb[0].mxu0 %v5337
    %v5481 = vpop.f32.mrb[0].mxu0
    %v5482 = vadd.f32 0.0, %v5481
    %v5483 = vpop.f32.mrb[0].mxu0
    %5484 = vmatprep.mubr.f32.mxu0 0.0
    %5485 = vmatmul.mubr.f32.gmra.mrb[0].mxu0 %v5342
    %v5486 = vpop.f32.mrb[0].mxu0
    %v5487 = vadd.f32 0.0, %v5486
    %v5488 = vpop.f32.mrb[0].mxu0
    %5489 = vmatprep.mubr.f32.mxu0 0.0
    %5490 = vmatmul.mubr.f32.gmra.mrb[0].mxu0 %v5347
    %v5491 = vpop.f32.mrb[0].mxu0
    %v5492 = vadd.f32 0.0, %v5491
    %v5493 = vpop.f32.mrb[0].mxu0
    %5494 = vmatprep.mubr.f32.mxu0 0.0
    %5495 = vmatmul.mubr.f32.gmra.mrb[0].mxu0 %v5352
    %v5496 = vpop.f32.mrb[0].mxu0
    %v5497 = vadd.f32 0.0, %v5496
    %v5498 = vpop.f32.mrb[0].mxu0
    %5499 = vmatprep.mubr.f32.mxu0 0.0
    %5500 = vmatmul.mubr.f32.gmra.mrb[0].mxu0 %v5357
    %v5501 = vpop.f32.mrb[0].mxu0
    %v5502 = vadd.f32 0.0, %v5501
    %v5503 = vpop.f32.mrb[0].mxu0
    %5504 = vmatprep.mubr.f32.mxu0 0.0
    %5505 = vmatmul.mubr.f32.gmra.mrb[0].mxu0 %v5362
    %v5506 = vpop.f32.mrb[0].mxu0
    %v5507 = vadd.f32 0.0, %v5506
    %v5508 = vpop.f32.mrb[0].mxu0
    %5509 = vdwg.mxu0
    %v5510 = vadd.f32 %v5188, %v5432
    %v5511 = vadd.f32 %v5189, %v5437
    %v5512 = vadd.f32 %v5190, %v5442
    %v5513 = vadd.f32 %v5191, %v5447
    %v5514 = vadd.f32 %v5192, %v5452
    %v5515 = vadd.f32 %v5193, %v5457
    %v5516 = vadd.f32 %v5194, %v5462
    %v5517 = vadd.f32 %v5195, %v5467
    %v5518 = vadd.f32 %v5196, %v5472
    %v5519 = vadd.f32 %v5197, %v5477
    %v5520 = vadd.f32 %v5198, %v5482
    %v5521 = vadd.f32 %v5199, %v5487
    %v5522 = vadd.f32 %v5200, %v5492
    %v5523 = vadd.f32 %v5201, %v5497
    %v5524 = vadd.f32 %v5202, %v5502
    %v5525 = vadd.f32 %v5203, %v5507
    %v5526 = vadd.f32 %v5510, %v5511
    %v5527 = vadd.f32 %v5526, %v5512
    %v5528 = vadd.f32 %v5527, %v5513
    %v5529 = vadd.f32 %v5528, %v5514
    %v5530 = vadd.f32 %v5529, %v5515
    %v5531 = vadd.f32 %v5530, %v5516
    %v5532 = vadd.f32 %v5531, %v5517
    %v5533 = vadd.f32 %v5532, %v5518
    %v5534 = vadd.f32 %v5533, %v5519
    %v5535 = vadd.f32 %v5534, %v5520
    %v5536 = vadd.f32 %v5535, %v5521
    %v5537 = vadd.f32 %v5536, %v5522
    %v5538 = vadd.f32 %v5537, %v5523
    %v5539 = vadd.f32 %v5538, %v5524
    %v5540 = vadd.f32 %v5539, %v5525
    %5541 = vadd.xlane.f32.xlu0 %v5540
    %v5542 = vpop.xlane.xlu0 %5541
    %v5543 = vrot.slane %v5542, 4
    %v5544 = vadd.f32 %v5542, %v5543
    %v5545 = vrot.slane %v5544, 2
    %v5546 = vadd.f32 %v5544, %v5545
    %v5547 = vrot.slane %v5546, 1
    %v5548 = vadd.f32 %v5546, %v5547
    %s5549 = vtos %v5548
    %v5550 = vstv %s5549
    %v5551 = vmul.f32 %v5550, %v3422
    %v5552 = vsub.f32 %v5510, %v5551
    %v5553 = vsub.f32 %v5511, %v5551
    %v5554 = vsub.f32 %v5512, %v5551
    %v5555 = vsub.f32 %v5513, %v5551
    %v5556 = vsub.f32 %v5514, %v5551
    %v5557 = vsub.f32 %v5515, %v5551
    %v5558 = vsub.f32 %v5516, %v5551
    %v5559 = vsub.f32 %v5517, %v5551
    %v5560 = vsub.f32 %v5518, %v5551
    %v5561 = vsub.f32 %v5519, %v5551
    %v5562 = vsub.f32 %v5520, %v5551
    %v5563 = vsub.f32 %v5521, %v5551
    %v5564 = vsub.f32 %v5522, %v5551
    %v5565 = vsub.f32 %v5523, %v5551
    %v5566 = vsub.f32 %v5524, %v5551
    %v5567 = vsub.f32 %v5525, %v5551
    %v5568 = vmul.f32 %v5552, %v5552
    %v5569 = vmul.f32 %v5553, %v5553
    %v5570 = vmul.f32 %v5554, %v5554
    %v5571 = vmul.f32 %v5555, %v5555
    %v5572 = vmul.f32 %v5556, %v5556
    %v5573 = vmul.f32 %v5557, %v5557
    %v5574 = vmul.f32 %v5558, %v5558
    %v5575 = vmul.f32 %v5559, %v5559
    %v5576 = vmul.f32 %v5560, %v5560
    %v5577 = vmul.f32 %v5561, %v5561
    %v5578 = vmul.f32 %v5562, %v5562
    %v5579 = vmul.f32 %v5563, %v5563
    %v5580 = vmul.f32 %v5564, %v5564
    %v5581 = vmul.f32 %v5565, %v5565
    %v5582 = vmul.f32 %v5566, %v5566
    %v5583 = vmul.f32 %v5567, %v5567
    %v5584 = vadd.f32 %v5568, %v5569
    %v5585 = vadd.f32 %v5584, %v5570
    %v5586 = vadd.f32 %v5585, %v5571
    %v5587 = vadd.f32 %v5586, %v5572
    %v5588 = vadd.f32 %v5587, %v5573
    %v5589 = vadd.f32 %v5588, %v5574
    %v5590 = vadd.f32 %v5589, %v5575
    %v5591 = vadd.f32 %v5590, %v5576
    %v5592 = vadd.f32 %v5591, %v5577
    %v5593 = vadd.f32 %v5592, %v5578
    %v5594 = vadd.f32 %v5593, %v5579
    %v5595 = vadd.f32 %v5594, %v5580
    %v5596 = vadd.f32 %v5595, %v5581
    %v5597 = vadd.f32 %v5596, %v5582
    %v5598 = vadd.f32 %v5597, %v5583
    %5599 = vadd.xlane.f32.xlu0 %v5598
    %v5600 = vpop.xlane.xlu0 %5599
    %v5601 = vrot.slane %v5600, 4
    %v5602 = vadd.f32 %v5600, %v5601
    %v5603 = vrot.slane %v5602, 2
    %v5604 = vadd.f32 %v5602, %v5603
    %v5605 = vrot.slane %v5604, 1
    %v5606 = vadd.f32 %v5604, %v5605
    %s5607 = vtos %v5606
    %v5608 = vstv %s5607
    %v5609 = vmul.f32 %v5608, %v3422
    %v5610 = vadd.f32 %v5609, 1e-05
    %v5611 = vrsqrt.pop %v5610
    %v5612 = vmul.f32 %v5552, %v5611
    %v5613 = vmul.f32 %v5553, %v5611
    %v5614 = vmul.f32 %v5554, %v5611
    %v5615 = vmul.f32 %v5555, %v5611
    %v5616 = vmul.f32 %v5556, %v5611
    %v5617 = vmul.f32 %v5557, %v5611
    %v5618 = vmul.f32 %v5558, %v5611
    %v5619 = vmul.f32 %v5559, %v5611
    %v5620 = vmul.f32 %v5560, %v5611
    %v5621 = vmul.f32 %v5561, %v5611
    %v5622 = vmul.f32 %v5562, %v5611
    %v5623 = vmul.f32 %v5563, %v5611
    %v5624 = vmul.f32 %v5564, %v5611
    %v5625 = vmul.f32 %v5565, %v5611
    %v5626 = vmul.f32 %v5566, %v5611
    %v5627 = vmul.f32 %v5567, %v5611
    %5629 = vset.pattern.permute.xlu0 0
    %5630 = vperm.xlu0 %5629, %v310
    %v5631 = vpop.permute.xlu0 %5630
    %5634 = vset.pattern.permute.xlu0 0
    %5635 = vperm.xlu0 %5634, %v311
    %v5636 = vpop.permute.xlu0 %5635
    %5639 = vset.pattern.permute.xlu0 0
    %5640 = vperm.xlu0 %5639, %v312
    %v5641 = vpop.permute.xlu0 %5640
    %5644 = vset.pattern.permute.xlu0 0
    %5645 = vperm.xlu0 %5644, %v313
    %v5646 = vpop.permute.xlu0 %5645
    %5649 = vset.pattern.permute.xlu0 0
    %5650 = vperm.xlu0 %5649, %v314
    %v5651 = vpop.permute.xlu0 %5650
    %5654 = vset.pattern.permute.xlu0 0
    %5655 = vperm.xlu0 %5654, %v315
    %v5656 = vpop.permute.xlu0 %5655
    %5659 = vset.pattern.permute.xlu0 0
    %5660 = vperm.xlu0 %5659, %v316
    %v5661 = vpop.permute.xlu0 %5660
    %5664 = vset.pattern.permute.xlu0 0
    %5665 = vperm.xlu0 %5664, %v317
    %v5666 = vpop.permute.xlu0 %5665
    %5669 = vset.pattern.permute.xlu0 0
    %5670 = vperm.xlu0 %5669, %v318
    %v5671 = vpop.permute.xlu0 %5670
    %5674 = vset.pattern.permute.xlu0 0
    %5675 = vperm.xlu0 %5674, %v319
    %v5676 = vpop.permute.xlu0 %5675
    %5679 = vset.pattern.permute.xlu0 0
    %5680 = vperm.xlu0 %5679, %v320
    %v5681 = vpop.permute.xlu0 %5680
    %5684 = vset.pattern.permute.xlu0 0
    %5685 = vperm.xlu0 %5684, %v321
    %v5686 = vpop.permute.xlu0 %5685
    %5689 = vset.pattern.permute.xlu0 0
    %5690 = vperm.xlu0 %5689, %v322
    %v5691 = vpop.permute.xlu0 %5690
    %5694 = vset.pattern.permute.xlu0 0
    %5695 = vperm.xlu0 %5694, %v323
    %v5696 = vpop.permute.xlu0 %5695
    %5699 = vset.pattern.permute.xlu0 0
    %5700 = vperm.xlu0 %5699, %v324
    %v5701 = vpop.permute.xlu0 %5700
    %5704 = vset.pattern.permute.xlu0 0
    %5705 = vperm.xlu0 %5704, %v325
    %v5706 = vpop.permute.xlu0 %5705
    %v5708 = vmul.f32 %v5612, %v5631
    %v5709 = vmul.f32 %v5613, %v5636
    %v5710 = vmul.f32 %v5614, %v5641
    %v5711 = vmul.f32 %v5615, %v5646
    %v5712 = vmul.f32 %v5616, %v5651
    %v5713 = vmul.f32 %v5617, %v5656
    %v5714 = vmul.f32 %v5618, %v5661
    %v5715 = vmul.f32 %v5619, %v5666
    %v5716 = vmul.f32 %v5620, %v5671
    %v5717 = vmul.f32 %v5621, %v5676
    %v5718 = vmul.f32 %v5622, %v5681
    %v5719 = vmul.f32 %v5623, %v5686
    %v5720 = vmul.f32 %v5624, %v5691
    %v5721 = vmul.f32 %v5625, %v5696
    %v5722 = vmul.f32 %v5626, %v5701
    %v5723 = vmul.f32 %v5627, %v5706
    %5725 = vset.pattern.permute.xlu0 0
    %5726 = vperm.xlu0 %5725, %v326
    %v5727 = vpop.permute.xlu0 %5726
    %5730 = vset.pattern.permute.xlu0 0
    %5731 = vperm.xlu0 %5730, %v327
    %v5732 = vpop.permute.xlu0 %5731
    %5735 = vset.pattern.permute.xlu0 0
    %5736 = vperm.xlu0 %5735, %v328
    %v5737 = vpop.permute.xlu0 %5736
    %5740 = vset.pattern.permute.xlu0 0
    %5741 = vperm.xlu0 %5740, %v329
    %v5742 = vpop.permute.xlu0 %5741
    %5745 = vset.pattern.permute.xlu0 0
    %5746 = vperm.xlu0 %5745, %v330
    %v5747 = vpop.permute.xlu0 %5746
    %5750 = vset.pattern.permute.xlu0 0
    %5751 = vperm.xlu0 %5750, %v331
    %v5752 = vpop.permute.xlu0 %5751
    %5755 = vset.pattern.permute.xlu0 0
    %5756 = vperm.xlu0 %5755, %v332
    %v5757 = vpop.permute.xlu0 %5756
    %5760 = vset.pattern.permute.xlu0 0
    %5761 = vperm.xlu0 %5760, %v333
    %v5762 = vpop.permute.xlu0 %5761
    %5765 = vset.pattern.permute.xlu0 0
    %5766 = vperm.xlu0 %5765, %v334
    %v5767 = vpop.permute.xlu0 %5766
    %5770 = vset.pattern.permute.xlu0 0
    %5771 = vperm.xlu0 %5770, %v335
    %v5772 = vpop.permute.xlu0 %5771
    %5775 = vset.pattern.permute.xlu0 0
    %5776 = vperm.xlu0 %5775, %v336
    %v5777 = vpop.permute.xlu0 %5776
    %5780 = vset.pattern.permute.xlu0 0
    %5781 = vperm.xlu0 %5780, %v337
    %v5782 = vpop.permute.xlu0 %5781
    %5785 = vset.pattern.permute.xlu0 0
    %5786 = vperm.xlu0 %5785, %v338
    %v5787 = vpop.permute.xlu0 %5786
    %5790 = vset.pattern.permute.xlu0 0
    %5791 = vperm.xlu0 %5790, %v339
    %v5792 = vpop.permute.xlu0 %5791
    %5795 = vset.pattern.permute.xlu0 0
    %5796 = vperm.xlu0 %5795, %v340
    %v5797 = vpop.permute.xlu0 %5796
    %5800 = vset.pattern.permute.xlu0 0
    %5801 = vperm.xlu0 %5800, %v341
    %v5802 = vpop.permute.xlu0 %5801
    %v5804 = vadd.f32 %v5708, %v5727
    %v5805 = vadd.f32 %v5709, %v5732
    %v5806 = vadd.f32 %v5710, %v5737
    %v5807 = vadd.f32 %v5711, %v5742
    %v5808 = vadd.f32 %v5712, %v5747
    %v5809 = vadd.f32 %v5713, %v5752
    %v5810 = vadd.f32 %v5714, %v5757
    %v5811 = vadd.f32 %v5715, %v5762
    %v5812 = vadd.f32 %v5716, %v5767
    %v5813 = vadd.f32 %v5717, %v5772
    %v5814 = vadd.f32 %v5718, %v5777
    %v5815 = vadd.f32 %v5719, %v5782
    %v5816 = vadd.f32 %v5720, %v5787
    %v5817 = vadd.f32 %v5721, %v5792
    %v5818 = vadd.f32 %v5722, %v5797
    %v5819 = vadd.f32 %v5723, %v5802
    %v5820 = vmul.f32 %v5804, 0.5
    %v5821 = vmul.f32 %v5805, 0.5
    %v5822 = vmul.f32 %v5806, 0.5
    %v5823 = vmul.f32 %v5807, 0.5
    %v5824 = vmul.f32 %v5808, 0.5
    %v5825 = vmul.f32 %v5809, 0.5
    %v5826 = vmul.f32 %v5810, 0.5
    %v5827 = vmul.f32 %v5811, 0.5
    %v5828 = vmul.f32 %v5812, 0.5
    %v5829 = vmul.f32 %v5813, 0.5
    %v5830 = vmul.f32 %v5814, 0.5
    %v5831 = vmul.f32 %v5815, 0.5
    %v5832 = vmul.f32 %v5816, 0.5
    %v5833 = vmul.f32 %v5817, 0.5
    %v5834 = vmul.f32 %v5818, 0.5
    %v5835 = vmul.f32 %v5819, 0.5
    %v5836 = vmul.f32 %v5804, 0.044715
    %v5837 = vmul.f32 %v5805, 0.044715
    %v5838 = vmul.f32 %v5806, 0.044715
    %v5839 = vmul.f32 %v5807, 0.044715
    %v5840 = vmul.f32 %v5808, 0.044715
    %v5841 = vmul.f32 %v5809, 0.044715
    %v5842 = vmul.f32 %v5810, 0.044715
    %v5843 = vmul.f32 %v5811, 0.044715
    %v5844 = vmul.f32 %v5812, 0.044715
    %v5845 = vmul.f32 %v5813, 0.044715
    %v5846 = vmul.f32 %v5814, 0.044715
    %v5847 = vmul.f32 %v5815, 0.044715
    %v5848 = vmul.f32 %v5816, 0.044715
    %v5849 = vmul.f32 %v5817, 0.044715
    %v5850 = vmul.f32 %v5818, 0.044715
    %v5851 = vmul.f32 %v5819, 0.044715
    %v5852 = vmul.f32 %v5836, %v5804
    %v5853 = vmul.f32 %v5837, %v5805
    %v5854 = vmul.f32 %v5838, %v5806
    %v5855 = vmul.f32 %v5839, %v5807
    %v5856 = vmul.f32 %v5840, %v5808
    %v5857 = vmul.f32 %v5841, %v5809
    %v5858 = vmul.f32 %v5842, %v5810
    %v5859 = vmul.f32 %v5843, %v5811
    %v5860 = vmul.f32 %v5844, %v5812
    %v5861 = vmul.f32 %v5845, %v5813
    %v5862 = vmul.f32 %v5846, %v5814
    %v5863 = vmul.f32 %v5847, %v5815
    %v5864 = vmul.f32 %v5848, %v5816
    %v5865 = vmul.f32 %v5849, %v5817
    %v5866 = vmul.f32 %v5850, %v5818
    %v5867 = vmul.f32 %v5851, %v5819
    %v5868 = vmul.f32 %v5852, %v5804
    %v5869 = vmul.f32 %v5853, %v5805
    %v5870 = vmul.f32 %v5854, %v5806
    %v5871 = vmul.f32 %v5855, %v5807
    %v5872 = vmul.f32 %v5856, %v5808
    %v5873 = vmul.f32 %v5857, %v5809
    %v5874 = vmul.f32 %v5858, %v5810
    %v5875 = vmul.f32 %v5859, %v5811
    %v5876 = vmul.f32 %v5860, %v5812
    %v5877 = vmul.f32 %v5861, %v5813
    %v5878 = vmul.f32 %v5862, %v5814
    %v5879 = vmul.f32 %v5863, %v5815
    %v5880 = vmul.f32 %v5864, %v5816
    %v5881 = vmul.f32 %v5865, %v5817
    %v5882 = vmul.f32 %v5866, %v5818
    %v5883 = vmul.f32 %v5867, %v5819
    %v5884 = vadd.f32 %v5804, %v5868
    %v5885 = vadd.f32 %v5805, %v5869
    %v5886 = vadd.f32 %v5806, %v5870
    %v5887 = vadd.f32 %v5807, %v5871
    %v5888 = vadd.f32 %v5808, %v5872
    %v5889 = vadd.f32 %v5809, %v5873
    %v5890 = vadd.f32 %v5810, %v5874
    %v5891 = vadd.f32 %v5811, %v5875
    %v5892 = vadd.f32 %v5812, %v5876
    %v5893 = vadd.f32 %v5813, %v5877
    %v5894 = vadd.f32 %v5814, %v5878
    %v5895 = vadd.f32 %v5815, %v5879
    %v5896 = vadd.f32 %v5816, %v5880
    %v5897 = vadd.f32 %v5817, %v5881
    %v5898 = vadd.f32 %v5818, %v5882
    %v5899 = vadd.f32 %v5819, %v5883
    %v5900 = vmul.f32 %v5884, 0.7978846
    %v5901 = vmul.f32 %v5885, 0.7978846
    %v5902 = vmul.f32 %v5886, 0.7978846
    %v5903 = vmul.f32 %v5887, 0.7978846
    %v5904 = vmul.f32 %v5888, 0.7978846
    %v5905 = vmul.f32 %v5889, 0.7978846
    %v5906 = vmul.f32 %v5890, 0.7978846
    %v5907 = vmul.f32 %v5891, 0.7978846
    %v5908 = vmul.f32 %v5892, 0.7978846
    %v5909 = vmul.f32 %v5893, 0.7978846
    %v5910 = vmul.f32 %v5894, 0.7978846
    %v5911 = vmul.f32 %v5895, 0.7978846
    %v5912 = vmul.f32 %v5896, 0.7978846
    %v5913 = vmul.f32 %v5897, 0.7978846
    %v5914 = vmul.f32 %v5898, 0.7978846
    %v5915 = vmul.f32 %v5899, 0.7978846
    %v5916 = vtanh.pop %v5900
    %v5917 = vtanh.pop %v5901
    %v5918 = vtanh.pop %v5902
    %v5919 = vtanh.pop %v5903
    %v5920 = vtanh.pop %v5904
    %v5921 = vtanh.pop %v5905
    %v5922 = vtanh.pop %v5906
    %v5923 = vtanh.pop %v5907
    %v5924 = vtanh.pop %v5908
    %v5925 = vtanh.pop %v5909
    %v5926 = vtanh.pop %v5910
    %v5927 = vtanh.pop %v5911
    %v5928 = vtanh.pop %v5912
    %v5929 = vtanh.pop %v5913
    %v5930 = vtanh.pop %v5914
    %v5931 = vtanh.pop %v5915
    %v5932 = vadd.f32 %v5916, 1.0
    %v5933 = vadd.f32 %v5917, 1.0
    %v5934 = vadd.f32 %v5918, 1.0
    %v5935 = vadd.f32 %v5919, 1.0
    %v5936 = vadd.f32 %v5920, 1.0
    %v5937 = vadd.f32 %v5921, 1.0
    %v5938 = vadd.f32 %v5922, 1.0
    %v5939 = vadd.f32 %v5923, 1.0
    %v5940 = vadd.f32 %v5924, 1.0
    %v5941 = vadd.f32 %v5925, 1.0
    %v5942 = vadd.f32 %v5926, 1.0
    %v5943 = vadd.f32 %v5927, 1.0
    %v5944 = vadd.f32 %v5928, 1.0
    %v5945 = vadd.f32 %v5929, 1.0
    %v5946 = vadd.f32 %v5930, 1.0
    %v5947 = vadd.f32 %v5931, 1.0
    %v5948 = vmul.f32 %v5820, %v5932
    %v5949 = vmul.f32 %v5821, %v5933
    %v5950 = vmul.f32 %v5822, %v5934
    %v5951 = vmul.f32 %v5823, %v5935
    %v5952 = vmul.f32 %v5824, %v5936
    %v5953 = vmul.f32 %v5825, %v5937
    %v5954 = vmul.f32 %v5826, %v5938
    %v5955 = vmul.f32 %v5827, %v5939
    %v5956 = vmul.f32 %v5828, %v5940
    %v5957 = vmul.f32 %v5829, %v5941
    %v5958 = vmul.f32 %v5830, %v5942
    %v5959 = vmul.f32 %v5831, %v5943
    %v5960 = vmul.f32 %v5832, %v5944
    %v5961 = vmul.f32 %v5833, %v5945
    %v5962 = vmul.f32 %v5834, %v5946
    %v5963 = vmul.f32 %v5835, %v5947
    %v5964 = vadd.f32 %v5948, %v2434
    %v5965 = vadd.f32 %v5949, %v2439
    %v5966 = vadd.f32 %v5950, %v2444
    %v5967 = vadd.f32 %v5951, %v2449
    %v5968 = vadd.f32 %v5952, %v2454
    %v5969 = vadd.f32 %v5953, %v2459
    %v5970 = vadd.f32 %v5954, %v2464
    %v5971 = vadd.f32 %v5955, %v2469
    %v5972 = vadd.f32 %v5956, %v2474
    %v5973 = vadd.f32 %v5957, %v2479
    %v5974 = vadd.f32 %v5958, %v2484
    %v5975 = vadd.f32 %v5959, %v2489
    %v5976 = vadd.f32 %v5960, %v2494
    %v5977 = vadd.f32 %v5961, %v2499
    %v5978 = vadd.f32 %v5962, %v2504
    %v5979 = vadd.f32 %v5963, %v2509
    %5980 = vst [vmem:[#allocation9] sm:$0xff] %v5964
    %5981 = vst [vmem:[#allocation9 + $0x8] sm:$0xff] %v5965
    %5982 = vst [vmem:[#allocation9 + $0x10] sm:$0xff] %v5966
    %5983 = vst [vmem:[#allocation9 + $0x18] sm:$0xff] %v5967
    %5984 = vst [vmem:[#allocation9 + $0x20] sm:$0xff] %v5968
    %5985 = vst [vmem:[#allocation9 + $0x28] sm:$0xff] %v5969
    %5986 = vst [vmem:[#allocation9 + $0x30] sm:$0xff] %v5970
    %5987 = vst [vmem:[#allocation9 + $0x38] sm:$0xff] %v5971
    %5988 = vst [vmem:[#allocation9 + $0x40] sm:$0xff] %v5972
    %5989 = vst [vmem:[#allocation9 + $0x48] sm:$0xff] %v5973
    %5990 = vst [vmem:[#allocation9 + $0x50] sm:$0xff] %v5974
    %5991 = vst [vmem:[#allocation9 + $0x58] sm:$0xff] %v5975
    %5992 = vst [vmem:[#allocation9 + $0x60] sm:$0xff] %v5976
    %5993 = vst [vmem:[#allocation9 + $0x68] sm:$0xff] %v5977
    %5994 = vst [vmem:[#allocation9 + $0x70] sm:$0xff] %v5978
    %5995 = vst [vmem:[#allocation9 + $0x78] sm:$0xff] %v5979
    %s5996 = sld [smem:[#allocation2 + $0x1]]
    %s5997 = smul.f32 %s5996, 6.2831855
    %v5998 = vstv %s5997
    %v5999 = vmul.f32 %v5998, %v342
    %v6000 = vand.u32 2147483647, %v5999
    %vm6001 = vcmp.le.f32.partialorder %v6000, 0.7853982
    %vm6002 = vcmp.lt.s32.totalorder %v5999, 0
    %v6003 = vand.u32 %v5999, 2139095040
    %v6004 = vshrl.u32 %v6003, 23
    %v6005 = vsub.s32 %v6004, 127
    %v6006 = vand.u32 2147483647, %v5999
    %v6007 = vand.u32 %v6006, 8388607
    %v6008 = vor.u32 %v6007, 8388608
    %v6009 = vsub.s32 0, %v6008
    %v6010 = vadd.s32 %v6005, 1
    %vm6011 = vcmp.gt.s32.totalorder %v6010, 0
    %v6012 = vsel %vm6011, %v6010, 0
    %v6013 = vshrl.u32 %v6012, 5
    %v6014 = vand.u32 %v6012, 31
    %v6015 = vsub.s32 32, %v6014
    %v6016 = vshrl.u32 683565275, %v6015
    %v6017 = vshll.u32 683565275, %v6014
    %v6018 = vshrl.u32 2475754826, %v6015
    %v6019 = vor.u32 %v6017, %v6018
    %v6020 = vshll.u32 2475754826, %v6014
    %v6021 = vshrl.u32 2131351028, %v6015
    %v6022 = vor.u32 %v6020, %v6021
    %v6023 = vshll.u32 2131351028, %v6014
    %v6024 = vshrl.u32 2102212464, %v6015
    %v6025 = vor.u32 %v6023, %v6024
    %v6026 = vshll.u32 2102212464, %v6014
    %v6027 = vshrl.u32 920167782, %v6015
    %v6028 = vor.u32 %v6026, %v6027
    %v6029 = vshll.u32 920167782, %v6014
    %v6030 = vshrl.u32 1326507024, %v6015
    %v6031 = vor.u32 %v6029, %v6030
    %vm6032 = vcmp.lt.s32.totalorder %v6013, 1
    %vm6033 = vcmp.lt.s32.totalorder %v6013, 2
    %vm6034 = vcmp.lt.s32.totalorder %v6013, 3
    %vm6035 = vcmp.lt.s32.totalorder %v6013, 4
    %v6036 = vsel %vm6032, %v6016, %v6019
    %v6037 = vsel %vm6035, %v6025, 2102212464
    %v6038 = vsel %vm6034, %v6022, %v6037
    %v6039 = vsel %vm6033, %v6036, %v6038
    %v6040 = vsel %vm6032, %v6019, %v6022
    %v6041 = vsel %vm6035, %v6028, 920167782
    %v6042 = vsel %vm6034, %v6025, %v6041
    %v6043 = vsel %vm6033, %v6040, %v6042
    %v6044 = vsel %vm6032, %v6022, %v6025
    %v6045 = vsel %vm6035, %v6031, 1326507024
    %v6046 = vsel %vm6034, %v6028, %v6045
    %v6047 = vsel %vm6033, %v6044, %v6046
    %v6048 = vshll.u32 %v6008, 8
    %v6049 = vmul.u32.u64.compose %v6048, %v6047
    %v6050 = vextract.low.u32 %v6049
    %v6051 = vextract.high.u32 %v6049
    %v6052 = vmul.u32.u64.compose %v6048, %v6043
    %v6053 = vextract.low.u32 %v6052
    %v6054 = vextract.high.u32 %v6052
    %v6055 = vmul.u32 %v6048, %v6039
    %v6056 = vadd.s32 %v6051, %v6053
    %vm6057 = vc.u32 %v6051, %v6053
    %v6058 = vadd.s32 %v6054, 1
    %v6059 = vsel %vm6057, %v6058, %v6054
    %v6060 = vadd.s32 %v6055, %v6059
    %v6061 = vadd.s32 %v6060, 536870912
    %v6062 = vshrl.u32 %v6061, 30
    %v6063 = vshll.u32 %v6062, 30
    %v6064 = vsub.s32 %v6060, %v6063
    %vm6065 = vcmp.lt.s32.totalorder %v6064, 0
    %v6066 = vsub.s32 0, %v6064
    %v6067 = vsel %vm6065, %v6066, %v6064
    %v6068 = vclz %v6067
    %v6069 = vsub.s32 %v6068, 2
    %vm6070 = vcmp.gt.s32.totalorder 0, %v6069
    %v6071 = vsel %vm6070, 0, %v6069
    %v6072 = vsub.s32 32, %v6071
    %v6073 = vshll.u32 %v6064, %v6071
    %v6074 = vshrl.u32 %v6056, %v6072
    %v6075 = vor.u32 %v6073, %v6074
    %v6076 = vsub.s32 4294967266, %v6071
    %v6077 = vadd.s32 %v6076, 127
    %v6078 = vshll.u32 %v6077, 23
    %v6079 = vor.u32 4788187, %v6078
    %v6080 = vand.u32 2147483647, %v6079
    %v6082 = vcvt.s32.f32 %v6075
    %v6083 = vmul.f32 %v6082, %v6080
    %v6084 = vxor.u32 %v6083, 2147483648
    %v6085 = vsel %vm6002, %v6084, %v6083
    %v6086 = vsub.s32 4, %v6062
    %v6087 = vsel %vm6002, %v6086, %v6062
    %v6088 = vsel %vm6001, %v5999, %v6085
    %v6089 = vsel %vm6001, 0, %v6087
    %v6090 = vcosq.f32.pop %v6088
    %v6091 = vsinq.f32.pop %v6088
    %vm6092 = vweird.f32 %v5999
    %v6093 = vand.u32 %v6089, 3
    %vm6094 = vcmp.lt.s32.totalorder %v6093, 2
    %vm6095 = vcmp.eq.s32.totalorder %v6093, 0
    %v6096 = vxor.u32 %v6091, 2147483648
    %v6097 = vsel %vm6095, %v6090, %v6096
    %vm6098 = vcmp.eq.s32.totalorder %v6093, 2
    %v6099 = vxor.u32 %v6090, 2147483648
    %v6100 = vsel %vm6098, %v6099, %v6091
    %v6101 = vsel %vm6094, %v6097, %v6100
    %v6102 = vsel %vm6092, nan, %v6101
    %v6103 = vand.u32 2147483647, %v5999
    %vm6104 = vcmp.le.f32.partialorder %v6103, 0.7853982
    %vm6105 = vcmp.lt.s32.totalorder %v5999, 0
    %v6106 = vand.u32 %v5999, 2139095040
    %v6107 = vshrl.u32 %v6106, 23
    %v6108 = vsub.s32 %v6107, 127
    %v6109 = vand.u32 2147483647, %v5999
    %v6110 = vand.u32 %v6109, 8388607
    %v6111 = vor.u32 %v6110, 8388608
    %v6112 = vsub.s32 0, %v6111
    %v6113 = vadd.s32 %v6108, 1
    %vm6114 = vcmp.gt.s32.totalorder %v6113, 0
    %v6115 = vsel %vm6114, %v6113, 0
    %v6116 = vshrl.u32 %v6115, 5
    %v6117 = vand.u32 %v6115, 31
    %v6118 = vsub.s32 32, %v6117
    %v6119 = vshrl.u32 683565275, %v6118
    %v6120 = vshll.u32 683565275, %v6117
    %v6121 = vshrl.u32 2475754826, %v6118
    %v6122 = vor.u32 %v6120, %v6121
    %v6123 = vshll.u32 2475754826, %v6117
    %v6124 = vshrl.u32 2131351028, %v6118
    %v6125 = vor.u32 %v6123, %v6124
    %v6126 = vshll.u32 2131351028, %v6117
    %v6127 = vshrl.u32 2102212464, %v6118
    %v6128 = vor.u32 %v6126, %v6127
    %v6129 = vshll.u32 2102212464, %v6117
    %v6130 = vshrl.u32 920167782, %v6118
    %v6131 = vor.u32 %v6129, %v6130
    %v6132 = vshll.u32 920167782, %v6117
    %v6133 = vshrl.u32 1326507024, %v6118
    %v6134 = vor.u32 %v6132, %v6133
    %vm6135 = vcmp.lt.s32.totalorder %v6116, 1
    %vm6136 = vcmp.lt.s32.totalorder %v6116, 2
    %vm6137 = vcmp.lt.s32.totalorder %v6116, 3
    %vm6138 = vcmp.lt.s32.totalorder %v6116, 4
    %v6139 = vsel %vm6135, %v6119, %v6122
    %v6140 = vsel %vm6138, %v6128, 2102212464
    %v6141 = vsel %vm6137, %v6125, %v6140
    %v6142 = vsel %vm6136, %v6139, %v6141
    %v6143 = vsel %vm6135, %v6122, %v6125
    %v6144 = vsel %vm6138, %v6131, 920167782
    %v6145 = vsel %vm6137, %v6128, %v6144
    %v6146 = vsel %vm6136, %v6143, %v6145
    %v6147 = vsel %vm6135, %v6125, %v6128
    %v6148 = vsel %vm6138, %v6134, 1326507024
    %v6149 = vsel %vm6137, %v6131, %v6148
    %v6150 = vsel %vm6136, %v6147, %v6149
    %v6151 = vshll.u32 %v6111, 8
    %v6152 = vmul.u32.u64.compose %v6151, %v6150
    %v6153 = vextract.low.u32 %v6152
    %v6154 = vextract.high.u32 %v6152
    %v6155 = vmul.u32.u64.compose %v6151, %v6146
    %v6156 = vextract.low.u32 %v6155
    %v6157 = vextract.high.u32 %v6155
    %v6158 = vmul.u32 %v6151, %v6142
    %v6159 = vadd.s32 %v6154, %v6156
    %vm6160 = vc.u32 %v6154, %v6156
    %v6161 = vadd.s32 %v6157, 1
    %v6162 = vsel %vm6160, %v6161, %v6157
    %v6163 = vadd.s32 %v6158, %v6162
    %v6164 = vadd.s32 %v6163, 536870912
    %v6165 = vshrl.u32 %v6164, 30
    %v6166 = vshll.u32 %v6165, 30
    %v6167 = vsub.s32 %v6163, %v6166
    %vm6168 = vcmp.lt.s32.totalorder %v6167, 0
    %v6169 = vsub.s32 0, %v6167
    %v6170 = vsel %vm6168, %v6169, %v6167
    %v6171 = vclz %v6170
    %v6172 = vsub.s32 %v6171, 2
    %vm6173 = vcmp.gt.s32.totalorder 0, %v6172
    %v6174 = vsel %vm6173, 0, %v6172
    %v6175 = vsub.s32 32, %v6174
    %v6176 = vshll.u32 %v6167, %v6174
    %v6177 = vshrl.u32 %v6159, %v6175
    %v6178 = vor.u32 %v6176, %v6177
    %v6179 = vsub.s32 4294967266, %v6174
    %v6180 = vadd.s32 %v6179, 127
    %v6181 = vshll.u32 %v6180, 23
    %v6182 = vor.u32 4788187, %v6181
    %v6183 = vand.u32 2147483647, %v6182
    %v6185 = vcvt.s32.f32 %v6178
    %v6186 = vmul.f32 %v6185, %v6183
    %v6187 = vxor.u32 %v6186, 2147483648
    %v6188 = vsel %vm6105, %v6187, %v6186
    %v6189 = vsub.s32 4, %v6165
    %v6190 = vsel %vm6105, %v6189, %v6165
    %v6191 = vsel %vm6104, %v5999, %v6188
    %v6192 = vsel %vm6104, 0, %v6190
    %v6193 = vcosq.f32.pop %v6191
    %v6194 = vsinq.f32.pop %v6191
    %vm6195 = vweird.f32 %v5999
    %v6196 = vadd.s32 %v6192, 3
    %v6197 = vand.u32 %v6196, 3
    %vm6198 = vcmp.lt.s32.totalorder %v6197, 2
    %vm6199 = vcmp.eq.s32.totalorder %v6197, 0
    %v6200 = vxor.u32 %v6194, 2147483648
    %v6201 = vsel %vm6199, %v6193, %v6200
    %vm6202 = vcmp.eq.s32.totalorder %v6197, 2
    %v6203 = vxor.u32 %v6193, 2147483648
    %v6204 = vsel %vm6202, %v6203, %v6194
    %v6205 = vsel %vm6198, %v6201, %v6204
    %v6206 = vsel %vm6195, nan, %v6205
    %6208 = vset.pattern.permute.xlu0 0
    %6209 = vperm.xlu0 %6208, %v6102
    %v6210 = vpop.permute.xlu0 %6209
    %6213 = vset.pattern.permute.xlu0 0
    %6214 = vperm.xlu0 %6213, %v6206
    %v6215 = vpop.permute.xlu0 %6214
    %s6217 = scalar_lea.vmem [#allocation7], 2
    %v6218 = vld [vmem:[%s6217] sm:$0x3]
    %v6220 = vsel %vm1129, %v6218, 0
    %6222 = vmatprep.subr.mxu0 0.0
    %6223 = vmatpush1.msra.mxu0 %v6220
    %6224 = vmatprep.subr.mxu0 0.0
    %6225 = vmatpush1.msra.mxu0 0.0
    %6226 = vmatprep.subr.mxu0 0.0
    %6227 = vmatpush1.msra.mxu0 0.0
    %6228 = vmatprep.subr.mxu0 0.0
    %6229 = vmatpush1.msra.mxu0 0.0
    %6230 = vmatprep.subr.mxu0 0.0
    %6231 = vmatpush1.msra.mxu0 0.0
    %6232 = vmatprep.subr.mxu0 0.0
    %6233 = vmatpush1.msra.mxu0 0.0
    %6234 = vmatprep.subr.mxu0 0.0
    %6235 = vmatpush1.msra.mxu0 0.0
    %6236 = vmatprep.subr.mxu0 0.0
    %6237 = vmatpush1.msra.mxu0 0.0
    %6238 = vmatprep.subr.mxu0 0.0
    %6239 = vmatpush1.msra.mxu0 0.0
    %6240 = vmatprep.subr.mxu0 0.0
    %6241 = vmatpush1.msra.mxu0 0.0
    %6242 = vmatprep.subr.mxu0 0.0
    %6243 = vmatpush1.msra.mxu0 0.0
    %6244 = vmatprep.subr.mxu0 0.0
    %6245 = vmatpush1.msra.mxu0 0.0
    %6246 = vmatprep.subr.mxu0 0.0
    %6247 = vmatpush1.msra.mxu0 0.0
    %6248 = vmatprep.subr.mxu0 0.0
    %6249 = vmatpush1.msra.mxu0 0.0
    %6250 = vmatprep.subr.mxu0 0.0
    %6251 = vmatpush1.msra.mxu0 0.0
    %6252 = vmatprep.subr.mxu0 0.0
    %6253 = vmatpush1.msra.mxu0 0.0
    %6254 = vmatprep.subr.mxu0 0.0
    %6255 = vmatpush1.msra.mxu0 0.0
    %6256 = vmatprep.subr.mxu0 0.0
    %6257 = vmatpush1.msra.mxu0 0.0
    %6258 = vmatprep.subr.mxu0 0.0
    %6259 = vmatpush1.msra.mxu0 0.0
    %6260 = vmatprep.subr.mxu0 0.0
    %6261 = vmatpush1.msra.mxu0 0.0
    %6262 = vmatprep.subr.mxu0 0.0
    %6263 = vmatpush1.msra.mxu0 0.0
    %6264 = vmatprep.subr.mxu0 0.0
    %6265 = vmatpush1.msra.mxu0 0.0
    %6266 = vmatprep.subr.mxu0 0.0
    %6267 = vmatpush1.msra.mxu0 0.0
    %6268 = vmatprep.subr.mxu0 0.0
    %6269 = vmatpush1.msra.mxu0 0.0
    %6270 = vmatprep.subr.mxu0 0.0
    %6271 = vmatpush1.msra.mxu0 0.0
    %6272 = vmatprep.subr.mxu0 0.0
    %6273 = vmatpush1.msra.mxu0 0.0
    %6274 = vmatprep.subr.mxu0 0.0
    %6275 = vmatpush1.msra.mxu0 0.0
    %6276 = vmatprep.subr.mxu0 0.0
    %6277 = vmatpush1.msra.mxu0 0.0
    %6278 = vmatprep.subr.mxu0 0.0
    %6279 = vmatpush1.msra.mxu0 0.0
    %6280 = vmatprep.subr.mxu0 0.0
    %6281 = vmatpush1.msra.mxu0 0.0
    %6282 = vmatprep.subr.mxu0 0.0
    %6283 = vmatpush1.msra.mxu0 0.0
    %6284 = vmatprep.subr.mxu0 0.0
    %6285 = vmatpush1.msra.mxu0 0.0
    %6286 = vmatprep.mubr.f32.mxu0 0.0
    %6287 = vmatmul.mubr.f32.gmra.mrb[0].mxu0 %v842
    %v6288 = vpop.f32.mrb[0].mxu0
    %v6289 = vadd.f32 0.0, %v6288
    %v6290 = vpop.f32.mrb[0].mxu0
    %6291 = vmatprep.mubr.f32.mxu0 0.0
    %6292 = vmatmul.mubr.f32.gmra.mrb[0].mxu0 %v845
    %v6293 = vpop.f32.mrb[0].mxu0
    %v6294 = vadd.f32 0.0, %v6293
    %v6295 = vpop.f32.mrb[0].mxu0
    %6296 = vmatprep.mubr.f32.mxu0 0.0
    %6297 = vmatmul.mubr.f32.gmra.mrb[0].mxu0 %v848
    %v6298 = vpop.f32.mrb[0].mxu0
    %v6299 = vadd.f32 0.0, %v6298
    %v6300 = vpop.f32.mrb[0].mxu0
    %6301 = vmatprep.mubr.f32.mxu0 0.0
    %6302 = vmatmul.mubr.f32.gmra.mrb[0].mxu0 %v851
    %v6303 = vpop.f32.mrb[0].mxu0
    %v6304 = vadd.f32 0.0, %v6303
    %v6305 = vpop.f32.mrb[0].mxu0
    %6306 = vmatprep.mubr.f32.mxu0 0.0
    %6307 = vmatmul.mubr.f32.gmra.mrb[0].mxu0 %v854
    %v6308 = vpop.f32.mrb[0].mxu0
    %v6309 = vadd.f32 0.0, %v6308
    %v6310 = vpop.f32.mrb[0].mxu0
    %6311 = vmatprep.mubr.f32.mxu0 0.0
    %6312 = vmatmul.mubr.f32.gmra.mrb[0].mxu0 %v857
    %v6313 = vpop.f32.mrb[0].mxu0
    %v6314 = vadd.f32 0.0, %v6313
    %v6315 = vpop.f32.mrb[0].mxu0
    %6316 = vmatprep.mubr.f32.mxu0 0.0
    %6317 = vmatmul.mubr.f32.gmra.mrb[0].mxu0 %v860
    %v6318 = vpop.f32.mrb[0].mxu0
    %v6319 = vadd.f32 0.0, %v6318
    %v6320 = vpop.f32.mrb[0].mxu0
    %6321 = vmatprep.mubr.f32.mxu0 0.0
    %6322 = vmatmul.mubr.f32.gmra.mrb[0].mxu0 %v863
    %v6323 = vpop.f32.mrb[0].mxu0
    %v6324 = vadd.f32 0.0, %v6323
    %v6325 = vpop.f32.mrb[0].mxu0
    %6326 = vmatprep.mubr.f32.mxu0 0.0
    %6327 = vmatmul.mubr.f32.gmra.mrb[0].mxu0 %v866
    %v6328 = vpop.f32.mrb[0].mxu0
    %v6329 = vadd.f32 0.0, %v6328
    %v6330 = vpop.f32.mrb[0].mxu0
    %6331 = vmatprep.mubr.f32.mxu0 0.0
    %6332 = vmatmul.mubr.f32.gmra.mrb[0].mxu0 %v869
    %v6333 = vpop.f32.mrb[0].mxu0
    %v6334 = vadd.f32 0.0, %v6333
    %v6335 = vpop.f32.mrb[0].mxu0
    %6336 = vmatprep.mubr.f32.mxu0 0.0
    %6337 = vmatmul.mubr.f32.gmra.mrb[0].mxu0 %v872
    %v6338 = vpop.f32.mrb[0].mxu0
    %v6339 = vadd.f32 0.0, %v6338
    %v6340 = vpop.f32.mrb[0].mxu0
    %6341 = vmatprep.mubr.f32.mxu0 0.0
    %6342 = vmatmul.mubr.f32.gmra.mrb[0].mxu0 %v875
    %v6343 = vpop.f32.mrb[0].mxu0
    %v6344 = vadd.f32 0.0, %v6343
    %v6345 = vpop.f32.mrb[0].mxu0
    %6346 = vmatprep.mubr.f32.mxu0 0.0
    %6347 = vmatmul.mubr.f32.gmra.mrb[0].mxu0 %v878
    %v6348 = vpop.f32.mrb[0].mxu0
    %v6349 = vadd.f32 0.0, %v6348
    %v6350 = vpop.f32.mrb[0].mxu0
    %6351 = vmatprep.mubr.f32.mxu0 0.0
    %6352 = vmatmul.mubr.f32.gmra.mrb[0].mxu0 %v881
    %v6353 = vpop.f32.mrb[0].mxu0
    %v6354 = vadd.f32 0.0, %v6353
    %v6355 = vpop.f32.mrb[0].mxu0
    %6356 = vmatprep.mubr.f32.mxu0 0.0
    %6357 = vmatmul.mubr.f32.gmra.mrb[0].mxu0 %v884
    %v6358 = vpop.f32.mrb[0].mxu0
    %v6359 = vadd.f32 0.0, %v6358
    %v6360 = vpop.f32.mrb[0].mxu0
    %6361 = vmatprep.mubr.f32.mxu0 0.0
    %6362 = vmatmul.mubr.f32.gmra.mrb[0].mxu0 %v887
    %v6363 = vpop.f32.mrb[0].mxu0
    %v6364 = vadd.f32 0.0, %v6363
    %v6365 = vpop.f32.mrb[0].mxu0
    %6366 = vmatprep.mubr.f32.mxu0 0.0
    %6367 = vmatmul.mubr.f32.gmra.mrb[0].mxu0 %v890
    %v6368 = vpop.f32.mrb[0].mxu0
    %v6369 = vadd.f32 0.0, %v6368
    %v6370 = vpop.f32.mrb[0].mxu0
    %6371 = vmatprep.mubr.f32.mxu0 0.0
    %6372 = vmatmul.mubr.f32.gmra.mrb[0].mxu0 %v893
    %v6373 = vpop.f32.mrb[0].mxu0
    %v6374 = vadd.f32 0.0, %v6373
    %v6375 = vpop.f32.mrb[0].mxu0
    %6376 = vmatprep.mubr.f32.mxu0 0.0
    %6377 = vmatmul.mubr.f32.gmra.mrb[0].mxu0 %v896
    %v6378 = vpop.f32.mrb[0].mxu0
    %v6379 = vadd.f32 0.0, %v6378
    %v6380 = vpop.f32.mrb[0].mxu0
    %6381 = vmatprep.mubr.f32.mxu0 0.0
    %6382 = vmatmul.mubr.f32.gmra.mrb[0].mxu0 %v899
    %v6383 = vpop.f32.mrb[0].mxu0
    %v6384 = vadd.f32 0.0, %v6383
    %v6385 = vpop.f32.mrb[0].mxu0
    %6386 = vmatprep.mubr.f32.mxu0 0.0
    %6387 = vmatmul.mubr.f32.gmra.mrb[0].mxu0 %v902
    %v6388 = vpop.f32.mrb[0].mxu0
    %v6389 = vadd.f32 0.0, %v6388
    %v6390 = vpop.f32.mrb[0].mxu0
    %6391 = vmatprep.mubr.f32.mxu0 0.0
    %6392 = vmatmul.mubr.f32.gmra.mrb[0].mxu0 %v905
    %v6393 = vpop.f32.mrb[0].mxu0
    %v6394 = vadd.f32 0.0, %v6393
    %v6395 = vpop.f32.mrb[0].mxu0
    %6396 = vmatprep.mubr.f32.mxu0 0.0
    %6397 = vmatmul.mubr.f32.gmra.mrb[0].mxu0 %v908
    %v6398 = vpop.f32.mrb[0].mxu0
    %v6399 = vadd.f32 0.0, %v6398
    %v6400 = vpop.f32.mrb[0].mxu0
    %6401 = vmatprep.mubr.f32.mxu0 0.0
    %6402 = vmatmul.mubr.f32.gmra.mrb[0].mxu0 %v911
    %v6403 = vpop.f32.mrb[0].mxu0
    %v6404 = vadd.f32 0.0, %v6403
    %v6405 = vpop.f32.mrb[0].mxu0
    %6406 = vmatprep.mubr.f32.mxu0 0.0
    %6407 = vmatmul.mubr.f32.gmra.mrb[0].mxu0 %v914
    %v6408 = vpop.f32.mrb[0].mxu0
    %v6409 = vadd.f32 0.0, %v6408
    %v6410 = vpop.f32.mrb[0].mxu0
    %6411 = vmatprep.mubr.f32.mxu0 0.0
    %6412 = vmatmul.mubr.f32.gmra.mrb[0].mxu0 %v917
    %v6413 = vpop.f32.mrb[0].mxu0
    %v6414 = vadd.f32 0.0, %v6413
    %v6415 = vpop.f32.mrb[0].mxu0
    %6416 = vmatprep.mubr.f32.mxu0 0.0
    %6417 = vmatmul.mubr.f32.gmra.mrb[0].mxu0 %v920
    %v6418 = vpop.f32.mrb[0].mxu0
    %v6419 = vadd.f32 0.0, %v6418
    %v6420 = vpop.f32.mrb[0].mxu0
    %6421 = vmatprep.mubr.f32.mxu0 0.0
    %6422 = vmatmul.mubr.f32.gmra.mrb[0].mxu0 %v923
    %v6423 = vpop.f32.mrb[0].mxu0
    %v6424 = vadd.f32 0.0, %v6423
    %v6425 = vpop.f32.mrb[0].mxu0
    %6426 = vmatprep.mubr.f32.mxu0 0.0
    %6427 = vmatmul.mubr.f32.gmra.mrb[0].mxu0 %v926
    %v6428 = vpop.f32.mrb[0].mxu0
    %v6429 = vadd.f32 0.0, %v6428
    %v6430 = vpop.f32.mrb[0].mxu0
    %6431 = vmatprep.mubr.f32.mxu0 0.0
    %6432 = vmatmul.mubr.f32.gmra.mrb[0].mxu0 %v929
    %v6433 = vpop.f32.mrb[0].mxu0
    %v6434 = vadd.f32 0.0, %v6433
    %v6435 = vpop.f32.mrb[0].mxu0
    %6436 = vmatprep.mubr.f32.mxu0 0.0
    %6437 = vmatmul.mubr.f32.gmra.mrb[0].mxu0 %v932
    %v6438 = vpop.f32.mrb[0].mxu0
    %v6439 = vadd.f32 0.0, %v6438
    %v6440 = vpop.f32.mrb[0].mxu0
    %6441 = vmatprep.mubr.f32.mxu0 0.0
    %6442 = vmatmul.mubr.f32.gmra.mrb[0].mxu0 %v935
    %v6443 = vpop.f32.mrb[0].mxu0
    %v6444 = vadd.f32 0.0, %v6443
    %v6445 = vpop.f32.mrb[0].mxu0
    %6446 = vmatprep.mubr.f32.mxu0 0.0
    %6447 = vmatmul.mubr.f32.gmra.mrb[0].mxu0 %v938
    %v6448 = vpop.f32.mrb[0].mxu0
    %v6449 = vadd.f32 0.0, %v6448
    %v6450 = vpop.f32.mrb[0].mxu0
    %6451 = vmatprep.mubr.f32.mxu0 0.0
    %6452 = vmatmul.mubr.f32.gmra.mrb[0].mxu0 %v941
    %v6453 = vpop.f32.mrb[0].mxu0
    %v6454 = vadd.f32 0.0, %v6453
    %v6455 = vpop.f32.mrb[0].mxu0
    %6456 = vmatprep.mubr.f32.mxu0 0.0
    %6457 = vmatmul.mubr.f32.gmra.mrb[0].mxu0 %v944
    %v6458 = vpop.f32.mrb[0].mxu0
    %v6459 = vadd.f32 0.0, %v6458
    %v6460 = vpop.f32.mrb[0].mxu0
    %6461 = vmatprep.mubr.f32.mxu0 0.0
    %6462 = vmatmul.mubr.f32.gmra.mrb[0].mxu0 %v947
    %v6463 = vpop.f32.mrb[0].mxu0
    %v6464 = vadd.f32 0.0, %v6463
    %v6465 = vpop.f32.mrb[0].mxu0
    %6466 = vmatprep.mubr.f32.mxu0 0.0
    %6467 = vmatmul.mubr.f32.gmra.mrb[0].mxu0 %v950
    %v6468 = vpop.f32.mrb[0].mxu0
    %v6469 = vadd.f32 0.0, %v6468
    %v6470 = vpop.f32.mrb[0].mxu0
    %6471 = vmatprep.mubr.f32.mxu0 0.0
    %6472 = vmatmul.mubr.f32.gmra.mrb[0].mxu0 %v953
    %v6473 = vpop.f32.mrb[0].mxu0
    %v6474 = vadd.f32 0.0, %v6473
    %v6475 = vpop.f32.mrb[0].mxu0
    %6476 = vmatprep.mubr.f32.mxu0 0.0
    %6477 = vmatmul.mubr.f32.gmra.mrb[0].mxu0 %v956
    %v6478 = vpop.f32.mrb[0].mxu0
    %v6479 = vadd.f32 0.0, %v6478
    %v6480 = vpop.f32.mrb[0].mxu0
    %6481 = vmatprep.mubr.f32.mxu0 0.0
    %6482 = vmatmul.mubr.f32.gmra.mrb[0].mxu0 %v959
    %v6483 = vpop.f32.mrb[0].mxu0
    %v6484 = vadd.f32 0.0, %v6483
    %v6485 = vpop.f32.mrb[0].mxu0
    %6486 = vmatprep.mubr.f32.mxu0 0.0
    %6487 = vmatmul.mubr.f32.gmra.mrb[0].mxu0 %v962
    %v6488 = vpop.f32.mrb[0].mxu0
    %v6489 = vadd.f32 0.0, %v6488
    %v6490 = vpop.f32.mrb[0].mxu0
    %6491 = vmatprep.mubr.f32.mxu0 0.0
    %6492 = vmatmul.mubr.f32.gmra.mrb[0].mxu0 %v965
    %v6493 = vpop.f32.mrb[0].mxu0
    %v6494 = vadd.f32 0.0, %v6493
    %v6495 = vpop.f32.mrb[0].mxu0
    %6496 = vmatprep.mubr.f32.mxu0 0.0
    %6497 = vmatmul.mubr.f32.gmra.mrb[0].mxu0 %v968
    %v6498 = vpop.f32.mrb[0].mxu0
    %v6499 = vadd.f32 0.0, %v6498
    %v6500 = vpop.f32.mrb[0].mxu0
    %6501 = vmatprep.mubr.f32.mxu0 0.0
    %6502 = vmatmul.mubr.f32.gmra.mrb[0].mxu0 %v971
    %v6503 = vpop.f32.mrb[0].mxu0
    %v6504 = vadd.f32 0.0, %v6503
    %v6505 = vpop.f32.mrb[0].mxu0
    %6506 = vmatprep.mubr.f32.mxu0 0.0
    %6507 = vmatmul.mubr.f32.gmra.mrb[0].mxu0 %v974
    %v6508 = vpop.f32.mrb[0].mxu0
    %v6509 = vadd.f32 0.0, %v6508
    %v6510 = vpop.f32.mrb[0].mxu0
    %6511 = vmatprep.mubr.f32.mxu0 0.0
    %6512 = vmatmul.mubr.f32.gmra.mrb[0].mxu0 %v977
    %v6513 = vpop.f32.mrb[0].mxu0
    %v6514 = vadd.f32 0.0, %v6513
    %v6515 = vpop.f32.mrb[0].mxu0
    %6516 = vmatprep.mubr.f32.mxu0 0.0
    %6517 = vmatmul.mubr.f32.gmra.mrb[0].mxu0 %v980
    %v6518 = vpop.f32.mrb[0].mxu0
    %v6519 = vadd.f32 0.0, %v6518
    %v6520 = vpop.f32.mrb[0].mxu0
    %6521 = vmatprep.mubr.f32.mxu0 0.0
    %6522 = vmatmul.mubr.f32.gmra.mrb[0].mxu0 %v983
    %v6523 = vpop.f32.mrb[0].mxu0
    %v6524 = vadd.f32 0.0, %v6523
    %v6525 = vpop.f32.mrb[0].mxu0
    %6526 = vmatprep.mubr.f32.mxu0 0.0
    %6527 = vmatmul.mubr.f32.gmra.mrb[0].mxu0 %v986
    %v6528 = vpop.f32.mrb[0].mxu0
    %v6529 = vadd.f32 0.0, %v6528
    %v6530 = vpop.f32.mrb[0].mxu0
    %6531 = vmatprep.mubr.f32.mxu0 0.0
    %6532 = vmatmul.mubr.f32.gmra.mrb[0].mxu0 %v989
    %v6533 = vpop.f32.mrb[0].mxu0
    %v6534 = vadd.f32 0.0, %v6533
    %v6535 = vpop.f32.mrb[0].mxu0
    %6536 = vmatprep.mubr.f32.mxu0 0.0
    %6537 = vmatmul.mubr.f32.gmra.mrb[0].mxu0 %v992
    %v6538 = vpop.f32.mrb[0].mxu0
    %v6539 = vadd.f32 0.0, %v6538
    %v6540 = vpop.f32.mrb[0].mxu0
    %6541 = vmatprep.mubr.f32.mxu0 0.0
    %6542 = vmatmul.mubr.f32.gmra.mrb[0].mxu0 %v995
    %v6543 = vpop.f32.mrb[0].mxu0
    %v6544 = vadd.f32 0.0, %v6543
    %v6545 = vpop.f32.mrb[0].mxu0
    %6546 = vmatprep.mubr.f32.mxu0 0.0
    %6547 = vmatmul.mubr.f32.gmra.mrb[0].mxu0 %v998
    %v6548 = vpop.f32.mrb[0].mxu0
    %v6549 = vadd.f32 0.0, %v6548
    %v6550 = vpop.f32.mrb[0].mxu0
    %6551 = vmatprep.mubr.f32.mxu0 0.0
    %6552 = vmatmul.mubr.f32.gmra.mrb[0].mxu0 %v1001
    %v6553 = vpop.f32.mrb[0].mxu0
    %v6554 = vadd.f32 0.0, %v6553
    %v6555 = vpop.f32.mrb[0].mxu0
    %6556 = vmatprep.mubr.f32.mxu0 0.0
    %6557 = vmatmul.mubr.f32.gmra.mrb[0].mxu0 %v1004
    %v6558 = vpop.f32.mrb[0].mxu0
    %v6559 = vadd.f32 0.0, %v6558
    %v6560 = vpop.f32.mrb[0].mxu0
    %6561 = vmatprep.mubr.f32.mxu0 0.0
    %6562 = vmatmul.mubr.f32.gmra.mrb[0].mxu0 %v1007
    %v6563 = vpop.f32.mrb[0].mxu0
    %v6564 = vadd.f32 0.0, %v6563
    %v6565 = vpop.f32.mrb[0].mxu0
    %6566 = vmatprep.mubr.f32.mxu0 0.0
    %6567 = vmatmul.mubr.f32.gmra.mrb[0].mxu0 %v1010
    %v6568 = vpop.f32.mrb[0].mxu0
    %v6569 = vadd.f32 0.0, %v6568
    %v6570 = vpop.f32.mrb[0].mxu0
    %6571 = vmatprep.mubr.f32.mxu0 0.0
    %6572 = vmatmul.mubr.f32.gmra.mrb[0].mxu0 %v1013
    %v6573 = vpop.f32.mrb[0].mxu0
    %v6574 = vadd.f32 0.0, %v6573
    %v6575 = vpop.f32.mrb[0].mxu0
    %6576 = vmatprep.mubr.f32.mxu0 0.0
    %6577 = vmatmul.mubr.f32.gmra.mrb[0].mxu0 %v1016
    %v6578 = vpop.f32.mrb[0].mxu0
    %v6579 = vadd.f32 0.0, %v6578
    %v6580 = vpop.f32.mrb[0].mxu0
    %6581 = vmatprep.mubr.f32.mxu0 0.0
    %6582 = vmatmul.mubr.f32.gmra.mrb[0].mxu0 %v1019
    %v6583 = vpop.f32.mrb[0].mxu0
    %v6584 = vadd.f32 0.0, %v6583
    %v6585 = vpop.f32.mrb[0].mxu0
    %6586 = vmatprep.mubr.f32.mxu0 0.0
    %6587 = vmatmul.mubr.f32.gmra.mrb[0].mxu0 %v1022
    %v6588 = vpop.f32.mrb[0].mxu0
    %v6589 = vadd.f32 0.0, %v6588
    %v6590 = vpop.f32.mrb[0].mxu0
    %6591 = vmatprep.mubr.f32.mxu0 0.0
    %6592 = vmatmul.mubr.f32.gmra.mrb[0].mxu0 %v1025
    %v6593 = vpop.f32.mrb[0].mxu0
    %v6594 = vadd.f32 0.0, %v6593
    %v6595 = vpop.f32.mrb[0].mxu0
    %6596 = vmatprep.mubr.f32.mxu0 0.0
    %6597 = vmatmul.mubr.f32.gmra.mrb[0].mxu0 %v1028
    %v6598 = vpop.f32.mrb[0].mxu0
    %v6599 = vadd.f32 0.0, %v6598
    %v6600 = vpop.f32.mrb[0].mxu0
    %6601 = vmatprep.mubr.f32.mxu0 0.0
    %6602 = vmatmul.mubr.f32.gmra.mrb[0].mxu0 %v1031
    %v6603 = vpop.f32.mrb[0].mxu0
    %v6604 = vadd.f32 0.0, %v6603
    %v6605 = vpop.f32.mrb[0].mxu0
    %6606 = vmatprep.mubr.f32.mxu0 0.0
    %6607 = vmatmul.mubr.f32.gmra.mrb[0].mxu0 %v1034
    %v6608 = vpop.f32.mrb[0].mxu0
    %v6609 = vadd.f32 0.0, %v6608
    %v6610 = vpop.f32.mrb[0].mxu0
    %6611 = vmatprep.mubr.f32.mxu0 0.0
    %6612 = vmatmul.mubr.f32.gmra.mrb[0].mxu0 %v1037
    %v6613 = vpop.f32.mrb[0].mxu0
    %v6614 = vadd.f32 0.0, %v6613
    %v6615 = vpop.f32.mrb[0].mxu0
    %6616 = vmatprep.mubr.f32.mxu0 0.0
    %6617 = vmatmul.mubr.f32.gmra.mrb[0].mxu0 %v1040
    %v6618 = vpop.f32.mrb[0].mxu0
    %v6619 = vadd.f32 0.0, %v6618
    %v6620 = vpop.f32.mrb[0].mxu0
    %6621 = vmatprep.mubr.f32.mxu0 0.0
    %6622 = vmatmul.mubr.f32.gmra.mrb[0].mxu0 %v1043
    %v6623 = vpop.f32.mrb[0].mxu0
    %v6624 = vadd.f32 0.0, %v6623
    %v6625 = vpop.f32.mrb[0].mxu0
    %6626 = vmatprep.mubr.f32.mxu0 0.0
    %6627 = vmatmul.mubr.f32.gmra.mrb[0].mxu0 %v1046
    %v6628 = vpop.f32.mrb[0].mxu0
    %v6629 = vadd.f32 0.0, %v6628
    %v6630 = vpop.f32.mrb[0].mxu0
    %6631 = vmatprep.mubr.f32.mxu0 0.0
    %6632 = vmatmul.mubr.f32.gmra.mrb[0].mxu0 %v1049
    %v6633 = vpop.f32.mrb[0].mxu0
    %v6634 = vadd.f32 0.0, %v6633
    %v6635 = vpop.f32.mrb[0].mxu0
    %6636 = vmatprep.mubr.f32.mxu0 0.0
    %6637 = vmatmul.mubr.f32.gmra.mrb[0].mxu0 %v1052
    %v6638 = vpop.f32.mrb[0].mxu0
    %v6639 = vadd.f32 0.0, %v6638
    %v6640 = vpop.f32.mrb[0].mxu0
    %6641 = vmatprep.mubr.f32.mxu0 0.0
    %6642 = vmatmul.mubr.f32.gmra.mrb[0].mxu0 %v1055
    %v6643 = vpop.f32.mrb[0].mxu0
    %v6644 = vadd.f32 0.0, %v6643
    %v6645 = vpop.f32.mrb[0].mxu0
    %6646 = vmatprep.mubr.f32.mxu0 0.0
    %6647 = vmatmul.mubr.f32.gmra.mrb[0].mxu0 %v1058
    %v6648 = vpop.f32.mrb[0].mxu0
    %v6649 = vadd.f32 0.0, %v6648
    %v6650 = vpop.f32.mrb[0].mxu0
    %6651 = vmatprep.mubr.f32.mxu0 0.0
    %6652 = vmatmul.mubr.f32.gmra.mrb[0].mxu0 %v1061
    %v6653 = vpop.f32.mrb[0].mxu0
    %v6654 = vadd.f32 0.0, %v6653
    %v6655 = vpop.f32.mrb[0].mxu0
    %6656 = vmatprep.mubr.f32.mxu0 0.0
    %6657 = vmatmul.mubr.f32.gmra.mrb[0].mxu0 %v1064
    %v6658 = vpop.f32.mrb[0].mxu0
    %v6659 = vadd.f32 0.0, %v6658
    %v6660 = vpop.f32.mrb[0].mxu0
    %6661 = vmatprep.mubr.f32.mxu0 0.0
    %6662 = vmatmul.mubr.f32.gmra.mrb[0].mxu0 %v1067
    %v6663 = vpop.f32.mrb[0].mxu0
    %v6664 = vadd.f32 0.0, %v6663
    %v6665 = vpop.f32.mrb[0].mxu0
    %6666 = vmatprep.mubr.f32.mxu0 0.0
    %6667 = vmatmul.mubr.f32.gmra.mrb[0].mxu0 %v1070
    %v6668 = vpop.f32.mrb[0].mxu0
    %v6669 = vadd.f32 0.0, %v6668
    %v6670 = vpop.f32.mrb[0].mxu0
    %6671 = vmatprep.mubr.f32.mxu0 0.0
    %6672 = vmatmul.mubr.f32.gmra.mrb[0].mxu0 %v1073
    %v6673 = vpop.f32.mrb[0].mxu0
    %v6674 = vadd.f32 0.0, %v6673
    %v6675 = vpop.f32.mrb[0].mxu0
    %6676 = vmatprep.mubr.f32.mxu0 0.0
    %6677 = vmatmul.mubr.f32.gmra.mrb[0].mxu0 %v1076
    %v6678 = vpop.f32.mrb[0].mxu0
    %v6679 = vadd.f32 0.0, %v6678
    %v6680 = vpop.f32.mrb[0].mxu0
    %6681 = vmatprep.mubr.f32.mxu0 0.0
    %6682 = vmatmul.mubr.f32.gmra.mrb[0].mxu0 %v1079
    %v6683 = vpop.f32.mrb[0].mxu0
    %v6684 = vadd.f32 0.0, %v6683
    %v6685 = vpop.f32.mrb[0].mxu0
    %6686 = vmatprep.mubr.f32.mxu0 0.0
    %6687 = vmatmul.mubr.f32.gmra.mrb[0].mxu0 %v1082
    %v6688 = vpop.f32.mrb[0].mxu0
    %v6689 = vadd.f32 0.0, %v6688
    %v6690 = vpop.f32.mrb[0].mxu0
    %6691 = vmatprep.mubr.f32.mxu0 0.0
    %6692 = vmatmul.mubr.f32.gmra.mrb[0].mxu0 %v1085
    %v6693 = vpop.f32.mrb[0].mxu0
    %v6694 = vadd.f32 0.0, %v6693
    %v6695 = vpop.f32.mrb[0].mxu0
    %6696 = vmatprep.mubr.f32.mxu0 0.0
    %6697 = vmatmul.mubr.f32.gmra.mrb[0].mxu0 %v1088
    %v6698 = vpop.f32.mrb[0].mxu0
    %v6699 = vadd.f32 0.0, %v6698
    %v6700 = vpop.f32.mrb[0].mxu0
    %6701 = vmatprep.mubr.f32.mxu0 0.0
    %6702 = vmatmul.mubr.f32.gmra.mrb[0].mxu0 %v1091
    %v6703 = vpop.f32.mrb[0].mxu0
    %v6704 = vadd.f32 0.0, %v6703
    %v6705 = vpop.f32.mrb[0].mxu0
    %6706 = vmatprep.mubr.f32.mxu0 0.0
    %6707 = vmatmul.mubr.f32.gmra.mrb[0].mxu0 %v1094
    %v6708 = vpop.f32.mrb[0].mxu0
    %v6709 = vadd.f32 0.0, %v6708
    %v6710 = vpop.f32.mrb[0].mxu0
    %6711 = vmatprep.mubr.f32.mxu0 0.0
    %6712 = vmatmul.mubr.f32.gmra.mrb[0].mxu0 %v1097
    %v6713 = vpop.f32.mrb[0].mxu0
    %v6714 = vadd.f32 0.0, %v6713
    %v6715 = vpop.f32.mrb[0].mxu0
    %6716 = vmatprep.mubr.f32.mxu0 0.0
    %6717 = vmatmul.mubr.f32.gmra.mrb[0].mxu0 %v1100
    %v6718 = vpop.f32.mrb[0].mxu0
    %v6719 = vadd.f32 0.0, %v6718
    %v6720 = vpop.f32.mrb[0].mxu0
    %6721 = vmatprep.mubr.f32.mxu0 0.0
    %6722 = vmatmul.mubr.f32.gmra.mrb[0].mxu0 %v1103
    %v6723 = vpop.f32.mrb[0].mxu0
    %v6724 = vadd.f32 0.0, %v6723
    %v6725 = vpop.f32.mrb[0].mxu0
    %6726 = vmatprep.mubr.f32.mxu0 0.0
    %6727 = vmatmul.mubr.f32.gmra.mrb[0].mxu0 %v1106
    %v6728 = vpop.f32.mrb[0].mxu0
    %v6729 = vadd.f32 0.0, %v6728
    %v6730 = vpop.f32.mrb[0].mxu0
    %6731 = vmatprep.mubr.f32.mxu0 0.0
    %6732 = vmatmul.mubr.f32.gmra.mrb[0].mxu0 %v1109
    %v6733 = vpop.f32.mrb[0].mxu0
    %v6734 = vadd.f32 0.0, %v6733
    %v6735 = vpop.f32.mrb[0].mxu0
    %6736 = vmatprep.mubr.f32.mxu0 0.0
    %6737 = vmatmul.mubr.f32.gmra.mrb[0].mxu0 %v1112
    %v6738 = vpop.f32.mrb[0].mxu0
    %v6739 = vadd.f32 0.0, %v6738
    %v6740 = vpop.f32.mrb[0].mxu0
    %6741 = vmatprep.mubr.f32.mxu0 0.0
    %6742 = vmatmul.mubr.f32.gmra.mrb[0].mxu0 %v1115
    %v6743 = vpop.f32.mrb[0].mxu0
    %v6744 = vadd.f32 0.0, %v6743
    %v6745 = vpop.f32.mrb[0].mxu0
    %6746 = vmatprep.mubr.f32.mxu0 0.0
    %6747 = vmatmul.mubr.f32.gmra.mrb[0].mxu0 %v1118
    %v6748 = vpop.f32.mrb[0].mxu0
    %v6749 = vadd.f32 0.0, %v6748
    %v6750 = vpop.f32.mrb[0].mxu0
    %6751 = vmatprep.mubr.f32.mxu0 0.0
    %6752 = vmatmul.mubr.f32.gmra.mrb[0].mxu0 %v1121
    %v6753 = vpop.f32.mrb[0].mxu0
    %v6754 = vadd.f32 0.0, %v6753
    %v6755 = vpop.f32.mrb[0].mxu0
    %6756 = vmatprep.mubr.f32.mxu0 0.0
    %6757 = vmatmul.mubr.f32.gmra.mrb[0].mxu0 %v1124
    %v6758 = vpop.f32.mrb[0].mxu0
    %v6759 = vadd.f32 0.0, %v6758
    %v6760 = vpop.f32.mrb[0].mxu0
    %6761 = vmatprep.mubr.f32.mxu0 0.0
    %6762 = vmatmul.mubr.f32.gmra.mrb[0].mxu0 %v1127
    %v6763 = vpop.f32.mrb[0].mxu0
    %v6764 = vadd.f32 0.0, %v6763
    %v6765 = vpop.f32.mrb[0].mxu0
    %6766 = vdwg.mxu0
    %6767 = vmatprep.subr.mxu0 0.0
    %6768 = vmatpush1.msra.mxu0 %v6210
    %6769 = vmatprep.subr.mxu0 0.0
    %6770 = vmatpush1.msra.mxu0 %v6215
    %6771 = vmatprep.subr.mxu0 0.0
    %6772 = vmatpush1.msra.mxu0 0.0
    %6773 = vmatprep.subr.mxu0 0.0
    %6774 = vmatpush1.msra.mxu0 0.0
    %6775 = vmatprep.subr.mxu0 0.0
    %6776 = vmatpush1.msra.mxu0 0.0
    %6777 = vmatprep.subr.mxu0 0.0
    %6778 = vmatpush1.msra.mxu0 0.0
    %6779 = vmatprep.subr.mxu0 0.0
    %6780 = vmatpush1.msra.mxu0 0.0
    %6781 = vmatprep.subr.mxu0 0.0
    %6782 = vmatpush1.msra.mxu0 0.0
    %6783 = vmatprep.subr.mxu0 0.0
    %6784 = vmatpush1.msra.mxu0 0.0
    %6785 = vmatprep.subr.mxu0 0.0
    %6786 = vmatpush1.msra.mxu0 0.0
    %6787 = vmatprep.subr.mxu0 0.0
    %6788 = vmatpush1.msra.mxu0 0.0
    %6789 = vmatprep.subr.mxu0 0.0
    %6790 = vmatpush1.msra.mxu0 0.0
    %6791 = vmatprep.subr.mxu0 0.0
    %6792 = vmatpush1.msra.mxu0 0.0
    %6793 = vmatprep.subr.mxu0 0.0
    %6794 = vmatpush1.msra.mxu0 0.0
    %6795 = vmatprep.subr.mxu0 0.0
    %6796 = vmatpush1.msra.mxu0 0.0
    %6797 = vmatprep.subr.mxu0 0.0
    %6798 = vmatpush1.msra.mxu0 0.0
    %6799 = vmatprep.subr.mxu0 0.0
    %6800 = vmatpush1.msra.mxu0 0.0
    %6801 = vmatprep.subr.mxu0 0.0
    %6802 = vmatpush1.msra.mxu0 0.0
    %6803 = vmatprep.subr.mxu0 0.0
    %6804 = vmatpush1.msra.mxu0 0.0
    %6805 = vmatprep.subr.mxu0 0.0
    %6806 = vmatpush1.msra.mxu0 0.0
    %6807 = vmatprep.subr.mxu0 0.0
    %6808 = vmatpush1.msra.mxu0 0.0
    %6809 = vmatprep.subr.mxu0 0.0
    %6810 = vmatpush1.msra.mxu0 0.0
    %6811 = vmatprep.subr.mxu0 0.0
    %6812 = vmatpush1.msra.mxu0 0.0
    %6813 = vmatprep.subr.mxu0 0.0
    %6814 = vmatpush1.msra.mxu0 0.0
    %6815 = vmatprep.subr.mxu0 0.0
    %6816 = vmatpush1.msra.mxu0 0.0
    %6817 = vmatprep.subr.mxu0 0.0
    %6818 = vmatpush1.msra.mxu0 0.0
    %6819 = vmatprep.subr.mxu0 0.0
    %6820 = vmatpush1.msra.mxu0 0.0
    %6821 = vmatprep.subr.mxu0 0.0
    %6822 = vmatpush1.msra.mxu0 0.0
    %6823 = vmatprep.subr.mxu0 0.0
    %6824 = vmatpush1.msra.mxu0 0.0
    %6825 = vmatprep.subr.mxu0 0.0
    %6826 = vmatpush1.msra.mxu0 0.0
    %6827 = vmatprep.subr.mxu0 0.0
    %6828 = vmatpush1.msra.mxu0 0.0
    %6829 = vmatprep.subr.mxu0 0.0
    %6830 = vmatpush1.msra.mxu0 0.0
    %6831 = vmatprep.mubr.f32.mxu0 0.0
    %6832 = vmatmul.mubr.f32.gmra.mrb[0].mxu0 %v1680
    %v6833 = vpop.f32.mrb[0].mxu0
    %v6834 = vadd.f32 %v6289, %v6833
    %v6835 = vpop.f32.mrb[0].mxu0
    %6836 = vmatprep.mubr.f32.mxu0 0.0
    %6837 = vmatmul.mubr.f32.gmra.mrb[0].mxu0 %v1683
    %v6838 = vpop.f32.mrb[0].mxu0
    %v6839 = vadd.f32 %v6294, %v6838
    %v6840 = vpop.f32.mrb[0].mxu0
    %6841 = vmatprep.mubr.f32.mxu0 0.0
    %6842 = vmatmul.mubr.f32.gmra.mrb[0].mxu0 %v1686
    %v6843 = vpop.f32.mrb[0].mxu0
    %v6844 = vadd.f32 %v6299, %v6843
    %v6845 = vpop.f32.mrb[0].mxu0
    %6846 = vmatprep.mubr.f32.mxu0 0.0
    %6847 = vmatmul.mubr.f32.gmra.mrb[0].mxu0 %v1689
    %v6848 = vpop.f32.mrb[0].mxu0
    %v6849 = vadd.f32 %v6304, %v6848
    %v6850 = vpop.f32.mrb[0].mxu0
    %6851 = vmatprep.mubr.f32.mxu0 0.0
    %6852 = vmatmul.mubr.f32.gmra.mrb[0].mxu0 %v1692
    %v6853 = vpop.f32.mrb[0].mxu0
    %v6854 = vadd.f32 %v6309, %v6853
    %v6855 = vpop.f32.mrb[0].mxu0
    %6856 = vmatprep.mubr.f32.mxu0 0.0
    %6857 = vmatmul.mubr.f32.gmra.mrb[0].mxu0 %v1695
    %v6858 = vpop.f32.mrb[0].mxu0
    %v6859 = vadd.f32 %v6314, %v6858
    %v6860 = vpop.f32.mrb[0].mxu0
    %6861 = vmatprep.mubr.f32.mxu0 0.0
    %6862 = vmatmul.mubr.f32.gmra.mrb[0].mxu0 %v1698
    %v6863 = vpop.f32.mrb[0].mxu0
    %v6864 = vadd.f32 %v6319, %v6863
    %v6865 = vpop.f32.mrb[0].mxu0
    %6866 = vmatprep.mubr.f32.mxu0 0.0
    %6867 = vmatmul.mubr.f32.gmra.mrb[0].mxu0 %v1701
    %v6868 = vpop.f32.mrb[0].mxu0
    %v6869 = vadd.f32 %v6324, %v6868
    %v6870 = vpop.f32.mrb[0].mxu0
    %6871 = vmatprep.mubr.f32.mxu0 0.0
    %6872 = vmatmul.mubr.f32.gmra.mrb[0].mxu0 %v1704
    %v6873 = vpop.f32.mrb[0].mxu0
    %v6874 = vadd.f32 %v6329, %v6873
    %v6875 = vpop.f32.mrb[0].mxu0
    %6876 = vmatprep.mubr.f32.mxu0 0.0
    %6877 = vmatmul.mubr.f32.gmra.mrb[0].mxu0 %v1707
    %v6878 = vpop.f32.mrb[0].mxu0
    %v6879 = vadd.f32 %v6334, %v6878
    %v6880 = vpop.f32.mrb[0].mxu0
    %6881 = vmatprep.mubr.f32.mxu0 0.0
    %6882 = vmatmul.mubr.f32.gmra.mrb[0].mxu0 %v1710
    %v6883 = vpop.f32.mrb[0].mxu0
    %v6884 = vadd.f32 %v6339, %v6883
    %v6885 = vpop.f32.mrb[0].mxu0
    %6886 = vmatprep.mubr.f32.mxu0 0.0
    %6887 = vmatmul.mubr.f32.gmra.mrb[0].mxu0 %v1713
    %v6888 = vpop.f32.mrb[0].mxu0
    %v6889 = vadd.f32 %v6344, %v6888
    %v6890 = vpop.f32.mrb[0].mxu0
    %6891 = vmatprep.mubr.f32.mxu0 0.0
    %6892 = vmatmul.mubr.f32.gmra.mrb[0].mxu0 %v1716
    %v6893 = vpop.f32.mrb[0].mxu0
    %v6894 = vadd.f32 %v6349, %v6893
    %v6895 = vpop.f32.mrb[0].mxu0
    %6896 = vmatprep.mubr.f32.mxu0 0.0
    %6897 = vmatmul.mubr.f32.gmra.mrb[0].mxu0 %v1719
    %v6898 = vpop.f32.mrb[0].mxu0
    %v6899 = vadd.f32 %v6354, %v6898
    %v6900 = vpop.f32.mrb[0].mxu0
    %6901 = vmatprep.mubr.f32.mxu0 0.0
    %6902 = vmatmul.mubr.f32.gmra.mrb[0].mxu0 %v1722
    %v6903 = vpop.f32.mrb[0].mxu0
    %v6904 = vadd.f32 %v6359, %v6903
    %v6905 = vpop.f32.mrb[0].mxu0
    %6906 = vmatprep.mubr.f32.mxu0 0.0
    %6907 = vmatmul.mubr.f32.gmra.mrb[0].mxu0 %v1725
    %v6908 = vpop.f32.mrb[0].mxu0
    %v6909 = vadd.f32 %v6364, %v6908
    %v6910 = vpop.f32.mrb[0].mxu0
    %6911 = vmatprep.mubr.f32.mxu0 0.0
    %6912 = vmatmul.mubr.f32.gmra.mrb[0].mxu0 %v1728
    %v6913 = vpop.f32.mrb[0].mxu0
    %v6914 = vadd.f32 %v6369, %v6913
    %v6915 = vpop.f32.mrb[0].mxu0
    %6916 = vmatprep.mubr.f32.mxu0 0.0
    %6917 = vmatmul.mubr.f32.gmra.mrb[0].mxu0 %v1731
    %v6918 = vpop.f32.mrb[0].mxu0
    %v6919 = vadd.f32 %v6374, %v6918
    %v6920 = vpop.f32.mrb[0].mxu0
    %6921 = vmatprep.mubr.f32.mxu0 0.0
    %6922 = vmatmul.mubr.f32.gmra.mrb[0].mxu0 %v1734
    %v6923 = vpop.f32.mrb[0].mxu0
    %v6924 = vadd.f32 %v6379, %v6923
    %v6925 = vpop.f32.mrb[0].mxu0
    %6926 = vmatprep.mubr.f32.mxu0 0.0
    %6927 = vmatmul.mubr.f32.gmra.mrb[0].mxu0 %v1737
    %v6928 = vpop.f32.mrb[0].mxu0
    %v6929 = vadd.f32 %v6384, %v6928
    %v6930 = vpop.f32.mrb[0].mxu0
    %6931 = vmatprep.mubr.f32.mxu0 0.0
    %6932 = vmatmul.mubr.f32.gmra.mrb[0].mxu0 %v1740
    %v6933 = vpop.f32.mrb[0].mxu0
    %v6934 = vadd.f32 %v6389, %v6933
    %v6935 = vpop.f32.mrb[0].mxu0
    %6936 = vmatprep.mubr.f32.mxu0 0.0
    %6937 = vmatmul.mubr.f32.gmra.mrb[0].mxu0 %v1743
    %v6938 = vpop.f32.mrb[0].mxu0
    %v6939 = vadd.f32 %v6394, %v6938
    %v6940 = vpop.f32.mrb[0].mxu0
    %6941 = vmatprep.mubr.f32.mxu0 0.0
    %6942 = vmatmul.mubr.f32.gmra.mrb[0].mxu0 %v1746
    %v6943 = vpop.f32.mrb[0].mxu0
    %v6944 = vadd.f32 %v6399, %v6943
    %v6945 = vpop.f32.mrb[0].mxu0
    %6946 = vmatprep.mubr.f32.mxu0 0.0
    %6947 = vmatmul.mubr.f32.gmra.mrb[0].mxu0 %v1749
    %v6948 = vpop.f32.mrb[0].mxu0
    %v6949 = vadd.f32 %v6404, %v6948
    %v6950 = vpop.f32.mrb[0].mxu0
    %6951 = vmatprep.mubr.f32.mxu0 0.0
    %6952 = vmatmul.mubr.f32.gmra.mrb[0].mxu0 %v1752
    %v6953 = vpop.f32.mrb[0].mxu0
    %v6954 = vadd.f32 %v6409, %v6953
    %v6955 = vpop.f32.mrb[0].mxu0
    %6956 = vmatprep.mubr.f32.mxu0 0.0
    %6957 = vmatmul.mubr.f32.gmra.mrb[0].mxu0 %v1755
    %v6958 = vpop.f32.mrb[0].mxu0
    %v6959 = vadd.f32 %v6414, %v6958
    %v6960 = vpop.f32.mrb[0].mxu0
    %6961 = vmatprep.mubr.f32.mxu0 0.0
    %6962 = vmatmul.mubr.f32.gmra.mrb[0].mxu0 %v1758
    %v6963 = vpop.f32.mrb[0].mxu0
    %v6964 = vadd.f32 %v6419, %v6963
    %v6965 = vpop.f32.mrb[0].mxu0
    %6966 = vmatprep.mubr.f32.mxu0 0.0
    %6967 = vmatmul.mubr.f32.gmra.mrb[0].mxu0 %v1761
    %v6968 = vpop.f32.mrb[0].mxu0
    %v6969 = vadd.f32 %v6424, %v6968
    %v6970 = vpop.f32.mrb[0].mxu0
    %6971 = vmatprep.mubr.f32.mxu0 0.0
    %6972 = vmatmul.mubr.f32.gmra.mrb[0].mxu0 %v1764
    %v6973 = vpop.f32.mrb[0].mxu0
    %v6974 = vadd.f32 %v6429, %v6973
    %v6975 = vpop.f32.mrb[0].mxu0
    %6976 = vmatprep.mubr.f32.mxu0 0.0
    %6977 = vmatmul.mubr.f32.gmra.mrb[0].mxu0 %v1767
    %v6978 = vpop.f32.mrb[0].mxu0
    %v6979 = vadd.f32 %v6434, %v6978
    %v6980 = vpop.f32.mrb[0].mxu0
    %6981 = vmatprep.mubr.f32.mxu0 0.0
    %6982 = vmatmul.mubr.f32.gmra.mrb[0].mxu0 %v1770
    %v6983 = vpop.f32.mrb[0].mxu0
    %v6984 = vadd.f32 %v6439, %v6983
    %v6985 = vpop.f32.mrb[0].mxu0
    %6986 = vmatprep.mubr.f32.mxu0 0.0
    %6987 = vmatmul.mubr.f32.gmra.mrb[0].mxu0 %v1773
    %v6988 = vpop.f32.mrb[0].mxu0
    %v6989 = vadd.f32 %v6444, %v6988
    %v6990 = vpop.f32.mrb[0].mxu0
    %6991 = vmatprep.mubr.f32.mxu0 0.0
    %6992 = vmatmul.mubr.f32.gmra.mrb[0].mxu0 %v1776
    %v6993 = vpop.f32.mrb[0].mxu0
    %v6994 = vadd.f32 %v6449, %v6993
    %v6995 = vpop.f32.mrb[0].mxu0
    %6996 = vmatprep.mubr.f32.mxu0 0.0
    %6997 = vmatmul.mubr.f32.gmra.mrb[0].mxu0 %v1779
    %v6998 = vpop.f32.mrb[0].mxu0
    %v6999 = vadd.f32 %v6454, %v6998
    %v7000 = vpop.f32.mrb[0].mxu0
    %7001 = vmatprep.mubr.f32.mxu0 0.0
    %7002 = vmatmul.mubr.f32.gmra.mrb[0].mxu0 %v1782
    %v7003 = vpop.f32.mrb[0].mxu0
    %v7004 = vadd.f32 %v6459, %v7003
    %v7005 = vpop.f32.mrb[0].mxu0
    %7006 = vmatprep.mubr.f32.mxu0 0.0
    %7007 = vmatmul.mubr.f32.gmra.mrb[0].mxu0 %v1785
    %v7008 = vpop.f32.mrb[0].mxu0
    %v7009 = vadd.f32 %v6464, %v7008
    %v7010 = vpop.f32.mrb[0].mxu0
    %7011 = vmatprep.mubr.f32.mxu0 0.0
    %7012 = vmatmul.mubr.f32.gmra.mrb[0].mxu0 %v1788
    %v7013 = vpop.f32.mrb[0].mxu0
    %v7014 = vadd.f32 %v6469, %v7013
    %v7015 = vpop.f32.mrb[0].mxu0
    %7016 = vmatprep.mubr.f32.mxu0 0.0
    %7017 = vmatmul.mubr.f32.gmra.mrb[0].mxu0 %v1791
    %v7018 = vpop.f32.mrb[0].mxu0
    %v7019 = vadd.f32 %v6474, %v7018
    %v7020 = vpop.f32.mrb[0].mxu0
    %7021 = vmatprep.mubr.f32.mxu0 0.0
    %7022 = vmatmul.mubr.f32.gmra.mrb[0].mxu0 %v1794
    %v7023 = vpop.f32.mrb[0].mxu0
    %v7024 = vadd.f32 %v6479, %v7023
    %v7025 = vpop.f32.mrb[0].mxu0
    %7026 = vmatprep.mubr.f32.mxu0 0.0
    %7027 = vmatmul.mubr.f32.gmra.mrb[0].mxu0 %v1797
    %v7028 = vpop.f32.mrb[0].mxu0
    %v7029 = vadd.f32 %v6484, %v7028
    %v7030 = vpop.f32.mrb[0].mxu0
    %7031 = vmatprep.mubr.f32.mxu0 0.0
    %7032 = vmatmul.mubr.f32.gmra.mrb[0].mxu0 %v1800
    %v7033 = vpop.f32.mrb[0].mxu0
    %v7034 = vadd.f32 %v6489, %v7033
    %v7035 = vpop.f32.mrb[0].mxu0
    %7036 = vmatprep.mubr.f32.mxu0 0.0
    %7037 = vmatmul.mubr.f32.gmra.mrb[0].mxu0 %v1803
    %v7038 = vpop.f32.mrb[0].mxu0
    %v7039 = vadd.f32 %v6494, %v7038
    %v7040 = vpop.f32.mrb[0].mxu0
    %7041 = vmatprep.mubr.f32.mxu0 0.0
    %7042 = vmatmul.mubr.f32.gmra.mrb[0].mxu0 %v1806
    %v7043 = vpop.f32.mrb[0].mxu0
    %v7044 = vadd.f32 %v6499, %v7043
    %v7045 = vpop.f32.mrb[0].mxu0
    %7046 = vmatprep.mubr.f32.mxu0 0.0
    %7047 = vmatmul.mubr.f32.gmra.mrb[0].mxu0 %v1809
    %v7048 = vpop.f32.mrb[0].mxu0
    %v7049 = vadd.f32 %v6504, %v7048
    %v7050 = vpop.f32.mrb[0].mxu0
    %7051 = vmatprep.mubr.f32.mxu0 0.0
    %7052 = vmatmul.mubr.f32.gmra.mrb[0].mxu0 %v1812
    %v7053 = vpop.f32.mrb[0].mxu0
    %v7054 = vadd.f32 %v6509, %v7053
    %v7055 = vpop.f32.mrb[0].mxu0
    %7056 = vmatprep.mubr.f32.mxu0 0.0
    %7057 = vmatmul.mubr.f32.gmra.mrb[0].mxu0 %v1815
    %v7058 = vpop.f32.mrb[0].mxu0
    %v7059 = vadd.f32 %v6514, %v7058
    %v7060 = vpop.f32.mrb[0].mxu0
    %7061 = vmatprep.mubr.f32.mxu0 0.0
    %7062 = vmatmul.mubr.f32.gmra.mrb[0].mxu0 %v1818
    %v7063 = vpop.f32.mrb[0].mxu0
    %v7064 = vadd.f32 %v6519, %v7063
    %v7065 = vpop.f32.mrb[0].mxu0
    %7066 = vmatprep.mubr.f32.mxu0 0.0
    %7067 = vmatmul.mubr.f32.gmra.mrb[0].mxu0 %v1821
    %v7068 = vpop.f32.mrb[0].mxu0
    %v7069 = vadd.f32 %v6524, %v7068
    %v7070 = vpop.f32.mrb[0].mxu0
    %7071 = vmatprep.mubr.f32.mxu0 0.0
    %7072 = vmatmul.mubr.f32.gmra.mrb[0].mxu0 %v1824
    %v7073 = vpop.f32.mrb[0].mxu0
    %v7074 = vadd.f32 %v6529, %v7073
    %v7075 = vpop.f32.mrb[0].mxu0
    %7076 = vmatprep.mubr.f32.mxu0 0.0
    %7077 = vmatmul.mubr.f32.gmra.mrb[0].mxu0 %v1827
    %v7078 = vpop.f32.mrb[0].mxu0
    %v7079 = vadd.f32 %v6534, %v7078
    %v7080 = vpop.f32.mrb[0].mxu0
    %7081 = vmatprep.mubr.f32.mxu0 0.0
    %7082 = vmatmul.mubr.f32.gmra.mrb[0].mxu0 %v1830
    %v7083 = vpop.f32.mrb[0].mxu0
    %v7084 = vadd.f32 %v6539, %v7083
    %v7085 = vpop.f32.mrb[0].mxu0
    %7086 = vmatprep.mubr.f32.mxu0 0.0
    %7087 = vmatmul.mubr.f32.gmra.mrb[0].mxu0 %v1833
    %v7088 = vpop.f32.mrb[0].mxu0
    %v7089 = vadd.f32 %v6544, %v7088
    %v7090 = vpop.f32.mrb[0].mxu0
    %7091 = vmatprep.mubr.f32.mxu0 0.0
    %7092 = vmatmul.mubr.f32.gmra.mrb[0].mxu0 %v1836
    %v7093 = vpop.f32.mrb[0].mxu0
    %v7094 = vadd.f32 %v6549, %v7093
    %v7095 = vpop.f32.mrb[0].mxu0
    %7096 = vmatprep.mubr.f32.mxu0 0.0
    %7097 = vmatmul.mubr.f32.gmra.mrb[0].mxu0 %v1839
    %v7098 = vpop.f32.mrb[0].mxu0
    %v7099 = vadd.f32 %v6554, %v7098
    %v7100 = vpop.f32.mrb[0].mxu0
    %7101 = vmatprep.mubr.f32.mxu0 0.0
    %7102 = vmatmul.mubr.f32.gmra.mrb[0].mxu0 %v1842
    %v7103 = vpop.f32.mrb[0].mxu0
    %v7104 = vadd.f32 %v6559, %v7103
    %v7105 = vpop.f32.mrb[0].mxu0
    %7106 = vmatprep.mubr.f32.mxu0 0.0
    %7107 = vmatmul.mubr.f32.gmra.mrb[0].mxu0 %v1845
    %v7108 = vpop.f32.mrb[0].mxu0
    %v7109 = vadd.f32 %v6564, %v7108
    %v7110 = vpop.f32.mrb[0].mxu0
    %7111 = vmatprep.mubr.f32.mxu0 0.0
    %7112 = vmatmul.mubr.f32.gmra.mrb[0].mxu0 %v1848
    %v7113 = vpop.f32.mrb[0].mxu0
    %v7114 = vadd.f32 %v6569, %v7113
    %v7115 = vpop.f32.mrb[0].mxu0
    %7116 = vmatprep.mubr.f32.mxu0 0.0
    %7117 = vmatmul.mubr.f32.gmra.mrb[0].mxu0 %v1851
    %v7118 = vpop.f32.mrb[0].mxu0
    %v7119 = vadd.f32 %v6574, %v7118
    %v7120 = vpop.f32.mrb[0].mxu0
    %7121 = vmatprep.mubr.f32.mxu0 0.0
    %7122 = vmatmul.mubr.f32.gmra.mrb[0].mxu0 %v1854
    %v7123 = vpop.f32.mrb[0].mxu0
    %v7124 = vadd.f32 %v6579, %v7123
    %v7125 = vpop.f32.mrb[0].mxu0
    %7126 = vmatprep.mubr.f32.mxu0 0.0
    %7127 = vmatmul.mubr.f32.gmra.mrb[0].mxu0 %v1857
    %v7128 = vpop.f32.mrb[0].mxu0
    %v7129 = vadd.f32 %v6584, %v7128
    %v7130 = vpop.f32.mrb[0].mxu0
    %7131 = vmatprep.mubr.f32.mxu0 0.0
    %7132 = vmatmul.mubr.f32.gmra.mrb[0].mxu0 %v1860
    %v7133 = vpop.f32.mrb[0].mxu0
    %v7134 = vadd.f32 %v6589, %v7133
    %v7135 = vpop.f32.mrb[0].mxu0
    %7136 = vmatprep.mubr.f32.mxu0 0.0
    %7137 = vmatmul.mubr.f32.gmra.mrb[0].mxu0 %v1863
    %v7138 = vpop.f32.mrb[0].mxu0
    %v7139 = vadd.f32 %v6594, %v7138
    %v7140 = vpop.f32.mrb[0].mxu0
    %7141 = vmatprep.mubr.f32.mxu0 0.0
    %7142 = vmatmul.mubr.f32.gmra.mrb[0].mxu0 %v1866
    %v7143 = vpop.f32.mrb[0].mxu0
    %v7144 = vadd.f32 %v6599, %v7143
    %v7145 = vpop.f32.mrb[0].mxu0
    %7146 = vmatprep.mubr.f32.mxu0 0.0
    %7147 = vmatmul.mubr.f32.gmra.mrb[0].mxu0 %v1869
    %v7148 = vpop.f32.mrb[0].mxu0
    %v7149 = vadd.f32 %v6604, %v7148
    %v7150 = vpop.f32.mrb[0].mxu0
    %7151 = vmatprep.mubr.f32.mxu0 0.0
    %7152 = vmatmul.mubr.f32.gmra.mrb[0].mxu0 %v1872
    %v7153 = vpop.f32.mrb[0].mxu0
    %v7154 = vadd.f32 %v6609, %v7153
    %v7155 = vpop.f32.mrb[0].mxu0
    %7156 = vmatprep.mubr.f32.mxu0 0.0
    %7157 = vmatmul.mubr.f32.gmra.mrb[0].mxu0 %v1875
    %v7158 = vpop.f32.mrb[0].mxu0
    %v7159 = vadd.f32 %v6614, %v7158
    %v7160 = vpop.f32.mrb[0].mxu0
    %7161 = vmatprep.mubr.f32.mxu0 0.0
    %7162 = vmatmul.mubr.f32.gmra.mrb[0].mxu0 %v1878
    %v7163 = vpop.f32.mrb[0].mxu0
    %v7164 = vadd.f32 %v6619, %v7163
    %v7165 = vpop.f32.mrb[0].mxu0
    %7166 = vmatprep.mubr.f32.mxu0 0.0
    %7167 = vmatmul.mubr.f32.gmra.mrb[0].mxu0 %v1881
    %v7168 = vpop.f32.mrb[0].mxu0
    %v7169 = vadd.f32 %v6624, %v7168
    %v7170 = vpop.f32.mrb[0].mxu0
    %7171 = vmatprep.mubr.f32.mxu0 0.0
    %7172 = vmatmul.mubr.f32.gmra.mrb[0].mxu0 %v1884
    %v7173 = vpop.f32.mrb[0].mxu0
    %v7174 = vadd.f32 %v6629, %v7173
    %v7175 = vpop.f32.mrb[0].mxu0
    %7176 = vmatprep.mubr.f32.mxu0 0.0
    %7177 = vmatmul.mubr.f32.gmra.mrb[0].mxu0 %v1887
    %v7178 = vpop.f32.mrb[0].mxu0
    %v7179 = vadd.f32 %v6634, %v7178
    %v7180 = vpop.f32.mrb[0].mxu0
    %7181 = vmatprep.mubr.f32.mxu0 0.0
    %7182 = vmatmul.mubr.f32.gmra.mrb[0].mxu0 %v1890
    %v7183 = vpop.f32.mrb[0].mxu0
    %v7184 = vadd.f32 %v6639, %v7183
    %v7185 = vpop.f32.mrb[0].mxu0
    %7186 = vmatprep.mubr.f32.mxu0 0.0
    %7187 = vmatmul.mubr.f32.gmra.mrb[0].mxu0 %v1893
    %v7188 = vpop.f32.mrb[0].mxu0
    %v7189 = vadd.f32 %v6644, %v7188
    %v7190 = vpop.f32.mrb[0].mxu0
    %7191 = vmatprep.mubr.f32.mxu0 0.0
    %7192 = vmatmul.mubr.f32.gmra.mrb[0].mxu0 %v1896
    %v7193 = vpop.f32.mrb[0].mxu0
    %v7194 = vadd.f32 %v6649, %v7193
    %v7195 = vpop.f32.mrb[0].mxu0
    %7196 = vmatprep.mubr.f32.mxu0 0.0
    %7197 = vmatmul.mubr.f32.gmra.mrb[0].mxu0 %v1899
    %v7198 = vpop.f32.mrb[0].mxu0
    %v7199 = vadd.f32 %v6654, %v7198
    %v7200 = vpop.f32.mrb[0].mxu0
    %7201 = vmatprep.mubr.f32.mxu0 0.0
    %7202 = vmatmul.mubr.f32.gmra.mrb[0].mxu0 %v1902
    %v7203 = vpop.f32.mrb[0].mxu0
    %v7204 = vadd.f32 %v6659, %v7203
    %v7205 = vpop.f32.mrb[0].mxu0
    %7206 = vmatprep.mubr.f32.mxu0 0.0
    %7207 = vmatmul.mubr.f32.gmra.mrb[0].mxu0 %v1905
    %v7208 = vpop.f32.mrb[0].mxu0
    %v7209 = vadd.f32 %v6664, %v7208
    %v7210 = vpop.f32.mrb[0].mxu0
    %7211 = vmatprep.mubr.f32.mxu0 0.0
    %7212 = vmatmul.mubr.f32.gmra.mrb[0].mxu0 %v1908
    %v7213 = vpop.f32.mrb[0].mxu0
    %v7214 = vadd.f32 %v6669, %v7213
    %v7215 = vpop.f32.mrb[0].mxu0
    %7216 = vmatprep.mubr.f32.mxu0 0.0
    %7217 = vmatmul.mubr.f32.gmra.mrb[0].mxu0 %v1911
    %v7218 = vpop.f32.mrb[0].mxu0
    %v7219 = vadd.f32 %v6674, %v7218
    %v7220 = vpop.f32.mrb[0].mxu0
    %7221 = vmatprep.mubr.f32.mxu0 0.0
    %7222 = vmatmul.mubr.f32.gmra.mrb[0].mxu0 %v1914
    %v7223 = vpop.f32.mrb[0].mxu0
    %v7224 = vadd.f32 %v6679, %v7223
    %v7225 = vpop.f32.mrb[0].mxu0
    %7226 = vmatprep.mubr.f32.mxu0 0.0
    %7227 = vmatmul.mubr.f32.gmra.mrb[0].mxu0 %v1917
    %v7228 = vpop.f32.mrb[0].mxu0
    %v7229 = vadd.f32 %v6684, %v7228
    %v7230 = vpop.f32.mrb[0].mxu0
    %7231 = vmatprep.mubr.f32.mxu0 0.0
    %7232 = vmatmul.mubr.f32.gmra.mrb[0].mxu0 %v1920
    %v7233 = vpop.f32.mrb[0].mxu0
    %v7234 = vadd.f32 %v6689, %v7233
    %v7235 = vpop.f32.mrb[0].mxu0
    %7236 = vmatprep.mubr.f32.mxu0 0.0
    %7237 = vmatmul.mubr.f32.gmra.mrb[0].mxu0 %v1923
    %v7238 = vpop.f32.mrb[0].mxu0
    %v7239 = vadd.f32 %v6694, %v7238
    %v7240 = vpop.f32.mrb[0].mxu0
    %7241 = vmatprep.mubr.f32.mxu0 0.0
    %7242 = vmatmul.mubr.f32.gmra.mrb[0].mxu0 %v1926
    %v7243 = vpop.f32.mrb[0].mxu0
    %v7244 = vadd.f32 %v6699, %v7243
    %v7245 = vpop.f32.mrb[0].mxu0
    %7246 = vmatprep.mubr.f32.mxu0 0.0
    %7247 = vmatmul.mubr.f32.gmra.mrb[0].mxu0 %v1929
    %v7248 = vpop.f32.mrb[0].mxu0
    %v7249 = vadd.f32 %v6704, %v7248
    %v7250 = vpop.f32.mrb[0].mxu0
    %7251 = vmatprep.mubr.f32.mxu0 0.0
    %7252 = vmatmul.mubr.f32.gmra.mrb[0].mxu0 %v1932
    %v7253 = vpop.f32.mrb[0].mxu0
    %v7254 = vadd.f32 %v6709, %v7253
    %v7255 = vpop.f32.mrb[0].mxu0
    %7256 = vmatprep.mubr.f32.mxu0 0.0
    %7257 = vmatmul.mubr.f32.gmra.mrb[0].mxu0 %v1935
    %v7258 = vpop.f32.mrb[0].mxu0
    %v7259 = vadd.f32 %v6714, %v7258
    %v7260 = vpop.f32.mrb[0].mxu0
    %7261 = vmatprep.mubr.f32.mxu0 0.0
    %7262 = vmatmul.mubr.f32.gmra.mrb[0].mxu0 %v1938
    %v7263 = vpop.f32.mrb[0].mxu0
    %v7264 = vadd.f32 %v6719, %v7263
    %v7265 = vpop.f32.mrb[0].mxu0
    %7266 = vmatprep.mubr.f32.mxu0 0.0
    %7267 = vmatmul.mubr.f32.gmra.mrb[0].mxu0 %v1941
    %v7268 = vpop.f32.mrb[0].mxu0
    %v7269 = vadd.f32 %v6724, %v7268
    %v7270 = vpop.f32.mrb[0].mxu0
    %7271 = vmatprep.mubr.f32.mxu0 0.0
    %7272 = vmatmul.mubr.f32.gmra.mrb[0].mxu0 %v1944
    %v7273 = vpop.f32.mrb[0].mxu0
    %v7274 = vadd.f32 %v6729, %v7273
    %v7275 = vpop.f32.mrb[0].mxu0
    %7276 = vmatprep.mubr.f32.mxu0 0.0
    %7277 = vmatmul.mubr.f32.gmra.mrb[0].mxu0 %v1947
    %v7278 = vpop.f32.mrb[0].mxu0
    %v7279 = vadd.f32 %v6734, %v7278
    %v7280 = vpop.f32.mrb[0].mxu0
    %7281 = vmatprep.mubr.f32.mxu0 0.0
    %7282 = vmatmul.mubr.f32.gmra.mrb[0].mxu0 %v1950
    %v7283 = vpop.f32.mrb[0].mxu0
    %v7284 = vadd.f32 %v6739, %v7283
    %v7285 = vpop.f32.mrb[0].mxu0
    %7286 = vmatprep.mubr.f32.mxu0 0.0
    %7287 = vmatmul.mubr.f32.gmra.mrb[0].mxu0 %v1953
    %v7288 = vpop.f32.mrb[0].mxu0
    %v7289 = vadd.f32 %v6744, %v7288
    %v7290 = vpop.f32.mrb[0].mxu0
    %7291 = vmatprep.mubr.f32.mxu0 0.0
    %7292 = vmatmul.mubr.f32.gmra.mrb[0].mxu0 %v1956
    %v7293 = vpop.f32.mrb[0].mxu0
    %v7294 = vadd.f32 %v6749, %v7293
    %v7295 = vpop.f32.mrb[0].mxu0
    %7296 = vmatprep.mubr.f32.mxu0 0.0
    %7297 = vmatmul.mubr.f32.gmra.mrb[0].mxu0 %v1959
    %v7298 = vpop.f32.mrb[0].mxu0
    %v7299 = vadd.f32 %v6754, %v7298
    %v7300 = vpop.f32.mrb[0].mxu0
    %7301 = vmatprep.mubr.f32.mxu0 0.0
    %7302 = vmatmul.mubr.f32.gmra.mrb[0].mxu0 %v1962
    %v7303 = vpop.f32.mrb[0].mxu0
    %v7304 = vadd.f32 %v6759, %v7303
    %v7305 = vpop.f32.mrb[0].mxu0
    %7306 = vmatprep.mubr.f32.mxu0 0.0
    %7307 = vmatmul.mubr.f32.gmra.mrb[0].mxu0 %v1965
    %v7308 = vpop.f32.mrb[0].mxu0
    %v7309 = vadd.f32 %v6764, %v7308
    %v7310 = vpop.f32.mrb[0].mxu0
    %7311 = vdwg.mxu0
    %7312 = vmatprep.subr.mxu0 0.0
    %7313 = vmatpush1.msra.mxu0 %v410
    %7314 = vmatprep.subr.mxu0 0.0
    %7315 = vmatpush1.msra.mxu0 %v411
    %7316 = vmatprep.subr.mxu0 0.0
    %7317 = vmatpush1.msra.mxu0 %v412
    %7318 = vmatprep.subr.mxu0 0.0
    %7319 = vmatpush1.msra.mxu0 %v413
    %7320 = vmatprep.subr.mxu0 0.0
    %7321 = vmatpush1.msra.mxu0 %v414
    %7322 = vmatprep.subr.mxu0 0.0
    %7323 = vmatpush1.msra.mxu0 %v415
    %7324 = vmatprep.subr.mxu0 0.0
    %7325 = vmatpush1.msra.mxu0 %v416
    %7326 = vmatprep.subr.mxu0 0.0
    %7327 = vmatpush1.msra.mxu0 %v417
    %7328 = vmatprep.subr.mxu0 0.0
    %7329 = vmatpush1.msra.mxu0 %v418
    %7330 = vmatprep.subr.mxu0 0.0
    %7331 = vmatpush1.msra.mxu0 %v419
    %7332 = vmatprep.subr.mxu0 0.0
    %7333 = vmatpush1.msra.mxu0 %v420
    %7334 = vmatprep.subr.mxu0 0.0
    %7335 = vmatpush1.msra.mxu0 %v421
    %7336 = vmatprep.subr.mxu0 0.0
    %7337 = vmatpush1.msra.mxu0 %v422
    %7338 = vmatprep.subr.mxu0 0.0
    %7339 = vmatpush1.msra.mxu0 %v423
    %7340 = vmatprep.subr.mxu0 0.0
    %7341 = vmatpush1.msra.mxu0 %v424
    %7342 = vmatprep.subr.mxu0 0.0
    %7343 = vmatpush1.msra.mxu0 %v425
    %7344 = vmatprep.subr.mxu0 0.0
    %7345 = vmatpush1.msra.mxu0 0.0
    %7346 = vmatprep.subr.mxu0 0.0
    %7347 = vmatpush1.msra.mxu0 0.0
    %7348 = vmatprep.subr.mxu0 0.0
    %7349 = vmatpush1.msra.mxu0 0.0
    %7350 = vmatprep.subr.mxu0 0.0
    %7351 = vmatpush1.msra.mxu0 0.0
    %7352 = vmatprep.subr.mxu0 0.0
    %7353 = vmatpush1.msra.mxu0 0.0
    %7354 = vmatprep.subr.mxu0 0.0
    %7355 = vmatpush1.msra.mxu0 0.0
    %7356 = vmatprep.subr.mxu0 0.0
    %7357 = vmatpush1.msra.mxu0 0.0
    %7358 = vmatprep.subr.mxu0 0.0
    %7359 = vmatpush1.msra.mxu0 0.0
    %7360 = vmatprep.subr.mxu0 0.0
    %7361 = vmatpush1.msra.mxu0 0.0
    %7362 = vmatprep.subr.mxu0 0.0
    %7363 = vmatpush1.msra.mxu0 0.0
    %7364 = vmatprep.subr.mxu0 0.0
    %7365 = vmatpush1.msra.mxu0 0.0
    %7366 = vmatprep.subr.mxu0 0.0
    %7367 = vmatpush1.msra.mxu0 0.0
    %7368 = vmatprep.subr.mxu0 0.0
    %7369 = vmatpush1.msra.mxu0 0.0
    %7370 = vmatprep.subr.mxu0 0.0
    %7371 = vmatpush1.msra.mxu0 0.0
    %7372 = vmatprep.subr.mxu0 0.0
    %7373 = vmatpush1.msra.mxu0 0.0
    %7374 = vmatprep.subr.mxu0 0.0
    %7375 = vmatpush1.msra.mxu0 0.0
    %7376 = vmatprep.mubr.f32.mxu0 0.0
    %7377 = vmatmul.mubr.f32.gmra.mrb[0].mxu0 %v6834
    %v7378 = vpop.f32.mrb[0].mxu0
    %v7379 = vadd.f32 0.0, %v7378
    %v7380 = vpop.f32.mrb[0].mxu0
    %7381 = vmatprep.mubr.f32.mxu0 0.0
    %7382 = vmatmul.mubr.f32.gmra.mrb[0].mxu0 %v6839
    %v7383 = vpop.f32.mrb[0].mxu0
    %v7384 = vadd.f32 0.0, %v7383
    %v7385 = vpop.f32.mrb[0].mxu0
    %7386 = vmatprep.mubr.f32.mxu0 0.0
    %7387 = vmatmul.mubr.f32.gmra.mrb[0].mxu0 %v6844
    %v7388 = vpop.f32.mrb[0].mxu0
    %v7389 = vadd.f32 0.0, %v7388
    %v7390 = vpop.f32.mrb[0].mxu0
    %7391 = vmatprep.mubr.f32.mxu0 0.0
    %7392 = vmatmul.mubr.f32.gmra.mrb[0].mxu0 %v6849
    %v7393 = vpop.f32.mrb[0].mxu0
    %v7394 = vadd.f32 0.0, %v7393
    %v7395 = vpop.f32.mrb[0].mxu0
    %7396 = vmatprep.mubr.f32.mxu0 0.0
    %7397 = vmatmul.mubr.f32.gmra.mrb[0].mxu0 %v6854
    %v7398 = vpop.f32.mrb[0].mxu0
    %v7399 = vadd.f32 0.0, %v7398
    %v7400 = vpop.f32.mrb[0].mxu0
    %7401 = vmatprep.mubr.f32.mxu0 0.0
    %7402 = vmatmul.mubr.f32.gmra.mrb[0].mxu0 %v6859
    %v7403 = vpop.f32.mrb[0].mxu0
    %v7404 = vadd.f32 0.0, %v7403
    %v7405 = vpop.f32.mrb[0].mxu0
    %7406 = vmatprep.mubr.f32.mxu0 0.0
    %7407 = vmatmul.mubr.f32.gmra.mrb[0].mxu0 %v6864
    %v7408 = vpop.f32.mrb[0].mxu0
    %v7409 = vadd.f32 0.0, %v7408
    %v7410 = vpop.f32.mrb[0].mxu0
    %7411 = vmatprep.mubr.f32.mxu0 0.0
    %7412 = vmatmul.mubr.f32.gmra.mrb[0].mxu0 %v6869
    %v7413 = vpop.f32.mrb[0].mxu0
    %v7414 = vadd.f32 0.0, %v7413
    %v7415 = vpop.f32.mrb[0].mxu0
    %7416 = vmatprep.mubr.f32.mxu0 0.0
    %7417 = vmatmul.mubr.f32.gmra.mrb[0].mxu0 %v6874
    %v7418 = vpop.f32.mrb[0].mxu0
    %v7419 = vadd.f32 0.0, %v7418
    %v7420 = vpop.f32.mrb[0].mxu0
    %7421 = vmatprep.mubr.f32.mxu0 0.0
    %7422 = vmatmul.mubr.f32.gmra.mrb[0].mxu0 %v6879
    %v7423 = vpop.f32.mrb[0].mxu0
    %v7424 = vadd.f32 0.0, %v7423
    %v7425 = vpop.f32.mrb[0].mxu0
    %7426 = vmatprep.mubr.f32.mxu0 0.0
    %7427 = vmatmul.mubr.f32.gmra.mrb[0].mxu0 %v6884
    %v7428 = vpop.f32.mrb[0].mxu0
    %v7429 = vadd.f32 0.0, %v7428
    %v7430 = vpop.f32.mrb[0].mxu0
    %7431 = vmatprep.mubr.f32.mxu0 0.0
    %7432 = vmatmul.mubr.f32.gmra.mrb[0].mxu0 %v6889
    %v7433 = vpop.f32.mrb[0].mxu0
    %v7434 = vadd.f32 0.0, %v7433
    %v7435 = vpop.f32.mrb[0].mxu0
    %7436 = vmatprep.mubr.f32.mxu0 0.0
    %7437 = vmatmul.mubr.f32.gmra.mrb[0].mxu0 %v6894
    %v7438 = vpop.f32.mrb[0].mxu0
    %v7439 = vadd.f32 0.0, %v7438
    %v7440 = vpop.f32.mrb[0].mxu0
    %7441 = vmatprep.mubr.f32.mxu0 0.0
    %7442 = vmatmul.mubr.f32.gmra.mrb[0].mxu0 %v6899
    %v7443 = vpop.f32.mrb[0].mxu0
    %v7444 = vadd.f32 0.0, %v7443
    %v7445 = vpop.f32.mrb[0].mxu0
    %7446 = vmatprep.mubr.f32.mxu0 0.0
    %7447 = vmatmul.mubr.f32.gmra.mrb[0].mxu0 %v6904
    %v7448 = vpop.f32.mrb[0].mxu0
    %v7449 = vadd.f32 0.0, %v7448
    %v7450 = vpop.f32.mrb[0].mxu0
    %7451 = vmatprep.mubr.f32.mxu0 0.0
    %7452 = vmatmul.mubr.f32.gmra.mrb[0].mxu0 %v6909
    %v7453 = vpop.f32.mrb[0].mxu0
    %v7454 = vadd.f32 0.0, %v7453
    %v7455 = vpop.f32.mrb[0].mxu0
    %7456 = vdwg.mxu0
    %v7457 = vadd.f32 %v2515, %v7379
    %v7458 = vadd.f32 %v2520, %v7384
    %v7459 = vadd.f32 %v2525, %v7389
    %v7460 = vadd.f32 %v2530, %v7394
    %v7461 = vadd.f32 %v2535, %v7399
    %v7462 = vadd.f32 %v2540, %v7404
    %v7463 = vadd.f32 %v2545, %v7409
    %v7464 = vadd.f32 %v2550, %v7414
    %v7465 = vadd.f32 %v2555, %v7419
    %v7466 = vadd.f32 %v2560, %v7424
    %v7467 = vadd.f32 %v2565, %v7429
    %v7468 = vadd.f32 %v2570, %v7434
    %v7469 = vadd.f32 %v2575, %v7439
    %v7470 = vadd.f32 %v2580, %v7444
    %v7471 = vadd.f32 %v2585, %v7449
    %v7472 = vadd.f32 %v2590, %v7454
    %7473 = vmatprep.subr.mxu0 0.0
    %7474 = vmatpush1.msra.mxu0 %v458
    %7475 = vmatprep.subr.mxu0 0.0
    %7476 = vmatpush1.msra.mxu0 %v459
    %7477 = vmatprep.subr.mxu0 0.0
    %7478 = vmatpush1.msra.mxu0 %v460
    %7479 = vmatprep.subr.mxu0 0.0
    %7480 = vmatpush1.msra.mxu0 %v461
    %7481 = vmatprep.subr.mxu0 0.0
    %7482 = vmatpush1.msra.mxu0 %v462
    %7483 = vmatprep.subr.mxu0 0.0
    %7484 = vmatpush1.msra.mxu0 %v463
    %7485 = vmatprep.subr.mxu0 0.0
    %7486 = vmatpush1.msra.mxu0 %v464
    %7487 = vmatprep.subr.mxu0 0.0
    %7488 = vmatpush1.msra.mxu0 %v465
    %7489 = vmatprep.subr.mxu0 0.0
    %7490 = vmatpush1.msra.mxu0 %v466
    %7491 = vmatprep.subr.mxu0 0.0
    %7492 = vmatpush1.msra.mxu0 %v467
    %7493 = vmatprep.subr.mxu0 0.0
    %7494 = vmatpush1.msra.mxu0 %v468
    %7495 = vmatprep.subr.mxu0 0.0
    %7496 = vmatpush1.msra.mxu0 %v469
    %7497 = vmatprep.subr.mxu0 0.0
    %7498 = vmatpush1.msra.mxu0 %v470
    %7499 = vmatprep.subr.mxu0 0.0
    %7500 = vmatpush1.msra.mxu0 %v471
    %7501 = vmatprep.subr.mxu0 0.0
    %7502 = vmatpush1.msra.mxu0 %v472
    %7503 = vmatprep.subr.mxu0 0.0
    %7504 = vmatpush1.msra.mxu0 %v473
    %7505 = vmatprep.subr.mxu0 0.0
    %7506 = vmatpush1.msra.mxu0 0.0
    %7507 = vmatprep.subr.mxu0 0.0
    %7508 = vmatpush1.msra.mxu0 0.0
    %7509 = vmatprep.subr.mxu0 0.0
    %7510 = vmatpush1.msra.mxu0 0.0
    %7511 = vmatprep.subr.mxu0 0.0
    %7512 = vmatpush1.msra.mxu0 0.0
    %7513 = vmatprep.subr.mxu0 0.0
    %7514 = vmatpush1.msra.mxu0 0.0
    %7515 = vmatprep.subr.mxu0 0.0
    %7516 = vmatpush1.msra.mxu0 0.0
    %7517 = vmatprep.subr.mxu0 0.0
    %7518 = vmatpush1.msra.mxu0 0.0
    %7519 = vmatprep.subr.mxu0 0.0
    %7520 = vmatpush1.msra.mxu0 0.0
    %7521 = vmatprep.subr.mxu0 0.0
    %7522 = vmatpush1.msra.mxu0 0.0
    %7523 = vmatprep.subr.mxu0 0.0
    %7524 = vmatpush1.msra.mxu0 0.0
    %7525 = vmatprep.subr.mxu0 0.0
    %7526 = vmatpush1.msra.mxu0 0.0
    %7527 = vmatprep.subr.mxu0 0.0
    %7528 = vmatpush1.msra.mxu0 0.0
    %7529 = vmatprep.subr.mxu0 0.0
    %7530 = vmatpush1.msra.mxu0 0.0
    %7531 = vmatprep.subr.mxu0 0.0
    %7532 = vmatpush1.msra.mxu0 0.0
    %7533 = vmatprep.subr.mxu0 0.0
    %7534 = vmatpush1.msra.mxu0 0.0
    %7535 = vmatprep.subr.mxu0 0.0
    %7536 = vmatpush1.msra.mxu0 0.0
    %7537 = vmatprep.mubr.f32.mxu0 0.0
    %7538 = vmatmul.mubr.f32.gmra.mrb[0].mxu0 %v6914
    %v7539 = vpop.f32.mrb[0].mxu0
    %v7540 = vadd.f32 0.0, %v7539
    %v7541 = vpop.f32.mrb[0].mxu0
    %7542 = vmatprep.mubr.f32.mxu0 0.0
    %7543 = vmatmul.mubr.f32.gmra.mrb[0].mxu0 %v6919
    %v7544 = vpop.f32.mrb[0].mxu0
    %v7545 = vadd.f32 0.0, %v7544
    %v7546 = vpop.f32.mrb[0].mxu0
    %7547 = vmatprep.mubr.f32.mxu0 0.0
    %7548 = vmatmul.mubr.f32.gmra.mrb[0].mxu0 %v6924
    %v7549 = vpop.f32.mrb[0].mxu0
    %v7550 = vadd.f32 0.0, %v7549
    %v7551 = vpop.f32.mrb[0].mxu0
    %7552 = vmatprep.mubr.f32.mxu0 0.0
    %7553 = vmatmul.mubr.f32.gmra.mrb[0].mxu0 %v6929
    %v7554 = vpop.f32.mrb[0].mxu0
    %v7555 = vadd.f32 0.0, %v7554
    %v7556 = vpop.f32.mrb[0].mxu0
    %7557 = vmatprep.mubr.f32.mxu0 0.0
    %7558 = vmatmul.mubr.f32.gmra.mrb[0].mxu0 %v6934
    %v7559 = vpop.f32.mrb[0].mxu0
    %v7560 = vadd.f32 0.0, %v7559
    %v7561 = vpop.f32.mrb[0].mxu0
    %7562 = vmatprep.mubr.f32.mxu0 0.0
    %7563 = vmatmul.mubr.f32.gmra.mrb[0].mxu0 %v6939
    %v7564 = vpop.f32.mrb[0].mxu0
    %v7565 = vadd.f32 0.0, %v7564
    %v7566 = vpop.f32.mrb[0].mxu0
    %7567 = vmatprep.mubr.f32.mxu0 0.0
    %7568 = vmatmul.mubr.f32.gmra.mrb[0].mxu0 %v6944
    %v7569 = vpop.f32.mrb[0].mxu0
    %v7570 = vadd.f32 0.0, %v7569
    %v7571 = vpop.f32.mrb[0].mxu0
    %7572 = vmatprep.mubr.f32.mxu0 0.0
    %7573 = vmatmul.mubr.f32.gmra.mrb[0].mxu0 %v6949
    %v7574 = vpop.f32.mrb[0].mxu0
    %v7575 = vadd.f32 0.0, %v7574
    %v7576 = vpop.f32.mrb[0].mxu0
    %7577 = vmatprep.mubr.f32.mxu0 0.0
    %7578 = vmatmul.mubr.f32.gmra.mrb[0].mxu0 %v6954
    %v7579 = vpop.f32.mrb[0].mxu0
    %v7580 = vadd.f32 0.0, %v7579
    %v7581 = vpop.f32.mrb[0].mxu0
    %7582 = vmatprep.mubr.f32.mxu0 0.0
    %7583 = vmatmul.mubr.f32.gmra.mrb[0].mxu0 %v6959
    %v7584 = vpop.f32.mrb[0].mxu0
    %v7585 = vadd.f32 0.0, %v7584
    %v7586 = vpop.f32.mrb[0].mxu0
    %7587 = vmatprep.mubr.f32.mxu0 0.0
    %7588 = vmatmul.mubr.f32.gmra.mrb[0].mxu0 %v6964
    %v7589 = vpop.f32.mrb[0].mxu0
    %v7590 = vadd.f32 0.0, %v7589
    %v7591 = vpop.f32.mrb[0].mxu0
    %7592 = vmatprep.mubr.f32.mxu0 0.0
    %7593 = vmatmul.mubr.f32.gmra.mrb[0].mxu0 %v6969
    %v7594 = vpop.f32.mrb[0].mxu0
    %v7595 = vadd.f32 0.0, %v7594
    %v7596 = vpop.f32.mrb[0].mxu0
    %7597 = vmatprep.mubr.f32.mxu0 0.0
    %7598 = vmatmul.mubr.f32.gmra.mrb[0].mxu0 %v6974
    %v7599 = vpop.f32.mrb[0].mxu0
    %v7600 = vadd.f32 0.0, %v7599
    %v7601 = vpop.f32.mrb[0].mxu0
    %7602 = vmatprep.mubr.f32.mxu0 0.0
    %7603 = vmatmul.mubr.f32.gmra.mrb[0].mxu0 %v6979
    %v7604 = vpop.f32.mrb[0].mxu0
    %v7605 = vadd.f32 0.0, %v7604
    %v7606 = vpop.f32.mrb[0].mxu0
    %7607 = vmatprep.mubr.f32.mxu0 0.0
    %7608 = vmatmul.mubr.f32.gmra.mrb[0].mxu0 %v6984
    %v7609 = vpop.f32.mrb[0].mxu0
    %v7610 = vadd.f32 0.0, %v7609
    %v7611 = vpop.f32.mrb[0].mxu0
    %7612 = vmatprep.mubr.f32.mxu0 0.0
    %7613 = vmatmul.mubr.f32.gmra.mrb[0].mxu0 %v6989
    %v7614 = vpop.f32.mrb[0].mxu0
    %v7615 = vadd.f32 0.0, %v7614
    %v7616 = vpop.f32.mrb[0].mxu0
    %7617 = vdwg.mxu0
    %v7618 = vadd.f32 %v7457, %v7540
    %v7619 = vadd.f32 %v7458, %v7545
    %v7620 = vadd.f32 %v7459, %v7550
    %v7621 = vadd.f32 %v7460, %v7555
    %v7622 = vadd.f32 %v7461, %v7560
    %v7623 = vadd.f32 %v7462, %v7565
    %v7624 = vadd.f32 %v7463, %v7570
    %v7625 = vadd.f32 %v7464, %v7575
    %v7626 = vadd.f32 %v7465, %v7580
    %v7627 = vadd.f32 %v7466, %v7585
    %v7628 = vadd.f32 %v7467, %v7590
    %v7629 = vadd.f32 %v7468, %v7595
    %v7630 = vadd.f32 %v7469, %v7600
    %v7631 = vadd.f32 %v7470, %v7605
    %v7632 = vadd.f32 %v7471, %v7610
    %v7633 = vadd.f32 %v7472, %v7615
    %7634 = vmatprep.subr.mxu0 0.0
    %7635 = vmatpush1.msra.mxu0 %v506
    %7636 = vmatprep.subr.mxu0 0.0
    %7637 = vmatpush1.msra.mxu0 %v507
    %7638 = vmatprep.subr.mxu0 0.0
    %7639 = vmatpush1.msra.mxu0 %v508
    %7640 = vmatprep.subr.mxu0 0.0
    %7641 = vmatpush1.msra.mxu0 %v509
    %7642 = vmatprep.subr.mxu0 0.0
    %7643 = vmatpush1.msra.mxu0 %v510
    %7644 = vmatprep.subr.mxu0 0.0
    %7645 = vmatpush1.msra.mxu0 %v511
    %7646 = vmatprep.subr.mxu0 0.0
    %7647 = vmatpush1.msra.mxu0 %v512
    %7648 = vmatprep.subr.mxu0 0.0
    %7649 = vmatpush1.msra.mxu0 %v513
    %7650 = vmatprep.subr.mxu0 0.0
    %7651 = vmatpush1.msra.mxu0 %v514
    %7652 = vmatprep.subr.mxu0 0.0
    %7653 = vmatpush1.msra.mxu0 %v515
    %7654 = vmatprep.subr.mxu0 0.0
    %7655 = vmatpush1.msra.mxu0 %v516
    %7656 = vmatprep.subr.mxu0 0.0
    %7657 = vmatpush1.msra.mxu0 %v517
    %7658 = vmatprep.subr.mxu0 0.0
    %7659 = vmatpush1.msra.mxu0 %v518
    %7660 = vmatprep.subr.mxu0 0.0
    %7661 = vmatpush1.msra.mxu0 %v519
    %7662 = vmatprep.subr.mxu0 0.0
    %7663 = vmatpush1.msra.mxu0 %v520
    %7664 = vmatprep.subr.mxu0 0.0
    %7665 = vmatpush1.msra.mxu0 %v521
    %7666 = vmatprep.subr.mxu0 0.0
    %7667 = vmatpush1.msra.mxu0 0.0
    %7668 = vmatprep.subr.mxu0 0.0
    %7669 = vmatpush1.msra.mxu0 0.0
    %7670 = vmatprep.subr.mxu0 0.0
    %7671 = vmatpush1.msra.mxu0 0.0
    %7672 = vmatprep.subr.mxu0 0.0
    %7673 = vmatpush1.msra.mxu0 0.0
    %7674 = vmatprep.subr.mxu0 0.0
    %7675 = vmatpush1.msra.mxu0 0.0
    %7676 = vmatprep.subr.mxu0 0.0
    %7677 = vmatpush1.msra.mxu0 0.0
    %7678 = vmatprep.subr.mxu0 0.0
    %7679 = vmatpush1.msra.mxu0 0.0
    %7680 = vmatprep.subr.mxu0 0.0
    %7681 = vmatpush1.msra.mxu0 0.0
    %7682 = vmatprep.subr.mxu0 0.0
    %7683 = vmatpush1.msra.mxu0 0.0
    %7684 = vmatprep.subr.mxu0 0.0
    %7685 = vmatpush1.msra.mxu0 0.0
    %7686 = vmatprep.subr.mxu0 0.0
    %7687 = vmatpush1.msra.mxu0 0.0
    %7688 = vmatprep.subr.mxu0 0.0
    %7689 = vmatpush1.msra.mxu0 0.0
    %7690 = vmatprep.subr.mxu0 0.0
    %7691 = vmatpush1.msra.mxu0 0.0
    %7692 = vmatprep.subr.mxu0 0.0
    %7693 = vmatpush1.msra.mxu0 0.0
    %7694 = vmatprep.subr.mxu0 0.0
    %7695 = vmatpush1.msra.mxu0 0.0
    %7696 = vmatprep.subr.mxu0 0.0
    %7697 = vmatpush1.msra.mxu0 0.0
    %7698 = vmatprep.mubr.f32.mxu0 0.0
    %7699 = vmatmul.mubr.f32.gmra.mrb[0].mxu0 %v6994
    %v7700 = vpop.f32.mrb[0].mxu0
    %v7701 = vadd.f32 0.0, %v7700
    %v7702 = vpop.f32.mrb[0].mxu0
    %7703 = vmatprep.mubr.f32.mxu0 0.0
    %7704 = vmatmul.mubr.f32.gmra.mrb[0].mxu0 %v6999
    %v7705 = vpop.f32.mrb[0].mxu0
    %v7706 = vadd.f32 0.0, %v7705
    %v7707 = vpop.f32.mrb[0].mxu0
    %7708 = vmatprep.mubr.f32.mxu0 0.0
    %7709 = vmatmul.mubr.f32.gmra.mrb[0].mxu0 %v7004
    %v7710 = vpop.f32.mrb[0].mxu0
    %v7711 = vadd.f32 0.0, %v7710
    %v7712 = vpop.f32.mrb[0].mxu0
    %7713 = vmatprep.mubr.f32.mxu0 0.0
    %7714 = vmatmul.mubr.f32.gmra.mrb[0].mxu0 %v7009
    %v7715 = vpop.f32.mrb[0].mxu0
    %v7716 = vadd.f32 0.0, %v7715
    %v7717 = vpop.f32.mrb[0].mxu0
    %7718 = vmatprep.mubr.f32.mxu0 0.0
    %7719 = vmatmul.mubr.f32.gmra.mrb[0].mxu0 %v7014
    %v7720 = vpop.f32.mrb[0].mxu0
    %v7721 = vadd.f32 0.0, %v7720
    %v7722 = vpop.f32.mrb[0].mxu0
    %7723 = vmatprep.mubr.f32.mxu0 0.0
    %7724 = vmatmul.mubr.f32.gmra.mrb[0].mxu0 %v7019
    %v7725 = vpop.f32.mrb[0].mxu0
    %v7726 = vadd.f32 0.0, %v7725
    %v7727 = vpop.f32.mrb[0].mxu0
    %7728 = vmatprep.mubr.f32.mxu0 0.0
    %7729 = vmatmul.mubr.f32.gmra.mrb[0].mxu0 %v7024
    %v7730 = vpop.f32.mrb[0].mxu0
    %v7731 = vadd.f32 0.0, %v7730
    %v7732 = vpop.f32.mrb[0].mxu0
    %7733 = vmatprep.mubr.f32.mxu0 0.0
    %7734 = vmatmul.mubr.f32.gmra.mrb[0].mxu0 %v7029
    %v7735 = vpop.f32.mrb[0].mxu0
    %v7736 = vadd.f32 0.0, %v7735
    %v7737 = vpop.f32.mrb[0].mxu0
    %7738 = vmatprep.mubr.f32.mxu0 0.0
    %7739 = vmatmul.mubr.f32.gmra.mrb[0].mxu0 %v7034
    %v7740 = vpop.f32.mrb[0].mxu0
    %v7741 = vadd.f32 0.0, %v7740
    %v7742 = vpop.f32.mrb[0].mxu0
    %7743 = vmatprep.mubr.f32.mxu0 0.0
    %7744 = vmatmul.mubr.f32.gmra.mrb[0].mxu0 %v7039
    %v7745 = vpop.f32.mrb[0].mxu0
    %v7746 = vadd.f32 0.0, %v7745
    %v7747 = vpop.f32.mrb[0].mxu0
    %7748 = vmatprep.mubr.f32.mxu0 0.0
    %7749 = vmatmul.mubr.f32.gmra.mrb[0].mxu0 %v7044
    %v7750 = vpop.f32.mrb[0].mxu0
    %v7751 = vadd.f32 0.0, %v7750
    %v7752 = vpop.f32.mrb[0].mxu0
    %7753 = vmatprep.mubr.f32.mxu0 0.0
    %7754 = vmatmul.mubr.f32.gmra.mrb[0].mxu0 %v7049
    %v7755 = vpop.f32.mrb[0].mxu0
    %v7756 = vadd.f32 0.0, %v7755
    %v7757 = vpop.f32.mrb[0].mxu0
    %7758 = vmatprep.mubr.f32.mxu0 0.0
    %7759 = vmatmul.mubr.f32.gmra.mrb[0].mxu0 %v7054
    %v7760 = vpop.f32.mrb[0].mxu0
    %v7761 = vadd.f32 0.0, %v7760
    %v7762 = vpop.f32.mrb[0].mxu0
    %7763 = vmatprep.mubr.f32.mxu0 0.0
    %7764 = vmatmul.mubr.f32.gmra.mrb[0].mxu0 %v7059
    %v7765 = vpop.f32.mrb[0].mxu0
    %v7766 = vadd.f32 0.0, %v7765
    %v7767 = vpop.f32.mrb[0].mxu0
    %7768 = vmatprep.mubr.f32.mxu0 0.0
    %7769 = vmatmul.mubr.f32.gmra.mrb[0].mxu0 %v7064
    %v7770 = vpop.f32.mrb[0].mxu0
    %v7771 = vadd.f32 0.0, %v7770
    %v7772 = vpop.f32.mrb[0].mxu0
    %7773 = vmatprep.mubr.f32.mxu0 0.0
    %7774 = vmatmul.mubr.f32.gmra.mrb[0].mxu0 %v7069
    %v7775 = vpop.f32.mrb[0].mxu0
    %v7776 = vadd.f32 0.0, %v7775
    %v7777 = vpop.f32.mrb[0].mxu0
    %7778 = vdwg.mxu0
    %v7779 = vadd.f32 %v7618, %v7701
    %v7780 = vadd.f32 %v7619, %v7706
    %v7781 = vadd.f32 %v7620, %v7711
    %v7782 = vadd.f32 %v7621, %v7716
    %v7783 = vadd.f32 %v7622, %v7721
    %v7784 = vadd.f32 %v7623, %v7726
    %v7785 = vadd.f32 %v7624, %v7731
    %v7786 = vadd.f32 %v7625, %v7736
    %v7787 = vadd.f32 %v7626, %v7741
    %v7788 = vadd.f32 %v7627, %v7746
    %v7789 = vadd.f32 %v7628, %v7751
    %v7790 = vadd.f32 %v7629, %v7756
    %v7791 = vadd.f32 %v7630, %v7761
    %v7792 = vadd.f32 %v7631, %v7766
    %v7793 = vadd.f32 %v7632, %v7771
    %v7794 = vadd.f32 %v7633, %v7776
    %7795 = vmatprep.subr.mxu0 0.0
    %7796 = vmatpush1.msra.mxu0 %v554
    %7797 = vmatprep.subr.mxu0 0.0
    %7798 = vmatpush1.msra.mxu0 %v555
    %7799 = vmatprep.subr.mxu0 0.0
    %7800 = vmatpush1.msra.mxu0 %v556
    %7801 = vmatprep.subr.mxu0 0.0
    %7802 = vmatpush1.msra.mxu0 %v557
    %7803 = vmatprep.subr.mxu0 0.0
    %7804 = vmatpush1.msra.mxu0 %v558
    %7805 = vmatprep.subr.mxu0 0.0
    %7806 = vmatpush1.msra.mxu0 %v559
    %7807 = vmatprep.subr.mxu0 0.0
    %7808 = vmatpush1.msra.mxu0 %v560
    %7809 = vmatprep.subr.mxu0 0.0
    %7810 = vmatpush1.msra.mxu0 %v561
    %7811 = vmatprep.subr.mxu0 0.0
    %7812 = vmatpush1.msra.mxu0 %v562
    %7813 = vmatprep.subr.mxu0 0.0
    %7814 = vmatpush1.msra.mxu0 %v563
    %7815 = vmatprep.subr.mxu0 0.0
    %7816 = vmatpush1.msra.mxu0 %v564
    %7817 = vmatprep.subr.mxu0 0.0
    %7818 = vmatpush1.msra.mxu0 %v565
    %7819 = vmatprep.subr.mxu0 0.0
    %7820 = vmatpush1.msra.mxu0 %v566
    %7821 = vmatprep.subr.mxu0 0.0
    %7822 = vmatpush1.msra.mxu0 %v567
    %7823 = vmatprep.subr.mxu0 0.0
    %7824 = vmatpush1.msra.mxu0 %v568
    %7825 = vmatprep.subr.mxu0 0.0
    %7826 = vmatpush1.msra.mxu0 %v569
    %7827 = vmatprep.subr.mxu0 0.0
    %7828 = vmatpush1.msra.mxu0 0.0
    %7829 = vmatprep.subr.mxu0 0.0
    %7830 = vmatpush1.msra.mxu0 0.0
    %7831 = vmatprep.subr.mxu0 0.0
    %7832 = vmatpush1.msra.mxu0 0.0
    %7833 = vmatprep.subr.mxu0 0.0
    %7834 = vmatpush1.msra.mxu0 0.0
    %7835 = vmatprep.subr.mxu0 0.0
    %7836 = vmatpush1.msra.mxu0 0.0
    %7837 = vmatprep.subr.mxu0 0.0
    %7838 = vmatpush1.msra.mxu0 0.0
    %7839 = vmatprep.subr.mxu0 0.0
    %7840 = vmatpush1.msra.mxu0 0.0
    %7841 = vmatprep.subr.mxu0 0.0
    %7842 = vmatpush1.msra.mxu0 0.0
    %7843 = vmatprep.subr.mxu0 0.0
    %7844 = vmatpush1.msra.mxu0 0.0
    %7845 = vmatprep.subr.mxu0 0.0
    %7846 = vmatpush1.msra.mxu0 0.0
    %7847 = vmatprep.subr.mxu0 0.0
    %7848 = vmatpush1.msra.mxu0 0.0
    %7849 = vmatprep.subr.mxu0 0.0
    %7850 = vmatpush1.msra.mxu0 0.0
    %7851 = vmatprep.subr.mxu0 0.0
    %7852 = vmatpush1.msra.mxu0 0.0
    %7853 = vmatprep.subr.mxu0 0.0
    %7854 = vmatpush1.msra.mxu0 0.0
    %7855 = vmatprep.subr.mxu0 0.0
    %7856 = vmatpush1.msra.mxu0 0.0
    %7857 = vmatprep.subr.mxu0 0.0
    %7858 = vmatpush1.msra.mxu0 0.0
    %7859 = vmatprep.mubr.f32.mxu0 0.0
    %7860 = vmatmul.mubr.f32.gmra.mrb[0].mxu0 %v7074
    %v7861 = vpop.f32.mrb[0].mxu0
    %v7862 = vadd.f32 0.0, %v7861
    %v7863 = vpop.f32.mrb[0].mxu0
    %7864 = vmatprep.mubr.f32.mxu0 0.0
    %7865 = vmatmul.mubr.f32.gmra.mrb[0].mxu0 %v7079
    %v7866 = vpop.f32.mrb[0].mxu0
    %v7867 = vadd.f32 0.0, %v7866
    %v7868 = vpop.f32.mrb[0].mxu0
    %7869 = vmatprep.mubr.f32.mxu0 0.0
    %7870 = vmatmul.mubr.f32.gmra.mrb[0].mxu0 %v7084
    %v7871 = vpop.f32.mrb[0].mxu0
    %v7872 = vadd.f32 0.0, %v7871
    %v7873 = vpop.f32.mrb[0].mxu0
    %7874 = vmatprep.mubr.f32.mxu0 0.0
    %7875 = vmatmul.mubr.f32.gmra.mrb[0].mxu0 %v7089
    %v7876 = vpop.f32.mrb[0].mxu0
    %v7877 = vadd.f32 0.0, %v7876
    %v7878 = vpop.f32.mrb[0].mxu0
    %7879 = vmatprep.mubr.f32.mxu0 0.0
    %7880 = vmatmul.mubr.f32.gmra.mrb[0].mxu0 %v7094
    %v7881 = vpop.f32.mrb[0].mxu0
    %v7882 = vadd.f32 0.0, %v7881
    %v7883 = vpop.f32.mrb[0].mxu0
    %7884 = vmatprep.mubr.f32.mxu0 0.0
    %7885 = vmatmul.mubr.f32.gmra.mrb[0].mxu0 %v7099
    %v7886 = vpop.f32.mrb[0].mxu0
    %v7887 = vadd.f32 0.0, %v7886
    %v7888 = vpop.f32.mrb[0].mxu0
    %7889 = vmatprep.mubr.f32.mxu0 0.0
    %7890 = vmatmul.mubr.f32.gmra.mrb[0].mxu0 %v7104
    %v7891 = vpop.f32.mrb[0].mxu0
    %v7892 = vadd.f32 0.0, %v7891
    %v7893 = vpop.f32.mrb[0].mxu0
    %7894 = vmatprep.mubr.f32.mxu0 0.0
    %7895 = vmatmul.mubr.f32.gmra.mrb[0].mxu0 %v7109
    %v7896 = vpop.f32.mrb[0].mxu0
    %v7897 = vadd.f32 0.0, %v7896
    %v7898 = vpop.f32.mrb[0].mxu0
    %7899 = vmatprep.mubr.f32.mxu0 0.0
    %7900 = vmatmul.mubr.f32.gmra.mrb[0].mxu0 %v7114
    %v7901 = vpop.f32.mrb[0].mxu0
    %v7902 = vadd.f32 0.0, %v7901
    %v7903 = vpop.f32.mrb[0].mxu0
    %7904 = vmatprep.mubr.f32.mxu0 0.0
    %7905 = vmatmul.mubr.f32.gmra.mrb[0].mxu0 %v7119
    %v7906 = vpop.f32.mrb[0].mxu0
    %v7907 = vadd.f32 0.0, %v7906
    %v7908 = vpop.f32.mrb[0].mxu0
    %7909 = vmatprep.mubr.f32.mxu0 0.0
    %7910 = vmatmul.mubr.f32.gmra.mrb[0].mxu0 %v7124
    %v7911 = vpop.f32.mrb[0].mxu0
    %v7912 = vadd.f32 0.0, %v7911
    %v7913 = vpop.f32.mrb[0].mxu0
    %7914 = vmatprep.mubr.f32.mxu0 0.0
    %7915 = vmatmul.mubr.f32.gmra.mrb[0].mxu0 %v7129
    %v7916 = vpop.f32.mrb[0].mxu0
    %v7917 = vadd.f32 0.0, %v7916
    %v7918 = vpop.f32.mrb[0].mxu0
    %7919 = vmatprep.mubr.f32.mxu0 0.0
    %7920 = vmatmul.mubr.f32.gmra.mrb[0].mxu0 %v7134
    %v7921 = vpop.f32.mrb[0].mxu0
    %v7922 = vadd.f32 0.0, %v7921
    %v7923 = vpop.f32.mrb[0].mxu0
    %7924 = vmatprep.mubr.f32.mxu0 0.0
    %7925 = vmatmul.mubr.f32.gmra.mrb[0].mxu0 %v7139
    %v7926 = vpop.f32.mrb[0].mxu0
    %v7927 = vadd.f32 0.0, %v7926
    %v7928 = vpop.f32.mrb[0].mxu0
    %7929 = vmatprep.mubr.f32.mxu0 0.0
    %7930 = vmatmul.mubr.f32.gmra.mrb[0].mxu0 %v7144
    %v7931 = vpop.f32.mrb[0].mxu0
    %v7932 = vadd.f32 0.0, %v7931
    %v7933 = vpop.f32.mrb[0].mxu0
    %7934 = vmatprep.mubr.f32.mxu0 0.0
    %7935 = vmatmul.mubr.f32.gmra.mrb[0].mxu0 %v7149
    %v7936 = vpop.f32.mrb[0].mxu0
    %v7937 = vadd.f32 0.0, %v7936
    %v7938 = vpop.f32.mrb[0].mxu0
    %7939 = vdwg.mxu0
    %v7940 = vadd.f32 %v7779, %v7862
    %v7941 = vadd.f32 %v7780, %v7867
    %v7942 = vadd.f32 %v7781, %v7872
    %v7943 = vadd.f32 %v7782, %v7877
    %v7944 = vadd.f32 %v7783, %v7882
    %v7945 = vadd.f32 %v7784, %v7887
    %v7946 = vadd.f32 %v7785, %v7892
    %v7947 = vadd.f32 %v7786, %v7897
    %v7948 = vadd.f32 %v7787, %v7902
    %v7949 = vadd.f32 %v7788, %v7907
    %v7950 = vadd.f32 %v7789, %v7912
    %v7951 = vadd.f32 %v7790, %v7917
    %v7952 = vadd.f32 %v7791, %v7922
    %v7953 = vadd.f32 %v7792, %v7927
    %v7954 = vadd.f32 %v7793, %v7932
    %v7955 = vadd.f32 %v7794, %v7937
    %7956 = vmatprep.subr.mxu0 0.0
    %7957 = vmatpush1.msra.mxu0 %v602
    %7958 = vmatprep.subr.mxu0 0.0
    %7959 = vmatpush1.msra.mxu0 %v603
    %7960 = vmatprep.subr.mxu0 0.0
    %7961 = vmatpush1.msra.mxu0 %v604
    %7962 = vmatprep.subr.mxu0 0.0
    %7963 = vmatpush1.msra.mxu0 %v605
    %7964 = vmatprep.subr.mxu0 0.0
    %7965 = vmatpush1.msra.mxu0 %v606
    %7966 = vmatprep.subr.mxu0 0.0
    %7967 = vmatpush1.msra.mxu0 %v607
    %7968 = vmatprep.subr.mxu0 0.0
    %7969 = vmatpush1.msra.mxu0 %v608
    %7970 = vmatprep.subr.mxu0 0.0
    %7971 = vmatpush1.msra.mxu0 %v609
    %7972 = vmatprep.subr.mxu0 0.0
    %7973 = vmatpush1.msra.mxu0 %v610
    %7974 = vmatprep.subr.mxu0 0.0
    %7975 = vmatpush1.msra.mxu0 %v611
    %7976 = vmatprep.subr.mxu0 0.0
    %7977 = vmatpush1.msra.mxu0 %v612
    %7978 = vmatprep.subr.mxu0 0.0
    %7979 = vmatpush1.msra.mxu0 %v613
    %7980 = vmatprep.subr.mxu0 0.0
    %7981 = vmatpush1.msra.mxu0 %v614
    %7982 = vmatprep.subr.mxu0 0.0
    %7983 = vmatpush1.msra.mxu0 %v615
    %7984 = vmatprep.subr.mxu0 0.0
    %7985 = vmatpush1.msra.mxu0 %v616
    %7986 = vmatprep.subr.mxu0 0.0
    %7987 = vmatpush1.msra.mxu0 %v617
    %7988 = vmatprep.subr.mxu0 0.0
    %7989 = vmatpush1.msra.mxu0 0.0
    %7990 = vmatprep.subr.mxu0 0.0
    %7991 = vmatpush1.msra.mxu0 0.0
    %7992 = vmatprep.subr.mxu0 0.0
    %7993 = vmatpush1.msra.mxu0 0.0
    %7994 = vmatprep.subr.mxu0 0.0
    %7995 = vmatpush1.msra.mxu0 0.0
    %7996 = vmatprep.subr.mxu0 0.0
    %7997 = vmatpush1.msra.mxu0 0.0
    %7998 = vmatprep.subr.mxu0 0.0
    %7999 = vmatpush1.msra.mxu0 0.0
    %8000 = vmatprep.subr.mxu0 0.0
    %8001 = vmatpush1.msra.mxu0 0.0
    %8002 = vmatprep.subr.mxu0 0.0
    %8003 = vmatpush1.msra.mxu0 0.0
    %8004 = vmatprep.subr.mxu0 0.0
    %8005 = vmatpush1.msra.mxu0 0.0
    %8006 = vmatprep.subr.mxu0 0.0
    %8007 = vmatpush1.msra.mxu0 0.0
    %8008 = vmatprep.subr.mxu0 0.0
    %8009 = vmatpush1.msra.mxu0 0.0
    %8010 = vmatprep.subr.mxu0 0.0
    %8011 = vmatpush1.msra.mxu0 0.0
    %8012 = vmatprep.subr.mxu0 0.0
    %8013 = vmatpush1.msra.mxu0 0.0
    %8014 = vmatprep.subr.mxu0 0.0
    %8015 = vmatpush1.msra.mxu0 0.0
    %8016 = vmatprep.subr.mxu0 0.0
    %8017 = vmatpush1.msra.mxu0 0.0
    %8018 = vmatprep.subr.mxu0 0.0
    %8019 = vmatpush1.msra.mxu0 0.0
    %8020 = vmatprep.mubr.f32.mxu0 0.0
    %8021 = vmatmul.mubr.f32.gmra.mrb[0].mxu0 %v7154
    %v8022 = vpop.f32.mrb[0].mxu0
    %v8023 = vadd.f32 0.0, %v8022
    %v8024 = vpop.f32.mrb[0].mxu0
    %8025 = vmatprep.mubr.f32.mxu0 0.0
    %8026 = vmatmul.mubr.f32.gmra.mrb[0].mxu0 %v7159
    %v8027 = vpop.f32.mrb[0].mxu0
    %v8028 = vadd.f32 0.0, %v8027
    %v8029 = vpop.f32.mrb[0].mxu0
    %8030 = vmatprep.mubr.f32.mxu0 0.0
    %8031 = vmatmul.mubr.f32.gmra.mrb[0].mxu0 %v7164
    %v8032 = vpop.f32.mrb[0].mxu0
    %v8033 = vadd.f32 0.0, %v8032
    %v8034 = vpop.f32.mrb[0].mxu0
    %8035 = vmatprep.mubr.f32.mxu0 0.0
    %8036 = vmatmul.mubr.f32.gmra.mrb[0].mxu0 %v7169
    %v8037 = vpop.f32.mrb[0].mxu0
    %v8038 = vadd.f32 0.0, %v8037
    %v8039 = vpop.f32.mrb[0].mxu0
    %8040 = vmatprep.mubr.f32.mxu0 0.0
    %8041 = vmatmul.mubr.f32.gmra.mrb[0].mxu0 %v7174
    %v8042 = vpop.f32.mrb[0].mxu0
    %v8043 = vadd.f32 0.0, %v8042
    %v8044 = vpop.f32.mrb[0].mxu0
    %8045 = vmatprep.mubr.f32.mxu0 0.0
    %8046 = vmatmul.mubr.f32.gmra.mrb[0].mxu0 %v7179
    %v8047 = vpop.f32.mrb[0].mxu0
    %v8048 = vadd.f32 0.0, %v8047
    %v8049 = vpop.f32.mrb[0].mxu0
    %8050 = vmatprep.mubr.f32.mxu0 0.0
    %8051 = vmatmul.mubr.f32.gmra.mrb[0].mxu0 %v7184
    %v8052 = vpop.f32.mrb[0].mxu0
    %v8053 = vadd.f32 0.0, %v8052
    %v8054 = vpop.f32.mrb[0].mxu0
    %8055 = vmatprep.mubr.f32.mxu0 0.0
    %8056 = vmatmul.mubr.f32.gmra.mrb[0].mxu0 %v7189
    %v8057 = vpop.f32.mrb[0].mxu0
    %v8058 = vadd.f32 0.0, %v8057
    %v8059 = vpop.f32.mrb[0].mxu0
    %8060 = vmatprep.mubr.f32.mxu0 0.0
    %8061 = vmatmul.mubr.f32.gmra.mrb[0].mxu0 %v7194
    %v8062 = vpop.f32.mrb[0].mxu0
    %v8063 = vadd.f32 0.0, %v8062
    %v8064 = vpop.f32.mrb[0].mxu0
    %8065 = vmatprep.mubr.f32.mxu0 0.0
    %8066 = vmatmul.mubr.f32.gmra.mrb[0].mxu0 %v7199
    %v8067 = vpop.f32.mrb[0].mxu0
    %v8068 = vadd.f32 0.0, %v8067
    %v8069 = vpop.f32.mrb[0].mxu0
    %8070 = vmatprep.mubr.f32.mxu0 0.0
    %8071 = vmatmul.mubr.f32.gmra.mrb[0].mxu0 %v7204
    %v8072 = vpop.f32.mrb[0].mxu0
    %v8073 = vadd.f32 0.0, %v8072
    %v8074 = vpop.f32.mrb[0].mxu0
    %8075 = vmatprep.mubr.f32.mxu0 0.0
    %8076 = vmatmul.mubr.f32.gmra.mrb[0].mxu0 %v7209
    %v8077 = vpop.f32.mrb[0].mxu0
    %v8078 = vadd.f32 0.0, %v8077
    %v8079 = vpop.f32.mrb[0].mxu0
    %8080 = vmatprep.mubr.f32.mxu0 0.0
    %8081 = vmatmul.mubr.f32.gmra.mrb[0].mxu0 %v7214
    %v8082 = vpop.f32.mrb[0].mxu0
    %v8083 = vadd.f32 0.0, %v8082
    %v8084 = vpop.f32.mrb[0].mxu0
    %8085 = vmatprep.mubr.f32.mxu0 0.0
    %8086 = vmatmul.mubr.f32.gmra.mrb[0].mxu0 %v7219
    %v8087 = vpop.f32.mrb[0].mxu0
    %v8088 = vadd.f32 0.0, %v8087
    %v8089 = vpop.f32.mrb[0].mxu0
    %8090 = vmatprep.mubr.f32.mxu0 0.0
    %8091 = vmatmul.mubr.f32.gmra.mrb[0].mxu0 %v7224
    %v8092 = vpop.f32.mrb[0].mxu0
    %v8093 = vadd.f32 0.0, %v8092
    %v8094 = vpop.f32.mrb[0].mxu0
    %8095 = vmatprep.mubr.f32.mxu0 0.0
    %8096 = vmatmul.mubr.f32.gmra.mrb[0].mxu0 %v7229
    %v8097 = vpop.f32.mrb[0].mxu0
    %v8098 = vadd.f32 0.0, %v8097
    %v8099 = vpop.f32.mrb[0].mxu0
    %8100 = vdwg.mxu0
    %v8101 = vadd.f32 %v7940, %v8023
    %v8102 = vadd.f32 %v7941, %v8028
    %v8103 = vadd.f32 %v7942, %v8033
    %v8104 = vadd.f32 %v7943, %v8038
    %v8105 = vadd.f32 %v7944, %v8043
    %v8106 = vadd.f32 %v7945, %v8048
    %v8107 = vadd.f32 %v7946, %v8053
    %v8108 = vadd.f32 %v7947, %v8058
    %v8109 = vadd.f32 %v7948, %v8063
    %v8110 = vadd.f32 %v7949, %v8068
    %v8111 = vadd.f32 %v7950, %v8073
    %v8112 = vadd.f32 %v7951, %v8078
    %v8113 = vadd.f32 %v7952, %v8083
    %v8114 = vadd.f32 %v7953, %v8088
    %v8115 = vadd.f32 %v7954, %v8093
    %v8116 = vadd.f32 %v7955, %v8098
    %v8117 = vadd.f32 %v8101, %v8102
    %v8118 = vadd.f32 %v8117, %v8103
    %v8119 = vadd.f32 %v8118, %v8104
    %v8120 = vadd.f32 %v8119, %v8105
    %v8121 = vadd.f32 %v8120, %v8106
    %v8122 = vadd.f32 %v8121, %v8107
    %v8123 = vadd.f32 %v8122, %v8108
    %v8124 = vadd.f32 %v8123, %v8109
    %v8125 = vadd.f32 %v8124, %v8110
    %v8126 = vadd.f32 %v8125, %v8111
    %v8127 = vadd.f32 %v8126, %v8112
    %v8128 = vadd.f32 %v8127, %v8113
    %v8129 = vadd.f32 %v8128, %v8114
    %v8130 = vadd.f32 %v8129, %v8115
    %v8131 = vadd.f32 %v8130, %v8116
    %8132 = vadd.xlane.f32.xlu0 %v8131
    %v8133 = vpop.xlane.xlu0 %8132
    %v8134 = vrot.slane %v8133, 4
    %v8135 = vadd.f32 %v8133, %v8134
    %v8136 = vrot.slane %v8135, 2
    %v8137 = vadd.f32 %v8135, %v8136
    %v8138 = vrot.slane %v8137, 1
    %v8139 = vadd.f32 %v8137, %v8138
    %s8140 = vtos %v8139
    %v8141 = vstv %s8140
    %v8142 = vmul.f32 %v8141, %v3422
    %v8143 = vsub.f32 %v8101, %v8142
    %v8144 = vsub.f32 %v8102, %v8142
    %v8145 = vsub.f32 %v8103, %v8142
    %v8146 = vsub.f32 %v8104, %v8142
    %v8147 = vsub.f32 %v8105, %v8142
    %v8148 = vsub.f32 %v8106, %v8142
    %v8149 = vsub.f32 %v8107, %v8142
    %v8150 = vsub.f32 %v8108, %v8142
    %v8151 = vsub.f32 %v8109, %v8142
    %v8152 = vsub.f32 %v8110, %v8142
    %v8153 = vsub.f32 %v8111, %v8142
    %v8154 = vsub.f32 %v8112, %v8142
    %v8155 = vsub.f32 %v8113, %v8142
    %v8156 = vsub.f32 %v8114, %v8142
    %v8157 = vsub.f32 %v8115, %v8142
    %v8158 = vsub.f32 %v8116, %v8142
    %v8159 = vmul.f32 %v8143, %v8143
    %v8160 = vmul.f32 %v8144, %v8144
    %v8161 = vmul.f32 %v8145, %v8145
    %v8162 = vmul.f32 %v8146, %v8146
    %v8163 = vmul.f32 %v8147, %v8147
    %v8164 = vmul.f32 %v8148, %v8148
    %v8165 = vmul.f32 %v8149, %v8149
    %v8166 = vmul.f32 %v8150, %v8150
    %v8167 = vmul.f32 %v8151, %v8151
    %v8168 = vmul.f32 %v8152, %v8152
    %v8169 = vmul.f32 %v8153, %v8153
    %v8170 = vmul.f32 %v8154, %v8154
    %v8171 = vmul.f32 %v8155, %v8155
    %v8172 = vmul.f32 %v8156, %v8156
    %v8173 = vmul.f32 %v8157, %v8157
    %v8174 = vmul.f32 %v8158, %v8158
    %v8175 = vadd.f32 %v8159, %v8160
    %v8176 = vadd.f32 %v8175, %v8161
    %v8177 = vadd.f32 %v8176, %v8162
    %v8178 = vadd.f32 %v8177, %v8163
    %v8179 = vadd.f32 %v8178, %v8164
    %v8180 = vadd.f32 %v8179, %v8165
    %v8181 = vadd.f32 %v8180, %v8166
    %v8182 = vadd.f32 %v8181, %v8167
    %v8183 = vadd.f32 %v8182, %v8168
    %v8184 = vadd.f32 %v8183, %v8169
    %v8185 = vadd.f32 %v8184, %v8170
    %v8186 = vadd.f32 %v8185, %v8171
    %v8187 = vadd.f32 %v8186, %v8172
    %v8188 = vadd.f32 %v8187, %v8173
    %v8189 = vadd.f32 %v8188, %v8174
    %8190 = vadd.xlane.f32.xlu0 %v8189
    %v8191 = vpop.xlane.xlu0 %8190
    %v8192 = vrot.slane %v8191, 4
    %v8193 = vadd.f32 %v8191, %v8192
    %v8194 = vrot.slane %v8193, 2
    %v8195 = vadd.f32 %v8193, %v8194
    %v8196 = vrot.slane %v8195, 1
    %v8197 = vadd.f32 %v8195, %v8196
    %s8198 = vtos %v8197
    %v8199 = vstv %s8198
    %v8200 = vmul.f32 %v8199, %v3422
    %v8201 = vadd.f32 %v8200, 1e-05
    %v8202 = vrsqrt.pop %v8201
    %v8203 = vmul.f32 %v8143, %v8202
    %v8204 = vmul.f32 %v8144, %v8202
    %v8205 = vmul.f32 %v8145, %v8202
    %v8206 = vmul.f32 %v8146, %v8202
    %v8207 = vmul.f32 %v8147, %v8202
    %v8208 = vmul.f32 %v8148, %v8202
    %v8209 = vmul.f32 %v8149, %v8202
    %v8210 = vmul.f32 %v8150, %v8202
    %v8211 = vmul.f32 %v8151, %v8202
    %v8212 = vmul.f32 %v8152, %v8202
    %v8213 = vmul.f32 %v8153, %v8202
    %v8214 = vmul.f32 %v8154, %v8202
    %v8215 = vmul.f32 %v8155, %v8202
    %v8216 = vmul.f32 %v8156, %v8202
    %v8217 = vmul.f32 %v8157, %v8202
    %v8218 = vmul.f32 %v8158, %v8202
    %v8219 = vmul.f32 %v8203, %v3503
    %v8220 = vmul.f32 %v8204, %v3508
    %v8221 = vmul.f32 %v8205, %v3513
    %v8222 = vmul.f32 %v8206, %v3518
    %v8223 = vmul.f32 %v8207, %v3523
    %v8224 = vmul.f32 %v8208, %v3528
    %v8225 = vmul.f32 %v8209, %v3533
    %v8226 = vmul.f32 %v8210, %v3538
    %v8227 = vmul.f32 %v8211, %v3543
    %v8228 = vmul.f32 %v8212, %v3548
    %v8229 = vmul.f32 %v8213, %v3553
    %v8230 = vmul.f32 %v8214, %v3558
    %v8231 = vmul.f32 %v8215, %v3563
    %v8232 = vmul.f32 %v8216, %v3568
    %v8233 = vmul.f32 %v8217, %v3573
    %v8234 = vmul.f32 %v8218, %v3578
    %v8235 = vadd.f32 %v8219, %v3599
    %v8236 = vadd.f32 %v8220, %v3604
    %v8237 = vadd.f32 %v8221, %v3609
    %v8238 = vadd.f32 %v8222, %v3614
    %v8239 = vadd.f32 %v8223, %v3619
    %v8240 = vadd.f32 %v8224, %v3624
    %v8241 = vadd.f32 %v8225, %v3629
    %v8242 = vadd.f32 %v8226, %v3634
    %v8243 = vadd.f32 %v8227, %v3639
    %v8244 = vadd.f32 %v8228, %v3644
    %v8245 = vadd.f32 %v8229, %v3649
    %v8246 = vadd.f32 %v8230, %v3654
    %v8247 = vadd.f32 %v8231, %v3659
    %v8248 = vadd.f32 %v8232, %v3664
    %v8249 = vadd.f32 %v8233, %v3669
    %v8250 = vadd.f32 %v8234, %v3674
    %v8251 = vmul.f32 %v8235, 0.5
    %v8252 = vmul.f32 %v8236, 0.5
    %v8253 = vmul.f32 %v8237, 0.5
    %v8254 = vmul.f32 %v8238, 0.5
    %v8255 = vmul.f32 %v8239, 0.5
    %v8256 = vmul.f32 %v8240, 0.5
    %v8257 = vmul.f32 %v8241, 0.5
    %v8258 = vmul.f32 %v8242, 0.5
    %v8259 = vmul.f32 %v8243, 0.5
    %v8260 = vmul.f32 %v8244, 0.5
    %v8261 = vmul.f32 %v8245, 0.5
    %v8262 = vmul.f32 %v8246, 0.5
    %v8263 = vmul.f32 %v8247, 0.5
    %v8264 = vmul.f32 %v8248, 0.5
    %v8265 = vmul.f32 %v8249, 0.5
    %v8266 = vmul.f32 %v8250, 0.5
    %v8267 = vmul.f32 %v8235, 0.044715
    %v8268 = vmul.f32 %v8236, 0.044715
    %v8269 = vmul.f32 %v8237, 0.044715
    %v8270 = vmul.f32 %v8238, 0.044715
    %v8271 = vmul.f32 %v8239, 0.044715
    %v8272 = vmul.f32 %v8240, 0.044715
    %v8273 = vmul.f32 %v8241, 0.044715
    %v8274 = vmul.f32 %v8242, 0.044715
    %v8275 = vmul.f32 %v8243, 0.044715
    %v8276 = vmul.f32 %v8244, 0.044715
    %v8277 = vmul.f32 %v8245, 0.044715
    %v8278 = vmul.f32 %v8246, 0.044715
    %v8279 = vmul.f32 %v8247, 0.044715
    %v8280 = vmul.f32 %v8248, 0.044715
    %v8281 = vmul.f32 %v8249, 0.044715
    %v8282 = vmul.f32 %v8250, 0.044715
    %v8283 = vmul.f32 %v8267, %v8235
    %v8284 = vmul.f32 %v8268, %v8236
    %v8285 = vmul.f32 %v8269, %v8237
    %v8286 = vmul.f32 %v8270, %v8238
    %v8287 = vmul.f32 %v8271, %v8239
    %v8288 = vmul.f32 %v8272, %v8240
    %v8289 = vmul.f32 %v8273, %v8241
    %v8290 = vmul.f32 %v8274, %v8242
    %v8291 = vmul.f32 %v8275, %v8243
    %v8292 = vmul.f32 %v8276, %v8244
    %v8293 = vmul.f32 %v8277, %v8245
    %v8294 = vmul.f32 %v8278, %v8246
    %v8295 = vmul.f32 %v8279, %v8247
    %v8296 = vmul.f32 %v8280, %v8248
    %v8297 = vmul.f32 %v8281, %v8249
    %v8298 = vmul.f32 %v8282, %v8250
    %v8299 = vmul.f32 %v8283, %v8235
    %v8300 = vmul.f32 %v8284, %v8236
    %v8301 = vmul.f32 %v8285, %v8237
    %v8302 = vmul.f32 %v8286, %v8238
    %v8303 = vmul.f32 %v8287, %v8239
    %v8304 = vmul.f32 %v8288, %v8240
    %v8305 = vmul.f32 %v8289, %v8241
    %v8306 = vmul.f32 %v8290, %v8242
    %v8307 = vmul.f32 %v8291, %v8243
    %v8308 = vmul.f32 %v8292, %v8244
    %v8309 = vmul.f32 %v8293, %v8245
    %v8310 = vmul.f32 %v8294, %v8246
    %v8311 = vmul.f32 %v8295, %v8247
    %v8312 = vmul.f32 %v8296, %v8248
    %v8313 = vmul.f32 %v8297, %v8249
    %v8314 = vmul.f32 %v8298, %v8250
    %v8315 = vadd.f32 %v8235, %v8299
    %v8316 = vadd.f32 %v8236, %v8300
    %v8317 = vadd.f32 %v8237, %v8301
    %v8318 = vadd.f32 %v8238, %v8302
    %v8319 = vadd.f32 %v8239, %v8303
    %v8320 = vadd.f32 %v8240, %v8304
    %v8321 = vadd.f32 %v8241, %v8305
    %v8322 = vadd.f32 %v8242, %v8306
    %v8323 = vadd.f32 %v8243, %v8307
    %v8324 = vadd.f32 %v8244, %v8308
    %v8325 = vadd.f32 %v8245, %v8309
    %v8326 = vadd.f32 %v8246, %v8310
    %v8327 = vadd.f32 %v8247, %v8311
    %v8328 = vadd.f32 %v8248, %v8312
    %v8329 = vadd.f32 %v8249, %v8313
    %v8330 = vadd.f32 %v8250, %v8314
    %v8331 = vmul.f32 %v8315, 0.7978846
    %v8332 = vmul.f32 %v8316, 0.7978846
    %v8333 = vmul.f32 %v8317, 0.7978846
    %v8334 = vmul.f32 %v8318, 0.7978846
    %v8335 = vmul.f32 %v8319, 0.7978846
    %v8336 = vmul.f32 %v8320, 0.7978846
    %v8337 = vmul.f32 %v8321, 0.7978846
    %v8338 = vmul.f32 %v8322, 0.7978846
    %v8339 = vmul.f32 %v8323, 0.7978846
    %v8340 = vmul.f32 %v8324, 0.7978846
    %v8341 = vmul.f32 %v8325, 0.7978846
    %v8342 = vmul.f32 %v8326, 0.7978846
    %v8343 = vmul.f32 %v8327, 0.7978846
    %v8344 = vmul.f32 %v8328, 0.7978846
    %v8345 = vmul.f32 %v8329, 0.7978846
    %v8346 = vmul.f32 %v8330, 0.7978846
    %v8347 = vtanh.pop %v8331
    %v8348 = vtanh.pop %v8332
    %v8349 = vtanh.pop %v8333
    %v8350 = vtanh.pop %v8334
    %v8351 = vtanh.pop %v8335
    %v8352 = vtanh.pop %v8336
    %v8353 = vtanh.pop %v8337
    %v8354 = vtanh.pop %v8338
    %v8355 = vtanh.pop %v8339
    %v8356 = vtanh.pop %v8340
    %v8357 = vtanh.pop %v8341
    %v8358 = vtanh.pop %v8342
    %v8359 = vtanh.pop %v8343
    %v8360 = vtanh.pop %v8344
    %v8361 = vtanh.pop %v8345
    %v8362 = vtanh.pop %v8346
    %v8363 = vadd.f32 %v8347, 1.0
    %v8364 = vadd.f32 %v8348, 1.0
    %v8365 = vadd.f32 %v8349, 1.0
    %v8366 = vadd.f32 %v8350, 1.0
    %v8367 = vadd.f32 %v8351, 1.0
    %v8368 = vadd.f32 %v8352, 1.0
    %v8369 = vadd.f32 %v8353, 1.0
    %v8370 = vadd.f32 %v8354, 1.0
    %v8371 = vadd.f32 %v8355, 1.0
    %v8372 = vadd.f32 %v8356, 1.0
    %v8373 = vadd.f32 %v8357, 1.0
    %v8374 = vadd.f32 %v8358, 1.0
    %v8375 = vadd.f32 %v8359, 1.0
    %v8376 = vadd.f32 %v8360, 1.0
    %v8377 = vadd.f32 %v8361, 1.0
    %v8378 = vadd.f32 %v8362, 1.0
    %v8379 = vmul.f32 %v8251, %v8363
    %v8380 = vmul.f32 %v8252, %v8364
    %v8381 = vmul.f32 %v8253, %v8365
    %v8382 = vmul.f32 %v8254, %v8366
    %v8383 = vmul.f32 %v8255, %v8367
    %v8384 = vmul.f32 %v8256, %v8368
    %v8385 = vmul.f32 %v8257, %v8369
    %v8386 = vmul.f32 %v8258, %v8370
    %v8387 = vmul.f32 %v8259, %v8371
    %v8388 = vmul.f32 %v8260, %v8372
    %v8389 = vmul.f32 %v8261, %v8373
    %v8390 = vmul.f32 %v8262, %v8374
    %v8391 = vmul.f32 %v8263, %v8375
    %v8392 = vmul.f32 %v8264, %v8376
    %v8393 = vmul.f32 %v8265, %v8377
    %v8394 = vmul.f32 %v8266, %v8378
    %v8395 = vld [vmem:[#allocation6] sm:$0xff]
    %v8396 = vld [vmem:[#allocation6 + $0x8] sm:$0xff]
    %v8397 = vld [vmem:[#allocation6 + $0x10] sm:$0xff]
    %v8398 = vld [vmem:[#allocation6 + $0x18] sm:$0xff]
    %v8399 = vld [vmem:[#allocation6 + $0x20] sm:$0xff]
    %v8400 = vld [vmem:[#allocation6 + $0x28] sm:$0xff]
    %v8401 = vld [vmem:[#allocation6 + $0x30] sm:$0xff]
    %v8402 = vld [vmem:[#allocation6 + $0x38] sm:$0xff]
    %v8403 = vld [vmem:[#allocation6 + $0x40] sm:$0xff]
    %v8404 = vld [vmem:[#allocation6 + $0x48] sm:$0xff]
    %v8405 = vld [vmem:[#allocation6 + $0x50] sm:$0xff]
    %v8406 = vld [vmem:[#allocation6 + $0x58] sm:$0xff]
    %v8407 = vld [vmem:[#allocation6 + $0x60] sm:$0xff]
    %v8408 = vld [vmem:[#allocation6 + $0x68] sm:$0xff]
    %v8409 = vld [vmem:[#allocation6 + $0x70] sm:$0xff]
    %v8410 = vld [vmem:[#allocation6 + $0x78] sm:$0xff]
    %8411 = vmatprep.subr.mxu0 0.0
    %8412 = vmatpush1.msra.mxu0 %v8379
    %8413 = vmatprep.subr.mxu0 0.0
    %8414 = vmatpush1.msra.mxu0 %v8380
    %8415 = vmatprep.subr.mxu0 0.0
    %8416 = vmatpush1.msra.mxu0 %v8381
    %8417 = vmatprep.subr.mxu0 0.0
    %8418 = vmatpush1.msra.mxu0 %v8382
    %8419 = vmatprep.subr.mxu0 0.0
    %8420 = vmatpush1.msra.mxu0 %v8383
    %8421 = vmatprep.subr.mxu0 0.0
    %8422 = vmatpush1.msra.mxu0 %v8384
    %8423 = vmatprep.subr.mxu0 0.0
    %8424 = vmatpush1.msra.mxu0 %v8385
    %8425 = vmatprep.subr.mxu0 0.0
    %8426 = vmatpush1.msra.mxu0 %v8386
    %8427 = vmatprep.subr.mxu0 0.0
    %8428 = vmatpush1.msra.mxu0 %v8387
    %8429 = vmatprep.subr.mxu0 0.0
    %8430 = vmatpush1.msra.mxu0 %v8388
    %8431 = vmatprep.subr.mxu0 0.0
    %8432 = vmatpush1.msra.mxu0 %v8389
    %8433 = vmatprep.subr.mxu0 0.0
    %8434 = vmatpush1.msra.mxu0 %v8390
    %8435 = vmatprep.subr.mxu0 0.0
    %8436 = vmatpush1.msra.mxu0 %v8391
    %8437 = vmatprep.subr.mxu0 0.0
    %8438 = vmatpush1.msra.mxu0 %v8392
    %8439 = vmatprep.subr.mxu0 0.0
    %8440 = vmatpush1.msra.mxu0 %v8393
    %8441 = vmatprep.subr.mxu0 0.0
    %8442 = vmatpush1.msra.mxu0 %v8394
    %8443 = vmatprep.subr.mxu0 0.0
    %8444 = vmatpush1.msra.mxu0 0.0
    %8445 = vmatprep.subr.mxu0 0.0
    %8446 = vmatpush1.msra.mxu0 0.0
    %8447 = vmatprep.subr.mxu0 0.0
    %8448 = vmatpush1.msra.mxu0 0.0
    %8449 = vmatprep.subr.mxu0 0.0
    %8450 = vmatpush1.msra.mxu0 0.0
    %8451 = vmatprep.subr.mxu0 0.0
    %8452 = vmatpush1.msra.mxu0 0.0
    %8453 = vmatprep.subr.mxu0 0.0
    %8454 = vmatpush1.msra.mxu0 0.0
    %8455 = vmatprep.subr.mxu0 0.0
    %8456 = vmatpush1.msra.mxu0 0.0
    %8457 = vmatprep.subr.mxu0 0.0
    %8458 = vmatpush1.msra.mxu0 0.0
    %8459 = vmatprep.subr.mxu0 0.0
    %8460 = vmatpush1.msra.mxu0 0.0
    %8461 = vmatprep.subr.mxu0 0.0
    %8462 = vmatpush1.msra.mxu0 0.0
    %8463 = vmatprep.subr.mxu0 0.0
    %8464 = vmatpush1.msra.mxu0 0.0
    %8465 = vmatprep.subr.mxu0 0.0
    %8466 = vmatpush1.msra.mxu0 0.0
    %8467 = vmatprep.subr.mxu0 0.0
    %8468 = vmatpush1.msra.mxu0 0.0
    %8469 = vmatprep.subr.mxu0 0.0
    %8470 = vmatpush1.msra.mxu0 0.0
    %8471 = vmatprep.subr.mxu0 0.0
    %8472 = vmatpush1.msra.mxu0 0.0
    %8473 = vmatprep.subr.mxu0 0.0
    %8474 = vmatpush1.msra.mxu0 0.0
    %8475 = vmatprep.mubr.f32.mxu0 0.0
    %8476 = vmatmul.mubr.f32.gmra.mrb[0].mxu0 %v8395
    %v8477 = vpop.f32.mrb[0].mxu0
    %v8478 = vadd.f32 0.0, %v8477
    %v8479 = vpop.f32.mrb[0].mxu0
    %8480 = vmatprep.mubr.f32.mxu0 0.0
    %8481 = vmatmul.mubr.f32.gmra.mrb[0].mxu0 %v8396
    %v8482 = vpop.f32.mrb[0].mxu0
    %v8483 = vadd.f32 0.0, %v8482
    %v8484 = vpop.f32.mrb[0].mxu0
    %8485 = vmatprep.mubr.f32.mxu0 0.0
    %8486 = vmatmul.mubr.f32.gmra.mrb[0].mxu0 %v8397
    %v8487 = vpop.f32.mrb[0].mxu0
    %v8488 = vadd.f32 0.0, %v8487
    %v8489 = vpop.f32.mrb[0].mxu0
    %8490 = vmatprep.mubr.f32.mxu0 0.0
    %8491 = vmatmul.mubr.f32.gmra.mrb[0].mxu0 %v8398
    %v8492 = vpop.f32.mrb[0].mxu0
    %v8493 = vadd.f32 0.0, %v8492
    %v8494 = vpop.f32.mrb[0].mxu0
    %8495 = vmatprep.mubr.f32.mxu0 0.0
    %8496 = vmatmul.mubr.f32.gmra.mrb[0].mxu0 %v8399
    %v8497 = vpop.f32.mrb[0].mxu0
    %v8498 = vadd.f32 0.0, %v8497
    %v8499 = vpop.f32.mrb[0].mxu0
    %8500 = vmatprep.mubr.f32.mxu0 0.0
    %8501 = vmatmul.mubr.f32.gmra.mrb[0].mxu0 %v8400
    %v8502 = vpop.f32.mrb[0].mxu0
    %v8503 = vadd.f32 0.0, %v8502
    %v8504 = vpop.f32.mrb[0].mxu0
    %8505 = vmatprep.mubr.f32.mxu0 0.0
    %8506 = vmatmul.mubr.f32.gmra.mrb[0].mxu0 %v8401
    %v8507 = vpop.f32.mrb[0].mxu0
    %v8508 = vadd.f32 0.0, %v8507
    %v8509 = vpop.f32.mrb[0].mxu0
    %8510 = vmatprep.mubr.f32.mxu0 0.0
    %8511 = vmatmul.mubr.f32.gmra.mrb[0].mxu0 %v8402
    %v8512 = vpop.f32.mrb[0].mxu0
    %v8513 = vadd.f32 0.0, %v8512
    %v8514 = vpop.f32.mrb[0].mxu0
    %8515 = vmatprep.mubr.f32.mxu0 0.0
    %8516 = vmatmul.mubr.f32.gmra.mrb[0].mxu0 %v8403
    %v8517 = vpop.f32.mrb[0].mxu0
    %v8518 = vadd.f32 0.0, %v8517
    %v8519 = vpop.f32.mrb[0].mxu0
    %8520 = vmatprep.mubr.f32.mxu0 0.0
    %8521 = vmatmul.mubr.f32.gmra.mrb[0].mxu0 %v8404
    %v8522 = vpop.f32.mrb[0].mxu0
    %v8523 = vadd.f32 0.0, %v8522
    %v8524 = vpop.f32.mrb[0].mxu0
    %8525 = vmatprep.mubr.f32.mxu0 0.0
    %8526 = vmatmul.mubr.f32.gmra.mrb[0].mxu0 %v8405
    %v8527 = vpop.f32.mrb[0].mxu0
    %v8528 = vadd.f32 0.0, %v8527
    %v8529 = vpop.f32.mrb[0].mxu0
    %8530 = vmatprep.mubr.f32.mxu0 0.0
    %8531 = vmatmul.mubr.f32.gmra.mrb[0].mxu0 %v8406
    %v8532 = vpop.f32.mrb[0].mxu0
    %v8533 = vadd.f32 0.0, %v8532
    %v8534 = vpop.f32.mrb[0].mxu0
    %8535 = vmatprep.mubr.f32.mxu0 0.0
    %8536 = vmatmul.mubr.f32.gmra.mrb[0].mxu0 %v8407
    %v8537 = vpop.f32.mrb[0].mxu0
    %v8538 = vadd.f32 0.0, %v8537
    %v8539 = vpop.f32.mrb[0].mxu0
    %8540 = vmatprep.mubr.f32.mxu0 0.0
    %8541 = vmatmul.mubr.f32.gmra.mrb[0].mxu0 %v8408
    %v8542 = vpop.f32.mrb[0].mxu0
    %v8543 = vadd.f32 0.0, %v8542
    %v8544 = vpop.f32.mrb[0].mxu0
    %8545 = vmatprep.mubr.f32.mxu0 0.0
    %8546 = vmatmul.mubr.f32.gmra.mrb[0].mxu0 %v8409
    %v8547 = vpop.f32.mrb[0].mxu0
    %v8548 = vadd.f32 0.0, %v8547
    %v8549 = vpop.f32.mrb[0].mxu0
    %8550 = vmatprep.mubr.f32.mxu0 0.0
    %8551 = vmatmul.mubr.f32.gmra.mrb[0].mxu0 %v8410
    %v8552 = vpop.f32.mrb[0].mxu0
    %v8553 = vadd.f32 0.0, %v8552
    %v8554 = vpop.f32.mrb[0].mxu0
    %8555 = vdwg.mxu0
    %8556 = vmatprep.subr.mxu0 0.0
    %8557 = vmatpush1.msra.mxu0 %v410
    %8558 = vmatprep.subr.mxu0 0.0
    %8559 = vmatpush1.msra.mxu0 %v411
    %8560 = vmatprep.subr.mxu0 0.0
    %8561 = vmatpush1.msra.mxu0 %v412
    %8562 = vmatprep.subr.mxu0 0.0
    %8563 = vmatpush1.msra.mxu0 %v413
    %8564 = vmatprep.subr.mxu0 0.0
    %8565 = vmatpush1.msra.mxu0 %v414
    %8566 = vmatprep.subr.mxu0 0.0
    %8567 = vmatpush1.msra.mxu0 %v415
    %8568 = vmatprep.subr.mxu0 0.0
    %8569 = vmatpush1.msra.mxu0 %v416
    %8570 = vmatprep.subr.mxu0 0.0
    %8571 = vmatpush1.msra.mxu0 %v417
    %8572 = vmatprep.subr.mxu0 0.0
    %8573 = vmatpush1.msra.mxu0 %v418
    %8574 = vmatprep.subr.mxu0 0.0
    %8575 = vmatpush1.msra.mxu0 %v419
    %8576 = vmatprep.subr.mxu0 0.0
    %8577 = vmatpush1.msra.mxu0 %v420
    %8578 = vmatprep.subr.mxu0 0.0
    %8579 = vmatpush1.msra.mxu0 %v421
    %8580 = vmatprep.subr.mxu0 0.0
    %8581 = vmatpush1.msra.mxu0 %v422
    %8582 = vmatprep.subr.mxu0 0.0
    %8583 = vmatpush1.msra.mxu0 %v423
    %8584 = vmatprep.subr.mxu0 0.0
    %8585 = vmatpush1.msra.mxu0 %v424
    %8586 = vmatprep.subr.mxu0 0.0
    %8587 = vmatpush1.msra.mxu0 %v425
    %8588 = vmatprep.subr.mxu0 0.0
    %8589 = vmatpush1.msra.mxu0 0.0
    %8590 = vmatprep.subr.mxu0 0.0
    %8591 = vmatpush1.msra.mxu0 0.0
    %8592 = vmatprep.subr.mxu0 0.0
    %8593 = vmatpush1.msra.mxu0 0.0
    %8594 = vmatprep.subr.mxu0 0.0
    %8595 = vmatpush1.msra.mxu0 0.0
    %8596 = vmatprep.subr.mxu0 0.0
    %8597 = vmatpush1.msra.mxu0 0.0
    %8598 = vmatprep.subr.mxu0 0.0
    %8599 = vmatpush1.msra.mxu0 0.0
    %8600 = vmatprep.subr.mxu0 0.0
    %8601 = vmatpush1.msra.mxu0 0.0
    %8602 = vmatprep.subr.mxu0 0.0
    %8603 = vmatpush1.msra.mxu0 0.0
    %8604 = vmatprep.subr.mxu0 0.0
    %8605 = vmatpush1.msra.mxu0 0.0
    %8606 = vmatprep.subr.mxu0 0.0
    %8607 = vmatpush1.msra.mxu0 0.0
    %8608 = vmatprep.subr.mxu0 0.0
    %8609 = vmatpush1.msra.mxu0 0.0
    %8610 = vmatprep.subr.mxu0 0.0
    %8611 = vmatpush1.msra.mxu0 0.0
    %8612 = vmatprep.subr.mxu0 0.0
    %8613 = vmatpush1.msra.mxu0 0.0
    %8614 = vmatprep.subr.mxu0 0.0
    %8615 = vmatpush1.msra.mxu0 0.0
    %8616 = vmatprep.subr.mxu0 0.0
    %8617 = vmatpush1.msra.mxu0 0.0
    %8618 = vmatprep.subr.mxu0 0.0
    %8619 = vmatpush1.msra.mxu0 0.0
    %8620 = vmatprep.mubr.f32.mxu0 0.0
    %8621 = vmatmul.mubr.f32.gmra.mrb[0].mxu0 %v8478
    %v8622 = vpop.f32.mrb[0].mxu0
    %v8623 = vadd.f32 0.0, %v8622
    %v8624 = vpop.f32.mrb[0].mxu0
    %8625 = vmatprep.mubr.f32.mxu0 0.0
    %8626 = vmatmul.mubr.f32.gmra.mrb[0].mxu0 %v8483
    %v8627 = vpop.f32.mrb[0].mxu0
    %v8628 = vadd.f32 0.0, %v8627
    %v8629 = vpop.f32.mrb[0].mxu0
    %8630 = vmatprep.mubr.f32.mxu0 0.0
    %8631 = vmatmul.mubr.f32.gmra.mrb[0].mxu0 %v8488
    %v8632 = vpop.f32.mrb[0].mxu0
    %v8633 = vadd.f32 0.0, %v8632
    %v8634 = vpop.f32.mrb[0].mxu0
    %8635 = vmatprep.mubr.f32.mxu0 0.0
    %8636 = vmatmul.mubr.f32.gmra.mrb[0].mxu0 %v8493
    %v8637 = vpop.f32.mrb[0].mxu0
    %v8638 = vadd.f32 0.0, %v8637
    %v8639 = vpop.f32.mrb[0].mxu0
    %8640 = vmatprep.mubr.f32.mxu0 0.0
    %8641 = vmatmul.mubr.f32.gmra.mrb[0].mxu0 %v8498
    %v8642 = vpop.f32.mrb[0].mxu0
    %v8643 = vadd.f32 0.0, %v8642
    %v8644 = vpop.f32.mrb[0].mxu0
    %8645 = vmatprep.mubr.f32.mxu0 0.0
    %8646 = vmatmul.mubr.f32.gmra.mrb[0].mxu0 %v8503
    %v8647 = vpop.f32.mrb[0].mxu0
    %v8648 = vadd.f32 0.0, %v8647
    %v8649 = vpop.f32.mrb[0].mxu0
    %8650 = vmatprep.mubr.f32.mxu0 0.0
    %8651 = vmatmul.mubr.f32.gmra.mrb[0].mxu0 %v8508
    %v8652 = vpop.f32.mrb[0].mxu0
    %v8653 = vadd.f32 0.0, %v8652
    %v8654 = vpop.f32.mrb[0].mxu0
    %8655 = vmatprep.mubr.f32.mxu0 0.0
    %8656 = vmatmul.mubr.f32.gmra.mrb[0].mxu0 %v8513
    %v8657 = vpop.f32.mrb[0].mxu0
    %v8658 = vadd.f32 0.0, %v8657
    %v8659 = vpop.f32.mrb[0].mxu0
    %8660 = vmatprep.mubr.f32.mxu0 0.0
    %8661 = vmatmul.mubr.f32.gmra.mrb[0].mxu0 %v8518
    %v8662 = vpop.f32.mrb[0].mxu0
    %v8663 = vadd.f32 0.0, %v8662
    %v8664 = vpop.f32.mrb[0].mxu0
    %8665 = vmatprep.mubr.f32.mxu0 0.0
    %8666 = vmatmul.mubr.f32.gmra.mrb[0].mxu0 %v8523
    %v8667 = vpop.f32.mrb[0].mxu0
    %v8668 = vadd.f32 0.0, %v8667
    %v8669 = vpop.f32.mrb[0].mxu0
    %8670 = vmatprep.mubr.f32.mxu0 0.0
    %8671 = vmatmul.mubr.f32.gmra.mrb[0].mxu0 %v8528
    %v8672 = vpop.f32.mrb[0].mxu0
    %v8673 = vadd.f32 0.0, %v8672
    %v8674 = vpop.f32.mrb[0].mxu0
    %8675 = vmatprep.mubr.f32.mxu0 0.0
    %8676 = vmatmul.mubr.f32.gmra.mrb[0].mxu0 %v8533
    %v8677 = vpop.f32.mrb[0].mxu0
    %v8678 = vadd.f32 0.0, %v8677
    %v8679 = vpop.f32.mrb[0].mxu0
    %8680 = vmatprep.mubr.f32.mxu0 0.0
    %8681 = vmatmul.mubr.f32.gmra.mrb[0].mxu0 %v8538
    %v8682 = vpop.f32.mrb[0].mxu0
    %v8683 = vadd.f32 0.0, %v8682
    %v8684 = vpop.f32.mrb[0].mxu0
    %8685 = vmatprep.mubr.f32.mxu0 0.0
    %8686 = vmatmul.mubr.f32.gmra.mrb[0].mxu0 %v8543
    %v8687 = vpop.f32.mrb[0].mxu0
    %v8688 = vadd.f32 0.0, %v8687
    %v8689 = vpop.f32.mrb[0].mxu0
    %8690 = vmatprep.mubr.f32.mxu0 0.0
    %8691 = vmatmul.mubr.f32.gmra.mrb[0].mxu0 %v8548
    %v8692 = vpop.f32.mrb[0].mxu0
    %v8693 = vadd.f32 0.0, %v8692
    %v8694 = vpop.f32.mrb[0].mxu0
    %8695 = vmatprep.mubr.f32.mxu0 0.0
    %8696 = vmatmul.mubr.f32.gmra.mrb[0].mxu0 %v8553
    %v8697 = vpop.f32.mrb[0].mxu0
    %v8698 = vadd.f32 0.0, %v8697
    %v8699 = vpop.f32.mrb[0].mxu0
    %8700 = vdwg.mxu0
    %v8701 = vadd.f32 %v3839, %v8623
    %v8702 = vadd.f32 %v3844, %v8628
    %v8703 = vadd.f32 %v3849, %v8633
    %v8704 = vadd.f32 %v3854, %v8638
    %v8705 = vadd.f32 %v3859, %v8643
    %v8706 = vadd.f32 %v3864, %v8648
    %v8707 = vadd.f32 %v3869, %v8653
    %v8708 = vadd.f32 %v3874, %v8658
    %v8709 = vadd.f32 %v3879, %v8663
    %v8710 = vadd.f32 %v3884, %v8668
    %v8711 = vadd.f32 %v3889, %v8673
    %v8712 = vadd.f32 %v3894, %v8678
    %v8713 = vadd.f32 %v3899, %v8683
    %v8714 = vadd.f32 %v3904, %v8688
    %v8715 = vadd.f32 %v3909, %v8693
    %v8716 = vadd.f32 %v3914, %v8698
    %v8717 = vld [vmem:[#allocation6 + $0x80] sm:$0xff]
    %v8718 = vld [vmem:[#allocation6 + $0x88] sm:$0xff]
    %v8719 = vld [vmem:[#allocation6 + $0x90] sm:$0xff]
    %v8720 = vld [vmem:[#allocation6 + $0x98] sm:$0xff]
    %v8721 = vld [vmem:[#allocation6 + $0xa0] sm:$0xff]
    %v8722 = vld [vmem:[#allocation6 + $0xa8] sm:$0xff]
    %v8723 = vld [vmem:[#allocation6 + $0xb0] sm:$0xff]
    %v8724 = vld [vmem:[#allocation6 + $0xb8] sm:$0xff]
    %v8725 = vld [vmem:[#allocation6 + $0xc0] sm:$0xff]
    %v8726 = vld [vmem:[#allocation6 + $0xc8] sm:$0xff]
    %v8727 = vld [vmem:[#allocation6 + $0xd0] sm:$0xff]
    %v8728 = vld [vmem:[#allocation6 + $0xd8] sm:$0xff]
    %v8729 = vld [vmem:[#allocation6 + $0xe0] sm:$0xff]
    %v8730 = vld [vmem:[#allocation6 + $0xe8] sm:$0xff]
    %v8731 = vld [vmem:[#allocation6 + $0xf0] sm:$0xff]
    %v8732 = vld [vmem:[#allocation6 + $0xf8] sm:$0xff]
    %8733 = vmatprep.subr.mxu0 0.0
    %8734 = vmatpush1.msra.mxu0 %v8379
    %8735 = vmatprep.subr.mxu0 0.0
    %8736 = vmatpush1.msra.mxu0 %v8380
    %8737 = vmatprep.subr.mxu0 0.0
    %8738 = vmatpush1.msra.mxu0 %v8381
    %8739 = vmatprep.subr.mxu0 0.0
    %8740 = vmatpush1.msra.mxu0 %v8382
    %8741 = vmatprep.subr.mxu0 0.0
    %8742 = vmatpush1.msra.mxu0 %v8383
    %8743 = vmatprep.subr.mxu0 0.0
    %8744 = vmatpush1.msra.mxu0 %v8384
    %8745 = vmatprep.subr.mxu0 0.0
    %8746 = vmatpush1.msra.mxu0 %v8385
    %8747 = vmatprep.subr.mxu0 0.0
    %8748 = vmatpush1.msra.mxu0 %v8386
    %8749 = vmatprep.subr.mxu0 0.0
    %8750 = vmatpush1.msra.mxu0 %v8387
    %8751 = vmatprep.subr.mxu0 0.0
    %8752 = vmatpush1.msra.mxu0 %v8388
    %8753 = vmatprep.subr.mxu0 0.0
    %8754 = vmatpush1.msra.mxu0 %v8389
    %8755 = vmatprep.subr.mxu0 0.0
    %8756 = vmatpush1.msra.mxu0 %v8390
    %8757 = vmatprep.subr.mxu0 0.0
    %8758 = vmatpush1.msra.mxu0 %v8391
    %8759 = vmatprep.subr.mxu0 0.0
    %8760 = vmatpush1.msra.mxu0 %v8392
    %8761 = vmatprep.subr.mxu0 0.0
    %8762 = vmatpush1.msra.mxu0 %v8393
    %8763 = vmatprep.subr.mxu0 0.0
    %8764 = vmatpush1.msra.mxu0 %v8394
    %8765 = vmatprep.subr.mxu0 0.0
    %8766 = vmatpush1.msra.mxu0 0.0
    %8767 = vmatprep.subr.mxu0 0.0
    %8768 = vmatpush1.msra.mxu0 0.0
    %8769 = vmatprep.subr.mxu0 0.0
    %8770 = vmatpush1.msra.mxu0 0.0
    %8771 = vmatprep.subr.mxu0 0.0
    %8772 = vmatpush1.msra.mxu0 0.0
    %8773 = vmatprep.subr.mxu0 0.0
    %8774 = vmatpush1.msra.mxu0 0.0
    %8775 = vmatprep.subr.mxu0 0.0
    %8776 = vmatpush1.msra.mxu0 0.0
    %8777 = vmatprep.subr.mxu0 0.0
    %8778 = vmatpush1.msra.mxu0 0.0
    %8779 = vmatprep.subr.mxu0 0.0
    %8780 = vmatpush1.msra.mxu0 0.0
    %8781 = vmatprep.subr.mxu0 0.0
    %8782 = vmatpush1.msra.mxu0 0.0
    %8783 = vmatprep.subr.mxu0 0.0
    %8784 = vmatpush1.msra.mxu0 0.0
    %8785 = vmatprep.subr.mxu0 0.0
    %8786 = vmatpush1.msra.mxu0 0.0
    %8787 = vmatprep.subr.mxu0 0.0
    %8788 = vmatpush1.msra.mxu0 0.0
    %8789 = vmatprep.subr.mxu0 0.0
    %8790 = vmatpush1.msra.mxu0 0.0
    %8791 = vmatprep.subr.mxu0 0.0
    %8792 = vmatpush1.msra.mxu0 0.0
    %8793 = vmatprep.subr.mxu0 0.0
    %8794 = vmatpush1.msra.mxu0 0.0
    %8795 = vmatprep.subr.mxu0 0.0
    %8796 = vmatpush1.msra.mxu0 0.0
    %8797 = vmatprep.mubr.f32.mxu0 0.0
    %8798 = vmatmul.mubr.f32.gmra.mrb[0].mxu0 %v8717
    %v8799 = vpop.f32.mrb[0].mxu0
    %v8800 = vadd.f32 0.0, %v8799
    %v8801 = vpop.f32.mrb[0].mxu0
    %8802 = vmatprep.mubr.f32.mxu0 0.0
    %8803 = vmatmul.mubr.f32.gmra.mrb[0].mxu0 %v8718
    %v8804 = vpop.f32.mrb[0].mxu0
    %v8805 = vadd.f32 0.0, %v8804
    %v8806 = vpop.f32.mrb[0].mxu0
    %8807 = vmatprep.mubr.f32.mxu0 0.0
    %8808 = vmatmul.mubr.f32.gmra.mrb[0].mxu0 %v8719
    %v8809 = vpop.f32.mrb[0].mxu0
    %v8810 = vadd.f32 0.0, %v8809
    %v8811 = vpop.f32.mrb[0].mxu0
    %8812 = vmatprep.mubr.f32.mxu0 0.0
    %8813 = vmatmul.mubr.f32.gmra.mrb[0].mxu0 %v8720
    %v8814 = vpop.f32.mrb[0].mxu0
    %v8815 = vadd.f32 0.0, %v8814
    %v8816 = vpop.f32.mrb[0].mxu0
    %8817 = vmatprep.mubr.f32.mxu0 0.0
    %8818 = vmatmul.mubr.f32.gmra.mrb[0].mxu0 %v8721
    %v8819 = vpop.f32.mrb[0].mxu0
    %v8820 = vadd.f32 0.0, %v8819
    %v8821 = vpop.f32.mrb[0].mxu0
    %8822 = vmatprep.mubr.f32.mxu0 0.0
    %8823 = vmatmul.mubr.f32.gmra.mrb[0].mxu0 %v8722
    %v8824 = vpop.f32.mrb[0].mxu0
    %v8825 = vadd.f32 0.0, %v8824
    %v8826 = vpop.f32.mrb[0].mxu0
    %8827 = vmatprep.mubr.f32.mxu0 0.0
    %8828 = vmatmul.mubr.f32.gmra.mrb[0].mxu0 %v8723
    %v8829 = vpop.f32.mrb[0].mxu0
    %v8830 = vadd.f32 0.0, %v8829
    %v8831 = vpop.f32.mrb[0].mxu0
    %8832 = vmatprep.mubr.f32.mxu0 0.0
    %8833 = vmatmul.mubr.f32.gmra.mrb[0].mxu0 %v8724
    %v8834 = vpop.f32.mrb[0].mxu0
    %v8835 = vadd.f32 0.0, %v8834
    %v8836 = vpop.f32.mrb[0].mxu0
    %8837 = vmatprep.mubr.f32.mxu0 0.0
    %8838 = vmatmul.mubr.f32.gmra.mrb[0].mxu0 %v8725
    %v8839 = vpop.f32.mrb[0].mxu0
    %v8840 = vadd.f32 0.0, %v8839
    %v8841 = vpop.f32.mrb[0].mxu0
    %8842 = vmatprep.mubr.f32.mxu0 0.0
    %8843 = vmatmul.mubr.f32.gmra.mrb[0].mxu0 %v8726
    %v8844 = vpop.f32.mrb[0].mxu0
    %v8845 = vadd.f32 0.0, %v8844
    %v8846 = vpop.f32.mrb[0].mxu0
    %8847 = vmatprep.mubr.f32.mxu0 0.0
    %8848 = vmatmul.mubr.f32.gmra.mrb[0].mxu0 %v8727
    %v8849 = vpop.f32.mrb[0].mxu0
    %v8850 = vadd.f32 0.0, %v8849
    %v8851 = vpop.f32.mrb[0].mxu0
    %8852 = vmatprep.mubr.f32.mxu0 0.0
    %8853 = vmatmul.mubr.f32.gmra.mrb[0].mxu0 %v8728
    %v8854 = vpop.f32.mrb[0].mxu0
    %v8855 = vadd.f32 0.0, %v8854
    %v8856 = vpop.f32.mrb[0].mxu0
    %8857 = vmatprep.mubr.f32.mxu0 0.0
    %8858 = vmatmul.mubr.f32.gmra.mrb[0].mxu0 %v8729
    %v8859 = vpop.f32.mrb[0].mxu0
    %v8860 = vadd.f32 0.0, %v8859
    %v8861 = vpop.f32.mrb[0].mxu0
    %8862 = vmatprep.mubr.f32.mxu0 0.0
    %8863 = vmatmul.mubr.f32.gmra.mrb[0].mxu0 %v8730
    %v8864 = vpop.f32.mrb[0].mxu0
    %v8865 = vadd.f32 0.0, %v8864
    %v8866 = vpop.f32.mrb[0].mxu0
    %8867 = vmatprep.mubr.f32.mxu0 0.0
    %8868 = vmatmul.mubr.f32.gmra.mrb[0].mxu0 %v8731
    %v8869 = vpop.f32.mrb[0].mxu0
    %v8870 = vadd.f32 0.0, %v8869
    %v8871 = vpop.f32.mrb[0].mxu0
    %8872 = vmatprep.mubr.f32.mxu0 0.0
    %8873 = vmatmul.mubr.f32.gmra.mrb[0].mxu0 %v8732
    %v8874 = vpop.f32.mrb[0].mxu0
    %v8875 = vadd.f32 0.0, %v8874
    %v8876 = vpop.f32.mrb[0].mxu0
    %8877 = vdwg.mxu0
    %8878 = vmatprep.subr.mxu0 0.0
    %8879 = vmatpush1.msra.mxu0 %v458
    %8880 = vmatprep.subr.mxu0 0.0
    %8881 = vmatpush1.msra.mxu0 %v459
    %8882 = vmatprep.subr.mxu0 0.0
    %8883 = vmatpush1.msra.mxu0 %v460
    %8884 = vmatprep.subr.mxu0 0.0
    %8885 = vmatpush1.msra.mxu0 %v461
    %8886 = vmatprep.subr.mxu0 0.0
    %8887 = vmatpush1.msra.mxu0 %v462
    %8888 = vmatprep.subr.mxu0 0.0
    %8889 = vmatpush1.msra.mxu0 %v463
    %8890 = vmatprep.subr.mxu0 0.0
    %8891 = vmatpush1.msra.mxu0 %v464
    %8892 = vmatprep.subr.mxu0 0.0
    %8893 = vmatpush1.msra.mxu0 %v465
    %8894 = vmatprep.subr.mxu0 0.0
    %8895 = vmatpush1.msra.mxu0 %v466
    %8896 = vmatprep.subr.mxu0 0.0
    %8897 = vmatpush1.msra.mxu0 %v467
    %8898 = vmatprep.subr.mxu0 0.0
    %8899 = vmatpush1.msra.mxu0 %v468
    %8900 = vmatprep.subr.mxu0 0.0
    %8901 = vmatpush1.msra.mxu0 %v469
    %8902 = vmatprep.subr.mxu0 0.0
    %8903 = vmatpush1.msra.mxu0 %v470
    %8904 = vmatprep.subr.mxu0 0.0
    %8905 = vmatpush1.msra.mxu0 %v471
    %8906 = vmatprep.subr.mxu0 0.0
    %8907 = vmatpush1.msra.mxu0 %v472
    %8908 = vmatprep.subr.mxu0 0.0
    %8909 = vmatpush1.msra.mxu0 %v473
    %8910 = vmatprep.subr.mxu0 0.0
    %8911 = vmatpush1.msra.mxu0 0.0
    %8912 = vmatprep.subr.mxu0 0.0
    %8913 = vmatpush1.msra.mxu0 0.0
    %8914 = vmatprep.subr.mxu0 0.0
    %8915 = vmatpush1.msra.mxu0 0.0
    %8916 = vmatprep.subr.mxu0 0.0
    %8917 = vmatpush1.msra.mxu0 0.0
    %8918 = vmatprep.subr.mxu0 0.0
    %8919 = vmatpush1.msra.mxu0 0.0
    %8920 = vmatprep.subr.mxu0 0.0
    %8921 = vmatpush1.msra.mxu0 0.0
    %8922 = vmatprep.subr.mxu0 0.0
    %8923 = vmatpush1.msra.mxu0 0.0
    %8924 = vmatprep.subr.mxu0 0.0
    %8925 = vmatpush1.msra.mxu0 0.0
    %8926 = vmatprep.subr.mxu0 0.0
    %8927 = vmatpush1.msra.mxu0 0.0
    %8928 = vmatprep.subr.mxu0 0.0
    %8929 = vmatpush1.msra.mxu0 0.0
    %8930 = vmatprep.subr.mxu0 0.0
    %8931 = vmatpush1.msra.mxu0 0.0
    %8932 = vmatprep.subr.mxu0 0.0
    %8933 = vmatpush1.msra.mxu0 0.0
    %8934 = vmatprep.subr.mxu0 0.0
    %8935 = vmatpush1.msra.mxu0 0.0
    %8936 = vmatprep.subr.mxu0 0.0
    %8937 = vmatpush1.msra.mxu0 0.0
    %8938 = vmatprep.subr.mxu0 0.0
    %8939 = vmatpush1.msra.mxu0 0.0
    %8940 = vmatprep.subr.mxu0 0.0
    %8941 = vmatpush1.msra.mxu0 0.0
    %8942 = vmatprep.mubr.f32.mxu0 0.0
    %8943 = vmatmul.mubr.f32.gmra.mrb[0].mxu0 %v8800
    %v8944 = vpop.f32.mrb[0].mxu0
    %v8945 = vadd.f32 0.0, %v8944
    %v8946 = vpop.f32.mrb[0].mxu0
    %8947 = vmatprep.mubr.f32.mxu0 0.0
    %8948 = vmatmul.mubr.f32.gmra.mrb[0].mxu0 %v8805
    %v8949 = vpop.f32.mrb[0].mxu0
    %v8950 = vadd.f32 0.0, %v8949
    %v8951 = vpop.f32.mrb[0].mxu0
    %8952 = vmatprep.mubr.f32.mxu0 0.0
    %8953 = vmatmul.mubr.f32.gmra.mrb[0].mxu0 %v8810
    %v8954 = vpop.f32.mrb[0].mxu0
    %v8955 = vadd.f32 0.0, %v8954
    %v8956 = vpop.f32.mrb[0].mxu0
    %8957 = vmatprep.mubr.f32.mxu0 0.0
    %8958 = vmatmul.mubr.f32.gmra.mrb[0].mxu0 %v8815
    %v8959 = vpop.f32.mrb[0].mxu0
    %v8960 = vadd.f32 0.0, %v8959
    %v8961 = vpop.f32.mrb[0].mxu0
    %8962 = vmatprep.mubr.f32.mxu0 0.0
    %8963 = vmatmul.mubr.f32.gmra.mrb[0].mxu0 %v8820
    %v8964 = vpop.f32.mrb[0].mxu0
    %v8965 = vadd.f32 0.0, %v8964
    %v8966 = vpop.f32.mrb[0].mxu0
    %8967 = vmatprep.mubr.f32.mxu0 0.0
    %8968 = vmatmul.mubr.f32.gmra.mrb[0].mxu0 %v8825
    %v8969 = vpop.f32.mrb[0].mxu0
    %v8970 = vadd.f32 0.0, %v8969
    %v8971 = vpop.f32.mrb[0].mxu0
    %8972 = vmatprep.mubr.f32.mxu0 0.0
    %8973 = vmatmul.mubr.f32.gmra.mrb[0].mxu0 %v8830
    %v8974 = vpop.f32.mrb[0].mxu0
    %v8975 = vadd.f32 0.0, %v8974
    %v8976 = vpop.f32.mrb[0].mxu0
    %8977 = vmatprep.mubr.f32.mxu0 0.0
    %8978 = vmatmul.mubr.f32.gmra.mrb[0].mxu0 %v8835
    %v8979 = vpop.f32.mrb[0].mxu0
    %v8980 = vadd.f32 0.0, %v8979
    %v8981 = vpop.f32.mrb[0].mxu0
    %8982 = vmatprep.mubr.f32.mxu0 0.0
    %8983 = vmatmul.mubr.f32.gmra.mrb[0].mxu0 %v8840
    %v8984 = vpop.f32.mrb[0].mxu0
    %v8985 = vadd.f32 0.0, %v8984
    %v8986 = vpop.f32.mrb[0].mxu0
    %8987 = vmatprep.mubr.f32.mxu0 0.0
    %8988 = vmatmul.mubr.f32.gmra.mrb[0].mxu0 %v8845
    %v8989 = vpop.f32.mrb[0].mxu0
    %v8990 = vadd.f32 0.0, %v8989
    %v8991 = vpop.f32.mrb[0].mxu0
    %8992 = vmatprep.mubr.f32.mxu0 0.0
    %8993 = vmatmul.mubr.f32.gmra.mrb[0].mxu0 %v8850
    %v8994 = vpop.f32.mrb[0].mxu0
    %v8995 = vadd.f32 0.0, %v8994
    %v8996 = vpop.f32.mrb[0].mxu0
    %8997 = vmatprep.mubr.f32.mxu0 0.0
    %8998 = vmatmul.mubr.f32.gmra.mrb[0].mxu0 %v8855
    %v8999 = vpop.f32.mrb[0].mxu0
    %v9000 = vadd.f32 0.0, %v8999
    %v9001 = vpop.f32.mrb[0].mxu0
    %9002 = vmatprep.mubr.f32.mxu0 0.0
    %9003 = vmatmul.mubr.f32.gmra.mrb[0].mxu0 %v8860
    %v9004 = vpop.f32.mrb[0].mxu0
    %v9005 = vadd.f32 0.0, %v9004
    %v9006 = vpop.f32.mrb[0].mxu0
    %9007 = vmatprep.mubr.f32.mxu0 0.0
    %9008 = vmatmul.mubr.f32.gmra.mrb[0].mxu0 %v8865
    %v9009 = vpop.f32.mrb[0].mxu0
    %v9010 = vadd.f32 0.0, %v9009
    %v9011 = vpop.f32.mrb[0].mxu0
    %9012 = vmatprep.mubr.f32.mxu0 0.0
    %9013 = vmatmul.mubr.f32.gmra.mrb[0].mxu0 %v8870
    %v9014 = vpop.f32.mrb[0].mxu0
    %v9015 = vadd.f32 0.0, %v9014
    %v9016 = vpop.f32.mrb[0].mxu0
    %9017 = vmatprep.mubr.f32.mxu0 0.0
    %9018 = vmatmul.mubr.f32.gmra.mrb[0].mxu0 %v8875
    %v9019 = vpop.f32.mrb[0].mxu0
    %v9020 = vadd.f32 0.0, %v9019
    %v9021 = vpop.f32.mrb[0].mxu0
    %9022 = vdwg.mxu0
    %v9023 = vadd.f32 %v8701, %v8945
    %v9024 = vadd.f32 %v8702, %v8950
    %v9025 = vadd.f32 %v8703, %v8955
    %v9026 = vadd.f32 %v8704, %v8960
    %v9027 = vadd.f32 %v8705, %v8965
    %v9028 = vadd.f32 %v8706, %v8970
    %v9029 = vadd.f32 %v8707, %v8975
    %v9030 = vadd.f32 %v8708, %v8980
    %v9031 = vadd.f32 %v8709, %v8985
    %v9032 = vadd.f32 %v8710, %v8990
    %v9033 = vadd.f32 %v8711, %v8995
    %v9034 = vadd.f32 %v8712, %v9000
    %v9035 = vadd.f32 %v8713, %v9005
    %v9036 = vadd.f32 %v8714, %v9010
    %v9037 = vadd.f32 %v8715, %v9015
    %v9038 = vadd.f32 %v8716, %v9020
    %v9039 = vld [vmem:[#allocation6 + $0x100] sm:$0xff]
    %v9040 = vld [vmem:[#allocation6 + $0x108] sm:$0xff]
    %v9041 = vld [vmem:[#allocation6 + $0x110] sm:$0xff]
    %v9042 = vld [vmem:[#allocation6 + $0x118] sm:$0xff]
    %v9043 = vld [vmem:[#allocation6 + $0x120] sm:$0xff]
    %v9044 = vld [vmem:[#allocation6 + $0x128] sm:$0xff]
    %v9045 = vld [vmem:[#allocation6 + $0x130] sm:$0xff]
    %v9046 = vld [vmem:[#allocation6 + $0x138] sm:$0xff]
    %v9047 = vld [vmem:[#allocation6 + $0x140] sm:$0xff]
    %v9048 = vld [vmem:[#allocation6 + $0x148] sm:$0xff]
    %v9049 = vld [vmem:[#allocation6 + $0x150] sm:$0xff]
    %v9050 = vld [vmem:[#allocation6 + $0x158] sm:$0xff]
    %v9051 = vld [vmem:[#allocation6 + $0x160] sm:$0xff]
    %v9052 = vld [vmem:[#allocation6 + $0x168] sm:$0xff]
    %v9053 = vld [vmem:[#allocation6 + $0x170] sm:$0xff]
    %v9054 = vld [vmem:[#allocation6 + $0x178] sm:$0xff]
    %9055 = vmatprep.subr.mxu0 0.0
    %9056 = vmatpush1.msra.mxu0 %v8379
    %9057 = vmatprep.subr.mxu0 0.0
    %9058 = vmatpush1.msra.mxu0 %v8380
    %9059 = vmatprep.subr.mxu0 0.0
    %9060 = vmatpush1.msra.mxu0 %v8381
    %9061 = vmatprep.subr.mxu0 0.0
    %9062 = vmatpush1.msra.mxu0 %v8382
    %9063 = vmatprep.subr.mxu0 0.0
    %9064 = vmatpush1.msra.mxu0 %v8383
    %9065 = vmatprep.subr.mxu0 0.0
    %9066 = vmatpush1.msra.mxu0 %v8384
    %9067 = vmatprep.subr.mxu0 0.0
    %9068 = vmatpush1.msra.mxu0 %v8385
    %9069 = vmatprep.subr.mxu0 0.0
    %9070 = vmatpush1.msra.mxu0 %v8386
    %9071 = vmatprep.subr.mxu0 0.0
    %9072 = vmatpush1.msra.mxu0 %v8387
    %9073 = vmatprep.subr.mxu0 0.0
    %9074 = vmatpush1.msra.mxu0 %v8388
    %9075 = vmatprep.subr.mxu0 0.0
    %9076 = vmatpush1.msra.mxu0 %v8389
    %9077 = vmatprep.subr.mxu0 0.0
    %9078 = vmatpush1.msra.mxu0 %v8390
    %9079 = vmatprep.subr.mxu0 0.0
    %9080 = vmatpush1.msra.mxu0 %v8391
    %9081 = vmatprep.subr.mxu0 0.0
    %9082 = vmatpush1.msra.mxu0 %v8392
    %9083 = vmatprep.subr.mxu0 0.0
    %9084 = vmatpush1.msra.mxu0 %v8393
    %9085 = vmatprep.subr.mxu0 0.0
    %9086 = vmatpush1.msra.mxu0 %v8394
    %9087 = vmatprep.subr.mxu0 0.0
    %9088 = vmatpush1.msra.mxu0 0.0
    %9089 = vmatprep.subr.mxu0 0.0
    %9090 = vmatpush1.msra.mxu0 0.0
    %9091 = vmatprep.subr.mxu0 0.0
    %9092 = vmatpush1.msra.mxu0 0.0
    %9093 = vmatprep.subr.mxu0 0.0
    %9094 = vmatpush1.msra.mxu0 0.0
    %9095 = vmatprep.subr.mxu0 0.0
    %9096 = vmatpush1.msra.mxu0 0.0
    %9097 = vmatprep.subr.mxu0 0.0
    %9098 = vmatpush1.msra.mxu0 0.0
    %9099 = vmatprep.subr.mxu0 0.0
    %9100 = vmatpush1.msra.mxu0 0.0
    %9101 = vmatprep.subr.mxu0 0.0
    %9102 = vmatpush1.msra.mxu0 0.0
    %9103 = vmatprep.subr.mxu0 0.0
    %9104 = vmatpush1.msra.mxu0 0.0
    %9105 = vmatprep.subr.mxu0 0.0
    %9106 = vmatpush1.msra.mxu0 0.0
    %9107 = vmatprep.subr.mxu0 0.0
    %9108 = vmatpush1.msra.mxu0 0.0
    %9109 = vmatprep.subr.mxu0 0.0
    %9110 = vmatpush1.msra.mxu0 0.0
    %9111 = vmatprep.subr.mxu0 0.0
    %9112 = vmatpush1.msra.mxu0 0.0
    %9113 = vmatprep.subr.mxu0 0.0
    %9114 = vmatpush1.msra.mxu0 0.0
    %9115 = vmatprep.subr.mxu0 0.0
    %9116 = vmatpush1.msra.mxu0 0.0
    %9117 = vmatprep.subr.mxu0 0.0
    %9118 = vmatpush1.msra.mxu0 0.0
    %9119 = vmatprep.mubr.f32.mxu0 0.0
    %9120 = vmatmul.mubr.f32.gmra.mrb[0].mxu0 %v9039
    %v9121 = vpop.f32.mrb[0].mxu0
    %v9122 = vadd.f32 0.0, %v9121
    %v9123 = vpop.f32.mrb[0].mxu0
    %9124 = vmatprep.mubr.f32.mxu0 0.0
    %9125 = vmatmul.mubr.f32.gmra.mrb[0].mxu0 %v9040
    %v9126 = vpop.f32.mrb[0].mxu0
    %v9127 = vadd.f32 0.0, %v9126
    %v9128 = vpop.f32.mrb[0].mxu0
    %9129 = vmatprep.mubr.f32.mxu0 0.0
    %9130 = vmatmul.mubr.f32.gmra.mrb[0].mxu0 %v9041
    %v9131 = vpop.f32.mrb[0].mxu0
    %v9132 = vadd.f32 0.0, %v9131
    %v9133 = vpop.f32.mrb[0].mxu0
    %9134 = vmatprep.mubr.f32.mxu0 0.0
    %9135 = vmatmul.mubr.f32.gmra.mrb[0].mxu0 %v9042
    %v9136 = vpop.f32.mrb[0].mxu0
    %v9137 = vadd.f32 0.0, %v9136
    %v9138 = vpop.f32.mrb[0].mxu0
    %9139 = vmatprep.mubr.f32.mxu0 0.0
    %9140 = vmatmul.mubr.f32.gmra.mrb[0].mxu0 %v9043
    %v9141 = vpop.f32.mrb[0].mxu0
    %v9142 = vadd.f32 0.0, %v9141
    %v9143 = vpop.f32.mrb[0].mxu0
    %9144 = vmatprep.mubr.f32.mxu0 0.0
    %9145 = vmatmul.mubr.f32.gmra.mrb[0].mxu0 %v9044
    %v9146 = vpop.f32.mrb[0].mxu0
    %v9147 = vadd.f32 0.0, %v9146
    %v9148 = vpop.f32.mrb[0].mxu0
    %9149 = vmatprep.mubr.f32.mxu0 0.0
    %9150 = vmatmul.mubr.f32.gmra.mrb[0].mxu0 %v9045
    %v9151 = vpop.f32.mrb[0].mxu0
    %v9152 = vadd.f32 0.0, %v9151
    %v9153 = vpop.f32.mrb[0].mxu0
    %9154 = vmatprep.mubr.f32.mxu0 0.0
    %9155 = vmatmul.mubr.f32.gmra.mrb[0].mxu0 %v9046
    %v9156 = vpop.f32.mrb[0].mxu0
    %v9157 = vadd.f32 0.0, %v9156
    %v9158 = vpop.f32.mrb[0].mxu0
    %9159 = vmatprep.mubr.f32.mxu0 0.0
    %9160 = vmatmul.mubr.f32.gmra.mrb[0].mxu0 %v9047
    %v9161 = vpop.f32.mrb[0].mxu0
    %v9162 = vadd.f32 0.0, %v9161
    %v9163 = vpop.f32.mrb[0].mxu0
    %9164 = vmatprep.mubr.f32.mxu0 0.0
    %9165 = vmatmul.mubr.f32.gmra.mrb[0].mxu0 %v9048
    %v9166 = vpop.f32.mrb[0].mxu0
    %v9167 = vadd.f32 0.0, %v9166
    %v9168 = vpop.f32.mrb[0].mxu0
    %9169 = vmatprep.mubr.f32.mxu0 0.0
    %9170 = vmatmul.mubr.f32.gmra.mrb[0].mxu0 %v9049
    %v9171 = vpop.f32.mrb[0].mxu0
    %v9172 = vadd.f32 0.0, %v9171
    %v9173 = vpop.f32.mrb[0].mxu0
    %9174 = vmatprep.mubr.f32.mxu0 0.0
    %9175 = vmatmul.mubr.f32.gmra.mrb[0].mxu0 %v9050
    %v9176 = vpop.f32.mrb[0].mxu0
    %v9177 = vadd.f32 0.0, %v9176
    %v9178 = vpop.f32.mrb[0].mxu0
    %9179 = vmatprep.mubr.f32.mxu0 0.0
    %9180 = vmatmul.mubr.f32.gmra.mrb[0].mxu0 %v9051
    %v9181 = vpop.f32.mrb[0].mxu0
    %v9182 = vadd.f32 0.0, %v9181
    %v9183 = vpop.f32.mrb[0].mxu0
    %9184 = vmatprep.mubr.f32.mxu0 0.0
    %9185 = vmatmul.mubr.f32.gmra.mrb[0].mxu0 %v9052
    %v9186 = vpop.f32.mrb[0].mxu0
    %v9187 = vadd.f32 0.0, %v9186
    %v9188 = vpop.f32.mrb[0].mxu0
    %9189 = vmatprep.mubr.f32.mxu0 0.0
    %9190 = vmatmul.mubr.f32.gmra.mrb[0].mxu0 %v9053
    %v9191 = vpop.f32.mrb[0].mxu0
    %v9192 = vadd.f32 0.0, %v9191
    %v9193 = vpop.f32.mrb[0].mxu0
    %9194 = vmatprep.mubr.f32.mxu0 0.0
    %9195 = vmatmul.mubr.f32.gmra.mrb[0].mxu0 %v9054
    %v9196 = vpop.f32.mrb[0].mxu0
    %v9197 = vadd.f32 0.0, %v9196
    %v9198 = vpop.f32.mrb[0].mxu0
    %9199 = vdwg.mxu0
    %9200 = vmatprep.subr.mxu0 0.0
    %9201 = vmatpush1.msra.mxu0 %v506
    %9202 = vmatprep.subr.mxu0 0.0
    %9203 = vmatpush1.msra.mxu0 %v507
    %9204 = vmatprep.subr.mxu0 0.0
    %9205 = vmatpush1.msra.mxu0 %v508
    %9206 = vmatprep.subr.mxu0 0.0
    %9207 = vmatpush1.msra.mxu0 %v509
    %9208 = vmatprep.subr.mxu0 0.0
    %9209 = vmatpush1.msra.mxu0 %v510
    %9210 = vmatprep.subr.mxu0 0.0
    %9211 = vmatpush1.msra.mxu0 %v511
    %9212 = vmatprep.subr.mxu0 0.0
    %9213 = vmatpush1.msra.mxu0 %v512
    %9214 = vmatprep.subr.mxu0 0.0
    %9215 = vmatpush1.msra.mxu0 %v513
    %9216 = vmatprep.subr.mxu0 0.0
    %9217 = vmatpush1.msra.mxu0 %v514
    %9218 = vmatprep.subr.mxu0 0.0
    %9219 = vmatpush1.msra.mxu0 %v515
    %9220 = vmatprep.subr.mxu0 0.0
    %9221 = vmatpush1.msra.mxu0 %v516
    %9222 = vmatprep.subr.mxu0 0.0
    %9223 = vmatpush1.msra.mxu0 %v517
    %9224 = vmatprep.subr.mxu0 0.0
    %9225 = vmatpush1.msra.mxu0 %v518
    %9226 = vmatprep.subr.mxu0 0.0
    %9227 = vmatpush1.msra.mxu0 %v519
    %9228 = vmatprep.subr.mxu0 0.0
    %9229 = vmatpush1.msra.mxu0 %v520
    %9230 = vmatprep.subr.mxu0 0.0
    %9231 = vmatpush1.msra.mxu0 %v521
    %9232 = vmatprep.subr.mxu0 0.0
    %9233 = vmatpush1.msra.mxu0 0.0
    %9234 = vmatprep.subr.mxu0 0.0
    %9235 = vmatpush1.msra.mxu0 0.0
    %9236 = vmatprep.subr.mxu0 0.0
    %9237 = vmatpush1.msra.mxu0 0.0
    %9238 = vmatprep.subr.mxu0 0.0
    %9239 = vmatpush1.msra.mxu0 0.0
    %9240 = vmatprep.subr.mxu0 0.0
    %9241 = vmatpush1.msra.mxu0 0.0
    %9242 = vmatprep.subr.mxu0 0.0
    %9243 = vmatpush1.msra.mxu0 0.0
    %9244 = vmatprep.subr.mxu0 0.0
    %9245 = vmatpush1.msra.mxu0 0.0
    %9246 = vmatprep.subr.mxu0 0.0
    %9247 = vmatpush1.msra.mxu0 0.0
    %9248 = vmatprep.subr.mxu0 0.0
    %9249 = vmatpush1.msra.mxu0 0.0
    %9250 = vmatprep.subr.mxu0 0.0
    %9251 = vmatpush1.msra.mxu0 0.0
    %9252 = vmatprep.subr.mxu0 0.0
    %9253 = vmatpush1.msra.mxu0 0.0
    %9254 = vmatprep.subr.mxu0 0.0
    %9255 = vmatpush1.msra.mxu0 0.0
    %9256 = vmatprep.subr.mxu0 0.0
    %9257 = vmatpush1.msra.mxu0 0.0
    %9258 = vmatprep.subr.mxu0 0.0
    %9259 = vmatpush1.msra.mxu0 0.0
    %9260 = vmatprep.subr.mxu0 0.0
    %9261 = vmatpush1.msra.mxu0 0.0
    %9262 = vmatprep.subr.mxu0 0.0
    %9263 = vmatpush1.msra.mxu0 0.0
    %9264 = vmatprep.mubr.f32.mxu0 0.0
    %9265 = vmatmul.mubr.f32.gmra.mrb[0].mxu0 %v9122
    %v9266 = vpop.f32.mrb[0].mxu0
    %v9267 = vadd.f32 0.0, %v9266
    %v9268 = vpop.f32.mrb[0].mxu0
    %9269 = vmatprep.mubr.f32.mxu0 0.0
    %9270 = vmatmul.mubr.f32.gmra.mrb[0].mxu0 %v9127
    %v9271 = vpop.f32.mrb[0].mxu0
    %v9272 = vadd.f32 0.0, %v9271
    %v9273 = vpop.f32.mrb[0].mxu0
    %9274 = vmatprep.mubr.f32.mxu0 0.0
    %9275 = vmatmul.mubr.f32.gmra.mrb[0].mxu0 %v9132
    %v9276 = vpop.f32.mrb[0].mxu0
    %v9277 = vadd.f32 0.0, %v9276
    %v9278 = vpop.f32.mrb[0].mxu0
    %9279 = vmatprep.mubr.f32.mxu0 0.0
    %9280 = vmatmul.mubr.f32.gmra.mrb[0].mxu0 %v9137
    %v9281 = vpop.f32.mrb[0].mxu0
    %v9282 = vadd.f32 0.0, %v9281
    %v9283 = vpop.f32.mrb[0].mxu0
    %9284 = vmatprep.mubr.f32.mxu0 0.0
    %9285 = vmatmul.mubr.f32.gmra.mrb[0].mxu0 %v9142
    %v9286 = vpop.f32.mrb[0].mxu0
    %v9287 = vadd.f32 0.0, %v9286
    %v9288 = vpop.f32.mrb[0].mxu0
    %9289 = vmatprep.mubr.f32.mxu0 0.0
    %9290 = vmatmul.mubr.f32.gmra.mrb[0].mxu0 %v9147
    %v9291 = vpop.f32.mrb[0].mxu0
    %v9292 = vadd.f32 0.0, %v9291
    %v9293 = vpop.f32.mrb[0].mxu0
    %9294 = vmatprep.mubr.f32.mxu0 0.0
    %9295 = vmatmul.mubr.f32.gmra.mrb[0].mxu0 %v9152
    %v9296 = vpop.f32.mrb[0].mxu0
    %v9297 = vadd.f32 0.0, %v9296
    %v9298 = vpop.f32.mrb[0].mxu0
    %9299 = vmatprep.mubr.f32.mxu0 0.0
    %9300 = vmatmul.mubr.f32.gmra.mrb[0].mxu0 %v9157
    %v9301 = vpop.f32.mrb[0].mxu0
    %v9302 = vadd.f32 0.0, %v9301
    %v9303 = vpop.f32.mrb[0].mxu0
    %9304 = vmatprep.mubr.f32.mxu0 0.0
    %9305 = vmatmul.mubr.f32.gmra.mrb[0].mxu0 %v9162
    %v9306 = vpop.f32.mrb[0].mxu0
    %v9307 = vadd.f32 0.0, %v9306
    %v9308 = vpop.f32.mrb[0].mxu0
    %9309 = vmatprep.mubr.f32.mxu0 0.0
    %9310 = vmatmul.mubr.f32.gmra.mrb[0].mxu0 %v9167
    %v9311 = vpop.f32.mrb[0].mxu0
    %v9312 = vadd.f32 0.0, %v9311
    %v9313 = vpop.f32.mrb[0].mxu0
    %9314 = vmatprep.mubr.f32.mxu0 0.0
    %9315 = vmatmul.mubr.f32.gmra.mrb[0].mxu0 %v9172
    %v9316 = vpop.f32.mrb[0].mxu0
    %v9317 = vadd.f32 0.0, %v9316
    %v9318 = vpop.f32.mrb[0].mxu0
    %9319 = vmatprep.mubr.f32.mxu0 0.0
    %9320 = vmatmul.mubr.f32.gmra.mrb[0].mxu0 %v9177
    %v9321 = vpop.f32.mrb[0].mxu0
    %v9322 = vadd.f32 0.0, %v9321
    %v9323 = vpop.f32.mrb[0].mxu0
    %9324 = vmatprep.mubr.f32.mxu0 0.0
    %9325 = vmatmul.mubr.f32.gmra.mrb[0].mxu0 %v9182
    %v9326 = vpop.f32.mrb[0].mxu0
    %v9327 = vadd.f32 0.0, %v9326
    %v9328 = vpop.f32.mrb[0].mxu0
    %9329 = vmatprep.mubr.f32.mxu0 0.0
    %9330 = vmatmul.mubr.f32.gmra.mrb[0].mxu0 %v9187
    %v9331 = vpop.f32.mrb[0].mxu0
    %v9332 = vadd.f32 0.0, %v9331
    %v9333 = vpop.f32.mrb[0].mxu0
    %9334 = vmatprep.mubr.f32.mxu0 0.0
    %9335 = vmatmul.mubr.f32.gmra.mrb[0].mxu0 %v9192
    %v9336 = vpop.f32.mrb[0].mxu0
    %v9337 = vadd.f32 0.0, %v9336
    %v9338 = vpop.f32.mrb[0].mxu0
    %9339 = vmatprep.mubr.f32.mxu0 0.0
    %9340 = vmatmul.mubr.f32.gmra.mrb[0].mxu0 %v9197
    %v9341 = vpop.f32.mrb[0].mxu0
    %v9342 = vadd.f32 0.0, %v9341
    %v9343 = vpop.f32.mrb[0].mxu0
    %9344 = vdwg.mxu0
    %v9345 = vadd.f32 %v9023, %v9267
    %v9346 = vadd.f32 %v9024, %v9272
    %v9347 = vadd.f32 %v9025, %v9277
    %v9348 = vadd.f32 %v9026, %v9282
    %v9349 = vadd.f32 %v9027, %v9287
    %v9350 = vadd.f32 %v9028, %v9292
    %v9351 = vadd.f32 %v9029, %v9297
    %v9352 = vadd.f32 %v9030, %v9302
    %v9353 = vadd.f32 %v9031, %v9307
    %v9354 = vadd.f32 %v9032, %v9312
    %v9355 = vadd.f32 %v9033, %v9317
    %v9356 = vadd.f32 %v9034, %v9322
    %v9357 = vadd.f32 %v9035, %v9327
    %v9358 = vadd.f32 %v9036, %v9332
    %v9359 = vadd.f32 %v9037, %v9337
    %v9360 = vadd.f32 %v9038, %v9342
    %v9361 = vld [vmem:[#allocation6 + $0x180] sm:$0xff]
    %v9362 = vld [vmem:[#allocation6 + $0x188] sm:$0xff]
    %v9363 = vld [vmem:[#allocation6 + $0x190] sm:$0xff]
    %v9364 = vld [vmem:[#allocation6 + $0x198] sm:$0xff]
    %v9365 = vld [vmem:[#allocation6 + $0x1a0] sm:$0xff]
    %v9366 = vld [vmem:[#allocation6 + $0x1a8] sm:$0xff]
    %v9367 = vld [vmem:[#allocation6 + $0x1b0] sm:$0xff]
    %v9368 = vld [vmem:[#allocation6 + $0x1b8] sm:$0xff]
    %v9369 = vld [vmem:[#allocation6 + $0x1c0] sm:$0xff]
    %v9370 = vld [vmem:[#allocation6 + $0x1c8] sm:$0xff]
    %v9371 = vld [vmem:[#allocation6 + $0x1d0] sm:$0xff]
    %v9372 = vld [vmem:[#allocation6 + $0x1d8] sm:$0xff]
    %v9373 = vld [vmem:[#allocation6 + $0x1e0] sm:$0xff]
    %v9374 = vld [vmem:[#allocation6 + $0x1e8] sm:$0xff]
    %v9375 = vld [vmem:[#allocation6 + $0x1f0] sm:$0xff]
    %v9376 = vld [vmem:[#allocation6 + $0x1f8] sm:$0xff]
    %9377 = vmatprep.subr.mxu0 0.0
    %9378 = vmatpush1.msra.mxu0 %v8379
    %9379 = vmatprep.subr.mxu0 0.0
    %9380 = vmatpush1.msra.mxu0 %v8380
    %9381 = vmatprep.subr.mxu0 0.0
    %9382 = vmatpush1.msra.mxu0 %v8381
    %9383 = vmatprep.subr.mxu0 0.0
    %9384 = vmatpush1.msra.mxu0 %v8382
    %9385 = vmatprep.subr.mxu0 0.0
    %9386 = vmatpush1.msra.mxu0 %v8383
    %9387 = vmatprep.subr.mxu0 0.0
    %9388 = vmatpush1.msra.mxu0 %v8384
    %9389 = vmatprep.subr.mxu0 0.0
    %9390 = vmatpush1.msra.mxu0 %v8385
    %9391 = vmatprep.subr.mxu0 0.0
    %9392 = vmatpush1.msra.mxu0 %v8386
    %9393 = vmatprep.subr.mxu0 0.0
    %9394 = vmatpush1.msra.mxu0 %v8387
    %9395 = vmatprep.subr.mxu0 0.0
    %9396 = vmatpush1.msra.mxu0 %v8388
    %9397 = vmatprep.subr.mxu0 0.0
    %9398 = vmatpush1.msra.mxu0 %v8389
    %9399 = vmatprep.subr.mxu0 0.0
    %9400 = vmatpush1.msra.mxu0 %v8390
    %9401 = vmatprep.subr.mxu0 0.0
    %9402 = vmatpush1.msra.mxu0 %v8391
    %9403 = vmatprep.subr.mxu0 0.0
    %9404 = vmatpush1.msra.mxu0 %v8392
    %9405 = vmatprep.subr.mxu0 0.0
    %9406 = vmatpush1.msra.mxu0 %v8393
    %9407 = vmatprep.subr.mxu0 0.0
    %9408 = vmatpush1.msra.mxu0 %v8394
    %9409 = vmatprep.subr.mxu0 0.0
    %9410 = vmatpush1.msra.mxu0 0.0
    %9411 = vmatprep.subr.mxu0 0.0
    %9412 = vmatpush1.msra.mxu0 0.0
    %9413 = vmatprep.subr.mxu0 0.0
    %9414 = vmatpush1.msra.mxu0 0.0
    %9415 = vmatprep.subr.mxu0 0.0
    %9416 = vmatpush1.msra.mxu0 0.0
    %9417 = vmatprep.subr.mxu0 0.0
    %9418 = vmatpush1.msra.mxu0 0.0
    %9419 = vmatprep.subr.mxu0 0.0
    %9420 = vmatpush1.msra.mxu0 0.0
    %9421 = vmatprep.subr.mxu0 0.0
    %9422 = vmatpush1.msra.mxu0 0.0
    %9423 = vmatprep.subr.mxu0 0.0
    %9424 = vmatpush1.msra.mxu0 0.0
    %9425 = vmatprep.subr.mxu0 0.0
    %9426 = vmatpush1.msra.mxu0 0.0
    %9427 = vmatprep.subr.mxu0 0.0
    %9428 = vmatpush1.msra.mxu0 0.0
    %9429 = vmatprep.subr.mxu0 0.0
    %9430 = vmatpush1.msra.mxu0 0.0
    %9431 = vmatprep.subr.mxu0 0.0
    %9432 = vmatpush1.msra.mxu0 0.0
    %9433 = vmatprep.subr.mxu0 0.0
    %9434 = vmatpush1.msra.mxu0 0.0
    %9435 = vmatprep.subr.mxu0 0.0
    %9436 = vmatpush1.msra.mxu0 0.0
    %9437 = vmatprep.subr.mxu0 0.0
    %9438 = vmatpush1.msra.mxu0 0.0
    %9439 = vmatprep.subr.mxu0 0.0
    %9440 = vmatpush1.msra.mxu0 0.0
    %9441 = vmatprep.mubr.f32.mxu0 0.0
    %9442 = vmatmul.mubr.f32.gmra.mrb[0].mxu0 %v9361
    %v9443 = vpop.f32.mrb[0].mxu0
    %v9444 = vadd.f32 0.0, %v9443
    %v9445 = vpop.f32.mrb[0].mxu0
    %9446 = vmatprep.mubr.f32.mxu0 0.0
    %9447 = vmatmul.mubr.f32.gmra.mrb[0].mxu0 %v9362
    %v9448 = vpop.f32.mrb[0].mxu0
    %v9449 = vadd.f32 0.0, %v9448
    %v9450 = vpop.f32.mrb[0].mxu0
    %9451 = vmatprep.mubr.f32.mxu0 0.0
    %9452 = vmatmul.mubr.f32.gmra.mrb[0].mxu0 %v9363
    %v9453 = vpop.f32.mrb[0].mxu0
    %v9454 = vadd.f32 0.0, %v9453
    %v9455 = vpop.f32.mrb[0].mxu0
    %9456 = vmatprep.mubr.f32.mxu0 0.0
    %9457 = vmatmul.mubr.f32.gmra.mrb[0].mxu0 %v9364
    %v9458 = vpop.f32.mrb[0].mxu0
    %v9459 = vadd.f32 0.0, %v9458
    %v9460 = vpop.f32.mrb[0].mxu0
    %9461 = vmatprep.mubr.f32.mxu0 0.0
    %9462 = vmatmul.mubr.f32.gmra.mrb[0].mxu0 %v9365
    %v9463 = vpop.f32.mrb[0].mxu0
    %v9464 = vadd.f32 0.0, %v9463
    %v9465 = vpop.f32.mrb[0].mxu0
    %9466 = vmatprep.mubr.f32.mxu0 0.0
    %9467 = vmatmul.mubr.f32.gmra.mrb[0].mxu0 %v9366
    %v9468 = vpop.f32.mrb[0].mxu0
    %v9469 = vadd.f32 0.0, %v9468
    %v9470 = vpop.f32.mrb[0].mxu0
    %9471 = vmatprep.mubr.f32.mxu0 0.0
    %9472 = vmatmul.mubr.f32.gmra.mrb[0].mxu0 %v9367
    %v9473 = vpop.f32.mrb[0].mxu0
    %v9474 = vadd.f32 0.0, %v9473
    %v9475 = vpop.f32.mrb[0].mxu0
    %9476 = vmatprep.mubr.f32.mxu0 0.0
    %9477 = vmatmul.mubr.f32.gmra.mrb[0].mxu0 %v9368
    %v9478 = vpop.f32.mrb[0].mxu0
    %v9479 = vadd.f32 0.0, %v9478
    %v9480 = vpop.f32.mrb[0].mxu0
    %9481 = vmatprep.mubr.f32.mxu0 0.0
    %9482 = vmatmul.mubr.f32.gmra.mrb[0].mxu0 %v9369
    %v9483 = vpop.f32.mrb[0].mxu0
    %v9484 = vadd.f32 0.0, %v9483
    %v9485 = vpop.f32.mrb[0].mxu0
    %9486 = vmatprep.mubr.f32.mxu0 0.0
    %9487 = vmatmul.mubr.f32.gmra.mrb[0].mxu0 %v9370
    %v9488 = vpop.f32.mrb[0].mxu0
    %v9489 = vadd.f32 0.0, %v9488
    %v9490 = vpop.f32.mrb[0].mxu0
    %9491 = vmatprep.mubr.f32.mxu0 0.0
    %9492 = vmatmul.mubr.f32.gmra.mrb[0].mxu0 %v9371
    %v9493 = vpop.f32.mrb[0].mxu0
    %v9494 = vadd.f32 0.0, %v9493
    %v9495 = vpop.f32.mrb[0].mxu0
    %9496 = vmatprep.mubr.f32.mxu0 0.0
    %9497 = vmatmul.mubr.f32.gmra.mrb[0].mxu0 %v9372
    %v9498 = vpop.f32.mrb[0].mxu0
    %v9499 = vadd.f32 0.0, %v9498
    %v9500 = vpop.f32.mrb[0].mxu0
    %9501 = vmatprep.mubr.f32.mxu0 0.0
    %9502 = vmatmul.mubr.f32.gmra.mrb[0].mxu0 %v9373
    %v9503 = vpop.f32.mrb[0].mxu0
    %v9504 = vadd.f32 0.0, %v9503
    %v9505 = vpop.f32.mrb[0].mxu0
    %9506 = vmatprep.mubr.f32.mxu0 0.0
    %9507 = vmatmul.mubr.f32.gmra.mrb[0].mxu0 %v9374
    %v9508 = vpop.f32.mrb[0].mxu0
    %v9509 = vadd.f32 0.0, %v9508
    %v9510 = vpop.f32.mrb[0].mxu0
    %9511 = vmatprep.mubr.f32.mxu0 0.0
    %9512 = vmatmul.mubr.f32.gmra.mrb[0].mxu0 %v9375
    %v9513 = vpop.f32.mrb[0].mxu0
    %v9514 = vadd.f32 0.0, %v9513
    %v9515 = vpop.f32.mrb[0].mxu0
    %9516 = vmatprep.mubr.f32.mxu0 0.0
    %9517 = vmatmul.mubr.f32.gmra.mrb[0].mxu0 %v9376
    %v9518 = vpop.f32.mrb[0].mxu0
    %v9519 = vadd.f32 0.0, %v9518
    %v9520 = vpop.f32.mrb[0].mxu0
    %9521 = vdwg.mxu0
    %9522 = vmatprep.subr.mxu0 0.0
    %9523 = vmatpush1.msra.mxu0 %v554
    %9524 = vmatprep.subr.mxu0 0.0
    %9525 = vmatpush1.msra.mxu0 %v555
    %9526 = vmatprep.subr.mxu0 0.0
    %9527 = vmatpush1.msra.mxu0 %v556
    %9528 = vmatprep.subr.mxu0 0.0
    %9529 = vmatpush1.msra.mxu0 %v557
    %9530 = vmatprep.subr.mxu0 0.0
    %9531 = vmatpush1.msra.mxu0 %v558
    %9532 = vmatprep.subr.mxu0 0.0
    %9533 = vmatpush1.msra.mxu0 %v559
    %9534 = vmatprep.subr.mxu0 0.0
    %9535 = vmatpush1.msra.mxu0 %v560
    %9536 = vmatprep.subr.mxu0 0.0
    %9537 = vmatpush1.msra.mxu0 %v561
    %9538 = vmatprep.subr.mxu0 0.0
    %9539 = vmatpush1.msra.mxu0 %v562
    %9540 = vmatprep.subr.mxu0 0.0
    %9541 = vmatpush1.msra.mxu0 %v563
    %9542 = vmatprep.subr.mxu0 0.0
    %9543 = vmatpush1.msra.mxu0 %v564
    %9544 = vmatprep.subr.mxu0 0.0
    %9545 = vmatpush1.msra.mxu0 %v565
    %9546 = vmatprep.subr.mxu0 0.0
    %9547 = vmatpush1.msra.mxu0 %v566
    %9548 = vmatprep.subr.mxu0 0.0
    %9549 = vmatpush1.msra.mxu0 %v567
    %9550 = vmatprep.subr.mxu0 0.0
    %9551 = vmatpush1.msra.mxu0 %v568
    %9552 = vmatprep.subr.mxu0 0.0
    %9553 = vmatpush1.msra.mxu0 %v569
    %9554 = vmatprep.subr.mxu0 0.0
    %9555 = vmatpush1.msra.mxu0 0.0
    %9556 = vmatprep.subr.mxu0 0.0
    %9557 = vmatpush1.msra.mxu0 0.0
    %9558 = vmatprep.subr.mxu0 0.0
    %9559 = vmatpush1.msra.mxu0 0.0
    %9560 = vmatprep.subr.mxu0 0.0
    %9561 = vmatpush1.msra.mxu0 0.0
    %9562 = vmatprep.subr.mxu0 0.0
    %9563 = vmatpush1.msra.mxu0 0.0
    %9564 = vmatprep.subr.mxu0 0.0
    %9565 = vmatpush1.msra.mxu0 0.0
    %9566 = vmatprep.subr.mxu0 0.0
    %9567 = vmatpush1.msra.mxu0 0.0
    %9568 = vmatprep.subr.mxu0 0.0
    %9569 = vmatpush1.msra.mxu0 0.0
    %9570 = vmatprep.subr.mxu0 0.0
    %9571 = vmatpush1.msra.mxu0 0.0
    %9572 = vmatprep.subr.mxu0 0.0
    %9573 = vmatpush1.msra.mxu0 0.0
    %9574 = vmatprep.subr.mxu0 0.0
    %9575 = vmatpush1.msra.mxu0 0.0
    %9576 = vmatprep.subr.mxu0 0.0
    %9577 = vmatpush1.msra.mxu0 0.0
    %9578 = vmatprep.subr.mxu0 0.0
    %9579 = vmatpush1.msra.mxu0 0.0
    %9580 = vmatprep.subr.mxu0 0.0
    %9581 = vmatpush1.msra.mxu0 0.0
    %9582 = vmatprep.subr.mxu0 0.0
    %9583 = vmatpush1.msra.mxu0 0.0
    %9584 = vmatprep.subr.mxu0 0.0
    %9585 = vmatpush1.msra.mxu0 0.0
    %9586 = vmatprep.mubr.f32.mxu0 0.0
    %9587 = vmatmul.mubr.f32.gmra.mrb[0].mxu0 %v9444
    %v9588 = vpop.f32.mrb[0].mxu0
    %v9589 = vadd.f32 0.0, %v9588
    %v9590 = vpop.f32.mrb[0].mxu0
    %9591 = vmatprep.mubr.f32.mxu0 0.0
    %9592 = vmatmul.mubr.f32.gmra.mrb[0].mxu0 %v9449
    %v9593 = vpop.f32.mrb[0].mxu0
    %v9594 = vadd.f32 0.0, %v9593
    %v9595 = vpop.f32.mrb[0].mxu0
    %9596 = vmatprep.mubr.f32.mxu0 0.0
    %9597 = vmatmul.mubr.f32.gmra.mrb[0].mxu0 %v9454
    %v9598 = vpop.f32.mrb[0].mxu0
    %v9599 = vadd.f32 0.0, %v9598
    %v9600 = vpop.f32.mrb[0].mxu0
    %9601 = vmatprep.mubr.f32.mxu0 0.0
    %9602 = vmatmul.mubr.f32.gmra.mrb[0].mxu0 %v9459
    %v9603 = vpop.f32.mrb[0].mxu0
    %v9604 = vadd.f32 0.0, %v9603
    %v9605 = vpop.f32.mrb[0].mxu0
    %9606 = vmatprep.mubr.f32.mxu0 0.0
    %9607 = vmatmul.mubr.f32.gmra.mrb[0].mxu0 %v9464
    %v9608 = vpop.f32.mrb[0].mxu0
    %v9609 = vadd.f32 0.0, %v9608
    %v9610 = vpop.f32.mrb[0].mxu0
    %9611 = vmatprep.mubr.f32.mxu0 0.0
    %9612 = vmatmul.mubr.f32.gmra.mrb[0].mxu0 %v9469
    %v9613 = vpop.f32.mrb[0].mxu0
    %v9614 = vadd.f32 0.0, %v9613
    %v9615 = vpop.f32.mrb[0].mxu0
    %9616 = vmatprep.mubr.f32.mxu0 0.0
    %9617 = vmatmul.mubr.f32.gmra.mrb[0].mxu0 %v9474
    %v9618 = vpop.f32.mrb[0].mxu0
    %v9619 = vadd.f32 0.0, %v9618
    %v9620 = vpop.f32.mrb[0].mxu0
    %9621 = vmatprep.mubr.f32.mxu0 0.0
    %9622 = vmatmul.mubr.f32.gmra.mrb[0].mxu0 %v9479
    %v9623 = vpop.f32.mrb[0].mxu0
    %v9624 = vadd.f32 0.0, %v9623
    %v9625 = vpop.f32.mrb[0].mxu0
    %9626 = vmatprep.mubr.f32.mxu0 0.0
    %9627 = vmatmul.mubr.f32.gmra.mrb[0].mxu0 %v9484
    %v9628 = vpop.f32.mrb[0].mxu0
    %v9629 = vadd.f32 0.0, %v9628
    %v9630 = vpop.f32.mrb[0].mxu0
    %9631 = vmatprep.mubr.f32.mxu0 0.0
    %9632 = vmatmul.mubr.f32.gmra.mrb[0].mxu0 %v9489
    %v9633 = vpop.f32.mrb[0].mxu0
    %v9634 = vadd.f32 0.0, %v9633
    %v9635 = vpop.f32.mrb[0].mxu0
    %9636 = vmatprep.mubr.f32.mxu0 0.0
    %9637 = vmatmul.mubr.f32.gmra.mrb[0].mxu0 %v9494
    %v9638 = vpop.f32.mrb[0].mxu0
    %v9639 = vadd.f32 0.0, %v9638
    %v9640 = vpop.f32.mrb[0].mxu0
    %9641 = vmatprep.mubr.f32.mxu0 0.0
    %9642 = vmatmul.mubr.f32.gmra.mrb[0].mxu0 %v9499
    %v9643 = vpop.f32.mrb[0].mxu0
    %v9644 = vadd.f32 0.0, %v9643
    %v9645 = vpop.f32.mrb[0].mxu0
    %9646 = vmatprep.mubr.f32.mxu0 0.0
    %9647 = vmatmul.mubr.f32.gmra.mrb[0].mxu0 %v9504
    %v9648 = vpop.f32.mrb[0].mxu0
    %v9649 = vadd.f32 0.0, %v9648
    %v9650 = vpop.f32.mrb[0].mxu0
    %9651 = vmatprep.mubr.f32.mxu0 0.0
    %9652 = vmatmul.mubr.f32.gmra.mrb[0].mxu0 %v9509
    %v9653 = vpop.f32.mrb[0].mxu0
    %v9654 = vadd.f32 0.0, %v9653
    %v9655 = vpop.f32.mrb[0].mxu0
    %9656 = vmatprep.mubr.f32.mxu0 0.0
    %9657 = vmatmul.mubr.f32.gmra.mrb[0].mxu0 %v9514
    %v9658 = vpop.f32.mrb[0].mxu0
    %v9659 = vadd.f32 0.0, %v9658
    %v9660 = vpop.f32.mrb[0].mxu0
    %9661 = vmatprep.mubr.f32.mxu0 0.0
    %9662 = vmatmul.mubr.f32.gmra.mrb[0].mxu0 %v9519
    %v9663 = vpop.f32.mrb[0].mxu0
    %v9664 = vadd.f32 0.0, %v9663
    %v9665 = vpop.f32.mrb[0].mxu0
    %9666 = vdwg.mxu0
    %v9667 = vadd.f32 %v9345, %v9589
    %v9668 = vadd.f32 %v9346, %v9594
    %v9669 = vadd.f32 %v9347, %v9599
    %v9670 = vadd.f32 %v9348, %v9604
    %v9671 = vadd.f32 %v9349, %v9609
    %v9672 = vadd.f32 %v9350, %v9614
    %v9673 = vadd.f32 %v9351, %v9619
    %v9674 = vadd.f32 %v9352, %v9624
    %v9675 = vadd.f32 %v9353, %v9629
    %v9676 = vadd.f32 %v9354, %v9634
    %v9677 = vadd.f32 %v9355, %v9639
    %v9678 = vadd.f32 %v9356, %v9644
    %v9679 = vadd.f32 %v9357, %v9649
    %v9680 = vadd.f32 %v9358, %v9654
    %v9681 = vadd.f32 %v9359, %v9659
    %v9682 = vadd.f32 %v9360, %v9664
    %v9683 = vld [vmem:[#allocation6 + $0x200] sm:$0xff]
    %v9684 = vld [vmem:[#allocation6 + $0x208] sm:$0xff]
    %v9685 = vld [vmem:[#allocation6 + $0x210] sm:$0xff]
    %v9686 = vld [vmem:[#allocation6 + $0x218] sm:$0xff]
    %v9687 = vld [vmem:[#allocation6 + $0x220] sm:$0xff]
    %v9688 = vld [vmem:[#allocation6 + $0x228] sm:$0xff]
    %v9689 = vld [vmem:[#allocation6 + $0x230] sm:$0xff]
    %v9690 = vld [vmem:[#allocation6 + $0x238] sm:$0xff]
    %v9691 = vld [vmem:[#allocation6 + $0x240] sm:$0xff]
    %v9692 = vld [vmem:[#allocation6 + $0x248] sm:$0xff]
    %v9693 = vld [vmem:[#allocation6 + $0x250] sm:$0xff]
    %v9694 = vld [vmem:[#allocation6 + $0x258] sm:$0xff]
    %v9695 = vld [vmem:[#allocation6 + $0x260] sm:$0xff]
    %v9696 = vld [vmem:[#allocation6 + $0x268] sm:$0xff]
    %v9697 = vld [vmem:[#allocation6 + $0x270] sm:$0xff]
    %v9698 = vld [vmem:[#allocation6 + $0x278] sm:$0xff]
    %9699 = vmatprep.subr.mxu0 0.0
    %9700 = vmatpush1.msra.mxu0 %v8379
    %9701 = vmatprep.subr.mxu0 0.0
    %9702 = vmatpush1.msra.mxu0 %v8380
    %9703 = vmatprep.subr.mxu0 0.0
    %9704 = vmatpush1.msra.mxu0 %v8381
    %9705 = vmatprep.subr.mxu0 0.0
    %9706 = vmatpush1.msra.mxu0 %v8382
    %9707 = vmatprep.subr.mxu0 0.0
    %9708 = vmatpush1.msra.mxu0 %v8383
    %9709 = vmatprep.subr.mxu0 0.0
    %9710 = vmatpush1.msra.mxu0 %v8384
    %9711 = vmatprep.subr.mxu0 0.0
    %9712 = vmatpush1.msra.mxu0 %v8385
    %9713 = vmatprep.subr.mxu0 0.0
    %9714 = vmatpush1.msra.mxu0 %v8386
    %9715 = vmatprep.subr.mxu0 0.0
    %9716 = vmatpush1.msra.mxu0 %v8387
    %9717 = vmatprep.subr.mxu0 0.0
    %9718 = vmatpush1.msra.mxu0 %v8388
    %9719 = vmatprep.subr.mxu0 0.0
    %9720 = vmatpush1.msra.mxu0 %v8389
    %9721 = vmatprep.subr.mxu0 0.0
    %9722 = vmatpush1.msra.mxu0 %v8390
    %9723 = vmatprep.subr.mxu0 0.0
    %9724 = vmatpush1.msra.mxu0 %v8391
    %9725 = vmatprep.subr.mxu0 0.0
    %9726 = vmatpush1.msra.mxu0 %v8392
    %9727 = vmatprep.subr.mxu0 0.0
    %9728 = vmatpush1.msra.mxu0 %v8393
    %9729 = vmatprep.subr.mxu0 0.0
    %9730 = vmatpush1.msra.mxu0 %v8394
    %9731 = vmatprep.subr.mxu0 0.0
    %9732 = vmatpush1.msra.mxu0 0.0
    %9733 = vmatprep.subr.mxu0 0.0
    %9734 = vmatpush1.msra.mxu0 0.0
    %9735 = vmatprep.subr.mxu0 0.0
    %9736 = vmatpush1.msra.mxu0 0.0
    %9737 = vmatprep.subr.mxu0 0.0
    %9738 = vmatpush1.msra.mxu0 0.0
    %9739 = vmatprep.subr.mxu0 0.0
    %9740 = vmatpush1.msra.mxu0 0.0
    %9741 = vmatprep.subr.mxu0 0.0
    %9742 = vmatpush1.msra.mxu0 0.0
    %9743 = vmatprep.subr.mxu0 0.0
    %9744 = vmatpush1.msra.mxu0 0.0
    %9745 = vmatprep.subr.mxu0 0.0
    %9746 = vmatpush1.msra.mxu0 0.0
    %9747 = vmatprep.subr.mxu0 0.0
    %9748 = vmatpush1.msra.mxu0 0.0
    %9749 = vmatprep.subr.mxu0 0.0
    %9750 = vmatpush1.msra.mxu0 0.0
    %9751 = vmatprep.subr.mxu0 0.0
    %9752 = vmatpush1.msra.mxu0 0.0
    %9753 = vmatprep.subr.mxu0 0.0
    %9754 = vmatpush1.msra.mxu0 0.0
    %9755 = vmatprep.subr.mxu0 0.0
    %9756 = vmatpush1.msra.mxu0 0.0
    %9757 = vmatprep.subr.mxu0 0.0
    %9758 = vmatpush1.msra.mxu0 0.0
    %9759 = vmatprep.subr.mxu0 0.0
    %9760 = vmatpush1.msra.mxu0 0.0
    %9761 = vmatprep.subr.mxu0 0.0
    %9762 = vmatpush1.msra.mxu0 0.0
    %9763 = vmatprep.mubr.f32.mxu0 0.0
    %9764 = vmatmul.mubr.f32.gmra.mrb[0].mxu0 %v9683
    %v9765 = vpop.f32.mrb[0].mxu0
    %v9766 = vadd.f32 0.0, %v9765
    %v9767 = vpop.f32.mrb[0].mxu0
    %9768 = vmatprep.mubr.f32.mxu0 0.0
    %9769 = vmatmul.mubr.f32.gmra.mrb[0].mxu0 %v9684
    %v9770 = vpop.f32.mrb[0].mxu0
    %v9771 = vadd.f32 0.0, %v9770
    %v9772 = vpop.f32.mrb[0].mxu0
    %9773 = vmatprep.mubr.f32.mxu0 0.0
    %9774 = vmatmul.mubr.f32.gmra.mrb[0].mxu0 %v9685
    %v9775 = vpop.f32.mrb[0].mxu0
    %v9776 = vadd.f32 0.0, %v9775
    %v9777 = vpop.f32.mrb[0].mxu0
    %9778 = vmatprep.mubr.f32.mxu0 0.0
    %9779 = vmatmul.mubr.f32.gmra.mrb[0].mxu0 %v9686
    %v9780 = vpop.f32.mrb[0].mxu0
    %v9781 = vadd.f32 0.0, %v9780
    %v9782 = vpop.f32.mrb[0].mxu0
    %9783 = vmatprep.mubr.f32.mxu0 0.0
    %9784 = vmatmul.mubr.f32.gmra.mrb[0].mxu0 %v9687
    %v9785 = vpop.f32.mrb[0].mxu0
    %v9786 = vadd.f32 0.0, %v9785
    %v9787 = vpop.f32.mrb[0].mxu0
    %9788 = vmatprep.mubr.f32.mxu0 0.0
    %9789 = vmatmul.mubr.f32.gmra.mrb[0].mxu0 %v9688
    %v9790 = vpop.f32.mrb[0].mxu0
    %v9791 = vadd.f32 0.0, %v9790
    %v9792 = vpop.f32.mrb[0].mxu0
    %9793 = vmatprep.mubr.f32.mxu0 0.0
    %9794 = vmatmul.mubr.f32.gmra.mrb[0].mxu0 %v9689
    %v9795 = vpop.f32.mrb[0].mxu0
    %v9796 = vadd.f32 0.0, %v9795
    %v9797 = vpop.f32.mrb[0].mxu0
    %9798 = vmatprep.mubr.f32.mxu0 0.0
    %9799 = vmatmul.mubr.f32.gmra.mrb[0].mxu0 %v9690
    %v9800 = vpop.f32.mrb[0].mxu0
    %v9801 = vadd.f32 0.0, %v9800
    %v9802 = vpop.f32.mrb[0].mxu0
    %9803 = vmatprep.mubr.f32.mxu0 0.0
    %9804 = vmatmul.mubr.f32.gmra.mrb[0].mxu0 %v9691
    %v9805 = vpop.f32.mrb[0].mxu0
    %v9806 = vadd.f32 0.0, %v9805
    %v9807 = vpop.f32.mrb[0].mxu0
    %9808 = vmatprep.mubr.f32.mxu0 0.0
    %9809 = vmatmul.mubr.f32.gmra.mrb[0].mxu0 %v9692
    %v9810 = vpop.f32.mrb[0].mxu0
    %v9811 = vadd.f32 0.0, %v9810
    %v9812 = vpop.f32.mrb[0].mxu0
    %9813 = vmatprep.mubr.f32.mxu0 0.0
    %9814 = vmatmul.mubr.f32.gmra.mrb[0].mxu0 %v9693
    %v9815 = vpop.f32.mrb[0].mxu0
    %v9816 = vadd.f32 0.0, %v9815
    %v9817 = vpop.f32.mrb[0].mxu0
    %9818 = vmatprep.mubr.f32.mxu0 0.0
    %9819 = vmatmul.mubr.f32.gmra.mrb[0].mxu0 %v9694
    %v9820 = vpop.f32.mrb[0].mxu0
    %v9821 = vadd.f32 0.0, %v9820
    %v9822 = vpop.f32.mrb[0].mxu0
    %9823 = vmatprep.mubr.f32.mxu0 0.0
    %9824 = vmatmul.mubr.f32.gmra.mrb[0].mxu0 %v9695
    %v9825 = vpop.f32.mrb[0].mxu0
    %v9826 = vadd.f32 0.0, %v9825
    %v9827 = vpop.f32.mrb[0].mxu0
    %9828 = vmatprep.mubr.f32.mxu0 0.0
    %9829 = vmatmul.mubr.f32.gmra.mrb[0].mxu0 %v9696
    %v9830 = vpop.f32.mrb[0].mxu0
    %v9831 = vadd.f32 0.0, %v9830
    %v9832 = vpop.f32.mrb[0].mxu0
    %9833 = vmatprep.mubr.f32.mxu0 0.0
    %9834 = vmatmul.mubr.f32.gmra.mrb[0].mxu0 %v9697
    %v9835 = vpop.f32.mrb[0].mxu0
    %v9836 = vadd.f32 0.0, %v9835
    %v9837 = vpop.f32.mrb[0].mxu0
    %9838 = vmatprep.mubr.f32.mxu0 0.0
    %9839 = vmatmul.mubr.f32.gmra.mrb[0].mxu0 %v9698
    %v9840 = vpop.f32.mrb[0].mxu0
    %v9841 = vadd.f32 0.0, %v9840
    %v9842 = vpop.f32.mrb[0].mxu0
    %9843 = vdwg.mxu0
    %9844 = vmatprep.subr.mxu0 0.0
    %9845 = vmatpush1.msra.mxu0 %v602
    %9846 = vmatprep.subr.mxu0 0.0
    %9847 = vmatpush1.msra.mxu0 %v603
    %9848 = vmatprep.subr.mxu0 0.0
    %9849 = vmatpush1.msra.mxu0 %v604
    %9850 = vmatprep.subr.mxu0 0.0
    %9851 = vmatpush1.msra.mxu0 %v605
    %9852 = vmatprep.subr.mxu0 0.0
    %9853 = vmatpush1.msra.mxu0 %v606
    %9854 = vmatprep.subr.mxu0 0.0
    %9855 = vmatpush1.msra.mxu0 %v607
    %9856 = vmatprep.subr.mxu0 0.0
    %9857 = vmatpush1.msra.mxu0 %v608
    %9858 = vmatprep.subr.mxu0 0.0
    %9859 = vmatpush1.msra.mxu0 %v609
    %9860 = vmatprep.subr.mxu0 0.0
    %9861 = vmatpush1.msra.mxu0 %v610
    %9862 = vmatprep.subr.mxu0 0.0
    %9863 = vmatpush1.msra.mxu0 %v611
    %9864 = vmatprep.subr.mxu0 0.0
    %9865 = vmatpush1.msra.mxu0 %v612
    %9866 = vmatprep.subr.mxu0 0.0
    %9867 = vmatpush1.msra.mxu0 %v613
    %9868 = vmatprep.subr.mxu0 0.0
    %9869 = vmatpush1.msra.mxu0 %v614
    %9870 = vmatprep.subr.mxu0 0.0
    %9871 = vmatpush1.msra.mxu0 %v615
    %9872 = vmatprep.subr.mxu0 0.0
    %9873 = vmatpush1.msra.mxu0 %v616
    %9874 = vmatprep.subr.mxu0 0.0
    %9875 = vmatpush1.msra.mxu0 %v617
    %9876 = vmatprep.subr.mxu0 0.0
    %9877 = vmatpush1.msra.mxu0 0.0
    %9878 = vmatprep.subr.mxu0 0.0
    %9879 = vmatpush1.msra.mxu0 0.0
    %9880 = vmatprep.subr.mxu0 0.0
    %9881 = vmatpush1.msra.mxu0 0.0
    %9882 = vmatprep.subr.mxu0 0.0
    %9883 = vmatpush1.msra.mxu0 0.0
    %9884 = vmatprep.subr.mxu0 0.0
    %9885 = vmatpush1.msra.mxu0 0.0
    %9886 = vmatprep.subr.mxu0 0.0
    %9887 = vmatpush1.msra.mxu0 0.0
    %9888 = vmatprep.subr.mxu0 0.0
    %9889 = vmatpush1.msra.mxu0 0.0
    %9890 = vmatprep.subr.mxu0 0.0
    %9891 = vmatpush1.msra.mxu0 0.0
    %9892 = vmatprep.subr.mxu0 0.0
    %9893 = vmatpush1.msra.mxu0 0.0
    %9894 = vmatprep.subr.mxu0 0.0
    %9895 = vmatpush1.msra.mxu0 0.0
    %9896 = vmatprep.subr.mxu0 0.0
    %9897 = vmatpush1.msra.mxu0 0.0
    %9898 = vmatprep.subr.mxu0 0.0
    %9899 = vmatpush1.msra.mxu0 0.0
    %9900 = vmatprep.subr.mxu0 0.0
    %9901 = vmatpush1.msra.mxu0 0.0
    %9902 = vmatprep.subr.mxu0 0.0
    %9903 = vmatpush1.msra.mxu0 0.0
    %9904 = vmatprep.subr.mxu0 0.0
    %9905 = vmatpush1.msra.mxu0 0.0
    %9906 = vmatprep.subr.mxu0 0.0
    %9907 = vmatpush1.msra.mxu0 0.0
    %9908 = vmatprep.mubr.f32.mxu0 0.0
    %9909 = vmatmul.mubr.f32.gmra.mrb[0].mxu0 %v9766
    %v9910 = vpop.f32.mrb[0].mxu0
    %v9911 = vadd.f32 0.0, %v9910
    %v9912 = vpop.f32.mrb[0].mxu0
    %9913 = vmatprep.mubr.f32.mxu0 0.0
    %9914 = vmatmul.mubr.f32.gmra.mrb[0].mxu0 %v9771
    %v9915 = vpop.f32.mrb[0].mxu0
    %v9916 = vadd.f32 0.0, %v9915
    %v9917 = vpop.f32.mrb[0].mxu0
    %9918 = vmatprep.mubr.f32.mxu0 0.0
    %9919 = vmatmul.mubr.f32.gmra.mrb[0].mxu0 %v9776
    %v9920 = vpop.f32.mrb[0].mxu0
    %v9921 = vadd.f32 0.0, %v9920
    %v9922 = vpop.f32.mrb[0].mxu0
    %9923 = vmatprep.mubr.f32.mxu0 0.0
    %9924 = vmatmul.mubr.f32.gmra.mrb[0].mxu0 %v9781
    %v9925 = vpop.f32.mrb[0].mxu0
    %v9926 = vadd.f32 0.0, %v9925
    %v9927 = vpop.f32.mrb[0].mxu0
    %9928 = vmatprep.mubr.f32.mxu0 0.0
    %9929 = vmatmul.mubr.f32.gmra.mrb[0].mxu0 %v9786
    %v9930 = vpop.f32.mrb[0].mxu0
    %v9931 = vadd.f32 0.0, %v9930
    %v9932 = vpop.f32.mrb[0].mxu0
    %9933 = vmatprep.mubr.f32.mxu0 0.0
    %9934 = vmatmul.mubr.f32.gmra.mrb[0].mxu0 %v9791
    %v9935 = vpop.f32.mrb[0].mxu0
    %v9936 = vadd.f32 0.0, %v9935
    %v9937 = vpop.f32.mrb[0].mxu0
    %9938 = vmatprep.mubr.f32.mxu0 0.0
    %9939 = vmatmul.mubr.f32.gmra.mrb[0].mxu0 %v9796
    %v9940 = vpop.f32.mrb[0].mxu0
    %v9941 = vadd.f32 0.0, %v9940
    %v9942 = vpop.f32.mrb[0].mxu0
    %9943 = vmatprep.mubr.f32.mxu0 0.0
    %9944 = vmatmul.mubr.f32.gmra.mrb[0].mxu0 %v9801
    %v9945 = vpop.f32.mrb[0].mxu0
    %v9946 = vadd.f32 0.0, %v9945
    %v9947 = vpop.f32.mrb[0].mxu0
    %9948 = vmatprep.mubr.f32.mxu0 0.0
    %9949 = vmatmul.mubr.f32.gmra.mrb[0].mxu0 %v9806
    %v9950 = vpop.f32.mrb[0].mxu0
    %v9951 = vadd.f32 0.0, %v9950
    %v9952 = vpop.f32.mrb[0].mxu0
    %9953 = vmatprep.mubr.f32.mxu0 0.0
    %9954 = vmatmul.mubr.f32.gmra.mrb[0].mxu0 %v9811
    %v9955 = vpop.f32.mrb[0].mxu0
    %v9956 = vadd.f32 0.0, %v9955
    %v9957 = vpop.f32.mrb[0].mxu0
    %9958 = vmatprep.mubr.f32.mxu0 0.0
    %9959 = vmatmul.mubr.f32.gmra.mrb[0].mxu0 %v9816
    %v9960 = vpop.f32.mrb[0].mxu0
    %v9961 = vadd.f32 0.0, %v9960
    %v9962 = vpop.f32.mrb[0].mxu0
    %9963 = vmatprep.mubr.f32.mxu0 0.0
    %9964 = vmatmul.mubr.f32.gmra.mrb[0].mxu0 %v9821
    %v9965 = vpop.f32.mrb[0].mxu0
    %v9966 = vadd.f32 0.0, %v9965
    %v9967 = vpop.f32.mrb[0].mxu0
    %9968 = vmatprep.mubr.f32.mxu0 0.0
    %9969 = vmatmul.mubr.f32.gmra.mrb[0].mxu0 %v9826
    %v9970 = vpop.f32.mrb[0].mxu0
    %v9971 = vadd.f32 0.0, %v9970
    %v9972 = vpop.f32.mrb[0].mxu0
    %9973 = vmatprep.mubr.f32.mxu0 0.0
    %9974 = vmatmul.mubr.f32.gmra.mrb[0].mxu0 %v9831
    %v9975 = vpop.f32.mrb[0].mxu0
    %v9976 = vadd.f32 0.0, %v9975
    %v9977 = vpop.f32.mrb[0].mxu0
    %9978 = vmatprep.mubr.f32.mxu0 0.0
    %9979 = vmatmul.mubr.f32.gmra.mrb[0].mxu0 %v9836
    %v9980 = vpop.f32.mrb[0].mxu0
    %v9981 = vadd.f32 0.0, %v9980
    %v9982 = vpop.f32.mrb[0].mxu0
    %9983 = vmatprep.mubr.f32.mxu0 0.0
    %9984 = vmatmul.mubr.f32.gmra.mrb[0].mxu0 %v9841
    %v9985 = vpop.f32.mrb[0].mxu0
    %v9986 = vadd.f32 0.0, %v9985
    %v9987 = vpop.f32.mrb[0].mxu0
    %9988 = vdwg.mxu0
    %v9989 = vadd.f32 %v9667, %v9911
    %v9990 = vadd.f32 %v9668, %v9916
    %v9991 = vadd.f32 %v9669, %v9921
    %v9992 = vadd.f32 %v9670, %v9926
    %v9993 = vadd.f32 %v9671, %v9931
    %v9994 = vadd.f32 %v9672, %v9936
    %v9995 = vadd.f32 %v9673, %v9941
    %v9996 = vadd.f32 %v9674, %v9946
    %v9997 = vadd.f32 %v9675, %v9951
    %v9998 = vadd.f32 %v9676, %v9956
    %v9999 = vadd.f32 %v9677, %v9961
    %v10000 = vadd.f32 %v9678, %v9966
    %v10001 = vadd.f32 %v9679, %v9971
    %v10002 = vadd.f32 %v9680, %v9976
    %v10003 = vadd.f32 %v9681, %v9981
    %v10004 = vadd.f32 %v9682, %v9986
    %v10005 = vadd.f32 %v9989, %v9990
    %v10006 = vadd.f32 %v10005, %v9991
    %v10007 = vadd.f32 %v10006, %v9992
    %v10008 = vadd.f32 %v10007, %v9993
    %v10009 = vadd.f32 %v10008, %v9994
    %v10010 = vadd.f32 %v10009, %v9995
    %v10011 = vadd.f32 %v10010, %v9996
    %v10012 = vadd.f32 %v10011, %v9997
    %v10013 = vadd.f32 %v10012, %v9998
    %v10014 = vadd.f32 %v10013, %v9999
    %v10015 = vadd.f32 %v10014, %v10000
    %v10016 = vadd.f32 %v10015, %v10001
    %v10017 = vadd.f32 %v10016, %v10002
    %v10018 = vadd.f32 %v10017, %v10003
    %v10019 = vadd.f32 %v10018, %v10004
    %10020 = vadd.xlane.f32.xlu0 %v10019
    %v10021 = vpop.xlane.xlu0 %10020
    %v10022 = vrot.slane %v10021, 4
    %v10023 = vadd.f32 %v10021, %v10022
    %v10024 = vrot.slane %v10023, 2
    %v10025 = vadd.f32 %v10023, %v10024
    %v10026 = vrot.slane %v10025, 1
    %v10027 = vadd.f32 %v10025, %v10026
    %s10028 = vtos %v10027
    %v10029 = vstv %s10028
    %v10030 = vmul.f32 %v10029, %v3422
    %v10031 = vsub.f32 %v9989, %v10030
    %v10032 = vsub.f32 %v9990, %v10030
    %v10033 = vsub.f32 %v9991, %v10030
    %v10034 = vsub.f32 %v9992, %v10030
    %v10035 = vsub.f32 %v9993, %v10030
    %v10036 = vsub.f32 %v9994, %v10030
    %v10037 = vsub.f32 %v9995, %v10030
    %v10038 = vsub.f32 %v9996, %v10030
    %v10039 = vsub.f32 %v9997, %v10030
    %v10040 = vsub.f32 %v9998, %v10030
    %v10041 = vsub.f32 %v9999, %v10030
    %v10042 = vsub.f32 %v10000, %v10030
    %v10043 = vsub.f32 %v10001, %v10030
    %v10044 = vsub.f32 %v10002, %v10030
    %v10045 = vsub.f32 %v10003, %v10030
    %v10046 = vsub.f32 %v10004, %v10030
    %v10047 = vmul.f32 %v10031, %v10031
    %v10048 = vmul.f32 %v10032, %v10032
    %v10049 = vmul.f32 %v10033, %v10033
    %v10050 = vmul.f32 %v10034, %v10034
    %v10051 = vmul.f32 %v10035, %v10035
    %v10052 = vmul.f32 %v10036, %v10036
    %v10053 = vmul.f32 %v10037, %v10037
    %v10054 = vmul.f32 %v10038, %v10038
    %v10055 = vmul.f32 %v10039, %v10039
    %v10056 = vmul.f32 %v10040, %v10040
    %v10057 = vmul.f32 %v10041, %v10041
    %v10058 = vmul.f32 %v10042, %v10042
    %v10059 = vmul.f32 %v10043, %v10043
    %v10060 = vmul.f32 %v10044, %v10044
    %v10061 = vmul.f32 %v10045, %v10045
    %v10062 = vmul.f32 %v10046, %v10046
    %v10063 = vadd.f32 %v10047, %v10048
    %v10064 = vadd.f32 %v10063, %v10049
    %v10065 = vadd.f32 %v10064, %v10050
    %v10066 = vadd.f32 %v10065, %v10051
    %v10067 = vadd.f32 %v10066, %v10052
    %v10068 = vadd.f32 %v10067, %v10053
    %v10069 = vadd.f32 %v10068, %v10054
    %v10070 = vadd.f32 %v10069, %v10055
    %v10071 = vadd.f32 %v10070, %v10056
    %v10072 = vadd.f32 %v10071, %v10057
    %v10073 = vadd.f32 %v10072, %v10058
    %v10074 = vadd.f32 %v10073, %v10059
    %v10075 = vadd.f32 %v10074, %v10060
    %v10076 = vadd.f32 %v10075, %v10061
    %v10077 = vadd.f32 %v10076, %v10062
    %10078 = vadd.xlane.f32.xlu0 %v10077
    %v10079 = vpop.xlane.xlu0 %10078
    %v10080 = vrot.slane %v10079, 4
    %v10081 = vadd.f32 %v10079, %v10080
    %v10082 = vrot.slane %v10081, 2
    %v10083 = vadd.f32 %v10081, %v10082
    %v10084 = vrot.slane %v10083, 1
    %v10085 = vadd.f32 %v10083, %v10084
    %s10086 = vtos %v10085
    %v10087 = vstv %s10086
    %v10088 = vmul.f32 %v10087, %v3422
    %v10089 = vadd.f32 %v10088, 1e-05
    %v10090 = vrsqrt.pop %v10089
    %v10091 = vmul.f32 %v10031, %v10090
    %v10092 = vmul.f32 %v10032, %v10090
    %v10093 = vmul.f32 %v10033, %v10090
    %v10094 = vmul.f32 %v10034, %v10090
    %v10095 = vmul.f32 %v10035, %v10090
    %v10096 = vmul.f32 %v10036, %v10090
    %v10097 = vmul.f32 %v10037, %v10090
    %v10098 = vmul.f32 %v10038, %v10090
    %v10099 = vmul.f32 %v10039, %v10090
    %v10100 = vmul.f32 %v10040, %v10090
    %v10101 = vmul.f32 %v10041, %v10090
    %v10102 = vmul.f32 %v10042, %v10090
    %v10103 = vmul.f32 %v10043, %v10090
    %v10104 = vmul.f32 %v10044, %v10090
    %v10105 = vmul.f32 %v10045, %v10090
    %v10106 = vmul.f32 %v10046, %v10090
    %v10107 = vmul.f32 %v10091, %v5631
    %v10108 = vmul.f32 %v10092, %v5636
    %v10109 = vmul.f32 %v10093, %v5641
    %v10110 = vmul.f32 %v10094, %v5646
    %v10111 = vmul.f32 %v10095, %v5651
    %v10112 = vmul.f32 %v10096, %v5656
    %v10113 = vmul.f32 %v10097, %v5661
    %v10114 = vmul.f32 %v10098, %v5666
    %v10115 = vmul.f32 %v10099, %v5671
    %v10116 = vmul.f32 %v10100, %v5676
    %v10117 = vmul.f32 %v10101, %v5681
    %v10118 = vmul.f32 %v10102, %v5686
    %v10119 = vmul.f32 %v10103, %v5691
    %v10120 = vmul.f32 %v10104, %v5696
    %v10121 = vmul.f32 %v10105, %v5701
    %v10122 = vmul.f32 %v10106, %v5706
    %v10123 = vadd.f32 %v10107, %v5727
    %v10124 = vadd.f32 %v10108, %v5732
    %v10125 = vadd.f32 %v10109, %v5737
    %v10126 = vadd.f32 %v10110, %v5742
    %v10127 = vadd.f32 %v10111, %v5747
    %v10128 = vadd.f32 %v10112, %v5752
    %v10129 = vadd.f32 %v10113, %v5757
    %v10130 = vadd.f32 %v10114, %v5762
    %v10131 = vadd.f32 %v10115, %v5767
    %v10132 = vadd.f32 %v10116, %v5772
    %v10133 = vadd.f32 %v10117, %v5777
    %v10134 = vadd.f32 %v10118, %v5782
    %v10135 = vadd.f32 %v10119, %v5787
    %v10136 = vadd.f32 %v10120, %v5792
    %v10137 = vadd.f32 %v10121, %v5797
    %v10138 = vadd.f32 %v10122, %v5802
    %v10139 = vmul.f32 %v10123, 0.5
    %v10140 = vmul.f32 %v10124, 0.5
    %v10141 = vmul.f32 %v10125, 0.5
    %v10142 = vmul.f32 %v10126, 0.5
    %v10143 = vmul.f32 %v10127, 0.5
    %v10144 = vmul.f32 %v10128, 0.5
    %v10145 = vmul.f32 %v10129, 0.5
    %v10146 = vmul.f32 %v10130, 0.5
    %v10147 = vmul.f32 %v10131, 0.5
    %v10148 = vmul.f32 %v10132, 0.5
    %v10149 = vmul.f32 %v10133, 0.5
    %v10150 = vmul.f32 %v10134, 0.5
    %v10151 = vmul.f32 %v10135, 0.5
    %v10152 = vmul.f32 %v10136, 0.5
    %v10153 = vmul.f32 %v10137, 0.5
    %v10154 = vmul.f32 %v10138, 0.5
    %v10155 = vmul.f32 %v10123, 0.044715
    %v10156 = vmul.f32 %v10124, 0.044715
    %v10157 = vmul.f32 %v10125, 0.044715
    %v10158 = vmul.f32 %v10126, 0.044715
    %v10159 = vmul.f32 %v10127, 0.044715
    %v10160 = vmul.f32 %v10128, 0.044715
    %v10161 = vmul.f32 %v10129, 0.044715
    %v10162 = vmul.f32 %v10130, 0.044715
    %v10163 = vmul.f32 %v10131, 0.044715
    %v10164 = vmul.f32 %v10132, 0.044715
    %v10165 = vmul.f32 %v10133, 0.044715
    %v10166 = vmul.f32 %v10134, 0.044715
    %v10167 = vmul.f32 %v10135, 0.044715
    %v10168 = vmul.f32 %v10136, 0.044715
    %v10169 = vmul.f32 %v10137, 0.044715
    %v10170 = vmul.f32 %v10138, 0.044715
    %v10171 = vmul.f32 %v10155, %v10123
    %v10172 = vmul.f32 %v10156, %v10124
    %v10173 = vmul.f32 %v10157, %v10125
    %v10174 = vmul.f32 %v10158, %v10126
    %v10175 = vmul.f32 %v10159, %v10127
    %v10176 = vmul.f32 %v10160, %v10128
    %v10177 = vmul.f32 %v10161, %v10129
    %v10178 = vmul.f32 %v10162, %v10130
    %v10179 = vmul.f32 %v10163, %v10131
    %v10180 = vmul.f32 %v10164, %v10132
    %v10181 = vmul.f32 %v10165, %v10133
    %v10182 = vmul.f32 %v10166, %v10134
    %v10183 = vmul.f32 %v10167, %v10135
    %v10184 = vmul.f32 %v10168, %v10136
    %v10185 = vmul.f32 %v10169, %v10137
    %v10186 = vmul.f32 %v10170, %v10138
    %v10187 = vmul.f32 %v10171, %v10123
    %v10188 = vmul.f32 %v10172, %v10124
    %v10189 = vmul.f32 %v10173, %v10125
    %v10190 = vmul.f32 %v10174, %v10126
    %v10191 = vmul.f32 %v10175, %v10127
    %v10192 = vmul.f32 %v10176, %v10128
    %v10193 = vmul.f32 %v10177, %v10129
    %v10194 = vmul.f32 %v10178, %v10130
    %v10195 = vmul.f32 %v10179, %v10131
    %v10196 = vmul.f32 %v10180, %v10132
    %v10197 = vmul.f32 %v10181, %v10133
    %v10198 = vmul.f32 %v10182, %v10134
    %v10199 = vmul.f32 %v10183, %v10135
    %v10200 = vmul.f32 %v10184, %v10136
    %v10201 = vmul.f32 %v10185, %v10137
    %v10202 = vmul.f32 %v10186, %v10138
    %v10203 = vadd.f32 %v10123, %v10187
    %v10204 = vadd.f32 %v10124, %v10188
    %v10205 = vadd.f32 %v10125, %v10189
    %v10206 = vadd.f32 %v10126, %v10190
    %v10207 = vadd.f32 %v10127, %v10191
    %v10208 = vadd.f32 %v10128, %v10192
    %v10209 = vadd.f32 %v10129, %v10193
    %v10210 = vadd.f32 %v10130, %v10194
    %v10211 = vadd.f32 %v10131, %v10195
    %v10212 = vadd.f32 %v10132, %v10196
    %v10213 = vadd.f32 %v10133, %v10197
    %v10214 = vadd.f32 %v10134, %v10198
    %v10215 = vadd.f32 %v10135, %v10199
    %v10216 = vadd.f32 %v10136, %v10200
    %v10217 = vadd.f32 %v10137, %v10201
    %v10218 = vadd.f32 %v10138, %v10202
    %v10219 = vmul.f32 %v10203, 0.7978846
    %v10220 = vmul.f32 %v10204, 0.7978846
    %v10221 = vmul.f32 %v10205, 0.7978846
    %v10222 = vmul.f32 %v10206, 0.7978846
    %v10223 = vmul.f32 %v10207, 0.7978846
    %v10224 = vmul.f32 %v10208, 0.7978846
    %v10225 = vmul.f32 %v10209, 0.7978846
    %v10226 = vmul.f32 %v10210, 0.7978846
    %v10227 = vmul.f32 %v10211, 0.7978846
    %v10228 = vmul.f32 %v10212, 0.7978846
    %v10229 = vmul.f32 %v10213, 0.7978846
    %v10230 = vmul.f32 %v10214, 0.7978846
    %v10231 = vmul.f32 %v10215, 0.7978846
    %v10232 = vmul.f32 %v10216, 0.7978846
    %v10233 = vmul.f32 %v10217, 0.7978846
    %v10234 = vmul.f32 %v10218, 0.7978846
    %v10235 = vtanh.pop %v10219
    %v10236 = vtanh.pop %v10220
    %v10237 = vtanh.pop %v10221
    %v10238 = vtanh.pop %v10222
    %v10239 = vtanh.pop %v10223
    %v10240 = vtanh.pop %v10224
    %v10241 = vtanh.pop %v10225
    %v10242 = vtanh.pop %v10226
    %v10243 = vtanh.pop %v10227
    %v10244 = vtanh.pop %v10228
    %v10245 = vtanh.pop %v10229
    %v10246 = vtanh.pop %v10230
    %v10247 = vtanh.pop %v10231
    %v10248 = vtanh.pop %v10232
    %v10249 = vtanh.pop %v10233
    %v10250 = vtanh.pop %v10234
    %v10251 = vadd.f32 %v10235, 1.0
    %v10252 = vadd.f32 %v10236, 1.0
    %v10253 = vadd.f32 %v10237, 1.0
    %v10254 = vadd.f32 %v10238, 1.0
    %v10255 = vadd.f32 %v10239, 1.0
    %v10256 = vadd.f32 %v10240, 1.0
    %v10257 = vadd.f32 %v10241, 1.0
    %v10258 = vadd.f32 %v10242, 1.0
    %v10259 = vadd.f32 %v10243, 1.0
    %v10260 = vadd.f32 %v10244, 1.0
    %v10261 = vadd.f32 %v10245, 1.0
    %v10262 = vadd.f32 %v10246, 1.0
    %v10263 = vadd.f32 %v10247, 1.0
    %v10264 = vadd.f32 %v10248, 1.0
    %v10265 = vadd.f32 %v10249, 1.0
    %v10266 = vadd.f32 %v10250, 1.0
    %v10267 = vmul.f32 %v10139, %v10251
    %v10268 = vmul.f32 %v10140, %v10252
    %v10269 = vmul.f32 %v10141, %v10253
    %v10270 = vmul.f32 %v10142, %v10254
    %v10271 = vmul.f32 %v10143, %v10255
    %v10272 = vmul.f32 %v10144, %v10256
    %v10273 = vmul.f32 %v10145, %v10257
    %v10274 = vmul.f32 %v10146, %v10258
    %v10275 = vmul.f32 %v10147, %v10259
    %v10276 = vmul.f32 %v10148, %v10260
    %v10277 = vmul.f32 %v10149, %v10261
    %v10278 = vmul.f32 %v10150, %v10262
    %v10279 = vmul.f32 %v10151, %v10263
    %v10280 = vmul.f32 %v10152, %v10264
    %v10281 = vmul.f32 %v10153, %v10265
    %v10282 = vmul.f32 %v10154, %v10266
    %v10283 = vadd.f32 %v10267, %v7234
    %v10284 = vadd.f32 %v10268, %v7239
    %v10285 = vadd.f32 %v10269, %v7244
    %v10286 = vadd.f32 %v10270, %v7249
    %v10287 = vadd.f32 %v10271, %v7254
    %v10288 = vadd.f32 %v10272, %v7259
    %v10289 = vadd.f32 %v10273, %v7264
    %v10290 = vadd.f32 %v10274, %v7269
    %v10291 = vadd.f32 %v10275, %v7274
    %v10292 = vadd.f32 %v10276, %v7279
    %v10293 = vadd.f32 %v10277, %v7284
    %v10294 = vadd.f32 %v10278, %v7289
    %v10295 = vadd.f32 %v10279, %v7294
    %v10296 = vadd.f32 %v10280, %v7299
    %v10297 = vadd.f32 %v10281, %v7304
    %v10298 = vadd.f32 %v10282, %v7309
    %s10299 = scalar_lea.vmem [#allocation9], 128
    %10300 = vst [vmem:[%s10299] sm:$0xff] %v10283
    %10301 = vst [vmem:[%s10299 + $0x8] sm:$0xff] %v10284
    %10302 = vst [vmem:[%s10299 + $0x10] sm:$0xff] %v10285
    %10303 = vst [vmem:[%s10299 + $0x18] sm:$0xff] %v10286
    %10304 = vst [vmem:[%s10299 + $0x20] sm:$0xff] %v10287
    %10305 = vst [vmem:[%s10299 + $0x28] sm:$0xff] %v10288
    %10306 = vst [vmem:[%s10299 + $0x30] sm:$0xff] %v10289
    %10307 = vst [vmem:[%s10299 + $0x38] sm:$0xff] %v10290
    %10308 = vst [vmem:[%s10299 + $0x40] sm:$0xff] %v10291
    %10309 = vst [vmem:[%s10299 + $0x48] sm:$0xff] %v10292
    %10310 = vst [vmem:[%s10299 + $0x50] sm:$0xff] %v10293
    %10311 = vst [vmem:[%s10299 + $0x58] sm:$0xff] %v10294
    %10312 = vst [vmem:[%s10299 + $0x60] sm:$0xff] %v10295
    %10313 = vst [vmem:[%s10299 + $0x68] sm:$0xff] %v10296
    %10314 = vst [vmem:[%s10299 + $0x70] sm:$0xff] %v10297
    %10315 = vst [vmem:[%s10299 + $0x78] sm:$0xff] %v10298
    // Predicated region
    $region26: #{diffusion_forward.1} parent=1 // pred_check
      _
    $region27: #{diffusion_forward.1} parent=1 // pred_check_branch
      %10317 = sbr.rel (0) target = $region29
    $region28: #{diffusion_forward.1} parent=1 // pred_region
      %s10319 = ssub.s32 4096, 4096
      %10320 = vsyncadd [#allocation4], %s10319
      %s10321 = sshll.u32 [#allocation9], 4
      %s10322 = int_to_ptr.vmem [resolvable:$true] %s10321
      %10327 = dma.vmem_to_hbm [thread:$0]  %s10322, 4096, %s3, [#allocation4], 128, 128, 8
    $region29: #{diffusion_forward.1} parent=1 // pred_fallthru
      _
    // Predicated region
    $region30: #{diffusion_forward.1} parent=1 // pred_check
      _
    $region31: #{diffusion_forward.1} parent=1 // pred_check_branch
      %10329 = sbr.rel (0) target = $region33
    $region32: #{diffusion_forward.1} parent=1 // pred_region
      %10330 = dma.done [#allocation4], 4096
    $region33: #{diffusion_forward.1} parent=1 // pred_fallthru
      _
    %10331 = vsyncpa [#allocation3], 1
    %10332 = vsyncpa [#allocation8], 1
    %10333 = vsyncpa [#allocation4], 1
    %10334 = vsyncpa [#allocation5], 1

</llo_original>
